<compile_context>
chip_gen: v7x
topology: tpu7x:2x2x1
jax: 0.10.0
libtpu: 0.0.40
codegen_flags: <defaults>
</compile_context>

<pallas_src>
import math

import numpy as np
import jax
import jax.numpy as jnp
from jax.experimental import pallas as pl
from jax.experimental.pallas import tpu as pltpu

lexicons = ['A', 'B', 'C', 'D', 'E', 'F', 'G', 'next', 'end']
state_actions = ['next', 'end']

VOCAB = len(lexicons)          # 9
EMBED = 10                     # self.embed_size
HIDDEN = 30                    # self.n_hidden
HP = 32                        # hidden padded to 32 lanes per gate block
N_ACTION = 2                   # self.n_action
MAX_STEPS = 21                 # 1 initial _max_action + up to 20 while-loop iterations
TOK_NEXT = lexicons.index('next')   # 7
TOK_END = lexicons.index('end')     # 8
GATES_W = 4 * HP               # 128 lanes: [i|f|g|o], each 30 real + 2 pad
HEAD_W = 128                   # lanes 0/1 = action logits, lane 2 = value, rest 0


def _rollout_kernel(xrows_ref,     # VMEM (2, 128) f32 : precomputed x@W_ih^T + b rows
                    whh_ref,       # VMEM (32, 128) f32: W_hh^T, gate-block padded
                    whead_ref,     # VMEM (32, 128) f32: fused [act0|act1|value] head
                    bhead_ref,     # VMEM (1, 128)  f32: fused head bias
                    head_out_ref,  # out VMEM (MAX_STEPS, 128) f32: per-step head rows
                    nsteps_ref,    # out SMEM (1,) i32
                    h_ref,         # scratch VMEM (1, 32) f32
                    c_ref,         # scratch VMEM (1, 32) f32
                    done_ref):     # scratch SMEM (1,) i32
    # Load weights once; they stay vreg/VMEM resident for the whole rollout.
    whh = whh_ref[...]
    whead = whead_ref[...]
    bhead = bhead_ref[...]
    xrows = xrows_ref[...]
    xrow0 = xrows[0:1, :]          # initial-token input contribution (incl. bias)
    xrow_next = xrows[1:2, :]      # 'next'-token input contribution (incl. bias)

    head_out_ref[...] = jnp.zeros_like(head_out_ref)
    h_ref[...] = jnp.zeros_like(h_ref)
    c_ref[...] = jnp.zeros_like(c_ref)
    done_ref[0] = 0
    nsteps_ref[0] = 0

    # Fully unrolled static loop; dead steps are skipped via pl.when.
    for step in range(MAX_STEPS):

        @pl.when(done_ref[0] == 0)
        def _(step=step):
            xrow = xrow0 if step == 0 else xrow_next           # static Python select
            h = h_ref[...]                                     # (1, 32)
            c = c_ref[...]                                     # (1, 32)

            # nn.LSTMCell: gates = x W_ih^T + b_ih + h W_hh^T + b_hh, order (i, f, g, o).
            gates = xrow + jnp.dot(h, whh, preferred_element_type=jnp.float32)  # (1, 128)
            ig = jax.nn.sigmoid(gates[:, 0 * HP:1 * HP])
            fg = jax.nn.sigmoid(gates[:, 1 * HP:2 * HP])
            gg = jnp.tanh(gates[:, 2 * HP:3 * HP])
            og = jax.nn.sigmoid(gates[:, 3 * HP:4 * HP])
            c_new = fg * c + ig * gg
            h_new = og * jnp.tanh(c_new)

            # Fused head: lanes 0/1 = hidden2action logits, lane 2 = value_regression.
            head = jnp.dot(h_new, whead, preferred_element_type=jnp.float32) + bhead
            head_out_ref[pl.ds(step, 1), :] = head             # lane-dense row store

            h_ref[...] = h_new
            c_ref[...] = c_new
            # Greedy action: argmax over logits (softmax is monotone -> dropped).
            # Strict '>' matches torch .max(1) first-index tie-breaking.
            done_ref[0] = (head[0, 1] > head[0, 0]).astype(jnp.int32)
            nsteps_ref[0] = step + 1


@jax.jit
def lstm_reinforce_forward(state_idx, packed):
    """Greedy forward rollout, fully inside one Pallas kernel."""
    xrows = jnp.stack([packed['xw_pad'][state_idx],
                       packed['xw_pad'][TOK_NEXT]])            # (2, 128)
    vmem = pltpu.MemorySpace.VMEM
    smem = pltpu.MemorySpace.SMEM
    head, nsteps = pl.pallas_call(
        _rollout_kernel,
        out_shape=(jax.ShapeDtypeStruct((MAX_STEPS, HEAD_W), jnp.float32),
                   jax.ShapeDtypeStruct((1,), jnp.int32)),
        in_specs=[pl.BlockSpec(memory_space=vmem)] * 4,
        out_specs=(pl.BlockSpec(memory_space=vmem),
                   pl.BlockSpec(memory_space=smem)),
        scratch_shapes=[pltpu.VMEM((1, HP), jnp.float32),      # h
                        pltpu.VMEM((1, HP), jnp.float32),      # c
                        pltpu.SMEM((1,), jnp.int32)],          # done flag
    )(xrows, packed['whh_pad'], packed['whead'], packed['bhead'])

    n = nsteps[0]
    idx = jnp.arange(MAX_STEPS)
    valid = idx < n
    values = jnp.where(valid, head[:, 2], 0.0)[:, None]                                  # (MAX_STEPS, 1)
    actions = jnp.where(valid, (head[:, 1] > head[:, 0]).astype(jnp.int32), -1)[:, None]  # (MAX_STEPS, 1)
    return values, actions, nsteps


def make_params(key):
    """Deterministic raw parameters matching the PyTorch module's shapes/layout."""
    ks = jax.random.split(key, 9)
    bound = 1.0 / math.sqrt(HIDDEN)
    return dict(
        embed=jax.random.normal(ks[0], (VOCAB, EMBED), jnp.float32),                      # nn.Embedding(9, 10)
        w_ih=jax.random.uniform(ks[1], (4 * HIDDEN, EMBED), jnp.float32, -bound, bound),  # LSTMCell W_ih
        w_hh=jax.random.uniform(ks[2], (4 * HIDDEN, HIDDEN), jnp.float32, -bound, bound), # LSTMCell W_hh
        b_ih=jax.random.uniform(ks[3], (4 * HIDDEN,), jnp.float32, -bound, bound),
        b_hh=jax.random.uniform(ks[4], (4 * HIDDEN,), jnp.float32, -bound, bound),
        w_act=jax.random.uniform(ks[5], (N_ACTION, HIDDEN), jnp.float32, -bound, bound),  # hidden2action
        b_act=jax.random.uniform(ks[6], (N_ACTION,), jnp.float32, -bound, bound),
        w_val=jax.random.uniform(ks[7], (1, HIDDEN), jnp.float32, -bound, bound),         # value_regression
        b_val=jax.random.uniform(ks[8], (1,), jnp.float32, -bound, bound),
    )


def pack_params(raw):
    """One-time weight packing: fuse embed/input-proj/bias, pad gate blocks 30->32,
    fuse the action/value heads, all into lane-aligned 128-wide matrices."""
    def pad_gate_cols(m):
        # (..., 4*HIDDEN) -> (..., 128), each 30-wide gate block zero-padded to 32.
        r = m.reshape(m.shape[:-1] + (4, HIDDEN))
        r = jnp.pad(r, [(0, 0)] * (r.ndim - 1) + [(0, HP - HIDDEN)])
        return r.reshape(m.shape[:-1] + (GATES_W,))

    b = raw['b_ih'] + raw['b_hh']                               # (4H,)
    xw = raw['embed'] @ raw['w_ih'].T + b                       # (VOCAB, 4H)
    xw_pad = pad_gate_cols(xw)                                  # (VOCAB, 128)

    whh_pad = pad_gate_cols(raw['w_hh'].T)                      # (HIDDEN, 128)
    whh_pad = jnp.pad(whh_pad, ((0, HP - HIDDEN), (0, 0)))      # (32, 128)

    whead = jnp.zeros((HP, HEAD_W), jnp.float32)
    whead = whead.at[:HIDDEN, 0:2].set(raw['w_act'].T)          # action logits
    whead = whead.at[:HIDDEN, 2:3].set(raw['w_val'].T)          # value
    bhead = jnp.zeros((1, HEAD_W), jnp.float32)
    bhead = bhead.at[0, 0:2].set(raw['b_act'])
    bhead = bhead.at[0, 2].set(raw['b_val'][0])

    return dict(xw_pad=xw_pad, whh_pad=whh_pad, whead=whead, bhead=bhead)


def ref_forward(istate, raw):
    """Pure-NumPy reference of LSTM_REINFORCE.forward (greedy rollout)."""
    embed = np.asarray(raw['embed'])
    wih_t = np.asarray(raw['w_ih']).T
    whh_t = np.asarray(raw['w_hh']).T
    b = np.asarray(raw['b_ih'] + raw['b_hh'])[None, :]
    wact_t = np.asarray(raw['w_act']).T
    bact = np.asarray(raw['b_act'])[None, :]
    wval_t = np.asarray(raw['w_val']).T
    bval = np.asarray(raw['b_val'])[None, :]

    def sig(z):
        return 1.0 / (1.0 + np.exp(-z))

    h = np.zeros((1, HIDDEN), np.float32)
    c = np.zeros((1, HIDDEN), np.float32)
    tok = int(istate)
    values, actions = [], []
    step = 0
    while True:
        x = embed[tok][None, :]
        gates = x @ wih_t + h @ whh_t + b
        ig = sig(gates[:, :HIDDEN]); fg = sig(gates[:, HIDDEN:2 * HIDDEN])
        gg = np.tanh(gates[:, 2 * HIDDEN:3 * HIDDEN]); og = sig(gates[:, 3 * HIDDEN:])
        c = fg * c + ig * gg
        h = og * np.tanh(c)
        value = float((h @ wval_t + bval)[0, 0])
        logits = h @ wact_t + bact
        action = 1 if logits[0, 1] > logits[0, 0] else 0
        values.append(value); actions.append(action)
        if action == 1 or step >= 20:      # 'end' or the i-limit in forward()
            break
        step += 1
        tok = TOK_NEXT
    return np.array(values, np.float32), np.array(actions, np.int32)


if __name__ == "__main__":
    key = jax.random.PRNGKey(0)
    raw = make_params(key)
    packed = pack_params(raw)

    state = 'C'                                    # forward(state) takes a lexicon symbol
    istate = jnp.array(lexicons.index(state), jnp.int32)

    values, actions, n_steps = lstm_reinforce_forward(istate, packed)
    jax.block_until_ready((values, actions, n_steps))

    n = int(np.asarray(n_steps)[0])
    vals_np = np.asarray(values)[:n, 0]
    acts_np = np.asarray(actions)[:n, 0]

    ref_vals, ref_acts = ref_forward(int(istate), raw)
    assert n == ref_vals.shape[0], (n, ref_vals.shape[0])
    assert np.array_equal(acts_np, ref_acts), (acts_np, ref_acts)
    assert np.allclose(vals_np, ref_vals, atol=1e-2, rtol=1e-2), (vals_np, ref_vals)
    # unused action slots stay -1
    assert np.all(np.asarray(actions)[n:, 0] == -1)

    print("KERNEL_OK")
</pallas_src>

<mosaic_0001>
module attributes {stable_mosaic.version = 11 : i64} {
  func.func @_rollout_kernel(%arg0: memref<2x128xf32, #tpu.memory_space<vmem>>, %arg1: memref<32x128xf32, #tpu.memory_space<vmem>>, %arg2: memref<32x128xf32, #tpu.memory_space<vmem>>, %arg3: memref<1x128xf32, #tpu.memory_space<vmem>>, %arg4: memref<21x128xf32, #tpu.memory_space<vmem>>, %arg5: memref<1xi32, #tpu.memory_space<smem>>, %arg6: memref<1x32xf32, #tpu.memory_space<vmem>>, %arg7: memref<1x32xf32, #tpu.memory_space<vmem>>, %arg8: memref<1xi32, #tpu.memory_space<smem>>) attributes {dimension_semantics = [], scalar_prefetch = 0 : i64, scratch_operands = 3 : i64, tpu.core_type = #tpu.core_type<tc>} {
    %c0 = arith.constant 0 : index
    %c0_0 = arith.constant 0 : index
    %0 = vector.load %arg1[%c0, %c0_0] : memref<32x128xf32, #tpu.memory_space<vmem>>, vector<32x128xf32>
    %c0_1 = arith.constant 0 : index
    %c0_2 = arith.constant 0 : index
    %1 = vector.load %arg2[%c0_1, %c0_2] : memref<32x128xf32, #tpu.memory_space<vmem>>, vector<32x128xf32>
    %c0_3 = arith.constant 0 : index
    %c0_4 = arith.constant 0 : index
    %2 = vector.load %arg3[%c0_3, %c0_4] : memref<1x128xf32, #tpu.memory_space<vmem>>, vector<1x128xf32>
    %c0_5 = arith.constant 0 : index
    %c0_6 = arith.constant 0 : index
    %3 = vector.load %arg0[%c0_5, %c0_6] : memref<2x128xf32, #tpu.memory_space<vmem>>, vector<2x128xf32>
    %4 = vector.extract_strided_slice %3 {offsets = [0, 0], sizes = [1, 128], strides = [1, 1]} : vector<2x128xf32> to vector<1x128xf32>
    %5 = vector.extract_strided_slice %3 {offsets = [1, 0], sizes = [1, 128], strides = [1, 1]} : vector<2x128xf32> to vector<1x128xf32>
    %cst = arith.constant 0.000000e+00 : f32
    %6 = vector.broadcast %cst : f32 to vector<21x128xf32>
    %c0_7 = arith.constant 0 : index
    %c0_8 = arith.constant 0 : index
    %7 = vector.load %arg4[%c0_7, %c0_8] : memref<21x128xf32, #tpu.memory_space<vmem>>, vector<21x128xf32>
    tpu.vector_store %arg4[%c0_7, %c0_8], %6 {strides = array<i32>} : memref<21x128xf32, #tpu.memory_space<vmem>>, vector<21x128xf32>,
    %cst_9 = arith.constant 0.000000e+00 : f32
    %8 = vector.broadcast %cst_9 : f32 to vector<1x32xf32>
    %c0_10 = arith.constant 0 : index
    %c0_11 = arith.constant 0 : index
    %9 = vector.load %arg6[%c0_10, %c0_11] : memref<1x32xf32, #tpu.memory_space<vmem>>, vector<1x32xf32>
    tpu.vector_store %arg6[%c0_10, %c0_11], %8 {strides = array<i32>} : memref<1x32xf32, #tpu.memory_space<vmem>>, vector<1x32xf32>,
    %cst_12 = arith.constant 0.000000e+00 : f32
    %10 = vector.broadcast %cst_12 : f32 to vector<1x32xf32>
    %c0_13 = arith.constant 0 : index
    %c0_14 = arith.constant 0 : index
    %11 = vector.load %arg7[%c0_13, %c0_14] : memref<1x32xf32, #tpu.memory_space<vmem>>, vector<1x32xf32>
    tpu.vector_store %arg7[%c0_13, %c0_14], %10 {strides = array<i32>} : memref<1x32xf32, #tpu.memory_space<vmem>>, vector<1x32xf32>,
    %c0_i32 = arith.constant 0 : i32
    %c0_15 = arith.constant 0 : index
    %12 = memref.load %arg8[%c0_15] : memref<1xi32, #tpu.memory_space<smem>>
    memref.store %c0_i32, %arg8[%c0_15] : memref<1xi32, #tpu.memory_space<smem>>
    %c0_i32_16 = arith.constant 0 : i32
    %c0_17 = arith.constant 0 : index
    %13 = memref.load %arg5[%c0_17] : memref<1xi32, #tpu.memory_space<smem>>
    memref.store %c0_i32_16, %arg5[%c0_17] : memref<1xi32, #tpu.memory_space<smem>>
    %c0_18 = arith.constant 0 : index
    %14 = memref.load %arg8[%c0_18] : memref<1xi32, #tpu.memory_space<smem>>
    %c0_i32_19 = arith.constant 0 : i32
    %15 = arith.cmpi eq, %14, %c0_i32_19 : i32
    %16 = arith.extui %15 : i1 to i32
    %c0_i32_20 = arith.constant 0 : i32
    %17 = arith.cmpi ne, %16, %c0_i32_20 : i32
    scf.if %17 {
      %c0_81 = arith.constant 0 : index
      %c0_82 = arith.constant 0 : index
      %98 = vector.load %arg6[%c0_81, %c0_82] : memref<1x32xf32, #tpu.memory_space<vmem>>, vector<1x32xf32>
      %c0_83 = arith.constant 0 : index
      %c0_84 = arith.constant 0 : index
      %99 = vector.load %arg7[%c0_83, %c0_84] : memref<1x32xf32, #tpu.memory_space<vmem>>, vector<1x32xf32>
      %cst_85 = arith.constant dense<0.000000e+00> : vector<1x128xf32>
      %100 = tpu.matmul %98, %0, %cst_85 {dimension_numbers = #tpu.dot_dimension_numbers<[1], [0], [0], [1], [0, 0, 1, 1], [], []>} : vector<1x32xf32>, vector<32x128xf32>, vector<1x128xf32> -> vector<1x128xf32>
      %101 = arith.addf %4, %100 : vector<1x128xf32>
      %102 = vector.extract_strided_slice %101 {offsets = [0, 0], sizes = [1, 32], strides = [1, 1]} : vector<1x128xf32> to vector<1x32xf32>
      %103 = arith.negf %102 : vector<1x32xf32>
      %104 = math.exp %103 : vector<1x32xf32>
      %cst_86 = arith.constant 1.000000e+00 : f32
      %105 = vector.broadcast %cst_86 : f32 to vector<1x32xf32>
      %106 = arith.addf %105, %104 : vector<1x32xf32>
      %107 = arith.divf %105, %106 : vector<1x32xf32>
      %108 = vector.extract_strided_slice %101 {offsets = [0, 32], sizes = [1, 32], strides = [1, 1]} : vector<1x128xf32> to vector<1x32xf32>
      %109 = arith.negf %108 : vector<1x32xf32>
      %110 = math.exp %109 : vector<1x32xf32>
      %cst_87 = arith.constant 1.000000e+00 : f32
      %111 = vector.broadcast %cst_87 : f32 to vector<1x32xf32>
      %112 = arith.addf %111, %110 : vector<1x32xf32>
      %113 = arith.divf %111, %112 : vector<1x32xf32>
      %114 = vector.extract_strided_slice %101 {offsets = [0, 64], sizes = [1, 32], strides = [1, 1]} : vector<1x128xf32> to vector<1x32xf32>
      %115 = math.tanh %114 : vector<1x32xf32>
      %116 = vector.extract_strided_slice %101 {offsets = [0, 96], sizes = [1, 32], strides = [1, 1]} : vector<1x128xf32> to vector<1x32xf32>
      %117 = arith.negf %116 : vector<1x32xf32>
      %118 = math.exp %117 : vector<1x32xf32>
      %cst_88 = arith.constant 1.000000e+00 : f32
      %119 = vector.broadcast %cst_88 : f32 to vector<1x32xf32>
      %120 = arith.addf %119, %118 : vector<1x32xf32>
      %121 = arith.divf %119, %120 : vector<1x32xf32>
      %122 = arith.mulf %113, %99 : vector<1x32xf32>
      %123 = arith.mulf %107, %115 : vector<1x32xf32>
      %124 = arith.addf %122, %123 : vector<1x32xf32>
      %125 = math.tanh %124 : vector<1x32xf32>
      %126 = arith.mulf %121, %125 : vector<1x32xf32>
      %cst_89 = arith.constant dense<0.000000e+00> : vector<1x128xf32>
      %127 = tpu.matmul %126, %1, %cst_89 {dimension_numbers = #tpu.dot_dimension_numbers<[1], [0], [0], [1], [0, 0, 1, 1], [], []>} : vector<1x32xf32>, vector<32x128xf32>, vector<1x128xf32> -> vector<1x128xf32>
      %128 = arith.addf %127, %2 : vector<1x128xf32>
      %c0_90 = arith.constant 0 : index
      %c0_91 = arith.constant 0 : index
      %129 = vector.load %arg4[%c0_90, %c0_91] : memref<21x128xf32, #tpu.memory_space<vmem>>, vector<1x128xf32>
      tpu.vector_store %arg4[%c0_90, %c0_91], %128 {strides = array<i32>} : memref<21x128xf32, #tpu.memory_space<vmem>>, vector<1x128xf32>,
      %c0_92 = arith.constant 0 : index
      %c0_93 = arith.constant 0 : index
      %130 = vector.load %arg6[%c0_92, %c0_93] : memref<1x32xf32, #tpu.memory_space<vmem>>, vector<1x32xf32>
      tpu.vector_store %arg6[%c0_92, %c0_93], %126 {strides = array<i32>} : memref<1x32xf32, #tpu.memory_space<vmem>>, vector<1x32xf32>,
      %c0_94 = arith.constant 0 : index
      %c0_95 = arith.constant 0 : index
      %131 = vector.load %arg7[%c0_94, %c0_95] : memref<1x32xf32, #tpu.memory_space<vmem>>, vector<1x32xf32>
      tpu.vector_store %arg7[%c0_94, %c0_95], %124 {strides = array<i32>} : memref<1x32xf32, #tpu.memory_space<vmem>>, vector<1x32xf32>,
      %132 = vector.extract_strided_slice %128 {offsets = [0, 1], sizes = [1, 1], strides = [1, 1]} : vector<1x128xf32> to vector<1x1xf32>
      %133 = vector.extract %132[0, 0] : f32 from vector<1x1xf32>
      %134 = vector.extract_strided_slice %128 {offsets = [0, 0], sizes = [1, 1], strides = [1, 1]} : vector<1x128xf32> to vector<1x1xf32>
      %135 = vector.extract %134[0, 0] : f32 from vector<1x1xf32>
      %136 = arith.cmpf ogt, %133, %135 : f32
      %137 = arith.extui %136 : i1 to i32
      %c0_96 = arith.constant 0 : index
      %138 = memref.load %arg8[%c0_96] : memref<1xi32, #tpu.memory_space<smem>>
      memref.store %137, %arg8[%c0_96] : memref<1xi32, #tpu.memory_space<smem>>
      %c1_i32 = arith.constant 1 : i32
      %c0_97 = arith.constant 0 : index
      %139 = memref.load %arg5[%c0_97] : memref<1xi32, #tpu.memory_space<smem>>
      memref.store %c1_i32, %arg5[%c0_97] : memref<1xi32, #tpu.memory_space<smem>>
    } else {
    }
    %c0_21 = arith.constant 0 : index
    %18 = memref.load %arg8[%c0_21] : memref<1xi32, #tpu.memory_space<smem>>
    %c0_i32_22 = arith.constant 0 : i32
    %19 = arith.cmpi eq, %18, %c0_i32_22 : i32
    %20 = arith.extui %19 : i1 to i32
    %c0_i32_23 = arith.constant 0 : i32
    %21 = arith.cmpi ne, %20, %c0_i32_23 : i32
    scf.if %21 {
      %c0_81 = arith.constant 0 : index
      %c0_82 = arith.constant 0 : index
      %98 = vector.load %arg6[%c0_81, %c0_82] : memref<1x32xf32, #tpu.memory_space<vmem>>, vector<1x32xf32>
      %c0_83 = arith.constant 0 : index
      %c0_84 = arith.constant 0 : index
      %99 = vector.load %arg7[%c0_83, %c0_84] : memref<1x32xf32, #tpu.memory_space<vmem>>, vector<1x32xf32>
      %cst_85 = arith.constant dense<0.000000e+00> : vector<1x128xf32>
      %100 = tpu.matmul %98, %0, %cst_85 {dimension_numbers = #tpu.dot_dimension_numbers<[1], [0], [0], [1], [0, 0, 1, 1], [], []>} : vector<1x32xf32>, vector<32x128xf32>, vector<1x128xf32> -> vector<1x128xf32>
      %101 = arith.addf %5, %100 : vector<1x128xf32>
      %102 = vector.extract_strided_slice %101 {offsets = [0, 0], sizes = [1, 32], strides = [1, 1]} : vector<1x128xf32> to vector<1x32xf32>
      %103 = arith.negf %102 : vector<1x32xf32>
      %104 = math.exp %103 : vector<1x32xf32>
      %cst_86 = arith.constant 1.000000e+00 : f32
      %105 = vector.broadcast %cst_86 : f32 to vector<1x32xf32>
      %106 = arith.addf %105, %104 : vector<1x32xf32>
      %107 = arith.divf %105, %106 : vector<1x32xf32>
      %108 = vector.extract_strided_slice %101 {offsets = [0, 32], sizes = [1, 32], strides = [1, 1]} : vector<1x128xf32> to vector<1x32xf32>
      %109 = arith.negf %108 : vector<1x32xf32>
      %110 = math.exp %109 : vector<1x32xf32>
      %cst_87 = arith.constant 1.000000e+00 : f32
      %111 = vector.broadcast %cst_87 : f32 to vector<1x32xf32>
      %112 = arith.addf %111, %110 : vector<1x32xf32>
      %113 = arith.divf %111, %112 : vector<1x32xf32>
      %114 = vector.extract_strided_slice %101 {offsets = [0, 64], sizes = [1, 32], strides = [1, 1]} : vector<1x128xf32> to vector<1x32xf32>
      %115 = math.tanh %114 : vector<1x32xf32>
      %116 = vector.extract_strided_slice %101 {offsets = [0, 96], sizes = [1, 32], strides = [1, 1]} : vector<1x128xf32> to vector<1x32xf32>
      %117 = arith.negf %116 : vector<1x32xf32>
      %118 = math.exp %117 : vector<1x32xf32>
      %cst_88 = arith.constant 1.000000e+00 : f32
      %119 = vector.broadcast %cst_88 : f32 to vector<1x32xf32>
      %120 = arith.addf %119, %118 : vector<1x32xf32>
      %121 = arith.divf %119, %120 : vector<1x32xf32>
      %122 = arith.mulf %113, %99 : vector<1x32xf32>
      %123 = arith.mulf %107, %115 : vector<1x32xf32>
      %124 = arith.addf %122, %123 : vector<1x32xf32>
      %125 = math.tanh %124 : vector<1x32xf32>
      %126 = arith.mulf %121, %125 : vector<1x32xf32>
      %cst_89 = arith.constant dense<0.000000e+00> : vector<1x128xf32>
      %127 = tpu.matmul %126, %1, %cst_89 {dimension_numbers = #tpu.dot_dimension_numbers<[1], [0], [0], [1], [0, 0, 1, 1], [], []>} : vector<1x32xf32>, vector<32x128xf32>, vector<1x128xf32> -> vector<1x128xf32>
      %128 = arith.addf %127, %2 : vector<1x128xf32>
      %c1 = arith.constant 1 : index
      %c0_90 = arith.constant 0 : index
      %129 = vector.load %arg4[%c1, %c0_90] : memref<21x128xf32, #tpu.memory_space<vmem>>, vector<1x128xf32>
      tpu.vector_store %arg4[%c1, %c0_90], %128 {strides = array<i32>} : memref<21x128xf32, #tpu.memory_space<vmem>>, vector<1x128xf32>,
      %c0_91 = arith.constant 0 : index
      %c0_92 = arith.constant 0 : index
      %130 = vector.load %arg6[%c0_91, %c0_92] : memref<1x32xf32, #tpu.memory_space<vmem>>, vector<1x32xf32>
      tpu.vector_store %arg6[%c0_91, %c0_92], %126 {strides = array<i32>} : memref<1x32xf32, #tpu.memory_space<vmem>>, vector<1x32xf32>,
      %c0_93 = arith.constant 0 : index
      %c0_94 = arith.constant 0 : index
      %131 = vector.load %arg7[%c0_93, %c0_94] : memref<1x32xf32, #tpu.memory_space<vmem>>, vector<1x32xf32>
      tpu.vector_store %arg7[%c0_93, %c0_94], %124 {strides = array<i32>} : memref<1x32xf32, #tpu.memory_space<vmem>>, vector<1x32xf32>,
      %132 = vector.extract_strided_slice %128 {offsets = [0, 1], sizes = [1, 1], strides = [1, 1]} : vector<1x128xf32> to vector<1x1xf32>
      %133 = vector.extract %132[0, 0] : f32 from vector<1x1xf32>
      %134 = vector.extract_strided_slice %128 {offsets = [0, 0], sizes = [1, 1], strides = [1, 1]} : vector<1x128xf32> to vector<1x1xf32>
      %135 = vector.extract %134[0, 0] : f32 from vector<1x1xf32>
      %136 = arith.cmpf ogt, %133, %135 : f32
      %137 = arith.extui %136 : i1 to i32
      %c0_95 = arith.constant 0 : index
      %138 = memref.load %arg8[%c0_95] : memref<1xi32, #tpu.memory_space<smem>>
      memref.store %137, %arg8[%c0_95] : memref<1xi32, #tpu.memory_space<smem>>
      %c2_i32 = arith.constant 2 : i32
      %c0_96 = arith.constant 0 : index
      %139 = memref.load %arg5[%c0_96] : memref<1xi32, #tpu.memory_space<smem>>
      memref.store %c2_i32, %arg5[%c0_96] : memref<1xi32, #tpu.memory_space<smem>>
    } else {
    }
    %c0_24 = arith.constant 0 : index
    %22 = memref.load %arg8[%c0_24] : memref<1xi32, #tpu.memory_space<smem>>
    %c0_i32_25 = arith.constant 0 : i32
    %23 = arith.cmpi eq, %22, %c0_i32_25 : i32
    %24 = arith.extui %23 : i1 to i32
    %c0_i32_26 = arith.constant 0 : i32
    %25 = arith.cmpi ne, %24, %c0_i32_26 : i32
    scf.if %25 {
      %c0_81 = arith.constant 0 : index
      %c0_82 = arith.constant 0 : index
      %98 = vector.load %arg6[%c0_81, %c0_82] : memref<1x32xf32, #tpu.memory_space<vmem>>, vector<1x32xf32>
      %c0_83 = arith.constant 0 : index
      %c0_84 = arith.constant 0 : index
      %99 = vector.load %arg7[%c0_83, %c0_84] : memref<1x32xf32, #tpu.memory_space<vmem>>, vector<1x32xf32>
      %cst_85 = arith.constant dense<0.000000e+00> : vector<1x128xf32>
      %100 = tpu.matmul %98, %0, %cst_85 {dimension_numbers = #tpu.dot_dimension_numbers<[1], [0], [0], [1], [0, 0, 1, 1], [], []>} : vector<1x32xf32>, vector<32x128xf32>, vector<1x128xf32> -> vector<1x128xf32>
      %101 = arith.addf %5, %100 : vector<1x128xf32>
      %102 = vector.extract_strided_slice %101 {offsets = [0, 0], sizes = [1, 32], strides = [1, 1]} : vector<1x128xf32> to vector<1x32xf32>
      %103 = arith.negf %102 : vector<1x32xf32>
      %104 = math.exp %103 : vector<1x32xf32>
      %cst_86 = arith.constant 1.000000e+00 : f32
      %105 = vector.broadcast %cst_86 : f32 to vector<1x32xf32>
      %106 = arith.addf %105, %104 : vector<1x32xf32>
      %107 = arith.divf %105, %106 : vector<1x32xf32>
      %108 = vector.extract_strided_slice %101 {offsets = [0, 32], sizes = [1, 32], strides = [1, 1]} : vector<1x128xf32> to vector<1x32xf32>
      %109 = arith.negf %108 : vector<1x32xf32>
      %110 = math.exp %109 : vector<1x32xf32>
      %cst_87 = arith.constant 1.000000e+00 : f32
      %111 = vector.broadcast %cst_87 : f32 to vector<1x32xf32>
      %112 = arith.addf %111, %110 : vector<1x32xf32>
      %113 = arith.divf %111, %112 : vector<1x32xf32>
      %114 = vector.extract_strided_slice %101 {offsets = [0, 64], sizes = [1, 32], strides = [1, 1]} : vector<1x128xf32> to vector<1x32xf32>
      %115 = math.tanh %114 : vector<1x32xf32>
      %116 = vector.extract_strided_slice %101 {offsets = [0, 96], sizes = [1, 32], strides = [1, 1]} : vector<1x128xf32> to vector<1x32xf32>
      %117 = arith.negf %116 : vector<1x32xf32>
      %118 = math.exp %117 : vector<1x32xf32>
      %cst_88 = arith.constant 1.000000e+00 : f32
      %119 = vector.broadcast %cst_88 : f32 to vector<1x32xf32>
      %120 = arith.addf %119, %118 : vector<1x32xf32>
      %121 = arith.divf %119, %120 : vector<1x32xf32>
      %122 = arith.mulf %113, %99 : vector<1x32xf32>
      %123 = arith.mulf %107, %115 : vector<1x32xf32>
      %124 = arith.addf %122, %123 : vector<1x32xf32>
      %125 = math.tanh %124 : vector<1x32xf32>
      %126 = arith.mulf %121, %125 : vector<1x32xf32>
      %cst_89 = arith.constant dense<0.000000e+00> : vector<1x128xf32>
      %127 = tpu.matmul %126, %1, %cst_89 {dimension_numbers = #tpu.dot_dimension_numbers<[1], [0], [0], [1], [0, 0, 1, 1], [], []>} : vector<1x32xf32>, vector<32x128xf32>, vector<1x128xf32> -> vector<1x128xf32>
      %128 = arith.addf %127, %2 : vector<1x128xf32>
      %c2 = arith.constant 2 : index
      %c0_90 = arith.constant 0 : index
      %129 = vector.load %arg4[%c2, %c0_90] : memref<21x128xf32, #tpu.memory_space<vmem>>, vector<1x128xf32>
      tpu.vector_store %arg4[%c2, %c0_90], %128 {strides = array<i32>} : memref<21x128xf32, #tpu.memory_space<vmem>>, vector<1x128xf32>,
      %c0_91 = arith.constant 0 : index
      %c0_92 = arith.constant 0 : index
      %130 = vector.load %arg6[%c0_91, %c0_92] : memref<1x32xf32, #tpu.memory_space<vmem>>, vector<1x32xf32>
      tpu.vector_store %arg6[%c0_91, %c0_92], %126 {strides = array<i32>} : memref<1x32xf32, #tpu.memory_space<vmem>>, vector<1x32xf32>,
      %c0_93 = arith.constant 0 : index
      %c0_94 = arith.constant 0 : index
      %131 = vector.load %arg7[%c0_93, %c0_94] : memref<1x32xf32, #tpu.memory_space<vmem>>, vector<1x32xf32>
      tpu.vector_store %arg7[%c0_93, %c0_94], %124 {strides = array<i32>} : memref<1x32xf32, #tpu.memory_space<vmem>>, vector<1x32xf32>,
      %132 = vector.extract_strided_slice %128 {offsets = [0, 1], sizes = [1, 1], strides = [1, 1]} : vector<1x128xf32> to vector<1x1xf32>
      %133 = vector.extract %132[0, 0] : f32 from vector<1x1xf32>
      %134 = vector.extract_strided_slice %128 {offsets = [0, 0], sizes = [1, 1], strides = [1, 1]} : vector<1x128xf32> to vector<1x1xf32>
      %135 = vector.extract %134[0, 0] : f32 from vector<1x1xf32>
      %136 = arith.cmpf ogt, %133, %135 : f32
      %137 = arith.extui %136 : i1 to i32
      %c0_95 = arith.constant 0 : index
      %138 = memref.load %arg8[%c0_95] : memref<1xi32, #tpu.memory_space<smem>>
      memref.store %137, %arg8[%c0_95] : memref<1xi32, #tpu.memory_space<smem>>
      %c3_i32 = arith.constant 3 : i32
      %c0_96 = arith.constant 0 : index
      %139 = memref.load %arg5[%c0_96] : memref<1xi32, #tpu.memory_space<smem>>
      memref.store %c3_i32, %arg5[%c0_96] : memref<1xi32, #tpu.memory_space<smem>>
    } else {
    }
    %c0_27 = arith.constant 0 : index
    %26 = memref.load %arg8[%c0_27] : memref<1xi32, #tpu.memory_space<smem>>
    %c0_i32_28 = arith.constant 0 : i32
    %27 = arith.cmpi eq, %26, %c0_i32_28 : i32
    %28 = arith.extui %27 : i1 to i32
    %c0_i32_29 = arith.constant 0 : i32
    %29 = arith.cmpi ne, %28, %c0_i32_29 : i32
    scf.if %29 {
      %c0_81 = arith.constant 0 : index
      %c0_82 = arith.constant 0 : index
      %98 = vector.load %arg6[%c0_81, %c0_82] : memref<1x32xf32, #tpu.memory_space<vmem>>, vector<1x32xf32>
      %c0_83 = arith.constant 0 : index
      %c0_84 = arith.constant 0 : index
      %99 = vector.load %arg7[%c0_83, %c0_84] : memref<1x32xf32, #tpu.memory_space<vmem>>, vector<1x32xf32>
      %cst_85 = arith.constant dense<0.000000e+00> : vector<1x128xf32>
      %100 = tpu.matmul %98, %0, %cst_85 {dimension_numbers = #tpu.dot_dimension_numbers<[1], [0], [0], [1], [0, 0, 1, 1], [], []>} : vector<1x32xf32>, vector<32x128xf32>, vector<1x128xf32> -> vector<1x128xf32>
      %101 = arith.addf %5, %100 : vector<1x128xf32>
      %102 = vector.extract_strided_slice %101 {offsets = [0, 0], sizes = [1, 32], strides = [1, 1]} : vector<1x128xf32> to vector<1x32xf32>
      %103 = arith.negf %102 : vector<1x32xf32>
      %104 = math.exp %103 : vector<1x32xf32>
      %cst_86 = arith.constant 1.000000e+00 : f32
      %105 = vector.broadcast %cst_86 : f32 to vector<1x32xf32>
      %106 = arith.addf %105, %104 : vector<1x32xf32>
      %107 = arith.divf %105, %106 : vector<1x32xf32>
      %108 = vector.extract_strided_slice %101 {offsets = [0, 32], sizes = [1, 32], strides = [1, 1]} : vector<1x128xf32> to vector<1x32xf32>
      %109 = arith.negf %108 : vector<1x32xf32>
      %110 = math.exp %109 : vector<1x32xf32>
      %cst_87 = arith.constant 1.000000e+00 : f32
      %111 = vector.broadcast %cst_87 : f32 to vector<1x32xf32>
      %112 = arith.addf %111, %110 : vector<1x32xf32>
      %113 = arith.divf %111, %112 : vector<1x32xf32>
      %114 = vector.extract_strided_slice %101 {offsets = [0, 64], sizes = [1, 32], strides = [1, 1]} : vector<1x128xf32> to vector<1x32xf32>
      %115 = math.tanh %114 : vector<1x32xf32>
      %116 = vector.extract_strided_slice %101 {offsets = [0, 96], sizes = [1, 32], strides = [1, 1]} : vector<1x128xf32> to vector<1x32xf32>
      %117 = arith.negf %116 : vector<1x32xf32>
      %118 = math.exp %117 : vector<1x32xf32>
      %cst_88 = arith.constant 1.000000e+00 : f32
      %119 = vector.broadcast %cst_88 : f32 to vector<1x32xf32>
      %120 = arith.addf %119, %118 : vector<1x32xf32>
      %121 = arith.divf %119, %120 : vector<1x32xf32>
      %122 = arith.mulf %113, %99 : vector<1x32xf32>
      %123 = arith.mulf %107, %115 : vector<1x32xf32>
      %124 = arith.addf %122, %123 : vector<1x32xf32>
      %125 = math.tanh %124 : vector<1x32xf32>
      %126 = arith.mulf %121, %125 : vector<1x32xf32>
      %cst_89 = arith.constant dense<0.000000e+00> : vector<1x128xf32>
      %127 = tpu.matmul %126, %1, %cst_89 {dimension_numbers = #tpu.dot_dimension_numbers<[1], [0], [0], [1], [0, 0, 1, 1], [], []>} : vector<1x32xf32>, vector<32x128xf32>, vector<1x128xf32> -> vector<1x128xf32>
      %128 = arith.addf %127, %2 : vector<1x128xf32>
      %c3 = arith.constant 3 : index
      %c0_90 = arith.constant 0 : index
      %129 = vector.load %arg4[%c3, %c0_90] : memref<21x128xf32, #tpu.memory_space<vmem>>, vector<1x128xf32>
      tpu.vector_store %arg4[%c3, %c0_90], %128 {strides = array<i32>} : memref<21x128xf32, #tpu.memory_space<vmem>>, vector<1x128xf32>,
      %c0_91 = arith.constant 0 : index
      %c0_92 = arith.constant 0 : index
      %130 = vector.load %arg6[%c0_91, %c0_92] : memref<1x32xf32, #tpu.memory_space<vmem>>, vector<1x32xf32>
      tpu.vector_store %arg6[%c0_91, %c0_92], %126 {strides = array<i32>} : memref<1x32xf32, #tpu.memory_space<vmem>>, vector<1x32xf32>,
      %c0_93 = arith.constant 0 : index
      %c0_94 = arith.constant 0 : index
      %131 = vector.load %arg7[%c0_93, %c0_94] : memref<1x32xf32, #tpu.memory_space<vmem>>, vector<1x32xf32>
      tpu.vector_store %arg7[%c0_93, %c0_94], %124 {strides = array<i32>} : memref<1x32xf32, #tpu.memory_space<vmem>>, vector<1x32xf32>,
      %132 = vector.extract_strided_slice %128 {offsets = [0, 1], sizes = [1, 1], strides = [1, 1]} : vector<1x128xf32> to vector<1x1xf32>
      %133 = vector.extract %132[0, 0] : f32 from vector<1x1xf32>
      %134 = vector.extract_strided_slice %128 {offsets = [0, 0], sizes = [1, 1], strides = [1, 1]} : vector<1x128xf32> to vector<1x1xf32>
      %135 = vector.extract %134[0, 0] : f32 from vector<1x1xf32>
      %136 = arith.cmpf ogt, %133, %135 : f32
      %137 = arith.extui %136 : i1 to i32
      %c0_95 = arith.constant 0 : index
      %138 = memref.load %arg8[%c0_95] : memref<1xi32, #tpu.memory_space<smem>>
      memref.store %137, %arg8[%c0_95] : memref<1xi32, #tpu.memory_space<smem>>
      %c4_i32 = arith.constant 4 : i32
      %c0_96 = arith.constant 0 : index
      %139 = memref.load %arg5[%c0_96] : memref<1xi32, #tpu.memory_space<smem>>
      memref.store %c4_i32, %arg5[%c0_96] : memref<1xi32, #tpu.memory_space<smem>>
    } else {
    }
    %c0_30 = arith.constant 0 : index
    %30 = memref.load %arg8[%c0_30] : memref<1xi32, #tpu.memory_space<smem>>
    %c0_i32_31 = arith.constant 0 : i32
    %31 = arith.cmpi eq, %30, %c0_i32_31 : i32
    %32 = arith.extui %31 : i1 to i32
    %c0_i32_32 = arith.constant 0 : i32
    %33 = arith.cmpi ne, %32, %c0_i32_32 : i32
    scf.if %33 {
      %c0_81 = arith.constant 0 : index
      %c0_82 = arith.constant 0 : index
      %98 = vector.load %arg6[%c0_81, %c0_82] : memref<1x32xf32, #tpu.memory_space<vmem>>, vector<1x32xf32>
      %c0_83 = arith.constant 0 : index
      %c0_84 = arith.constant 0 : index
      %99 = vector.load %arg7[%c0_83, %c0_84] : memref<1x32xf32, #tpu.memory_space<vmem>>, vector<1x32xf32>
      %cst_85 = arith.constant dense<0.000000e+00> : vector<1x128xf32>
      %100 = tpu.matmul %98, %0, %cst_85 {dimension_numbers = #tpu.dot_dimension_numbers<[1], [0], [0], [1], [0, 0, 1, 1], [], []>} : vector<1x32xf32>, vector<32x128xf32>, vector<1x128xf32> -> vector<1x128xf32>
      %101 = arith.addf %5, %100 : vector<1x128xf32>
      %102 = vector.extract_strided_slice %101 {offsets = [0, 0], sizes = [1, 32], strides = [1, 1]} : vector<1x128xf32> to vector<1x32xf32>
      %103 = arith.negf %102 : vector<1x32xf32>
      %104 = math.exp %103 : vector<1x32xf32>
      %cst_86 = arith.constant 1.000000e+00 : f32
      %105 = vector.broadcast %cst_86 : f32 to vector<1x32xf32>
      %106 = arith.addf %105, %104 : vector<1x32xf32>
      %107 = arith.divf %105, %106 : vector<1x32xf32>
      %108 = vector.extract_strided_slice %101 {offsets = [0, 32], sizes = [1, 32], strides = [1, 1]} : vector<1x128xf32> to vector<1x32xf32>
      %109 = arith.negf %108 : vector<1x32xf32>
      %110 = math.exp %109 : vector<1x32xf32>
      %cst_87 = arith.constant 1.000000e+00 : f32
      %111 = vector.broadcast %cst_87 : f32 to vector<1x32xf32>
      %112 = arith.addf %111, %110 : vector<1x32xf32>
      %113 = arith.divf %111, %112 : vector<1x32xf32>
      %114 = vector.extract_strided_slice %101 {offsets = [0, 64], sizes = [1, 32], strides = [1, 1]} : vector<1x128xf32> to vector<1x32xf32>
      %115 = math.tanh %114 : vector<1x32xf32>
      %116 = vector.extract_strided_slice %101 {offsets = [0, 96], sizes = [1, 32], strides = [1, 1]} : vector<1x128xf32> to vector<1x32xf32>
      %117 = arith.negf %116 : vector<1x32xf32>
      %118 = math.exp %117 : vector<1x32xf32>
      %cst_88 = arith.constant 1.000000e+00 : f32
      %119 = vector.broadcast %cst_88 : f32 to vector<1x32xf32>
      %120 = arith.addf %119, %118 : vector<1x32xf32>
      %121 = arith.divf %119, %120 : vector<1x32xf32>
      %122 = arith.mulf %113, %99 : vector<1x32xf32>
      %123 = arith.mulf %107, %115 : vector<1x32xf32>
      %124 = arith.addf %122, %123 : vector<1x32xf32>
      %125 = math.tanh %124 : vector<1x32xf32>
      %126 = arith.mulf %121, %125 : vector<1x32xf32>
      %cst_89 = arith.constant dense<0.000000e+00> : vector<1x128xf32>
      %127 = tpu.matmul %126, %1, %cst_89 {dimension_numbers = #tpu.dot_dimension_numbers<[1], [0], [0], [1], [0, 0, 1, 1], [], []>} : vector<1x32xf32>, vector<32x128xf32>, vector<1x128xf32> -> vector<1x128xf32>
      %128 = arith.addf %127, %2 : vector<1x128xf32>
      %c4 = arith.constant 4 : index
      %c0_90 = arith.constant 0 : index
      %129 = vector.load %arg4[%c4, %c0_90] : memref<21x128xf32, #tpu.memory_space<vmem>>, vector<1x128xf32>
      tpu.vector_store %arg4[%c4, %c0_90], %128 {strides = array<i32>} : memref<21x128xf32, #tpu.memory_space<vmem>>, vector<1x128xf32>,
      %c0_91 = arith.constant 0 : index
      %c0_92 = arith.constant 0 : index
      %130 = vector.load %arg6[%c0_91, %c0_92] : memref<1x32xf32, #tpu.memory_space<vmem>>, vector<1x32xf32>
      tpu.vector_store %arg6[%c0_91, %c0_92], %126 {strides = array<i32>} : memref<1x32xf32, #tpu.memory_space<vmem>>, vector<1x32xf32>,
      %c0_93 = arith.constant 0 : index
      %c0_94 = arith.constant 0 : index
      %131 = vector.load %arg7[%c0_93, %c0_94] : memref<1x32xf32, #tpu.memory_space<vmem>>, vector<1x32xf32>
      tpu.vector_store %arg7[%c0_93, %c0_94], %124 {strides = array<i32>} : memref<1x32xf32, #tpu.memory_space<vmem>>, vector<1x32xf32>,
      %132 = vector.extract_strided_slice %128 {offsets = [0, 1], sizes = [1, 1], strides = [1, 1]} : vector<1x128xf32> to vector<1x1xf32>
      %133 = vector.extract %132[0, 0] : f32 from vector<1x1xf32>
      %134 = vector.extract_strided_slice %128 {offsets = [0, 0], sizes = [1, 1], strides = [1, 1]} : vector<1x128xf32> to vector<1x1xf32>
      %135 = vector.extract %134[0, 0] : f32 from vector<1x1xf32>
      %136 = arith.cmpf ogt, %133, %135 : f32
      %137 = arith.extui %136 : i1 to i32
      %c0_95 = arith.constant 0 : index
      %138 = memref.load %arg8[%c0_95] : memref<1xi32, #tpu.memory_space<smem>>
      memref.store %137, %arg8[%c0_95] : memref<1xi32, #tpu.memory_space<smem>>
      %c5_i32 = arith.constant 5 : i32
      %c0_96 = arith.constant 0 : index
      %139 = memref.load %arg5[%c0_96] : memref<1xi32, #tpu.memory_space<smem>>
      memref.store %c5_i32, %arg5[%c0_96] : memref<1xi32, #tpu.memory_space<smem>>
    } else {
    }
    %c0_33 = arith.constant 0 : index
    %34 = memref.load %arg8[%c0_33] : memref<1xi32, #tpu.memory_space<smem>>
    %c0_i32_34 = arith.constant 0 : i32
    %35 = arith.cmpi eq, %34, %c0_i32_34 : i32
    %36 = arith.extui %35 : i1 to i32
    %c0_i32_35 = arith.constant 0 : i32
    %37 = arith.cmpi ne, %36, %c0_i32_35 : i32
    scf.if %37 {
      %c0_81 = arith.constant 0 : index
      %c0_82 = arith.constant 0 : index
      %98 = vector.load %arg6[%c0_81, %c0_82] : memref<1x32xf32, #tpu.memory_space<vmem>>, vector<1x32xf32>
      %c0_83 = arith.constant 0 : index
      %c0_84 = arith.constant 0 : index
      %99 = vector.load %arg7[%c0_83, %c0_84] : memref<1x32xf32, #tpu.memory_space<vmem>>, vector<1x32xf32>
      %cst_85 = arith.constant dense<0.000000e+00> : vector<1x128xf32>
      %100 = tpu.matmul %98, %0, %cst_85 {dimension_numbers = #tpu.dot_dimension_numbers<[1], [0], [0], [1], [0, 0, 1, 1], [], []>} : vector<1x32xf32>, vector<32x128xf32>, vector<1x128xf32> -> vector<1x128xf32>
      %101 = arith.addf %5, %100 : vector<1x128xf32>
      %102 = vector.extract_strided_slice %101 {offsets = [0, 0], sizes = [1, 32], strides = [1, 1]} : vector<1x128xf32> to vector<1x32xf32>
      %103 = arith.negf %102 : vector<1x32xf32>
      %104 = math.exp %103 : vector<1x32xf32>
      %cst_86 = arith.constant 1.000000e+00 : f32
      %105 = vector.broadcast %cst_86 : f32 to vector<1x32xf32>
      %106 = arith.addf %105, %104 : vector<1x32xf32>
      %107 = arith.divf %105, %106 : vector<1x32xf32>
      %108 = vector.extract_strided_slice %101 {offsets = [0, 32], sizes = [1, 32], strides = [1, 1]} : vector<1x128xf32> to vector<1x32xf32>
      %109 = arith.negf %108 : vector<1x32xf32>
      %110 = math.exp %109 : vector<1x32xf32>
      %cst_87 = arith.constant 1.000000e+00 : f32
      %111 = vector.broadcast %cst_87 : f32 to vector<1x32xf32>
      %112 = arith.addf %111, %110 : vector<1x32xf32>
      %113 = arith.divf %111, %112 : vector<1x32xf32>
      %114 = vector.extract_strided_slice %101 {offsets = [0, 64], sizes = [1, 32], strides = [1, 1]} : vector<1x128xf32> to vector<1x32xf32>
      %115 = math.tanh %114 : vector<1x32xf32>
      %116 = vector.extract_strided_slice %101 {offsets = [0, 96], sizes = [1, 32], strides = [1, 1]} : vector<1x128xf32> to vector<1x32xf32>
      %117 = arith.negf %116 : vector<1x32xf32>
      %118 = math.exp %117 : vector<1x32xf32>
      %cst_88 = arith.constant 1.000000e+00 : f32
      %119 = vector.broadcast %cst_88 : f32 to vector<1x32xf32>
      %120 = arith.addf %119, %118 : vector<1x32xf32>
      %121 = arith.divf %119, %120 : vector<1x32xf32>
      %122 = arith.mulf %113, %99 : vector<1x32xf32>
      %123 = arith.mulf %107, %115 : vector<1x32xf32>
      %124 = arith.addf %122, %123 : vector<1x32xf32>
      %125 = math.tanh %124 : vector<1x32xf32>
      %126 = arith.mulf %121, %125 : vector<1x32xf32>
      %cst_89 = arith.constant dense<0.000000e+00> : vector<1x128xf32>
      %127 = tpu.matmul %126, %1, %cst_89 {dimension_numbers = #tpu.dot_dimension_numbers<[1], [0], [0], [1], [0, 0, 1, 1], [], []>} : vector<1x32xf32>, vector<32x128xf32>, vector<1x128xf32> -> vector<1x128xf32>
      %128 = arith.addf %127, %2 : vector<1x128xf32>
      %c5 = arith.constant 5 : index
      %c0_90 = arith.constant 0 : index
      %129 = vector.load %arg4[%c5, %c0_90] : memref<21x128xf32, #tpu.memory_space<vmem>>, vector<1x128xf32>
      tpu.vector_store %arg4[%c5, %c0_90], %128 {strides = array<i32>} : memref<21x128xf32, #tpu.memory_space<vmem>>, vector<1x128xf32>,
      %c0_91 = arith.constant 0 : index
      %c0_92 = arith.constant 0 : index
      %130 = vector.load %arg6[%c0_91, %c0_92] : memref<1x32xf32, #tpu.memory_space<vmem>>, vector<1x32xf32>
      tpu.vector_store %arg6[%c0_91, %c0_92], %126 {strides = array<i32>} : memref<1x32xf32, #tpu.memory_space<vmem>>, vector<1x32xf32>,
      %c0_93 = arith.constant 0 : index
      %c0_94 = arith.constant 0 : index
      %131 = vector.load %arg7[%c0_93, %c0_94] : memref<1x32xf32, #tpu.memory_space<vmem>>, vector<1x32xf32>
      tpu.vector_store %arg7[%c0_93, %c0_94], %124 {strides = array<i32>} : memref<1x32xf32, #tpu.memory_space<vmem>>, vector<1x32xf32>,
      %132 = vector.extract_strided_slice %128 {offsets = [0, 1], sizes = [1, 1], strides = [1, 1]} : vector<1x128xf32> to vector<1x1xf32>
      %133 = vector.extract %132[0, 0] : f32 from vector<1x1xf32>
      %134 = vector.extract_strided_slice %128 {offsets = [0, 0], sizes = [1, 1], strides = [1, 1]} : vector<1x128xf32> to vector<1x1xf32>
      %135 = vector.extract %134[0, 0] : f32 from vector<1x1xf32>
      %136 = arith.cmpf ogt, %133, %135 : f32
      %137 = arith.extui %136 : i1 to i32
      %c0_95 = arith.constant 0 : index
      %138 = memref.load %arg8[%c0_95] : memref<1xi32, #tpu.memory_space<smem>>
      memref.store %137, %arg8[%c0_95] : memref<1xi32, #tpu.memory_space<smem>>
      %c6_i32 = arith.constant 6 : i32
      %c0_96 = arith.constant 0 : index
      %139 = memref.load %arg5[%c0_96] : memref<1xi32, #tpu.memory_space<smem>>
      memref.store %c6_i32, %arg5[%c0_96] : memref<1xi32, #tpu.memory_space<smem>>
    } else {
    }
    %c0_36 = arith.constant 0 : index
    %38 = memref.load %arg8[%c0_36] : memref<1xi32, #tpu.memory_space<smem>>
    %c0_i32_37 = arith.constant 0 : i32
    %39 = arith.cmpi eq, %38, %c0_i32_37 : i32
    %40 = arith.extui %39 : i1 to i32
    %c0_i32_38 = arith.constant 0 : i32
    %41 = arith.cmpi ne, %40, %c0_i32_38 : i32
    scf.if %41 {
      %c0_81 = arith.constant 0 : index
      %c0_82 = arith.constant 0 : index
      %98 = vector.load %arg6[%c0_81, %c0_82] : memref<1x32xf32, #tpu.memory_space<vmem>>, vector<1x32xf32>
      %c0_83 = arith.constant 0 : index
      %c0_84 = arith.constant 0 : index
      %99 = vector.load %arg7[%c0_83, %c0_84] : memref<1x32xf32, #tpu.memory_space<vmem>>, vector<1x32xf32>
      %cst_85 = arith.constant dense<0.000000e+00> : vector<1x128xf32>
      %100 = tpu.matmul %98, %0, %cst_85 {dimension_numbers = #tpu.dot_dimension_numbers<[1], [0], [0], [1], [0, 0, 1, 1], [], []>} : vector<1x32xf32>, vector<32x128xf32>, vector<1x128xf32> -> vector<1x128xf32>
      %101 = arith.addf %5, %100 : vector<1x128xf32>
      %102 = vector.extract_strided_slice %101 {offsets = [0, 0], sizes = [1, 32], strides = [1, 1]} : vector<1x128xf32> to vector<1x32xf32>
      %103 = arith.negf %102 : vector<1x32xf32>
      %104 = math.exp %103 : vector<1x32xf32>
      %cst_86 = arith.constant 1.000000e+00 : f32
      %105 = vector.broadcast %cst_86 : f32 to vector<1x32xf32>
      %106 = arith.addf %105, %104 : vector<1x32xf32>
      %107 = arith.divf %105, %106 : vector<1x32xf32>
      %108 = vector.extract_strided_slice %101 {offsets = [0, 32], sizes = [1, 32], strides = [1, 1]} : vector<1x128xf32> to vector<1x32xf32>
      %109 = arith.negf %108 : vector<1x32xf32>
      %110 = math.exp %109 : vector<1x32xf32>
      %cst_87 = arith.constant 1.000000e+00 : f32
      %111 = vector.broadcast %cst_87 : f32 to vector<1x32xf32>
      %112 = arith.addf %111, %110 : vector<1x32xf32>
      %113 = arith.divf %111, %112 : vector<1x32xf32>
      %114 = vector.extract_strided_slice %101 {offsets = [0, 64], sizes = [1, 32], strides = [1, 1]} : vector<1x128xf32> to vector<1x32xf32>
      %115 = math.tanh %114 : vector<1x32xf32>
      %116 = vector.extract_strided_slice %101 {offsets = [0, 96], sizes = [1, 32], strides = [1, 1]} : vector<1x128xf32> to vector<1x32xf32>
      %117 = arith.negf %116 : vector<1x32xf32>
      %118 = math.exp %117 : vector<1x32xf32>
      %cst_88 = arith.constant 1.000000e+00 : f32
      %119 = vector.broadcast %cst_88 : f32 to vector<1x32xf32>
      %120 = arith.addf %119, %118 : vector<1x32xf32>
      %121 = arith.divf %119, %120 : vector<1x32xf32>
      %122 = arith.mulf %113, %99 : vector<1x32xf32>
      %123 = arith.mulf %107, %115 : vector<1x32xf32>
      %124 = arith.addf %122, %123 : vector<1x32xf32>
      %125 = math.tanh %124 : vector<1x32xf32>
      %126 = arith.mulf %121, %125 : vector<1x32xf32>
      %cst_89 = arith.constant dense<0.000000e+00> : vector<1x128xf32>
      %127 = tpu.matmul %126, %1, %cst_89 {dimension_numbers = #tpu.dot_dimension_numbers<[1], [0], [0], [1], [0, 0, 1, 1], [], []>} : vector<1x32xf32>, vector<32x128xf32>, vector<1x128xf32> -> vector<1x128xf32>
      %128 = arith.addf %127, %2 : vector<1x128xf32>
      %c6 = arith.constant 6 : index
      %c0_90 = arith.constant 0 : index
      %129 = vector.load %arg4[%c6, %c0_90] : memref<21x128xf32, #tpu.memory_space<vmem>>, vector<1x128xf32>
      tpu.vector_store %arg4[%c6, %c0_90], %128 {strides = array<i32>} : memref<21x128xf32, #tpu.memory_space<vmem>>, vector<1x128xf32>,
      %c0_91 = arith.constant 0 : index
      %c0_92 = arith.constant 0 : index
      %130 = vector.load %arg6[%c0_91, %c0_92] : memref<1x32xf32, #tpu.memory_space<vmem>>, vector<1x32xf32>
      tpu.vector_store %arg6[%c0_91, %c0_92], %126 {strides = array<i32>} : memref<1x32xf32, #tpu.memory_space<vmem>>, vector<1x32xf32>,
      %c0_93 = arith.constant 0 : index
      %c0_94 = arith.constant 0 : index
      %131 = vector.load %arg7[%c0_93, %c0_94] : memref<1x32xf32, #tpu.memory_space<vmem>>, vector<1x32xf32>
      tpu.vector_store %arg7[%c0_93, %c0_94], %124 {strides = array<i32>} : memref<1x32xf32, #tpu.memory_space<vmem>>, vector<1x32xf32>,
      %132 = vector.extract_strided_slice %128 {offsets = [0, 1], sizes = [1, 1], strides = [1, 1]} : vector<1x128xf32> to vector<1x1xf32>
      %133 = vector.extract %132[0, 0] : f32 from vector<1x1xf32>
      %134 = vector.extract_strided_slice %128 {offsets = [0, 0], sizes = [1, 1], strides = [1, 1]} : vector<1x128xf32> to vector<1x1xf32>
      %135 = vector.extract %134[0, 0] : f32 from vector<1x1xf32>
      %136 = arith.cmpf ogt, %133, %135 : f32
      %137 = arith.extui %136 : i1 to i32
      %c0_95 = arith.constant 0 : index
      %138 = memref.load %arg8[%c0_95] : memref<1xi32, #tpu.memory_space<smem>>
      memref.store %137, %arg8[%c0_95] : memref<1xi32, #tpu.memory_space<smem>>
      %c7_i32 = arith.constant 7 : i32
      %c0_96 = arith.constant 0 : index
      %139 = memref.load %arg5[%c0_96] : memref<1xi32, #tpu.memory_space<smem>>
      memref.store %c7_i32, %arg5[%c0_96] : memref<1xi32, #tpu.memory_space<smem>>
    } else {
    }
    %c0_39 = arith.constant 0 : index
    %42 = memref.load %arg8[%c0_39] : memref<1xi32, #tpu.memory_space<smem>>
    %c0_i32_40 = arith.constant 0 : i32
    %43 = arith.cmpi eq, %42, %c0_i32_40 : i32
    %44 = arith.extui %43 : i1 to i32
    %c0_i32_41 = arith.constant 0 : i32
    %45 = arith.cmpi ne, %44, %c0_i32_41 : i32
    scf.if %45 {
      %c0_81 = arith.constant 0 : index
      %c0_82 = arith.constant 0 : index
      %98 = vector.load %arg6[%c0_81, %c0_82] : memref<1x32xf32, #tpu.memory_space<vmem>>, vector<1x32xf32>
      %c0_83 = arith.constant 0 : index
      %c0_84 = arith.constant 0 : index
      %99 = vector.load %arg7[%c0_83, %c0_84] : memref<1x32xf32, #tpu.memory_space<vmem>>, vector<1x32xf32>
      %cst_85 = arith.constant dense<0.000000e+00> : vector<1x128xf32>
      %100 = tpu.matmul %98, %0, %cst_85 {dimension_numbers = #tpu.dot_dimension_numbers<[1], [0], [0], [1], [0, 0, 1, 1], [], []>} : vector<1x32xf32>, vector<32x128xf32>, vector<1x128xf32> -> vector<1x128xf32>
      %101 = arith.addf %5, %100 : vector<1x128xf32>
      %102 = vector.extract_strided_slice %101 {offsets = [0, 0], sizes = [1, 32], strides = [1, 1]} : vector<1x128xf32> to vector<1x32xf32>
      %103 = arith.negf %102 : vector<1x32xf32>
      %104 = math.exp %103 : vector<1x32xf32>
      %cst_86 = arith.constant 1.000000e+00 : f32
      %105 = vector.broadcast %cst_86 : f32 to vector<1x32xf32>
      %106 = arith.addf %105, %104 : vector<1x32xf32>
      %107 = arith.divf %105, %106 : vector<1x32xf32>
      %108 = vector.extract_strided_slice %101 {offsets = [0, 32], sizes = [1, 32], strides = [1, 1]} : vector<1x128xf32> to vector<1x32xf32>
      %109 = arith.negf %108 : vector<1x32xf32>
      %110 = math.exp %109 : vector<1x32xf32>
      %cst_87 = arith.constant 1.000000e+00 : f32
      %111 = vector.broadcast %cst_87 : f32 to vector<1x32xf32>
      %112 = arith.addf %111, %110 : vector<1x32xf32>
      %113 = arith.divf %111, %112 : vector<1x32xf32>
      %114 = vector.extract_strided_slice %101 {offsets = [0, 64], sizes = [1, 32], strides = [1, 1]} : vector<1x128xf32> to vector<1x32xf32>
      %115 = math.tanh %114 : vector<1x32xf32>
      %116 = vector.extract_strided_slice %101 {offsets = [0, 96], sizes = [1, 32], strides = [1, 1]} : vector<1x128xf32> to vector<1x32xf32>
      %117 = arith.negf %116 : vector<1x32xf32>
      %118 = math.exp %117 : vector<1x32xf32>
      %cst_88 = arith.constant 1.000000e+00 : f32
      %119 = vector.broadcast %cst_88 : f32 to vector<1x32xf32>
      %120 = arith.addf %119, %118 : vector<1x32xf32>
      %121 = arith.divf %119, %120 : vector<1x32xf32>
      %122 = arith.mulf %113, %99 : vector<1x32xf32>
      %123 = arith.mulf %107, %115 : vector<1x32xf32>
      %124 = arith.addf %122, %123 : vector<1x32xf32>
      %125 = math.tanh %124 : vector<1x32xf32>
      %126 = arith.mulf %121, %125 : vector<1x32xf32>
      %cst_89 = arith.constant dense<0.000000e+00> : vector<1x128xf32>
      %127 = tpu.matmul %126, %1, %cst_89 {dimension_numbers = #tpu.dot_dimension_numbers<[1], [0], [0], [1], [0, 0, 1, 1], [], []>} : vector<1x32xf32>, vector<32x128xf32>, vector<1x128xf32> -> vector<1x128xf32>
      %128 = arith.addf %127, %2 : vector<1x128xf32>
      %c7 = arith.constant 7 : index
      %c0_90 = arith.constant 0 : index
      %129 = vector.load %arg4[%c7, %c0_90] : memref<21x128xf32, #tpu.memory_space<vmem>>, vector<1x128xf32>
      tpu.vector_store %arg4[%c7, %c0_90], %128 {strides = array<i32>} : memref<21x128xf32, #tpu.memory_space<vmem>>, vector<1x128xf32>,
      %c0_91 = arith.constant 0 : index
      %c0_92 = arith.constant 0 : index
      %130 = vector.load %arg6[%c0_91, %c0_92] : memref<1x32xf32, #tpu.memory_space<vmem>>, vector<1x32xf32>
      tpu.vector_store %arg6[%c0_91, %c0_92], %126 {strides = array<i32>} : memref<1x32xf32, #tpu.memory_space<vmem>>, vector<1x32xf32>,
      %c0_93 = arith.constant 0 : index
      %c0_94 = arith.constant 0 : index
      %131 = vector.load %arg7[%c0_93, %c0_94] : memref<1x32xf32, #tpu.memory_space<vmem>>, vector<1x32xf32>
      tpu.vector_store %arg7[%c0_93, %c0_94], %124 {strides = array<i32>} : memref<1x32xf32, #tpu.memory_space<vmem>>, vector<1x32xf32>,
      %132 = vector.extract_strided_slice %128 {offsets = [0, 1], sizes = [1, 1], strides = [1, 1]} : vector<1x128xf32> to vector<1x1xf32>
      %133 = vector.extract %132[0, 0] : f32 from vector<1x1xf32>
      %134 = vector.extract_strided_slice %128 {offsets = [0, 0], sizes = [1, 1], strides = [1, 1]} : vector<1x128xf32> to vector<1x1xf32>
      %135 = vector.extract %134[0, 0] : f32 from vector<1x1xf32>
      %136 = arith.cmpf ogt, %133, %135 : f32
      %137 = arith.extui %136 : i1 to i32
      %c0_95 = arith.constant 0 : index
      %138 = memref.load %arg8[%c0_95] : memref<1xi32, #tpu.memory_space<smem>>
      memref.store %137, %arg8[%c0_95] : memref<1xi32, #tpu.memory_space<smem>>
      %c8_i32 = arith.constant 8 : i32
      %c0_96 = arith.constant 0 : index
      %139 = memref.load %arg5[%c0_96] : memref<1xi32, #tpu.memory_space<smem>>
      memref.store %c8_i32, %arg5[%c0_96] : memref<1xi32, #tpu.memory_space<smem>>
    } else {
    }
    %c0_42 = arith.constant 0 : index
    %46 = memref.load %arg8[%c0_42] : memref<1xi32, #tpu.memory_space<smem>>
    %c0_i32_43 = arith.constant 0 : i32
    %47 = arith.cmpi eq, %46, %c0_i32_43 : i32
    %48 = arith.extui %47 : i1 to i32
    %c0_i32_44 = arith.constant 0 : i32
    %49 = arith.cmpi ne, %48, %c0_i32_44 : i32
    scf.if %49 {
      %c0_81 = arith.constant 0 : index
      %c0_82 = arith.constant 0 : index
      %98 = vector.load %arg6[%c0_81, %c0_82] : memref<1x32xf32, #tpu.memory_space<vmem>>, vector<1x32xf32>
      %c0_83 = arith.constant 0 : index
      %c0_84 = arith.constant 0 : index
      %99 = vector.load %arg7[%c0_83, %c0_84] : memref<1x32xf32, #tpu.memory_space<vmem>>, vector<1x32xf32>
      %cst_85 = arith.constant dense<0.000000e+00> : vector<1x128xf32>
      %100 = tpu.matmul %98, %0, %cst_85 {dimension_numbers = #tpu.dot_dimension_numbers<[1], [0], [0], [1], [0, 0, 1, 1], [], []>} : vector<1x32xf32>, vector<32x128xf32>, vector<1x128xf32> -> vector<1x128xf32>
      %101 = arith.addf %5, %100 : vector<1x128xf32>
      %102 = vector.extract_strided_slice %101 {offsets = [0, 0], sizes = [1, 32], strides = [1, 1]} : vector<1x128xf32> to vector<1x32xf32>
      %103 = arith.negf %102 : vector<1x32xf32>
      %104 = math.exp %103 : vector<1x32xf32>
      %cst_86 = arith.constant 1.000000e+00 : f32
      %105 = vector.broadcast %cst_86 : f32 to vector<1x32xf32>
      %106 = arith.addf %105, %104 : vector<1x32xf32>
      %107 = arith.divf %105, %106 : vector<1x32xf32>
      %108 = vector.extract_strided_slice %101 {offsets = [0, 32], sizes = [1, 32], strides = [1, 1]} : vector<1x128xf32> to vector<1x32xf32>
      %109 = arith.negf %108 : vector<1x32xf32>
      %110 = math.exp %109 : vector<1x32xf32>
      %cst_87 = arith.constant 1.000000e+00 : f32
      %111 = vector.broadcast %cst_87 : f32 to vector<1x32xf32>
      %112 = arith.addf %111, %110 : vector<1x32xf32>
      %113 = arith.divf %111, %112 : vector<1x32xf32>
      %114 = vector.extract_strided_slice %101 {offsets = [0, 64], sizes = [1, 32], strides = [1, 1]} : vector<1x128xf32> to vector<1x32xf32>
      %115 = math.tanh %114 : vector<1x32xf32>
      %116 = vector.extract_strided_slice %101 {offsets = [0, 96], sizes = [1, 32], strides = [1, 1]} : vector<1x128xf32> to vector<1x32xf32>
      %117 = arith.negf %116 : vector<1x32xf32>
      %118 = math.exp %117 : vector<1x32xf32>
      %cst_88 = arith.constant 1.000000e+00 : f32
      %119 = vector.broadcast %cst_88 : f32 to vector<1x32xf32>
      %120 = arith.addf %119, %118 : vector<1x32xf32>
      %121 = arith.divf %119, %120 : vector<1x32xf32>
      %122 = arith.mulf %113, %99 : vector<1x32xf32>
      %123 = arith.mulf %107, %115 : vector<1x32xf32>
      %124 = arith.addf %122, %123 : vector<1x32xf32>
      %125 = math.tanh %124 : vector<1x32xf32>
      %126 = arith.mulf %121, %125 : vector<1x32xf32>
      %cst_89 = arith.constant dense<0.000000e+00> : vector<1x128xf32>
      %127 = tpu.matmul %126, %1, %cst_89 {dimension_numbers = #tpu.dot_dimension_numbers<[1], [0], [0], [1], [0, 0, 1, 1], [], []>} : vector<1x32xf32>, vector<32x128xf32>, vector<1x128xf32> -> vector<1x128xf32>
      %128 = arith.addf %127, %2 : vector<1x128xf32>
      %c8 = arith.constant 8 : index
      %c0_90 = arith.constant 0 : index
      %129 = vector.load %arg4[%c8, %c0_90] : memref<21x128xf32, #tpu.memory_space<vmem>>, vector<1x128xf32>
      tpu.vector_store %arg4[%c8, %c0_90], %128 {strides = array<i32>} : memref<21x128xf32, #tpu.memory_space<vmem>>, vector<1x128xf32>,
      %c0_91 = arith.constant 0 : index
      %c0_92 = arith.constant 0 : index
      %130 = vector.load %arg6[%c0_91, %c0_92] : memref<1x32xf32, #tpu.memory_space<vmem>>, vector<1x32xf32>
      tpu.vector_store %arg6[%c0_91, %c0_92], %126 {strides = array<i32>} : memref<1x32xf32, #tpu.memory_space<vmem>>, vector<1x32xf32>,
      %c0_93 = arith.constant 0 : index
      %c0_94 = arith.constant 0 : index
      %131 = vector.load %arg7[%c0_93, %c0_94] : memref<1x32xf32, #tpu.memory_space<vmem>>, vector<1x32xf32>
      tpu.vector_store %arg7[%c0_93, %c0_94], %124 {strides = array<i32>} : memref<1x32xf32, #tpu.memory_space<vmem>>, vector<1x32xf32>,
      %132 = vector.extract_strided_slice %128 {offsets = [0, 1], sizes = [1, 1], strides = [1, 1]} : vector<1x128xf32> to vector<1x1xf32>
      %133 = vector.extract %132[0, 0] : f32 from vector<1x1xf32>
      %134 = vector.extract_strided_slice %128 {offsets = [0, 0], sizes = [1, 1], strides = [1, 1]} : vector<1x128xf32> to vector<1x1xf32>
      %135 = vector.extract %134[0, 0] : f32 from vector<1x1xf32>
      %136 = arith.cmpf ogt, %133, %135 : f32
      %137 = arith.extui %136 : i1 to i32
      %c0_95 = arith.constant 0 : index
      %138 = memref.load %arg8[%c0_95] : memref<1xi32, #tpu.memory_space<smem>>
      memref.store %137, %arg8[%c0_95] : memref<1xi32, #tpu.memory_space<smem>>
      %c9_i32 = arith.constant 9 : i32
      %c0_96 = arith.constant 0 : index
      %139 = memref.load %arg5[%c0_96] : memref<1xi32, #tpu.memory_space<smem>>
      memref.store %c9_i32, %arg5[%c0_96] : memref<1xi32, #tpu.memory_space<smem>>
    } else {
    }
    %c0_45 = arith.constant 0 : index
    %50 = memref.load %arg8[%c0_45] : memref<1xi32, #tpu.memory_space<smem>>
    %c0_i32_46 = arith.constant 0 : i32
    %51 = arith.cmpi eq, %50, %c0_i32_46 : i32
    %52 = arith.extui %51 : i1 to i32
    %c0_i32_47 = arith.constant 0 : i32
    %53 = arith.cmpi ne, %52, %c0_i32_47 : i32
    scf.if %53 {
      %c0_81 = arith.constant 0 : index
      %c0_82 = arith.constant 0 : index
      %98 = vector.load %arg6[%c0_81, %c0_82] : memref<1x32xf32, #tpu.memory_space<vmem>>, vector<1x32xf32>
      %c0_83 = arith.constant 0 : index
      %c0_84 = arith.constant 0 : index
      %99 = vector.load %arg7[%c0_83, %c0_84] : memref<1x32xf32, #tpu.memory_space<vmem>>, vector<1x32xf32>
      %cst_85 = arith.constant dense<0.000000e+00> : vector<1x128xf32>
      %100 = tpu.matmul %98, %0, %cst_85 {dimension_numbers = #tpu.dot_dimension_numbers<[1], [0], [0], [1], [0, 0, 1, 1], [], []>} : vector<1x32xf32>, vector<32x128xf32>, vector<1x128xf32> -> vector<1x128xf32>
      %101 = arith.addf %5, %100 : vector<1x128xf32>
      %102 = vector.extract_strided_slice %101 {offsets = [0, 0], sizes = [1, 32], strides = [1, 1]} : vector<1x128xf32> to vector<1x32xf32>
      %103 = arith.negf %102 : vector<1x32xf32>
      %104 = math.exp %103 : vector<1x32xf32>
      %cst_86 = arith.constant 1.000000e+00 : f32
      %105 = vector.broadcast %cst_86 : f32 to vector<1x32xf32>
      %106 = arith.addf %105, %104 : vector<1x32xf32>
      %107 = arith.divf %105, %106 : vector<1x32xf32>
      %108 = vector.extract_strided_slice %101 {offsets = [0, 32], sizes = [1, 32], strides = [1, 1]} : vector<1x128xf32> to vector<1x32xf32>
      %109 = arith.negf %108 : vector<1x32xf32>
      %110 = math.exp %109 : vector<1x32xf32>
      %cst_87 = arith.constant 1.000000e+00 : f32
      %111 = vector.broadcast %cst_87 : f32 to vector<1x32xf32>
      %112 = arith.addf %111, %110 : vector<1x32xf32>
      %113 = arith.divf %111, %112 : vector<1x32xf32>
      %114 = vector.extract_strided_slice %101 {offsets = [0, 64], sizes = [1, 32], strides = [1, 1]} : vector<1x128xf32> to vector<1x32xf32>
      %115 = math.tanh %114 : vector<1x32xf32>
      %116 = vector.extract_strided_slice %101 {offsets = [0, 96], sizes = [1, 32], strides = [1, 1]} : vector<1x128xf32> to vector<1x32xf32>
      %117 = arith.negf %116 : vector<1x32xf32>
      %118 = math.exp %117 : vector<1x32xf32>
      %cst_88 = arith.constant 1.000000e+00 : f32
      %119 = vector.broadcast %cst_88 : f32 to vector<1x32xf32>
      %120 = arith.addf %119, %118 : vector<1x32xf32>
      %121 = arith.divf %119, %120 : vector<1x32xf32>
      %122 = arith.mulf %113, %99 : vector<1x32xf32>
      %123 = arith.mulf %107, %115 : vector<1x32xf32>
      %124 = arith.addf %122, %123 : vector<1x32xf32>
      %125 = math.tanh %124 : vector<1x32xf32>
      %126 = arith.mulf %121, %125 : vector<1x32xf32>
      %cst_89 = arith.constant dense<0.000000e+00> : vector<1x128xf32>
      %127 = tpu.matmul %126, %1, %cst_89 {dimension_numbers = #tpu.dot_dimension_numbers<[1], [0], [0], [1], [0, 0, 1, 1], [], []>} : vector<1x32xf32>, vector<32x128xf32>, vector<1x128xf32> -> vector<1x128xf32>
      %128 = arith.addf %127, %2 : vector<1x128xf32>
      %c9 = arith.constant 9 : index
      %c0_90 = arith.constant 0 : index
      %129 = vector.load %arg4[%c9, %c0_90] : memref<21x128xf32, #tpu.memory_space<vmem>>, vector<1x128xf32>
      tpu.vector_store %arg4[%c9, %c0_90], %128 {strides = array<i32>} : memref<21x128xf32, #tpu.memory_space<vmem>>, vector<1x128xf32>,
      %c0_91 = arith.constant 0 : index
      %c0_92 = arith.constant 0 : index
      %130 = vector.load %arg6[%c0_91, %c0_92] : memref<1x32xf32, #tpu.memory_space<vmem>>, vector<1x32xf32>
      tpu.vector_store %arg6[%c0_91, %c0_92], %126 {strides = array<i32>} : memref<1x32xf32, #tpu.memory_space<vmem>>, vector<1x32xf32>,
      %c0_93 = arith.constant 0 : index
      %c0_94 = arith.constant 0 : index
      %131 = vector.load %arg7[%c0_93, %c0_94] : memref<1x32xf32, #tpu.memory_space<vmem>>, vector<1x32xf32>
      tpu.vector_store %arg7[%c0_93, %c0_94], %124 {strides = array<i32>} : memref<1x32xf32, #tpu.memory_space<vmem>>, vector<1x32xf32>,
      %132 = vector.extract_strided_slice %128 {offsets = [0, 1], sizes = [1, 1], strides = [1, 1]} : vector<1x128xf32> to vector<1x1xf32>
      %133 = vector.extract %132[0, 0] : f32 from vector<1x1xf32>
      %134 = vector.extract_strided_slice %128 {offsets = [0, 0], sizes = [1, 1], strides = [1, 1]} : vector<1x128xf32> to vector<1x1xf32>
      %135 = vector.extract %134[0, 0] : f32 from vector<1x1xf32>
      %136 = arith.cmpf ogt, %133, %135 : f32
      %137 = arith.extui %136 : i1 to i32
      %c0_95 = arith.constant 0 : index
      %138 = memref.load %arg8[%c0_95] : memref<1xi32, #tpu.memory_space<smem>>
      memref.store %137, %arg8[%c0_95] : memref<1xi32, #tpu.memory_space<smem>>
      %c10_i32 = arith.constant 10 : i32
      %c0_96 = arith.constant 0 : index
      %139 = memref.load %arg5[%c0_96] : memref<1xi32, #tpu.memory_space<smem>>
      memref.store %c10_i32, %arg5[%c0_96] : memref<1xi32, #tpu.memory_space<smem>>
    } else {
    }
    %c0_48 = arith.constant 0 : index
    %54 = memref.load %arg8[%c0_48] : memref<1xi32, #tpu.memory_space<smem>>
    %c0_i32_49 = arith.constant 0 : i32
    %55 = arith.cmpi eq, %54, %c0_i32_49 : i32
    %56 = arith.extui %55 : i1 to i32
    %c0_i32_50 = arith.constant 0 : i32
    %57 = arith.cmpi ne, %56, %c0_i32_50 : i32
    scf.if %57 {
      %c0_81 = arith.constant 0 : index
      %c0_82 = arith.constant 0 : index
      %98 = vector.load %arg6[%c0_81, %c0_82] : memref<1x32xf32, #tpu.memory_space<vmem>>, vector<1x32xf32>
      %c0_83 = arith.constant 0 : index
      %c0_84 = arith.constant 0 : index
      %99 = vector.load %arg7[%c0_83, %c0_84] : memref<1x32xf32, #tpu.memory_space<vmem>>, vector<1x32xf32>
      %cst_85 = arith.constant dense<0.000000e+00> : vector<1x128xf32>
      %100 = tpu.matmul %98, %0, %cst_85 {dimension_numbers = #tpu.dot_dimension_numbers<[1], [0], [0], [1], [0, 0, 1, 1], [], []>} : vector<1x32xf32>, vector<32x128xf32>, vector<1x128xf32> -> vector<1x128xf32>
      %101 = arith.addf %5, %100 : vector<1x128xf32>
      %102 = vector.extract_strided_slice %101 {offsets = [0, 0], sizes = [1, 32], strides = [1, 1]} : vector<1x128xf32> to vector<1x32xf32>
      %103 = arith.negf %102 : vector<1x32xf32>
      %104 = math.exp %103 : vector<1x32xf32>
      %cst_86 = arith.constant 1.000000e+00 : f32
      %105 = vector.broadcast %cst_86 : f32 to vector<1x32xf32>
      %106 = arith.addf %105, %104 : vector<1x32xf32>
      %107 = arith.divf %105, %106 : vector<1x32xf32>
      %108 = vector.extract_strided_slice %101 {offsets = [0, 32], sizes = [1, 32], strides = [1, 1]} : vector<1x128xf32> to vector<1x32xf32>
      %109 = arith.negf %108 : vector<1x32xf32>
      %110 = math.exp %109 : vector<1x32xf32>
      %cst_87 = arith.constant 1.000000e+00 : f32
      %111 = vector.broadcast %cst_87 : f32 to vector<1x32xf32>
      %112 = arith.addf %111, %110 : vector<1x32xf32>
      %113 = arith.divf %111, %112 : vector<1x32xf32>
      %114 = vector.extract_strided_slice %101 {offsets = [0, 64], sizes = [1, 32], strides = [1, 1]} : vector<1x128xf32> to vector<1x32xf32>
      %115 = math.tanh %114 : vector<1x32xf32>
      %116 = vector.extract_strided_slice %101 {offsets = [0, 96], sizes = [1, 32], strides = [1, 1]} : vector<1x128xf32> to vector<1x32xf32>
      %117 = arith.negf %116 : vector<1x32xf32>
      %118 = math.exp %117 : vector<1x32xf32>
      %cst_88 = arith.constant 1.000000e+00 : f32
      %119 = vector.broadcast %cst_88 : f32 to vector<1x32xf32>
      %120 = arith.addf %119, %118 : vector<1x32xf32>
      %121 = arith.divf %119, %120 : vector<1x32xf32>
      %122 = arith.mulf %113, %99 : vector<1x32xf32>
      %123 = arith.mulf %107, %115 : vector<1x32xf32>
      %124 = arith.addf %122, %123 : vector<1x32xf32>
      %125 = math.tanh %124 : vector<1x32xf32>
      %126 = arith.mulf %121, %125 : vector<1x32xf32>
      %cst_89 = arith.constant dense<0.000000e+00> : vector<1x128xf32>
      %127 = tpu.matmul %126, %1, %cst_89 {dimension_numbers = #tpu.dot_dimension_numbers<[1], [0], [0], [1], [0, 0, 1, 1], [], []>} : vector<1x32xf32>, vector<32x128xf32>, vector<1x128xf32> -> vector<1x128xf32>
      %128 = arith.addf %127, %2 : vector<1x128xf32>
      %c10 = arith.constant 10 : index
      %c0_90 = arith.constant 0 : index
      %129 = vector.load %arg4[%c10, %c0_90] : memref<21x128xf32, #tpu.memory_space<vmem>>, vector<1x128xf32>
      tpu.vector_store %arg4[%c10, %c0_90], %128 {strides = array<i32>} : memref<21x128xf32, #tpu.memory_space<vmem>>, vector<1x128xf32>,
      %c0_91 = arith.constant 0 : index
      %c0_92 = arith.constant 0 : index
      %130 = vector.load %arg6[%c0_91, %c0_92] : memref<1x32xf32, #tpu.memory_space<vmem>>, vector<1x32xf32>
      tpu.vector_store %arg6[%c0_91, %c0_92], %126 {strides = array<i32>} : memref<1x32xf32, #tpu.memory_space<vmem>>, vector<1x32xf32>,
      %c0_93 = arith.constant 0 : index
      %c0_94 = arith.constant 0 : index
      %131 = vector.load %arg7[%c0_93, %c0_94] : memref<1x32xf32, #tpu.memory_space<vmem>>, vector<1x32xf32>
      tpu.vector_store %arg7[%c0_93, %c0_94], %124 {strides = array<i32>} : memref<1x32xf32, #tpu.memory_space<vmem>>, vector<1x32xf32>,
      %132 = vector.extract_strided_slice %128 {offsets = [0, 1], sizes = [1, 1], strides = [1, 1]} : vector<1x128xf32> to vector<1x1xf32>
      %133 = vector.extract %132[0, 0] : f32 from vector<1x1xf32>
      %134 = vector.extract_strided_slice %128 {offsets = [0, 0], sizes = [1, 1], strides = [1, 1]} : vector<1x128xf32> to vector<1x1xf32>
      %135 = vector.extract %134[0, 0] : f32 from vector<1x1xf32>
      %136 = arith.cmpf ogt, %133, %135 : f32
      %137 = arith.extui %136 : i1 to i32
      %c0_95 = arith.constant 0 : index
      %138 = memref.load %arg8[%c0_95] : memref<1xi32, #tpu.memory_space<smem>>
      memref.store %137, %arg8[%c0_95] : memref<1xi32, #tpu.memory_space<smem>>
      %c11_i32 = arith.constant 11 : i32
      %c0_96 = arith.constant 0 : index
      %139 = memref.load %arg5[%c0_96] : memref<1xi32, #tpu.memory_space<smem>>
      memref.store %c11_i32, %arg5[%c0_96] : memref<1xi32, #tpu.memory_space<smem>>
    } else {
    }
    %c0_51 = arith.constant 0 : index
    %58 = memref.load %arg8[%c0_51] : memref<1xi32, #tpu.memory_space<smem>>
    %c0_i32_52 = arith.constant 0 : i32
    %59 = arith.cmpi eq, %58, %c0_i32_52 : i32
    %60 = arith.extui %59 : i1 to i32
    %c0_i32_53 = arith.constant 0 : i32
    %61 = arith.cmpi ne, %60, %c0_i32_53 : i32
    scf.if %61 {
      %c0_81 = arith.constant 0 : index
      %c0_82 = arith.constant 0 : index
      %98 = vector.load %arg6[%c0_81, %c0_82] : memref<1x32xf32, #tpu.memory_space<vmem>>, vector<1x32xf32>
      %c0_83 = arith.constant 0 : index
      %c0_84 = arith.constant 0 : index
      %99 = vector.load %arg7[%c0_83, %c0_84] : memref<1x32xf32, #tpu.memory_space<vmem>>, vector<1x32xf32>
      %cst_85 = arith.constant dense<0.000000e+00> : vector<1x128xf32>
      %100 = tpu.matmul %98, %0, %cst_85 {dimension_numbers = #tpu.dot_dimension_numbers<[1], [0], [0], [1], [0, 0, 1, 1], [], []>} : vector<1x32xf32>, vector<32x128xf32>, vector<1x128xf32> -> vector<1x128xf32>
      %101 = arith.addf %5, %100 : vector<1x128xf32>
      %102 = vector.extract_strided_slice %101 {offsets = [0, 0], sizes = [1, 32], strides = [1, 1]} : vector<1x128xf32> to vector<1x32xf32>
      %103 = arith.negf %102 : vector<1x32xf32>
      %104 = math.exp %103 : vector<1x32xf32>
      %cst_86 = arith.constant 1.000000e+00 : f32
      %105 = vector.broadcast %cst_86 : f32 to vector<1x32xf32>
      %106 = arith.addf %105, %104 : vector<1x32xf32>
      %107 = arith.divf %105, %106 : vector<1x32xf32>
      %108 = vector.extract_strided_slice %101 {offsets = [0, 32], sizes = [1, 32], strides = [1, 1]} : vector<1x128xf32> to vector<1x32xf32>
      %109 = arith.negf %108 : vector<1x32xf32>
      %110 = math.exp %109 : vector<1x32xf32>
      %cst_87 = arith.constant 1.000000e+00 : f32
      %111 = vector.broadcast %cst_87 : f32 to vector<1x32xf32>
      %112 = arith.addf %111, %110 : vector<1x32xf32>
      %113 = arith.divf %111, %112 : vector<1x32xf32>
      %114 = vector.extract_strided_slice %101 {offsets = [0, 64], sizes = [1, 32], strides = [1, 1]} : vector<1x128xf32> to vector<1x32xf32>
      %115 = math.tanh %114 : vector<1x32xf32>
      %116 = vector.extract_strided_slice %101 {offsets = [0, 96], sizes = [1, 32], strides = [1, 1]} : vector<1x128xf32> to vector<1x32xf32>
      %117 = arith.negf %116 : vector<1x32xf32>
      %118 = math.exp %117 : vector<1x32xf32>
      %cst_88 = arith.constant 1.000000e+00 : f32
      %119 = vector.broadcast %cst_88 : f32 to vector<1x32xf32>
      %120 = arith.addf %119, %118 : vector<1x32xf32>
      %121 = arith.divf %119, %120 : vector<1x32xf32>
      %122 = arith.mulf %113, %99 : vector<1x32xf32>
      %123 = arith.mulf %107, %115 : vector<1x32xf32>
      %124 = arith.addf %122, %123 : vector<1x32xf32>
      %125 = math.tanh %124 : vector<1x32xf32>
      %126 = arith.mulf %121, %125 : vector<1x32xf32>
      %cst_89 = arith.constant dense<0.000000e+00> : vector<1x128xf32>
      %127 = tpu.matmul %126, %1, %cst_89 {dimension_numbers = #tpu.dot_dimension_numbers<[1], [0], [0], [1], [0, 0, 1, 1], [], []>} : vector<1x32xf32>, vector<32x128xf32>, vector<1x128xf32> -> vector<1x128xf32>
      %128 = arith.addf %127, %2 : vector<1x128xf32>
      %c11 = arith.constant 11 : index
      %c0_90 = arith.constant 0 : index
      %129 = vector.load %arg4[%c11, %c0_90] : memref<21x128xf32, #tpu.memory_space<vmem>>, vector<1x128xf32>
      tpu.vector_store %arg4[%c11, %c0_90], %128 {strides = array<i32>} : memref<21x128xf32, #tpu.memory_space<vmem>>, vector<1x128xf32>,
      %c0_91 = arith.constant 0 : index
      %c0_92 = arith.constant 0 : index
      %130 = vector.load %arg6[%c0_91, %c0_92] : memref<1x32xf32, #tpu.memory_space<vmem>>, vector<1x32xf32>
      tpu.vector_store %arg6[%c0_91, %c0_92], %126 {strides = array<i32>} : memref<1x32xf32, #tpu.memory_space<vmem>>, vector<1x32xf32>,
      %c0_93 = arith.constant 0 : index
      %c0_94 = arith.constant 0 : index
      %131 = vector.load %arg7[%c0_93, %c0_94] : memref<1x32xf32, #tpu.memory_space<vmem>>, vector<1x32xf32>
      tpu.vector_store %arg7[%c0_93, %c0_94], %124 {strides = array<i32>} : memref<1x32xf32, #tpu.memory_space<vmem>>, vector<1x32xf32>,
      %132 = vector.extract_strided_slice %128 {offsets = [0, 1], sizes = [1, 1], strides = [1, 1]} : vector<1x128xf32> to vector<1x1xf32>
      %133 = vector.extract %132[0, 0] : f32 from vector<1x1xf32>
      %134 = vector.extract_strided_slice %128 {offsets = [0, 0], sizes = [1, 1], strides = [1, 1]} : vector<1x128xf32> to vector<1x1xf32>
      %135 = vector.extract %134[0, 0] : f32 from vector<1x1xf32>
      %136 = arith.cmpf ogt, %133, %135 : f32
      %137 = arith.extui %136 : i1 to i32
      %c0_95 = arith.constant 0 : index
      %138 = memref.load %arg8[%c0_95] : memref<1xi32, #tpu.memory_space<smem>>
      memref.store %137, %arg8[%c0_95] : memref<1xi32, #tpu.memory_space<smem>>
      %c12_i32 = arith.constant 12 : i32
      %c0_96 = arith.constant 0 : index
      %139 = memref.load %arg5[%c0_96] : memref<1xi32, #tpu.memory_space<smem>>
      memref.store %c12_i32, %arg5[%c0_96] : memref<1xi32, #tpu.memory_space<smem>>
    } else {
    }
    %c0_54 = arith.constant 0 : index
    %62 = memref.load %arg8[%c0_54] : memref<1xi32, #tpu.memory_space<smem>>
    %c0_i32_55 = arith.constant 0 : i32
    %63 = arith.cmpi eq, %62, %c0_i32_55 : i32
    %64 = arith.extui %63 : i1 to i32
    %c0_i32_56 = arith.constant 0 : i32
    %65 = arith.cmpi ne, %64, %c0_i32_56 : i32
    scf.if %65 {
      %c0_81 = arith.constant 0 : index
      %c0_82 = arith.constant 0 : index
      %98 = vector.load %arg6[%c0_81, %c0_82] : memref<1x32xf32, #tpu.memory_space<vmem>>, vector<1x32xf32>
      %c0_83 = arith.constant 0 : index
      %c0_84 = arith.constant 0 : index
      %99 = vector.load %arg7[%c0_83, %c0_84] : memref<1x32xf32, #tpu.memory_space<vmem>>, vector<1x32xf32>
      %cst_85 = arith.constant dense<0.000000e+00> : vector<1x128xf32>
      %100 = tpu.matmul %98, %0, %cst_85 {dimension_numbers = #tpu.dot_dimension_numbers<[1], [0], [0], [1], [0, 0, 1, 1], [], []>} : vector<1x32xf32>, vector<32x128xf32>, vector<1x128xf32> -> vector<1x128xf32>
      %101 = arith.addf %5, %100 : vector<1x128xf32>
      %102 = vector.extract_strided_slice %101 {offsets = [0, 0], sizes = [1, 32], strides = [1, 1]} : vector<1x128xf32> to vector<1x32xf32>
      %103 = arith.negf %102 : vector<1x32xf32>
      %104 = math.exp %103 : vector<1x32xf32>
      %cst_86 = arith.constant 1.000000e+00 : f32
      %105 = vector.broadcast %cst_86 : f32 to vector<1x32xf32>
      %106 = arith.addf %105, %104 : vector<1x32xf32>
      %107 = arith.divf %105, %106 : vector<1x32xf32>
      %108 = vector.extract_strided_slice %101 {offsets = [0, 32], sizes = [1, 32], strides = [1, 1]} : vector<1x128xf32> to vector<1x32xf32>
      %109 = arith.negf %108 : vector<1x32xf32>
      %110 = math.exp %109 : vector<1x32xf32>
      %cst_87 = arith.constant 1.000000e+00 : f32
      %111 = vector.broadcast %cst_87 : f32 to vector<1x32xf32>
      %112 = arith.addf %111, %110 : vector<1x32xf32>
      %113 = arith.divf %111, %112 : vector<1x32xf32>
      %114 = vector.extract_strided_slice %101 {offsets = [0, 64], sizes = [1, 32], strides = [1, 1]} : vector<1x128xf32> to vector<1x32xf32>
      %115 = math.tanh %114 : vector<1x32xf32>
      %116 = vector.extract_strided_slice %101 {offsets = [0, 96], sizes = [1, 32], strides = [1, 1]} : vector<1x128xf32> to vector<1x32xf32>
      %117 = arith.negf %116 : vector<1x32xf32>
      %118 = math.exp %117 : vector<1x32xf32>
      %cst_88 = arith.constant 1.000000e+00 : f32
      %119 = vector.broadcast %cst_88 : f32 to vector<1x32xf32>
      %120 = arith.addf %119, %118 : vector<1x32xf32>
      %121 = arith.divf %119, %120 : vector<1x32xf32>
      %122 = arith.mulf %113, %99 : vector<1x32xf32>
      %123 = arith.mulf %107, %115 : vector<1x32xf32>
      %124 = arith.addf %122, %123 : vector<1x32xf32>
      %125 = math.tanh %124 : vector<1x32xf32>
      %126 = arith.mulf %121, %125 : vector<1x32xf32>
      %cst_89 = arith.constant dense<0.000000e+00> : vector<1x128xf32>
      %127 = tpu.matmul %126, %1, %cst_89 {dimension_numbers = #tpu.dot_dimension_numbers<[1], [0], [0], [1], [0, 0, 1, 1], [], []>} : vector<1x32xf32>, vector<32x128xf32>, vector<1x128xf32> -> vector<1x128xf32>
      %128 = arith.addf %127, %2 : vector<1x128xf32>
      %c12 = arith.constant 12 : index
      %c0_90 = arith.constant 0 : index
      %129 = vector.load %arg4[%c12, %c0_90] : memref<21x128xf32, #tpu.memory_space<vmem>>, vector<1x128xf32>
      tpu.vector_store %arg4[%c12, %c0_90], %128 {strides = array<i32>} : memref<21x128xf32, #tpu.memory_space<vmem>>, vector<1x128xf32>,
      %c0_91 = arith.constant 0 : index
      %c0_92 = arith.constant 0 : index
      %130 = vector.load %arg6[%c0_91, %c0_92] : memref<1x32xf32, #tpu.memory_space<vmem>>, vector<1x32xf32>
      tpu.vector_store %arg6[%c0_91, %c0_92], %126 {strides = array<i32>} : memref<1x32xf32, #tpu.memory_space<vmem>>, vector<1x32xf32>,
      %c0_93 = arith.constant 0 : index
      %c0_94 = arith.constant 0 : index
      %131 = vector.load %arg7[%c0_93, %c0_94] : memref<1x32xf32, #tpu.memory_space<vmem>>, vector<1x32xf32>
      tpu.vector_store %arg7[%c0_93, %c0_94], %124 {strides = array<i32>} : memref<1x32xf32, #tpu.memory_space<vmem>>, vector<1x32xf32>,
      %132 = vector.extract_strided_slice %128 {offsets = [0, 1], sizes = [1, 1], strides = [1, 1]} : vector<1x128xf32> to vector<1x1xf32>
      %133 = vector.extract %132[0, 0] : f32 from vector<1x1xf32>
      %134 = vector.extract_strided_slice %128 {offsets = [0, 0], sizes = [1, 1], strides = [1, 1]} : vector<1x128xf32> to vector<1x1xf32>
      %135 = vector.extract %134[0, 0] : f32 from vector<1x1xf32>
      %136 = arith.cmpf ogt, %133, %135 : f32
      %137 = arith.extui %136 : i1 to i32
      %c0_95 = arith.constant 0 : index
      %138 = memref.load %arg8[%c0_95] : memref<1xi32, #tpu.memory_space<smem>>
      memref.store %137, %arg8[%c0_95] : memref<1xi32, #tpu.memory_space<smem>>
      %c13_i32 = arith.constant 13 : i32
      %c0_96 = arith.constant 0 : index
      %139 = memref.load %arg5[%c0_96] : memref<1xi32, #tpu.memory_space<smem>>
      memref.store %c13_i32, %arg5[%c0_96] : memref<1xi32, #tpu.memory_space<smem>>
    } else {
    }
    %c0_57 = arith.constant 0 : index
    %66 = memref.load %arg8[%c0_57] : memref<1xi32, #tpu.memory_space<smem>>
    %c0_i32_58 = arith.constant 0 : i32
    %67 = arith.cmpi eq, %66, %c0_i32_58 : i32
    %68 = arith.extui %67 : i1 to i32
    %c0_i32_59 = arith.constant 0 : i32
    %69 = arith.cmpi ne, %68, %c0_i32_59 : i32
    scf.if %69 {
      %c0_81 = arith.constant 0 : index
      %c0_82 = arith.constant 0 : index
      %98 = vector.load %arg6[%c0_81, %c0_82] : memref<1x32xf32, #tpu.memory_space<vmem>>, vector<1x32xf32>
      %c0_83 = arith.constant 0 : index
      %c0_84 = arith.constant 0 : index
      %99 = vector.load %arg7[%c0_83, %c0_84] : memref<1x32xf32, #tpu.memory_space<vmem>>, vector<1x32xf32>
      %cst_85 = arith.constant dense<0.000000e+00> : vector<1x128xf32>
      %100 = tpu.matmul %98, %0, %cst_85 {dimension_numbers = #tpu.dot_dimension_numbers<[1], [0], [0], [1], [0, 0, 1, 1], [], []>} : vector<1x32xf32>, vector<32x128xf32>, vector<1x128xf32> -> vector<1x128xf32>
      %101 = arith.addf %5, %100 : vector<1x128xf32>
      %102 = vector.extract_strided_slice %101 {offsets = [0, 0], sizes = [1, 32], strides = [1, 1]} : vector<1x128xf32> to vector<1x32xf32>
      %103 = arith.negf %102 : vector<1x32xf32>
      %104 = math.exp %103 : vector<1x32xf32>
      %cst_86 = arith.constant 1.000000e+00 : f32
      %105 = vector.broadcast %cst_86 : f32 to vector<1x32xf32>
      %106 = arith.addf %105, %104 : vector<1x32xf32>
      %107 = arith.divf %105, %106 : vector<1x32xf32>
      %108 = vector.extract_strided_slice %101 {offsets = [0, 32], sizes = [1, 32], strides = [1, 1]} : vector<1x128xf32> to vector<1x32xf32>
      %109 = arith.negf %108 : vector<1x32xf32>
      %110 = math.exp %109 : vector<1x32xf32>
      %cst_87 = arith.constant 1.000000e+00 : f32
      %111 = vector.broadcast %cst_87 : f32 to vector<1x32xf32>
      %112 = arith.addf %111, %110 : vector<1x32xf32>
      %113 = arith.divf %111, %112 : vector<1x32xf32>
      %114 = vector.extract_strided_slice %101 {offsets = [0, 64], sizes = [1, 32], strides = [1, 1]} : vector<1x128xf32> to vector<1x32xf32>
      %115 = math.tanh %114 : vector<1x32xf32>
      %116 = vector.extract_strided_slice %101 {offsets = [0, 96], sizes = [1, 32], strides = [1, 1]} : vector<1x128xf32> to vector<1x32xf32>
      %117 = arith.negf %116 : vector<1x32xf32>
      %118 = math.exp %117 : vector<1x32xf32>
      %cst_88 = arith.constant 1.000000e+00 : f32
      %119 = vector.broadcast %cst_88 : f32 to vector<1x32xf32>
      %120 = arith.addf %119, %118 : vector<1x32xf32>
      %121 = arith.divf %119, %120 : vector<1x32xf32>
      %122 = arith.mulf %113, %99 : vector<1x32xf32>
      %123 = arith.mulf %107, %115 : vector<1x32xf32>
      %124 = arith.addf %122, %123 : vector<1x32xf32>
      %125 = math.tanh %124 : vector<1x32xf32>
      %126 = arith.mulf %121, %125 : vector<1x32xf32>
      %cst_89 = arith.constant dense<0.000000e+00> : vector<1x128xf32>
      %127 = tpu.matmul %126, %1, %cst_89 {dimension_numbers = #tpu.dot_dimension_numbers<[1], [0], [0], [1], [0, 0, 1, 1], [], []>} : vector<1x32xf32>, vector<32x128xf32>, vector<1x128xf32> -> vector<1x128xf32>
      %128 = arith.addf %127, %2 : vector<1x128xf32>
      %c13 = arith.constant 13 : index
      %c0_90 = arith.constant 0 : index
      %129 = vector.load %arg4[%c13, %c0_90] : memref<21x128xf32, #tpu.memory_space<vmem>>, vector<1x128xf32>
      tpu.vector_store %arg4[%c13, %c0_90], %128 {strides = array<i32>} : memref<21x128xf32, #tpu.memory_space<vmem>>, vector<1x128xf32>,
      %c0_91 = arith.constant 0 : index
      %c0_92 = arith.constant 0 : index
      %130 = vector.load %arg6[%c0_91, %c0_92] : memref<1x32xf32, #tpu.memory_space<vmem>>, vector<1x32xf32>
      tpu.vector_store %arg6[%c0_91, %c0_92], %126 {strides = array<i32>} : memref<1x32xf32, #tpu.memory_space<vmem>>, vector<1x32xf32>,
      %c0_93 = arith.constant 0 : index
      %c0_94 = arith.constant 0 : index
      %131 = vector.load %arg7[%c0_93, %c0_94] : memref<1x32xf32, #tpu.memory_space<vmem>>, vector<1x32xf32>
      tpu.vector_store %arg7[%c0_93, %c0_94], %124 {strides = array<i32>} : memref<1x32xf32, #tpu.memory_space<vmem>>, vector<1x32xf32>,
      %132 = vector.extract_strided_slice %128 {offsets = [0, 1], sizes = [1, 1], strides = [1, 1]} : vector<1x128xf32> to vector<1x1xf32>
      %133 = vector.extract %132[0, 0] : f32 from vector<1x1xf32>
      %134 = vector.extract_strided_slice %128 {offsets = [0, 0], sizes = [1, 1], strides = [1, 1]} : vector<1x128xf32> to vector<1x1xf32>
      %135 = vector.extract %134[0, 0] : f32 from vector<1x1xf32>
      %136 = arith.cmpf ogt, %133, %135 : f32
      %137 = arith.extui %136 : i1 to i32
      %c0_95 = arith.constant 0 : index
      %138 = memref.load %arg8[%c0_95] : memref<1xi32, #tpu.memory_space<smem>>
      memref.store %137, %arg8[%c0_95] : memref<1xi32, #tpu.memory_space<smem>>
      %c14_i32 = arith.constant 14 : i32
      %c0_96 = arith.constant 0 : index
      %139 = memref.load %arg5[%c0_96] : memref<1xi32, #tpu.memory_space<smem>>
      memref.store %c14_i32, %arg5[%c0_96] : memref<1xi32, #tpu.memory_space<smem>>
    } else {
    }
    %c0_60 = arith.constant 0 : index
    %70 = memref.load %arg8[%c0_60] : memref<1xi32, #tpu.memory_space<smem>>
    %c0_i32_61 = arith.constant 0 : i32
    %71 = arith.cmpi eq, %70, %c0_i32_61 : i32
    %72 = arith.extui %71 : i1 to i32
    %c0_i32_62 = arith.constant 0 : i32
    %73 = arith.cmpi ne, %72, %c0_i32_62 : i32
    scf.if %73 {
      %c0_81 = arith.constant 0 : index
      %c0_82 = arith.constant 0 : index
      %98 = vector.load %arg6[%c0_81, %c0_82] : memref<1x32xf32, #tpu.memory_space<vmem>>, vector<1x32xf32>
      %c0_83 = arith.constant 0 : index
      %c0_84 = arith.constant 0 : index
      %99 = vector.load %arg7[%c0_83, %c0_84] : memref<1x32xf32, #tpu.memory_space<vmem>>, vector<1x32xf32>
      %cst_85 = arith.constant dense<0.000000e+00> : vector<1x128xf32>
      %100 = tpu.matmul %98, %0, %cst_85 {dimension_numbers = #tpu.dot_dimension_numbers<[1], [0], [0], [1], [0, 0, 1, 1], [], []>} : vector<1x32xf32>, vector<32x128xf32>, vector<1x128xf32> -> vector<1x128xf32>
      %101 = arith.addf %5, %100 : vector<1x128xf32>
      %102 = vector.extract_strided_slice %101 {offsets = [0, 0], sizes = [1, 32], strides = [1, 1]} : vector<1x128xf32> to vector<1x32xf32>
      %103 = arith.negf %102 : vector<1x32xf32>
      %104 = math.exp %103 : vector<1x32xf32>
      %cst_86 = arith.constant 1.000000e+00 : f32
      %105 = vector.broadcast %cst_86 : f32 to vector<1x32xf32>
      %106 = arith.addf %105, %104 : vector<1x32xf32>
      %107 = arith.divf %105, %106 : vector<1x32xf32>
      %108 = vector.extract_strided_slice %101 {offsets = [0, 32], sizes = [1, 32], strides = [1, 1]} : vector<1x128xf32> to vector<1x32xf32>
      %109 = arith.negf %108 : vector<1x32xf32>
      %110 = math.exp %109 : vector<1x32xf32>
      %cst_87 = arith.constant 1.000000e+00 : f32
      %111 = vector.broadcast %cst_87 : f32 to vector<1x32xf32>
      %112 = arith.addf %111, %110 : vector<1x32xf32>
      %113 = arith.divf %111, %112 : vector<1x32xf32>
      %114 = vector.extract_strided_slice %101 {offsets = [0, 64], sizes = [1, 32], strides = [1, 1]} : vector<1x128xf32> to vector<1x32xf32>
      %115 = math.tanh %114 : vector<1x32xf32>
      %116 = vector.extract_strided_slice %101 {offsets = [0, 96], sizes = [1, 32], strides = [1, 1]} : vector<1x128xf32> to vector<1x32xf32>
      %117 = arith.negf %116 : vector<1x32xf32>
      %118 = math.exp %117 : vector<1x32xf32>
      %cst_88 = arith.constant 1.000000e+00 : f32
      %119 = vector.broadcast %cst_88 : f32 to vector<1x32xf32>
      %120 = arith.addf %119, %118 : vector<1x32xf32>
      %121 = arith.divf %119, %120 : vector<1x32xf32>
      %122 = arith.mulf %113, %99 : vector<1x32xf32>
      %123 = arith.mulf %107, %115 : vector<1x32xf32>
      %124 = arith.addf %122, %123 : vector<1x32xf32>
      %125 = math.tanh %124 : vector<1x32xf32>
      %126 = arith.mulf %121, %125 : vector<1x32xf32>
      %cst_89 = arith.constant dense<0.000000e+00> : vector<1x128xf32>
      %127 = tpu.matmul %126, %1, %cst_89 {dimension_numbers = #tpu.dot_dimension_numbers<[1], [0], [0], [1], [0, 0, 1, 1], [], []>} : vector<1x32xf32>, vector<32x128xf32>, vector<1x128xf32> -> vector<1x128xf32>
      %128 = arith.addf %127, %2 : vector<1x128xf32>
      %c14 = arith.constant 14 : index
      %c0_90 = arith.constant 0 : index
      %129 = vector.load %arg4[%c14, %c0_90] : memref<21x128xf32, #tpu.memory_space<vmem>>, vector<1x128xf32>
      tpu.vector_store %arg4[%c14, %c0_90], %128 {strides = array<i32>} : memref<21x128xf32, #tpu.memory_space<vmem>>, vector<1x128xf32>,
      %c0_91 = arith.constant 0 : index
      %c0_92 = arith.constant 0 : index
      %130 = vector.load %arg6[%c0_91, %c0_92] : memref<1x32xf32, #tpu.memory_space<vmem>>, vector<1x32xf32>
      tpu.vector_store %arg6[%c0_91, %c0_92], %126 {strides = array<i32>} : memref<1x32xf32, #tpu.memory_space<vmem>>, vector<1x32xf32>,
      %c0_93 = arith.constant 0 : index
      %c0_94 = arith.constant 0 : index
      %131 = vector.load %arg7[%c0_93, %c0_94] : memref<1x32xf32, #tpu.memory_space<vmem>>, vector<1x32xf32>
      tpu.vector_store %arg7[%c0_93, %c0_94], %124 {strides = array<i32>} : memref<1x32xf32, #tpu.memory_space<vmem>>, vector<1x32xf32>,
      %132 = vector.extract_strided_slice %128 {offsets = [0, 1], sizes = [1, 1], strides = [1, 1]} : vector<1x128xf32> to vector<1x1xf32>
      %133 = vector.extract %132[0, 0] : f32 from vector<1x1xf32>
      %134 = vector.extract_strided_slice %128 {offsets = [0, 0], sizes = [1, 1], strides = [1, 1]} : vector<1x128xf32> to vector<1x1xf32>
      %135 = vector.extract %134[0, 0] : f32 from vector<1x1xf32>
      %136 = arith.cmpf ogt, %133, %135 : f32
      %137 = arith.extui %136 : i1 to i32
      %c0_95 = arith.constant 0 : index
      %138 = memref.load %arg8[%c0_95] : memref<1xi32, #tpu.memory_space<smem>>
      memref.store %137, %arg8[%c0_95] : memref<1xi32, #tpu.memory_space<smem>>
      %c15_i32 = arith.constant 15 : i32
      %c0_96 = arith.constant 0 : index
      %139 = memref.load %arg5[%c0_96] : memref<1xi32, #tpu.memory_space<smem>>
      memref.store %c15_i32, %arg5[%c0_96] : memref<1xi32, #tpu.memory_space<smem>>
    } else {
    }
    %c0_63 = arith.constant 0 : index
    %74 = memref.load %arg8[%c0_63] : memref<1xi32, #tpu.memory_space<smem>>
    %c0_i32_64 = arith.constant 0 : i32
    %75 = arith.cmpi eq, %74, %c0_i32_64 : i32
    %76 = arith.extui %75 : i1 to i32
    %c0_i32_65 = arith.constant 0 : i32
    %77 = arith.cmpi ne, %76, %c0_i32_65 : i32
    scf.if %77 {
      %c0_81 = arith.constant 0 : index
      %c0_82 = arith.constant 0 : index
      %98 = vector.load %arg6[%c0_81, %c0_82] : memref<1x32xf32, #tpu.memory_space<vmem>>, vector<1x32xf32>
      %c0_83 = arith.constant 0 : index
      %c0_84 = arith.constant 0 : index
      %99 = vector.load %arg7[%c0_83, %c0_84] : memref<1x32xf32, #tpu.memory_space<vmem>>, vector<1x32xf32>
      %cst_85 = arith.constant dense<0.000000e+00> : vector<1x128xf32>
      %100 = tpu.matmul %98, %0, %cst_85 {dimension_numbers = #tpu.dot_dimension_numbers<[1], [0], [0], [1], [0, 0, 1, 1], [], []>} : vector<1x32xf32>, vector<32x128xf32>, vector<1x128xf32> -> vector<1x128xf32>
      %101 = arith.addf %5, %100 : vector<1x128xf32>
      %102 = vector.extract_strided_slice %101 {offsets = [0, 0], sizes = [1, 32], strides = [1, 1]} : vector<1x128xf32> to vector<1x32xf32>
      %103 = arith.negf %102 : vector<1x32xf32>
      %104 = math.exp %103 : vector<1x32xf32>
      %cst_86 = arith.constant 1.000000e+00 : f32
      %105 = vector.broadcast %cst_86 : f32 to vector<1x32xf32>
      %106 = arith.addf %105, %104 : vector<1x32xf32>
      %107 = arith.divf %105, %106 : vector<1x32xf32>
      %108 = vector.extract_strided_slice %101 {offsets = [0, 32], sizes = [1, 32], strides = [1, 1]} : vector<1x128xf32> to vector<1x32xf32>
      %109 = arith.negf %108 : vector<1x32xf32>
      %110 = math.exp %109 : vector<1x32xf32>
      %cst_87 = arith.constant 1.000000e+00 : f32
      %111 = vector.broadcast %cst_87 : f32 to vector<1x32xf32>
      %112 = arith.addf %111, %110 : vector<1x32xf32>
      %113 = arith.divf %111, %112 : vector<1x32xf32>
      %114 = vector.extract_strided_slice %101 {offsets = [0, 64], sizes = [1, 32], strides = [1, 1]} : vector<1x128xf32> to vector<1x32xf32>
      %115 = math.tanh %114 : vector<1x32xf32>
      %116 = vector.extract_strided_slice %101 {offsets = [0, 96], sizes = [1, 32], strides = [1, 1]} : vector<1x128xf32> to vector<1x32xf32>
      %117 = arith.negf %116 : vector<1x32xf32>
      %118 = math.exp %117 : vector<1x32xf32>
      %cst_88 = arith.constant 1.000000e+00 : f32
      %119 = vector.broadcast %cst_88 : f32 to vector<1x32xf32>
      %120 = arith.addf %119, %118 : vector<1x32xf32>
      %121 = arith.divf %119, %120 : vector<1x32xf32>
      %122 = arith.mulf %113, %99 : vector<1x32xf32>
      %123 = arith.mulf %107, %115 : vector<1x32xf32>
      %124 = arith.addf %122, %123 : vector<1x32xf32>
      %125 = math.tanh %124 : vector<1x32xf32>
      %126 = arith.mulf %121, %125 : vector<1x32xf32>
      %cst_89 = arith.constant dense<0.000000e+00> : vector<1x128xf32>
      %127 = tpu.matmul %126, %1, %cst_89 {dimension_numbers = #tpu.dot_dimension_numbers<[1], [0], [0], [1], [0, 0, 1, 1], [], []>} : vector<1x32xf32>, vector<32x128xf32>, vector<1x128xf32> -> vector<1x128xf32>
      %128 = arith.addf %127, %2 : vector<1x128xf32>
      %c15 = arith.constant 15 : index
      %c0_90 = arith.constant 0 : index
      %129 = vector.load %arg4[%c15, %c0_90] : memref<21x128xf32, #tpu.memory_space<vmem>>, vector<1x128xf32>
      tpu.vector_store %arg4[%c15, %c0_90], %128 {strides = array<i32>} : memref<21x128xf32, #tpu.memory_space<vmem>>, vector<1x128xf32>,
      %c0_91 = arith.constant 0 : index
      %c0_92 = arith.constant 0 : index
      %130 = vector.load %arg6[%c0_91, %c0_92] : memref<1x32xf32, #tpu.memory_space<vmem>>, vector<1x32xf32>
      tpu.vector_store %arg6[%c0_91, %c0_92], %126 {strides = array<i32>} : memref<1x32xf32, #tpu.memory_space<vmem>>, vector<1x32xf32>,
      %c0_93 = arith.constant 0 : index
      %c0_94 = arith.constant 0 : index
      %131 = vector.load %arg7[%c0_93, %c0_94] : memref<1x32xf32, #tpu.memory_space<vmem>>, vector<1x32xf32>
      tpu.vector_store %arg7[%c0_93, %c0_94], %124 {strides = array<i32>} : memref<1x32xf32, #tpu.memory_space<vmem>>, vector<1x32xf32>,
      %132 = vector.extract_strided_slice %128 {offsets = [0, 1], sizes = [1, 1], strides = [1, 1]} : vector<1x128xf32> to vector<1x1xf32>
      %133 = vector.extract %132[0, 0] : f32 from vector<1x1xf32>
      %134 = vector.extract_strided_slice %128 {offsets = [0, 0], sizes = [1, 1], strides = [1, 1]} : vector<1x128xf32> to vector<1x1xf32>
      %135 = vector.extract %134[0, 0] : f32 from vector<1x1xf32>
      %136 = arith.cmpf ogt, %133, %135 : f32
      %137 = arith.extui %136 : i1 to i32
      %c0_95 = arith.constant 0 : index
      %138 = memref.load %arg8[%c0_95] : memref<1xi32, #tpu.memory_space<smem>>
      memref.store %137, %arg8[%c0_95] : memref<1xi32, #tpu.memory_space<smem>>
      %c16_i32 = arith.constant 16 : i32
      %c0_96 = arith.constant 0 : index
      %139 = memref.load %arg5[%c0_96] : memref<1xi32, #tpu.memory_space<smem>>
      memref.store %c16_i32, %arg5[%c0_96] : memref<1xi32, #tpu.memory_space<smem>>
    } else {
    }
    %c0_66 = arith.constant 0 : index
    %78 = memref.load %arg8[%c0_66] : memref<1xi32, #tpu.memory_space<smem>>
    %c0_i32_67 = arith.constant 0 : i32
    %79 = arith.cmpi eq, %78, %c0_i32_67 : i32
    %80 = arith.extui %79 : i1 to i32
    %c0_i32_68 = arith.constant 0 : i32
    %81 = arith.cmpi ne, %80, %c0_i32_68 : i32
    scf.if %81 {
      %c0_81 = arith.constant 0 : index
      %c0_82 = arith.constant 0 : index
      %98 = vector.load %arg6[%c0_81, %c0_82] : memref<1x32xf32, #tpu.memory_space<vmem>>, vector<1x32xf32>
      %c0_83 = arith.constant 0 : index
      %c0_84 = arith.constant 0 : index
      %99 = vector.load %arg7[%c0_83, %c0_84] : memref<1x32xf32, #tpu.memory_space<vmem>>, vector<1x32xf32>
      %cst_85 = arith.constant dense<0.000000e+00> : vector<1x128xf32>
      %100 = tpu.matmul %98, %0, %cst_85 {dimension_numbers = #tpu.dot_dimension_numbers<[1], [0], [0], [1], [0, 0, 1, 1], [], []>} : vector<1x32xf32>, vector<32x128xf32>, vector<1x128xf32> -> vector<1x128xf32>
      %101 = arith.addf %5, %100 : vector<1x128xf32>
      %102 = vector.extract_strided_slice %101 {offsets = [0, 0], sizes = [1, 32], strides = [1, 1]} : vector<1x128xf32> to vector<1x32xf32>
      %103 = arith.negf %102 : vector<1x32xf32>
      %104 = math.exp %103 : vector<1x32xf32>
      %cst_86 = arith.constant 1.000000e+00 : f32
      %105 = vector.broadcast %cst_86 : f32 to vector<1x32xf32>
      %106 = arith.addf %105, %104 : vector<1x32xf32>
      %107 = arith.divf %105, %106 : vector<1x32xf32>
      %108 = vector.extract_strided_slice %101 {offsets = [0, 32], sizes = [1, 32], strides = [1, 1]} : vector<1x128xf32> to vector<1x32xf32>
      %109 = arith.negf %108 : vector<1x32xf32>
      %110 = math.exp %109 : vector<1x32xf32>
      %cst_87 = arith.constant 1.000000e+00 : f32
      %111 = vector.broadcast %cst_87 : f32 to vector<1x32xf32>
      %112 = arith.addf %111, %110 : vector<1x32xf32>
      %113 = arith.divf %111, %112 : vector<1x32xf32>
      %114 = vector.extract_strided_slice %101 {offsets = [0, 64], sizes = [1, 32], strides = [1, 1]} : vector<1x128xf32> to vector<1x32xf32>
      %115 = math.tanh %114 : vector<1x32xf32>
      %116 = vector.extract_strided_slice %101 {offsets = [0, 96], sizes = [1, 32], strides = [1, 1]} : vector<1x128xf32> to vector<1x32xf32>
      %117 = arith.negf %116 : vector<1x32xf32>
      %118 = math.exp %117 : vector<1x32xf32>
      %cst_88 = arith.constant 1.000000e+00 : f32
      %119 = vector.broadcast %cst_88 : f32 to vector<1x32xf32>
      %120 = arith.addf %119, %118 : vector<1x32xf32>
      %121 = arith.divf %119, %120 : vector<1x32xf32>
      %122 = arith.mulf %113, %99 : vector<1x32xf32>
      %123 = arith.mulf %107, %115 : vector<1x32xf32>
      %124 = arith.addf %122, %123 : vector<1x32xf32>
      %125 = math.tanh %124 : vector<1x32xf32>
      %126 = arith.mulf %121, %125 : vector<1x32xf32>
      %cst_89 = arith.constant dense<0.000000e+00> : vector<1x128xf32>
      %127 = tpu.matmul %126, %1, %cst_89 {dimension_numbers = #tpu.dot_dimension_numbers<[1], [0], [0], [1], [0, 0, 1, 1], [], []>} : vector<1x32xf32>, vector<32x128xf32>, vector<1x128xf32> -> vector<1x128xf32>
      %128 = arith.addf %127, %2 : vector<1x128xf32>
      %c16 = arith.constant 16 : index
      %c0_90 = arith.constant 0 : index
      %129 = vector.load %arg4[%c16, %c0_90] : memref<21x128xf32, #tpu.memory_space<vmem>>, vector<1x128xf32>
      tpu.vector_store %arg4[%c16, %c0_90], %128 {strides = array<i32>} : memref<21x128xf32, #tpu.memory_space<vmem>>, vector<1x128xf32>,
      %c0_91 = arith.constant 0 : index
      %c0_92 = arith.constant 0 : index
      %130 = vector.load %arg6[%c0_91, %c0_92] : memref<1x32xf32, #tpu.memory_space<vmem>>, vector<1x32xf32>
      tpu.vector_store %arg6[%c0_91, %c0_92], %126 {strides = array<i32>} : memref<1x32xf32, #tpu.memory_space<vmem>>, vector<1x32xf32>,
      %c0_93 = arith.constant 0 : index
      %c0_94 = arith.constant 0 : index
      %131 = vector.load %arg7[%c0_93, %c0_94] : memref<1x32xf32, #tpu.memory_space<vmem>>, vector<1x32xf32>
      tpu.vector_store %arg7[%c0_93, %c0_94], %124 {strides = array<i32>} : memref<1x32xf32, #tpu.memory_space<vmem>>, vector<1x32xf32>,
      %132 = vector.extract_strided_slice %128 {offsets = [0, 1], sizes = [1, 1], strides = [1, 1]} : vector<1x128xf32> to vector<1x1xf32>
      %133 = vector.extract %132[0, 0] : f32 from vector<1x1xf32>
      %134 = vector.extract_strided_slice %128 {offsets = [0, 0], sizes = [1, 1], strides = [1, 1]} : vector<1x128xf32> to vector<1x1xf32>
      %135 = vector.extract %134[0, 0] : f32 from vector<1x1xf32>
      %136 = arith.cmpf ogt, %133, %135 : f32
      %137 = arith.extui %136 : i1 to i32
      %c0_95 = arith.constant 0 : index
      %138 = memref.load %arg8[%c0_95] : memref<1xi32, #tpu.memory_space<smem>>
      memref.store %137, %arg8[%c0_95] : memref<1xi32, #tpu.memory_space<smem>>
      %c17_i32 = arith.constant 17 : i32
      %c0_96 = arith.constant 0 : index
      %139 = memref.load %arg5[%c0_96] : memref<1xi32, #tpu.memory_space<smem>>
      memref.store %c17_i32, %arg5[%c0_96] : memref<1xi32, #tpu.memory_space<smem>>
    } else {
    }
    %c0_69 = arith.constant 0 : index
    %82 = memref.load %arg8[%c0_69] : memref<1xi32, #tpu.memory_space<smem>>
    %c0_i32_70 = arith.constant 0 : i32
    %83 = arith.cmpi eq, %82, %c0_i32_70 : i32
    %84 = arith.extui %83 : i1 to i32
    %c0_i32_71 = arith.constant 0 : i32
    %85 = arith.cmpi ne, %84, %c0_i32_71 : i32
    scf.if %85 {
      %c0_81 = arith.constant 0 : index
      %c0_82 = arith.constant 0 : index
      %98 = vector.load %arg6[%c0_81, %c0_82] : memref<1x32xf32, #tpu.memory_space<vmem>>, vector<1x32xf32>
      %c0_83 = arith.constant 0 : index
      %c0_84 = arith.constant 0 : index
      %99 = vector.load %arg7[%c0_83, %c0_84] : memref<1x32xf32, #tpu.memory_space<vmem>>, vector<1x32xf32>
      %cst_85 = arith.constant dense<0.000000e+00> : vector<1x128xf32>
      %100 = tpu.matmul %98, %0, %cst_85 {dimension_numbers = #tpu.dot_dimension_numbers<[1], [0], [0], [1], [0, 0, 1, 1], [], []>} : vector<1x32xf32>, vector<32x128xf32>, vector<1x128xf32> -> vector<1x128xf32>
      %101 = arith.addf %5, %100 : vector<1x128xf32>
      %102 = vector.extract_strided_slice %101 {offsets = [0, 0], sizes = [1, 32], strides = [1, 1]} : vector<1x128xf32> to vector<1x32xf32>
      %103 = arith.negf %102 : vector<1x32xf32>
      %104 = math.exp %103 : vector<1x32xf32>
      %cst_86 = arith.constant 1.000000e+00 : f32
      %105 = vector.broadcast %cst_86 : f32 to vector<1x32xf32>
      %106 = arith.addf %105, %104 : vector<1x32xf32>
      %107 = arith.divf %105, %106 : vector<1x32xf32>
      %108 = vector.extract_strided_slice %101 {offsets = [0, 32], sizes = [1, 32], strides = [1, 1]} : vector<1x128xf32> to vector<1x32xf32>
      %109 = arith.negf %108 : vector<1x32xf32>
      %110 = math.exp %109 : vector<1x32xf32>
      %cst_87 = arith.constant 1.000000e+00 : f32
      %111 = vector.broadcast %cst_87 : f32 to vector<1x32xf32>
      %112 = arith.addf %111, %110 : vector<1x32xf32>
      %113 = arith.divf %111, %112 : vector<1x32xf32>
      %114 = vector.extract_strided_slice %101 {offsets = [0, 64], sizes = [1, 32], strides = [1, 1]} : vector<1x128xf32> to vector<1x32xf32>
      %115 = math.tanh %114 : vector<1x32xf32>
      %116 = vector.extract_strided_slice %101 {offsets = [0, 96], sizes = [1, 32], strides = [1, 1]} : vector<1x128xf32> to vector<1x32xf32>
      %117 = arith.negf %116 : vector<1x32xf32>
      %118 = math.exp %117 : vector<1x32xf32>
      %cst_88 = arith.constant 1.000000e+00 : f32
      %119 = vector.broadcast %cst_88 : f32 to vector<1x32xf32>
      %120 = arith.addf %119, %118 : vector<1x32xf32>
      %121 = arith.divf %119, %120 : vector<1x32xf32>
      %122 = arith.mulf %113, %99 : vector<1x32xf32>
      %123 = arith.mulf %107, %115 : vector<1x32xf32>
      %124 = arith.addf %122, %123 : vector<1x32xf32>
      %125 = math.tanh %124 : vector<1x32xf32>
      %126 = arith.mulf %121, %125 : vector<1x32xf32>
      %cst_89 = arith.constant dense<0.000000e+00> : vector<1x128xf32>
      %127 = tpu.matmul %126, %1, %cst_89 {dimension_numbers = #tpu.dot_dimension_numbers<[1], [0], [0], [1], [0, 0, 1, 1], [], []>} : vector<1x32xf32>, vector<32x128xf32>, vector<1x128xf32> -> vector<1x128xf32>
      %128 = arith.addf %127, %2 : vector<1x128xf32>
      %c17 = arith.constant 17 : index
      %c0_90 = arith.constant 0 : index
      %129 = vector.load %arg4[%c17, %c0_90] : memref<21x128xf32, #tpu.memory_space<vmem>>, vector<1x128xf32>
      tpu.vector_store %arg4[%c17, %c0_90], %128 {strides = array<i32>} : memref<21x128xf32, #tpu.memory_space<vmem>>, vector<1x128xf32>,
      %c0_91 = arith.constant 0 : index
      %c0_92 = arith.constant 0 : index
      %130 = vector.load %arg6[%c0_91, %c0_92] : memref<1x32xf32, #tpu.memory_space<vmem>>, vector<1x32xf32>
      tpu.vector_store %arg6[%c0_91, %c0_92], %126 {strides = array<i32>} : memref<1x32xf32, #tpu.memory_space<vmem>>, vector<1x32xf32>,
      %c0_93 = arith.constant 0 : index
      %c0_94 = arith.constant 0 : index
      %131 = vector.load %arg7[%c0_93, %c0_94] : memref<1x32xf32, #tpu.memory_space<vmem>>, vector<1x32xf32>
      tpu.vector_store %arg7[%c0_93, %c0_94], %124 {strides = array<i32>} : memref<1x32xf32, #tpu.memory_space<vmem>>, vector<1x32xf32>,
      %132 = vector.extract_strided_slice %128 {offsets = [0, 1], sizes = [1, 1], strides = [1, 1]} : vector<1x128xf32> to vector<1x1xf32>
      %133 = vector.extract %132[0, 0] : f32 from vector<1x1xf32>
      %134 = vector.extract_strided_slice %128 {offsets = [0, 0], sizes = [1, 1], strides = [1, 1]} : vector<1x128xf32> to vector<1x1xf32>
      %135 = vector.extract %134[0, 0] : f32 from vector<1x1xf32>
      %136 = arith.cmpf ogt, %133, %135 : f32
      %137 = arith.extui %136 : i1 to i32
      %c0_95 = arith.constant 0 : index
      %138 = memref.load %arg8[%c0_95] : memref<1xi32, #tpu.memory_space<smem>>
      memref.store %137, %arg8[%c0_95] : memref<1xi32, #tpu.memory_space<smem>>
      %c18_i32 = arith.constant 18 : i32
      %c0_96 = arith.constant 0 : index
      %139 = memref.load %arg5[%c0_96] : memref<1xi32, #tpu.memory_space<smem>>
      memref.store %c18_i32, %arg5[%c0_96] : memref<1xi32, #tpu.memory_space<smem>>
    } else {
    }
    %c0_72 = arith.constant 0 : index
    %86 = memref.load %arg8[%c0_72] : memref<1xi32, #tpu.memory_space<smem>>
    %c0_i32_73 = arith.constant 0 : i32
    %87 = arith.cmpi eq, %86, %c0_i32_73 : i32
    %88 = arith.extui %87 : i1 to i32
    %c0_i32_74 = arith.constant 0 : i32
    %89 = arith.cmpi ne, %88, %c0_i32_74 : i32
    scf.if %89 {
      %c0_81 = arith.constant 0 : index
      %c0_82 = arith.constant 0 : index
      %98 = vector.load %arg6[%c0_81, %c0_82] : memref<1x32xf32, #tpu.memory_space<vmem>>, vector<1x32xf32>
      %c0_83 = arith.constant 0 : index
      %c0_84 = arith.constant 0 : index
      %99 = vector.load %arg7[%c0_83, %c0_84] : memref<1x32xf32, #tpu.memory_space<vmem>>, vector<1x32xf32>
      %cst_85 = arith.constant dense<0.000000e+00> : vector<1x128xf32>
      %100 = tpu.matmul %98, %0, %cst_85 {dimension_numbers = #tpu.dot_dimension_numbers<[1], [0], [0], [1], [0, 0, 1, 1], [], []>} : vector<1x32xf32>, vector<32x128xf32>, vector<1x128xf32> -> vector<1x128xf32>
      %101 = arith.addf %5, %100 : vector<1x128xf32>
      %102 = vector.extract_strided_slice %101 {offsets = [0, 0], sizes = [1, 32], strides = [1, 1]} : vector<1x128xf32> to vector<1x32xf32>
      %103 = arith.negf %102 : vector<1x32xf32>
      %104 = math.exp %103 : vector<1x32xf32>
      %cst_86 = arith.constant 1.000000e+00 : f32
      %105 = vector.broadcast %cst_86 : f32 to vector<1x32xf32>
      %106 = arith.addf %105, %104 : vector<1x32xf32>
      %107 = arith.divf %105, %106 : vector<1x32xf32>
      %108 = vector.extract_strided_slice %101 {offsets = [0, 32], sizes = [1, 32], strides = [1, 1]} : vector<1x128xf32> to vector<1x32xf32>
      %109 = arith.negf %108 : vector<1x32xf32>
      %110 = math.exp %109 : vector<1x32xf32>
      %cst_87 = arith.constant 1.000000e+00 : f32
      %111 = vector.broadcast %cst_87 : f32 to vector<1x32xf32>
      %112 = arith.addf %111, %110 : vector<1x32xf32>
      %113 = arith.divf %111, %112 : vector<1x32xf32>
      %114 = vector.extract_strided_slice %101 {offsets = [0, 64], sizes = [1, 32], strides = [1, 1]} : vector<1x128xf32> to vector<1x32xf32>
      %115 = math.tanh %114 : vector<1x32xf32>
      %116 = vector.extract_strided_slice %101 {offsets = [0, 96], sizes = [1, 32], strides = [1, 1]} : vector<1x128xf32> to vector<1x32xf32>
      %117 = arith.negf %116 : vector<1x32xf32>
      %118 = math.exp %117 : vector<1x32xf32>
      %cst_88 = arith.constant 1.000000e+00 : f32
      %119 = vector.broadcast %cst_88 : f32 to vector<1x32xf32>
      %120 = arith.addf %119, %118 : vector<1x32xf32>
      %121 = arith.divf %119, %120 : vector<1x32xf32>
      %122 = arith.mulf %113, %99 : vector<1x32xf32>
      %123 = arith.mulf %107, %115 : vector<1x32xf32>
      %124 = arith.addf %122, %123 : vector<1x32xf32>
      %125 = math.tanh %124 : vector<1x32xf32>
      %126 = arith.mulf %121, %125 : vector<1x32xf32>
      %cst_89 = arith.constant dense<0.000000e+00> : vector<1x128xf32>
      %127 = tpu.matmul %126, %1, %cst_89 {dimension_numbers = #tpu.dot_dimension_numbers<[1], [0], [0], [1], [0, 0, 1, 1], [], []>} : vector<1x32xf32>, vector<32x128xf32>, vector<1x128xf32> -> vector<1x128xf32>
      %128 = arith.addf %127, %2 : vector<1x128xf32>
      %c18 = arith.constant 18 : index
      %c0_90 = arith.constant 0 : index
      %129 = vector.load %arg4[%c18, %c0_90] : memref<21x128xf32, #tpu.memory_space<vmem>>, vector<1x128xf32>
      tpu.vector_store %arg4[%c18, %c0_90], %128 {strides = array<i32>} : memref<21x128xf32, #tpu.memory_space<vmem>>, vector<1x128xf32>,
      %c0_91 = arith.constant 0 : index
      %c0_92 = arith.constant 0 : index
      %130 = vector.load %arg6[%c0_91, %c0_92] : memref<1x32xf32, #tpu.memory_space<vmem>>, vector<1x32xf32>
      tpu.vector_store %arg6[%c0_91, %c0_92], %126 {strides = array<i32>} : memref<1x32xf32, #tpu.memory_space<vmem>>, vector<1x32xf32>,
      %c0_93 = arith.constant 0 : index
      %c0_94 = arith.constant 0 : index
      %131 = vector.load %arg7[%c0_93, %c0_94] : memref<1x32xf32, #tpu.memory_space<vmem>>, vector<1x32xf32>
      tpu.vector_store %arg7[%c0_93, %c0_94], %124 {strides = array<i32>} : memref<1x32xf32, #tpu.memory_space<vmem>>, vector<1x32xf32>,
      %132 = vector.extract_strided_slice %128 {offsets = [0, 1], sizes = [1, 1], strides = [1, 1]} : vector<1x128xf32> to vector<1x1xf32>
      %133 = vector.extract %132[0, 0] : f32 from vector<1x1xf32>
      %134 = vector.extract_strided_slice %128 {offsets = [0, 0], sizes = [1, 1], strides = [1, 1]} : vector<1x128xf32> to vector<1x1xf32>
      %135 = vector.extract %134[0, 0] : f32 from vector<1x1xf32>
      %136 = arith.cmpf ogt, %133, %135 : f32
      %137 = arith.extui %136 : i1 to i32
      %c0_95 = arith.constant 0 : index
      %138 = memref.load %arg8[%c0_95] : memref<1xi32, #tpu.memory_space<smem>>
      memref.store %137, %arg8[%c0_95] : memref<1xi32, #tpu.memory_space<smem>>
      %c19_i32 = arith.constant 19 : i32
      %c0_96 = arith.constant 0 : index
      %139 = memref.load %arg5[%c0_96] : memref<1xi32, #tpu.memory_space<smem>>
      memref.store %c19_i32, %arg5[%c0_96] : memref<1xi32, #tpu.memory_space<smem>>
    } else {
    }
    %c0_75 = arith.constant 0 : index
    %90 = memref.load %arg8[%c0_75] : memref<1xi32, #tpu.memory_space<smem>>
    %c0_i32_76 = arith.constant 0 : i32
    %91 = arith.cmpi eq, %90, %c0_i32_76 : i32
    %92 = arith.extui %91 : i1 to i32
    %c0_i32_77 = arith.constant 0 : i32
    %93 = arith.cmpi ne, %92, %c0_i32_77 : i32
    scf.if %93 {
      %c0_81 = arith.constant 0 : index
      %c0_82 = arith.constant 0 : index
      %98 = vector.load %arg6[%c0_81, %c0_82] : memref<1x32xf32, #tpu.memory_space<vmem>>, vector<1x32xf32>
      %c0_83 = arith.constant 0 : index
      %c0_84 = arith.constant 0 : index
      %99 = vector.load %arg7[%c0_83, %c0_84] : memref<1x32xf32, #tpu.memory_space<vmem>>, vector<1x32xf32>
      %cst_85 = arith.constant dense<0.000000e+00> : vector<1x128xf32>
      %100 = tpu.matmul %98, %0, %cst_85 {dimension_numbers = #tpu.dot_dimension_numbers<[1], [0], [0], [1], [0, 0, 1, 1], [], []>} : vector<1x32xf32>, vector<32x128xf32>, vector<1x128xf32> -> vector<1x128xf32>
      %101 = arith.addf %5, %100 : vector<1x128xf32>
      %102 = vector.extract_strided_slice %101 {offsets = [0, 0], sizes = [1, 32], strides = [1, 1]} : vector<1x128xf32> to vector<1x32xf32>
      %103 = arith.negf %102 : vector<1x32xf32>
      %104 = math.exp %103 : vector<1x32xf32>
      %cst_86 = arith.constant 1.000000e+00 : f32
      %105 = vector.broadcast %cst_86 : f32 to vector<1x32xf32>
      %106 = arith.addf %105, %104 : vector<1x32xf32>
      %107 = arith.divf %105, %106 : vector<1x32xf32>
      %108 = vector.extract_strided_slice %101 {offsets = [0, 32], sizes = [1, 32], strides = [1, 1]} : vector<1x128xf32> to vector<1x32xf32>
      %109 = arith.negf %108 : vector<1x32xf32>
      %110 = math.exp %109 : vector<1x32xf32>
      %cst_87 = arith.constant 1.000000e+00 : f32
      %111 = vector.broadcast %cst_87 : f32 to vector<1x32xf32>
      %112 = arith.addf %111, %110 : vector<1x32xf32>
      %113 = arith.divf %111, %112 : vector<1x32xf32>
      %114 = vector.extract_strided_slice %101 {offsets = [0, 64], sizes = [1, 32], strides = [1, 1]} : vector<1x128xf32> to vector<1x32xf32>
      %115 = math.tanh %114 : vector<1x32xf32>
      %116 = vector.extract_strided_slice %101 {offsets = [0, 96], sizes = [1, 32], strides = [1, 1]} : vector<1x128xf32> to vector<1x32xf32>
      %117 = arith.negf %116 : vector<1x32xf32>
      %118 = math.exp %117 : vector<1x32xf32>
      %cst_88 = arith.constant 1.000000e+00 : f32
      %119 = vector.broadcast %cst_88 : f32 to vector<1x32xf32>
      %120 = arith.addf %119, %118 : vector<1x32xf32>
      %121 = arith.divf %119, %120 : vector<1x32xf32>
      %122 = arith.mulf %113, %99 : vector<1x32xf32>
      %123 = arith.mulf %107, %115 : vector<1x32xf32>
      %124 = arith.addf %122, %123 : vector<1x32xf32>
      %125 = math.tanh %124 : vector<1x32xf32>
      %126 = arith.mulf %121, %125 : vector<1x32xf32>
      %cst_89 = arith.constant dense<0.000000e+00> : vector<1x128xf32>
      %127 = tpu.matmul %126, %1, %cst_89 {dimension_numbers = #tpu.dot_dimension_numbers<[1], [0], [0], [1], [0, 0, 1, 1], [], []>} : vector<1x32xf32>, vector<32x128xf32>, vector<1x128xf32> -> vector<1x128xf32>
      %128 = arith.addf %127, %2 : vector<1x128xf32>
      %c19 = arith.constant 19 : index
      %c0_90 = arith.constant 0 : index
      %129 = vector.load %arg4[%c19, %c0_90] : memref<21x128xf32, #tpu.memory_space<vmem>>, vector<1x128xf32>
      tpu.vector_store %arg4[%c19, %c0_90], %128 {strides = array<i32>} : memref<21x128xf32, #tpu.memory_space<vmem>>, vector<1x128xf32>,
      %c0_91 = arith.constant 0 : index
      %c0_92 = arith.constant 0 : index
      %130 = vector.load %arg6[%c0_91, %c0_92] : memref<1x32xf32, #tpu.memory_space<vmem>>, vector<1x32xf32>
      tpu.vector_store %arg6[%c0_91, %c0_92], %126 {strides = array<i32>} : memref<1x32xf32, #tpu.memory_space<vmem>>, vector<1x32xf32>,
      %c0_93 = arith.constant 0 : index
      %c0_94 = arith.constant 0 : index
      %131 = vector.load %arg7[%c0_93, %c0_94] : memref<1x32xf32, #tpu.memory_space<vmem>>, vector<1x32xf32>
      tpu.vector_store %arg7[%c0_93, %c0_94], %124 {strides = array<i32>} : memref<1x32xf32, #tpu.memory_space<vmem>>, vector<1x32xf32>,
      %132 = vector.extract_strided_slice %128 {offsets = [0, 1], sizes = [1, 1], strides = [1, 1]} : vector<1x128xf32> to vector<1x1xf32>
      %133 = vector.extract %132[0, 0] : f32 from vector<1x1xf32>
      %134 = vector.extract_strided_slice %128 {offsets = [0, 0], sizes = [1, 1], strides = [1, 1]} : vector<1x128xf32> to vector<1x1xf32>
      %135 = vector.extract %134[0, 0] : f32 from vector<1x1xf32>
      %136 = arith.cmpf ogt, %133, %135 : f32
      %137 = arith.extui %136 : i1 to i32
      %c0_95 = arith.constant 0 : index
      %138 = memref.load %arg8[%c0_95] : memref<1xi32, #tpu.memory_space<smem>>
      memref.store %137, %arg8[%c0_95] : memref<1xi32, #tpu.memory_space<smem>>
      %c20_i32 = arith.constant 20 : i32
      %c0_96 = arith.constant 0 : index
      %139 = memref.load %arg5[%c0_96] : memref<1xi32, #tpu.memory_space<smem>>
      memref.store %c20_i32, %arg5[%c0_96] : memref<1xi32, #tpu.memory_space<smem>>
    } else {
    }
    %c0_78 = arith.constant 0 : index
    %94 = memref.load %arg8[%c0_78] : memref<1xi32, #tpu.memory_space<smem>>
    %c0_i32_79 = arith.constant 0 : i32
    %95 = arith.cmpi eq, %94, %c0_i32_79 : i32
    %96 = arith.extui %95 : i1 to i32
    %c0_i32_80 = arith.constant 0 : i32
    %97 = arith.cmpi ne, %96, %c0_i32_80 : i32
    scf.if %97 {
      %c0_81 = arith.constant 0 : index
      %c0_82 = arith.constant 0 : index
      %98 = vector.load %arg6[%c0_81, %c0_82] : memref<1x32xf32, #tpu.memory_space<vmem>>, vector<1x32xf32>
      %c0_83 = arith.constant 0 : index
      %c0_84 = arith.constant 0 : index
      %99 = vector.load %arg7[%c0_83, %c0_84] : memref<1x32xf32, #tpu.memory_space<vmem>>, vector<1x32xf32>
      %cst_85 = arith.constant dense<0.000000e+00> : vector<1x128xf32>
      %100 = tpu.matmul %98, %0, %cst_85 {dimension_numbers = #tpu.dot_dimension_numbers<[1], [0], [0], [1], [0, 0, 1, 1], [], []>} : vector<1x32xf32>, vector<32x128xf32>, vector<1x128xf32> -> vector<1x128xf32>
      %101 = arith.addf %5, %100 : vector<1x128xf32>
      %102 = vector.extract_strided_slice %101 {offsets = [0, 0], sizes = [1, 32], strides = [1, 1]} : vector<1x128xf32> to vector<1x32xf32>
      %103 = arith.negf %102 : vector<1x32xf32>
      %104 = math.exp %103 : vector<1x32xf32>
      %cst_86 = arith.constant 1.000000e+00 : f32
      %105 = vector.broadcast %cst_86 : f32 to vector<1x32xf32>
      %106 = arith.addf %105, %104 : vector<1x32xf32>
      %107 = arith.divf %105, %106 : vector<1x32xf32>
      %108 = vector.extract_strided_slice %101 {offsets = [0, 32], sizes = [1, 32], strides = [1, 1]} : vector<1x128xf32> to vector<1x32xf32>
      %109 = arith.negf %108 : vector<1x32xf32>
      %110 = math.exp %109 : vector<1x32xf32>
      %cst_87 = arith.constant 1.000000e+00 : f32
      %111 = vector.broadcast %cst_87 : f32 to vector<1x32xf32>
      %112 = arith.addf %111, %110 : vector<1x32xf32>
      %113 = arith.divf %111, %112 : vector<1x32xf32>
      %114 = vector.extract_strided_slice %101 {offsets = [0, 64], sizes = [1, 32], strides = [1, 1]} : vector<1x128xf32> to vector<1x32xf32>
      %115 = math.tanh %114 : vector<1x32xf32>
      %116 = vector.extract_strided_slice %101 {offsets = [0, 96], sizes = [1, 32], strides = [1, 1]} : vector<1x128xf32> to vector<1x32xf32>
      %117 = arith.negf %116 : vector<1x32xf32>
      %118 = math.exp %117 : vector<1x32xf32>
      %cst_88 = arith.constant 1.000000e+00 : f32
      %119 = vector.broadcast %cst_88 : f32 to vector<1x32xf32>
      %120 = arith.addf %119, %118 : vector<1x32xf32>
      %121 = arith.divf %119, %120 : vector<1x32xf32>
      %122 = arith.mulf %113, %99 : vector<1x32xf32>
      %123 = arith.mulf %107, %115 : vector<1x32xf32>
      %124 = arith.addf %122, %123 : vector<1x32xf32>
      %125 = math.tanh %124 : vector<1x32xf32>
      %126 = arith.mulf %121, %125 : vector<1x32xf32>
      %cst_89 = arith.constant dense<0.000000e+00> : vector<1x128xf32>
      %127 = tpu.matmul %126, %1, %cst_89 {dimension_numbers = #tpu.dot_dimension_numbers<[1], [0], [0], [1], [0, 0, 1, 1], [], []>} : vector<1x32xf32>, vector<32x128xf32>, vector<1x128xf32> -> vector<1x128xf32>
      %128 = arith.addf %127, %2 : vector<1x128xf32>
      %c20 = arith.constant 20 : index
      %c0_90 = arith.constant 0 : index
      %129 = vector.load %arg4[%c20, %c0_90] : memref<21x128xf32, #tpu.memory_space<vmem>>, vector<1x128xf32>
      tpu.vector_store %arg4[%c20, %c0_90], %128 {strides = array<i32>} : memref<21x128xf32, #tpu.memory_space<vmem>>, vector<1x128xf32>,
      %c0_91 = arith.constant 0 : index
      %c0_92 = arith.constant 0 : index
      %130 = vector.load %arg6[%c0_91, %c0_92] : memref<1x32xf32, #tpu.memory_space<vmem>>, vector<1x32xf32>
      tpu.vector_store %arg6[%c0_91, %c0_92], %126 {strides = array<i32>} : memref<1x32xf32, #tpu.memory_space<vmem>>, vector<1x32xf32>,
      %c0_93 = arith.constant 0 : index
      %c0_94 = arith.constant 0 : index
      %131 = vector.load %arg7[%c0_93, %c0_94] : memref<1x32xf32, #tpu.memory_space<vmem>>, vector<1x32xf32>
      tpu.vector_store %arg7[%c0_93, %c0_94], %124 {strides = array<i32>} : memref<1x32xf32, #tpu.memory_space<vmem>>, vector<1x32xf32>,
      %132 = vector.extract_strided_slice %128 {offsets = [0, 1], sizes = [1, 1], strides = [1, 1]} : vector<1x128xf32> to vector<1x1xf32>
      %133 = vector.extract %132[0, 0] : f32 from vector<1x1xf32>
      %134 = vector.extract_strided_slice %128 {offsets = [0, 0], sizes = [1, 1], strides = [1, 1]} : vector<1x128xf32> to vector<1x1xf32>
      %135 = vector.extract %134[0, 0] : f32 from vector<1x1xf32>
      %136 = arith.cmpf ogt, %133, %135 : f32
      %137 = arith.extui %136 : i1 to i32
      %c0_95 = arith.constant 0 : index
      %138 = memref.load %arg8[%c0_95] : memref<1xi32, #tpu.memory_space<smem>>
      memref.store %137, %arg8[%c0_95] : memref<1xi32, #tpu.memory_space<smem>>
      %c21_i32 = arith.constant 21 : i32
      %c0_96 = arith.constant 0 : index
      %139 = memref.load %arg5[%c0_96] : memref<1xi32, #tpu.memory_space<smem>>
      memref.store %c21_i32, %arg5[%c0_96] : memref<1xi32, #tpu.memory_space<smem>>
    } else {
    }
    return
  }
}

</mosaic_0001>

<llo_original>
// kernel: lstm_reinforce_forward.1
$region0: #{lstm_reinforce_forward.1}
  #allocation0 [shape = 'u32[]', space=smem, size = 0x4, offset = 0x4, fixed_abs, tag = 'smem constant byte address 0x4 - core index']
  #allocation1 [shape = 'u32[144,128]{1,0:T(1,128)}', space=vmem, size = 0x12000, scoped, tag = 'internal scratch']
  #allocation2 [shape = 'f32[1,32]{1,0:T(1,128)}', space=vmem, size = 0x200, scoped, tag = 'scratch operand']
  #allocation3 [shape = 'f32[1,32]{1,0:T(1,128)}', space=vmem, size = 0x200, scoped, tag = 'scratch operand']
  #allocation4 [shape = 's32[1]{0:T(128)}', space=smem, size = 0x200, scoped, tag = 'scratch operand']
  %s0 = inlined_call_operand.vmem [shape: f32[2,128], index: 0, kind: input, shape index: {}]
  %s1 = inlined_call_operand.vmem [shape: f32[32,128], index: 1, kind: input, shape index: {}]
  %s2 = inlined_call_operand.hbm [shape: f32[32,128], index: 2, kind: input, shape index: {}]
  %s3 = inlined_call_operand.vmem [shape: f32[1,128], index: 3, kind: input, shape index: {}]
  %s4 = inlined_call_operand.vmem [shape: f32[21,128], index: 4, kind: output, shape index: {0}]
  %s5 = inlined_call_operand.hbm [shape: s32[1], index: 5, kind: output, shape index: {1}]
  %6 = xla_tuple %s4, %s5
  %s7 = sld [smem:[#allocation0]]
  $region122: #{lstm_reinforce_forward.1} parent=0
    _
  %s9 = ssub.s32 1, %s7
  %s10 = scalar_select 0, %s9, %s7
  $region1: #{lstm_reinforce_forward.1} parent=0
    #allocation5 [shape = 'u8[16384]{0}', space=vmem, size = 0x4000, scoped, tag = 'input window, operand 2, single buffered']
    #allocation6 [shape = 's32[1]{0}', space=sflag, size = 0x4, scoped, tag = 'scoped memory for lstm_reinforce_forward.1']
    #allocation7 [shape = 's32[1]{0}', space=sflag, size = 0x4, scoped, tag = 'scoped memory for lstm_reinforce_forward.1']
    #allocation8 [shape = 'u8[512]{0}', space=smem, size = 0x200, scoped, tag = 'output window, operand 1, single buffered']
    %11 = vsyncpa [#allocation6], 0
    %12 = vsyncpa [#allocation7], 0
    // Predicated region
    $region2: #{lstm_reinforce_forward.1} parent=1 // pred_check
      _
    $region3: #{lstm_reinforce_forward.1} parent=1 // pred_check_branch
      %14 = sbr.rel (0) target = $region5
    $region4: #{lstm_reinforce_forward.1} parent=1 // pred_region
      _
    $region5: #{lstm_reinforce_forward.1} parent=1 // pred_fallthru
      _
    // Predicated region
    $region6: #{lstm_reinforce_forward.1} parent=1 // pred_check
      _
    $region7: #{lstm_reinforce_forward.1} parent=1 // pred_check_branch
      %16 = sbr.rel (0) target = $region9
    $region8: #{lstm_reinforce_forward.1} parent=1 // pred_region
      _
    $region9: #{lstm_reinforce_forward.1} parent=1 // pred_fallthru
      _
    // Predicated region
    $region10: #{lstm_reinforce_forward.1} parent=1 // pred_check
      _
    $region11: #{lstm_reinforce_forward.1} parent=1 // pred_check_branch
      %18 = sbr.rel (0) target = $region13
    $region12: #{lstm_reinforce_forward.1} parent=1 // pred_region
      %s20 = ssub.s32 512, 512
      %21 = vsyncadd [#allocation6], %s20
      %s22 = sshll.u32 [#allocation5], 4
      %s23 = int_to_ptr.vmem [resolvable:$true] %s22
      %28 = dma.hbm_to_vmem [thread:$0]  %s2, 512, %s23, [#allocation6], 128, 128, 8
    $region13: #{lstm_reinforce_forward.1} parent=1 // pred_fallthru
      _
    // Predicated region
    $region14: #{lstm_reinforce_forward.1} parent=1 // pred_check
      _
    $region15: #{lstm_reinforce_forward.1} parent=1 // pred_check_branch
      %30 = sbr.rel (0) target = $region17
    $region16: #{lstm_reinforce_forward.1} parent=1 // pred_region
      _
    $region17: #{lstm_reinforce_forward.1} parent=1 // pred_fallthru
      _
    // Predicated region
    $region18: #{lstm_reinforce_forward.1} parent=1 // pred_check
      _
    $region19: #{lstm_reinforce_forward.1} parent=1 // pred_check_branch
      %32 = sbr.rel (0) target = $region21
    $region20: #{lstm_reinforce_forward.1} parent=1 // pred_region
      %33 = dma.done [#allocation6], 512
    $region21: #{lstm_reinforce_forward.1} parent=1 // pred_fallthru
      _
    %v34 = vld [vmem:[%s1] sm:$0xff]
    %v35 = vld [vmem:[%s1 + $0x8] sm:$0xff]
    %v36 = vld [vmem:[%s1 + $0x10] sm:$0xff]
    %v37 = vld [vmem:[%s1 + $0x18] sm:$0xff]
    %v38 = vld [vmem:[#allocation5] sm:$0xff]
    %v39 = vld [vmem:[#allocation5 + $0x8] sm:$0xff]
    %v40 = vld [vmem:[#allocation5 + $0x10] sm:$0xff]
    %v41 = vld [vmem:[#allocation5 + $0x18] sm:$0xff]
    %v42 = vld [vmem:[%s3] sm:$0x1]
    %v43 = vld [vmem:[%s0] sm:$0x3]
    %44 = vst [vmem:[%s4] sm:$0xff] 0.0
    %45 = vst [vmem:[%s4 + $0x8] sm:$0xff] 0.0
    %46 = vst [vmem:[%s4 + $0x10] sm:$0x1f] 0.0
    %vm47 = vcmask 253952
    %48 = vst.msk [vmem:[#allocation2] sm:$0x1] %vm47, 0.0
    %49 = vst.msk [vmem:[#allocation3] sm:$0x1] %vm47, 0.0
    %s50 = scalar_lea.smem [#allocation4], 0
    %51 = sst [smem:[%s50]] 0
    %s52 = scalar_lea.smem [#allocation8], 0
    %53 = sst [smem:[%s52]] 0
    %s54 = sld [smem:[#allocation4]]
    %p55 = scmp.eq.s32.totalorder %s54, 0
    // Predicated region
    $region22: #{lstm_reinforce_forward.1} parent=1 // pred_check
      %p56 = pneg %p55
    $region23: #{lstm_reinforce_forward.1} parent=1 // pred_check_branch
      %58 = sbr.rel (%p56) target = $region25
    $region24: #{lstm_reinforce_forward.1} parent=1 // pred_region
      %v59 = vld [vmem:[#allocation2] sm:$0x1]
      %v60 = vld [vmem:[#allocation3] sm:$0x1]
      %vm61 = vcmask 261120
      %v63 = vsel %vm61, %v59, 0
      %65 = vmatprep.subr.mxu0 0.0
      %66 = vmatpush1.msra.mxu0 %v34
      %67 = vmatprep.subr.mxu0 0.0
      %68 = vmatpush1.msra.mxu0 %v35
      %69 = vmatprep.subr.mxu0 0.0
      %70 = vmatpush1.msra.mxu0 %v36
      %71 = vmatprep.subr.mxu0 0.0
      %72 = vmatpush1.msra.mxu0 %v37
      %73 = vmatprep.subr.mxu0 0.0
      %74 = vmatpush1.msra.mxu0 0.0
      %75 = vmatprep.subr.mxu0 0.0
      %76 = vmatpush1.msra.mxu0 0.0
      %77 = vmatprep.subr.mxu0 0.0
      %78 = vmatpush1.msra.mxu0 0.0
      %79 = vmatprep.subr.mxu0 0.0
      %80 = vmatpush1.msra.mxu0 0.0
      %81 = vmatprep.subr.mxu0 0.0
      %82 = vmatpush1.msra.mxu0 0.0
      %83 = vmatprep.subr.mxu0 0.0
      %84 = vmatpush1.msra.mxu0 0.0
      %85 = vmatprep.subr.mxu0 0.0
      %86 = vmatpush1.msra.mxu0 0.0
      %87 = vmatprep.subr.mxu0 0.0
      %88 = vmatpush1.msra.mxu0 0.0
      %89 = vmatprep.subr.mxu0 0.0
      %90 = vmatpush1.msra.mxu0 0.0
      %91 = vmatprep.subr.mxu0 0.0
      %92 = vmatpush1.msra.mxu0 0.0
      %93 = vmatprep.subr.mxu0 0.0
      %94 = vmatpush1.msra.mxu0 0.0
      %95 = vmatprep.subr.mxu0 0.0
      %96 = vmatpush1.msra.mxu0 0.0
      %97 = vmatprep.subr.mxu0 0.0
      %98 = vmatpush1.msra.mxu0 0.0
      %99 = vmatprep.subr.mxu0 0.0
      %100 = vmatpush1.msra.mxu0 0.0
      %101 = vmatprep.subr.mxu0 0.0
      %102 = vmatpush1.msra.mxu0 0.0
      %103 = vmatprep.subr.mxu0 0.0
      %104 = vmatpush1.msra.mxu0 0.0
      %105 = vmatprep.subr.mxu0 0.0
      %106 = vmatpush1.msra.mxu0 0.0
      %107 = vmatprep.subr.mxu0 0.0
      %108 = vmatpush1.msra.mxu0 0.0
      %109 = vmatprep.subr.mxu0 0.0
      %110 = vmatpush1.msra.mxu0 0.0
      %111 = vmatprep.subr.mxu0 0.0
      %112 = vmatpush1.msra.mxu0 0.0
      %113 = vmatprep.subr.mxu0 0.0
      %114 = vmatpush1.msra.mxu0 0.0
      %115 = vmatprep.subr.mxu0 0.0
      %116 = vmatpush1.msra.mxu0 0.0
      %117 = vmatprep.subr.mxu0 0.0
      %118 = vmatpush1.msra.mxu0 0.0
      %119 = vmatprep.subr.mxu0 0.0
      %120 = vmatpush1.msra.mxu0 0.0
      %121 = vmatprep.subr.mxu0 0.0
      %122 = vmatpush1.msra.mxu0 0.0
      %123 = vmatprep.subr.mxu0 0.0
      %124 = vmatpush1.msra.mxu0 0.0
      %125 = vmatprep.subr.mxu0 0.0
      %126 = vmatpush1.msra.mxu0 0.0
      %127 = vmatprep.subr.mxu0 0.0
      %128 = vmatpush1.msra.mxu0 0.0
      %129 = vmatprep.mubr.f32.mxu0 0.0
      %130 = vmatmul.mubr.f32.gmra.mrb[0].mxu0 %v63
      %v131 = vpop.f32.mrb[0].mxu0
      %v132 = vadd.f32 0.0, %v131
      %v133 = vpop.f32.mrb[0].mxu0
      %134 = vdwg.mxu0
      %v135 = vadd.f32 %v43, %v132
      %v136 = vxor.u32 %v135, 2147483648
      %v137 = vmul.f32 %v136, 1.442695
      %v138 = vpow.pop %v137
      %v139 = vadd.f32 %v138, 1.0
      %v140 = vrcp.pop %v139
      %v141 = vmul.f32 1.0, %v140
      %v142 = vtanh.pop %v135
      %v144 = vlaneseq
      %v145 = vshrl.u32 %v144, 7
      %v146 = vsub.s32 0, %v145
      %v147 = vrot.slane %v60, %v146
      %148 = vrot.lane.b32.xlu0 %v147, 32
      %v149 = vpop.permute.xlu0 %148
      %v151 = vmul.f32 %v141, %v149
      %153 = vrot.lane.b32.xlu0 %v142, 64
      %v154 = vpop.permute.xlu0 %153
      %v156 = vmul.f32 %v141, %v154
      %158 = vrot.lane.b32.xlu0 %v156, 32
      %v159 = vpop.permute.xlu0 %158
      %v161 = vadd.f32 %v151, %v159
      %v162 = vtanh.pop %v161
      %164 = vrot.lane.b32.xlu0 %v162, 64
      %v165 = vpop.permute.xlu0 %164
      %v167 = vmul.f32 %v141, %v165
      %169 = vrot.lane.b32.xlu0 %v167, 32
      %v170 = vpop.permute.xlu0 %169
      %v171 = vsel %vm61, %v170, 0
      %173 = vmatprep.subr.mxu0 0.0
      %174 = vmatpush1.msra.mxu0 %v38
      %175 = vmatprep.subr.mxu0 0.0
      %176 = vmatpush1.msra.mxu0 %v39
      %177 = vmatprep.subr.mxu0 0.0
      %178 = vmatpush1.msra.mxu0 %v40
      %179 = vmatprep.subr.mxu0 0.0
      %180 = vmatpush1.msra.mxu0 %v41
      %181 = vmatprep.subr.mxu0 0.0
      %182 = vmatpush1.msra.mxu0 0.0
      %183 = vmatprep.subr.mxu0 0.0
      %184 = vmatpush1.msra.mxu0 0.0
      %185 = vmatprep.subr.mxu0 0.0
      %186 = vmatpush1.msra.mxu0 0.0
      %187 = vmatprep.subr.mxu0 0.0
      %188 = vmatpush1.msra.mxu0 0.0
      %189 = vmatprep.subr.mxu0 0.0
      %190 = vmatpush1.msra.mxu0 0.0
      %191 = vmatprep.subr.mxu0 0.0
      %192 = vmatpush1.msra.mxu0 0.0
      %193 = vmatprep.subr.mxu0 0.0
      %194 = vmatpush1.msra.mxu0 0.0
      %195 = vmatprep.subr.mxu0 0.0
      %196 = vmatpush1.msra.mxu0 0.0
      %197 = vmatprep.subr.mxu0 0.0
      %198 = vmatpush1.msra.mxu0 0.0
      %199 = vmatprep.subr.mxu0 0.0
      %200 = vmatpush1.msra.mxu0 0.0
      %201 = vmatprep.subr.mxu0 0.0
      %202 = vmatpush1.msra.mxu0 0.0
      %203 = vmatprep.subr.mxu0 0.0
      %204 = vmatpush1.msra.mxu0 0.0
      %205 = vmatprep.subr.mxu0 0.0
      %206 = vmatpush1.msra.mxu0 0.0
      %207 = vmatprep.subr.mxu0 0.0
      %208 = vmatpush1.msra.mxu0 0.0
      %209 = vmatprep.subr.mxu0 0.0
      %210 = vmatpush1.msra.mxu0 0.0
      %211 = vmatprep.subr.mxu0 0.0
      %212 = vmatpush1.msra.mxu0 0.0
      %213 = vmatprep.subr.mxu0 0.0
      %214 = vmatpush1.msra.mxu0 0.0
      %215 = vmatprep.subr.mxu0 0.0
      %216 = vmatpush1.msra.mxu0 0.0
      %217 = vmatprep.subr.mxu0 0.0
      %218 = vmatpush1.msra.mxu0 0.0
      %219 = vmatprep.subr.mxu0 0.0
      %220 = vmatpush1.msra.mxu0 0.0
      %221 = vmatprep.subr.mxu0 0.0
      %222 = vmatpush1.msra.mxu0 0.0
      %223 = vmatprep.subr.mxu0 0.0
      %224 = vmatpush1.msra.mxu0 0.0
      %225 = vmatprep.subr.mxu0 0.0
      %226 = vmatpush1.msra.mxu0 0.0
      %227 = vmatprep.subr.mxu0 0.0
      %228 = vmatpush1.msra.mxu0 0.0
      %229 = vmatprep.subr.mxu0 0.0
      %230 = vmatpush1.msra.mxu0 0.0
      %231 = vmatprep.subr.mxu0 0.0
      %232 = vmatpush1.msra.mxu0 0.0
      %233 = vmatprep.subr.mxu0 0.0
      %234 = vmatpush1.msra.mxu0 0.0
      %235 = vmatprep.subr.mxu0 0.0
      %236 = vmatpush1.msra.mxu0 0.0
      %237 = vmatprep.mubr.f32.mxu0 0.0
      %238 = vmatmul.mubr.f32.gmra.mrb[0].mxu0 %v171
      %v239 = vpop.f32.mrb[0].mxu0
      %v240 = vadd.f32 %v42, %v239
      %v241 = vpop.f32.mrb[0].mxu0
      %242 = vdwg.mxu0
      %243 = vst [vmem:[%s4] sm:$0x1] %v240
      %245 = vst.msk [vmem:[#allocation2] sm:$0x1] %vm47, %v170
      %247 = vrot.lane.b32.xlu0 %v161, 96
      %v248 = vpop.permute.xlu0 %247
      %250 = vst.msk [vmem:[#allocation3] sm:$0x1] %vm47, %v248
      %251 = vrot.lane.b32.xlu0 %v240, 127
      %v252 = vpop.permute.xlu0 %251
      %s253 = vtos %v252
      %s254 = vtos %v240
      %p255 = scmp.gt.f32.partialorder %s253, %s254
      %s256 = scalar_select %p255, 1, 0
      %257 = sst [smem:[%s50]] %s256
      %258 = sst [smem:[%s52]] 1
    $region25: #{lstm_reinforce_forward.1} parent=1 // pred_fallthru
      _
    %s259 = sld [smem:[#allocation4]]
    %p260 = scmp.eq.s32.totalorder %s259, 0
    // Predicated region
    $region26: #{lstm_reinforce_forward.1} parent=1 // pred_check
      %p261 = pneg %p260
    $region27: #{lstm_reinforce_forward.1} parent=1 // pred_check_branch
      %263 = sbr.rel (%p261) target = $region29
    $region28: #{lstm_reinforce_forward.1} parent=1 // pred_region
      %v264 = vld [vmem:[#allocation2] sm:$0x1]
      %v265 = vld [vmem:[#allocation3] sm:$0x1]
      %vm266 = vcmask 261120
      %v268 = vsel %vm266, %v264, 0
      %270 = vmatprep.subr.mxu0 0.0
      %271 = vmatpush1.msra.mxu0 %v34
      %272 = vmatprep.subr.mxu0 0.0
      %273 = vmatpush1.msra.mxu0 %v35
      %274 = vmatprep.subr.mxu0 0.0
      %275 = vmatpush1.msra.mxu0 %v36
      %276 = vmatprep.subr.mxu0 0.0
      %277 = vmatpush1.msra.mxu0 %v37
      %278 = vmatprep.subr.mxu0 0.0
      %279 = vmatpush1.msra.mxu0 0.0
      %280 = vmatprep.subr.mxu0 0.0
      %281 = vmatpush1.msra.mxu0 0.0
      %282 = vmatprep.subr.mxu0 0.0
      %283 = vmatpush1.msra.mxu0 0.0
      %284 = vmatprep.subr.mxu0 0.0
      %285 = vmatpush1.msra.mxu0 0.0
      %286 = vmatprep.subr.mxu0 0.0
      %287 = vmatpush1.msra.mxu0 0.0
      %288 = vmatprep.subr.mxu0 0.0
      %289 = vmatpush1.msra.mxu0 0.0
      %290 = vmatprep.subr.mxu0 0.0
      %291 = vmatpush1.msra.mxu0 0.0
      %292 = vmatprep.subr.mxu0 0.0
      %293 = vmatpush1.msra.mxu0 0.0
      %294 = vmatprep.subr.mxu0 0.0
      %295 = vmatpush1.msra.mxu0 0.0
      %296 = vmatprep.subr.mxu0 0.0
      %297 = vmatpush1.msra.mxu0 0.0
      %298 = vmatprep.subr.mxu0 0.0
      %299 = vmatpush1.msra.mxu0 0.0
      %300 = vmatprep.subr.mxu0 0.0
      %301 = vmatpush1.msra.mxu0 0.0
      %302 = vmatprep.subr.mxu0 0.0
      %303 = vmatpush1.msra.mxu0 0.0
      %304 = vmatprep.subr.mxu0 0.0
      %305 = vmatpush1.msra.mxu0 0.0
      %306 = vmatprep.subr.mxu0 0.0
      %307 = vmatpush1.msra.mxu0 0.0
      %308 = vmatprep.subr.mxu0 0.0
      %309 = vmatpush1.msra.mxu0 0.0
      %310 = vmatprep.subr.mxu0 0.0
      %311 = vmatpush1.msra.mxu0 0.0
      %312 = vmatprep.subr.mxu0 0.0
      %313 = vmatpush1.msra.mxu0 0.0
      %314 = vmatprep.subr.mxu0 0.0
      %315 = vmatpush1.msra.mxu0 0.0
      %316 = vmatprep.subr.mxu0 0.0
      %317 = vmatpush1.msra.mxu0 0.0
      %318 = vmatprep.subr.mxu0 0.0
      %319 = vmatpush1.msra.mxu0 0.0
      %320 = vmatprep.subr.mxu0 0.0
      %321 = vmatpush1.msra.mxu0 0.0
      %322 = vmatprep.subr.mxu0 0.0
      %323 = vmatpush1.msra.mxu0 0.0
      %324 = vmatprep.subr.mxu0 0.0
      %325 = vmatpush1.msra.mxu0 0.0
      %326 = vmatprep.subr.mxu0 0.0
      %327 = vmatpush1.msra.mxu0 0.0
      %328 = vmatprep.subr.mxu0 0.0
      %329 = vmatpush1.msra.mxu0 0.0
      %330 = vmatprep.subr.mxu0 0.0
      %331 = vmatpush1.msra.mxu0 0.0
      %332 = vmatprep.subr.mxu0 0.0
      %333 = vmatpush1.msra.mxu0 0.0
      %334 = vmatprep.mubr.f32.mxu0 0.0
      %335 = vmatmul.mubr.f32.gmra.mrb[0].mxu0 %v268
      %v336 = vpop.f32.mrb[0].mxu0
      %v337 = vadd.f32 0.0, %v336
      %v338 = vpop.f32.mrb[0].mxu0
      %339 = vdwg.mxu0
      %v341 = vrot.slane %v337, 7
      %v343 = vadd.f32 %v43, %v341
      %v344 = vxor.u32 %v343, 2147483648
      %v345 = vmul.f32 %v344, 1.442695
      %v346 = vpow.pop %v345
      %v347 = vadd.f32 %v346, 1.0
      %v348 = vrcp.pop %v347
      %v349 = vmul.f32 1.0, %v348
      %v350 = vtanh.pop %v343
      %v352 = vlaneseq
      %v353 = vshrl.u32 %v352, 7
      %v354 = vsub.s32 0, %v353
      %v355 = vrot.slane %v265, %v354
      %356 = vrot.lane.b32.xlu0 %v355, 32
      %v357 = vpop.permute.xlu0 %356
      %v359 = vmul.f32 %v349, %v357
      %361 = vrot.lane.b32.xlu0 %v350, 64
      %v362 = vpop.permute.xlu0 %361
      %v364 = vmul.f32 %v349, %v362
      %366 = vrot.lane.b32.xlu0 %v364, 32
      %v367 = vpop.permute.xlu0 %366
      %v369 = vadd.f32 %v359, %v367
      %v370 = vtanh.pop %v369
      %372 = vrot.lane.b32.xlu0 %v370, 64
      %v373 = vpop.permute.xlu0 %372
      %v375 = vmul.f32 %v349, %v373
      %v377 = vrot.slane %v375, 1
      %378 = vrot.lane.b32.xlu0 %v377, 32
      %v379 = vpop.permute.xlu0 %378
      %v380 = vsel %vm266, %v379, 0
      %382 = vmatprep.subr.mxu0 0.0
      %383 = vmatpush1.msra.mxu0 %v38
      %384 = vmatprep.subr.mxu0 0.0
      %385 = vmatpush1.msra.mxu0 %v39
      %386 = vmatprep.subr.mxu0 0.0
      %387 = vmatpush1.msra.mxu0 %v40
      %388 = vmatprep.subr.mxu0 0.0
      %389 = vmatpush1.msra.mxu0 %v41
      %390 = vmatprep.subr.mxu0 0.0
      %391 = vmatpush1.msra.mxu0 0.0
      %392 = vmatprep.subr.mxu0 0.0
      %393 = vmatpush1.msra.mxu0 0.0
      %394 = vmatprep.subr.mxu0 0.0
      %395 = vmatpush1.msra.mxu0 0.0
      %396 = vmatprep.subr.mxu0 0.0
      %397 = vmatpush1.msra.mxu0 0.0
      %398 = vmatprep.subr.mxu0 0.0
      %399 = vmatpush1.msra.mxu0 0.0
      %400 = vmatprep.subr.mxu0 0.0
      %401 = vmatpush1.msra.mxu0 0.0
      %402 = vmatprep.subr.mxu0 0.0
      %403 = vmatpush1.msra.mxu0 0.0
      %404 = vmatprep.subr.mxu0 0.0
      %405 = vmatpush1.msra.mxu0 0.0
      %406 = vmatprep.subr.mxu0 0.0
      %407 = vmatpush1.msra.mxu0 0.0
      %408 = vmatprep.subr.mxu0 0.0
      %409 = vmatpush1.msra.mxu0 0.0
      %410 = vmatprep.subr.mxu0 0.0
      %411 = vmatpush1.msra.mxu0 0.0
      %412 = vmatprep.subr.mxu0 0.0
      %413 = vmatpush1.msra.mxu0 0.0
      %414 = vmatprep.subr.mxu0 0.0
      %415 = vmatpush1.msra.mxu0 0.0
      %416 = vmatprep.subr.mxu0 0.0
      %417 = vmatpush1.msra.mxu0 0.0
      %418 = vmatprep.subr.mxu0 0.0
      %419 = vmatpush1.msra.mxu0 0.0
      %420 = vmatprep.subr.mxu0 0.0
      %421 = vmatpush1.msra.mxu0 0.0
      %422 = vmatprep.subr.mxu0 0.0
      %423 = vmatpush1.msra.mxu0 0.0
      %424 = vmatprep.subr.mxu0 0.0
      %425 = vmatpush1.msra.mxu0 0.0
      %426 = vmatprep.subr.mxu0 0.0
      %427 = vmatpush1.msra.mxu0 0.0
      %428 = vmatprep.subr.mxu0 0.0
      %429 = vmatpush1.msra.mxu0 0.0
      %430 = vmatprep.subr.mxu0 0.0
      %431 = vmatpush1.msra.mxu0 0.0
      %432 = vmatprep.subr.mxu0 0.0
      %433 = vmatpush1.msra.mxu0 0.0
      %434 = vmatprep.subr.mxu0 0.0
      %435 = vmatpush1.msra.mxu0 0.0
      %436 = vmatprep.subr.mxu0 0.0
      %437 = vmatpush1.msra.mxu0 0.0
      %438 = vmatprep.subr.mxu0 0.0
      %439 = vmatpush1.msra.mxu0 0.0
      %440 = vmatprep.subr.mxu0 0.0
      %441 = vmatpush1.msra.mxu0 0.0
      %442 = vmatprep.subr.mxu0 0.0
      %443 = vmatpush1.msra.mxu0 0.0
      %444 = vmatprep.subr.mxu0 0.0
      %445 = vmatpush1.msra.mxu0 0.0
      %446 = vmatprep.mubr.f32.mxu0 0.0
      %447 = vmatmul.mubr.f32.gmra.mrb[0].mxu0 %v380
      %v448 = vpop.f32.mrb[0].mxu0
      %v449 = vadd.f32 %v42, %v448
      %v450 = vpop.f32.mrb[0].mxu0
      %451 = vdwg.mxu0
      %452 = vst [vmem:[%s4 + $0x1] sm:$0x1] %v449
      %453 = vrot.lane.b32.xlu0 %v375, 32
      %v454 = vpop.permute.xlu0 %453
      %vm456 = vcmask 254977
      %457 = vst.msk [vmem:[#allocation2 - $0x1] sm:$0x2] %vm456, %v454
      %459 = vrot.lane.b32.xlu0 %v369, 96
      %v460 = vpop.permute.xlu0 %459
      %462 = vst.msk [vmem:[#allocation3 - $0x1] sm:$0x2] %vm456, %v460
      %463 = vrot.lane.b32.xlu0 %v449, 127
      %v464 = vpop.permute.xlu0 %463
      %s465 = vtos %v464
      %s466 = vtos %v449
      %p467 = scmp.gt.f32.partialorder %s465, %s466
      %s468 = scalar_select %p467, 1, 0
      %469 = sst [smem:[%s50]] %s468
      %470 = sst [smem:[%s52]] 2
    $region29: #{lstm_reinforce_forward.1} parent=1 // pred_fallthru
      _
    %s471 = sld [smem:[#allocation4]]
    %p472 = scmp.eq.s32.totalorder %s471, 0
    // Predicated region
    $region30: #{lstm_reinforce_forward.1} parent=1 // pred_check
      %p473 = pneg %p472
    $region31: #{lstm_reinforce_forward.1} parent=1 // pred_check_branch
      %475 = sbr.rel (%p473) target = $region33
    $region32: #{lstm_reinforce_forward.1} parent=1 // pred_region
      %v476 = vld [vmem:[#allocation2] sm:$0x1]
      %v477 = vld [vmem:[#allocation3] sm:$0x1]
      %vm478 = vcmask 261120
      %v480 = vsel %vm478, %v476, 0
      %482 = vmatprep.subr.mxu0 0.0
      %483 = vmatpush1.msra.mxu0 %v34
      %484 = vmatprep.subr.mxu0 0.0
      %485 = vmatpush1.msra.mxu0 %v35
      %486 = vmatprep.subr.mxu0 0.0
      %487 = vmatpush1.msra.mxu0 %v36
      %488 = vmatprep.subr.mxu0 0.0
      %489 = vmatpush1.msra.mxu0 %v37
      %490 = vmatprep.subr.mxu0 0.0
      %491 = vmatpush1.msra.mxu0 0.0
      %492 = vmatprep.subr.mxu0 0.0
      %493 = vmatpush1.msra.mxu0 0.0
      %494 = vmatprep.subr.mxu0 0.0
      %495 = vmatpush1.msra.mxu0 0.0
      %496 = vmatprep.subr.mxu0 0.0
      %497 = vmatpush1.msra.mxu0 0.0
      %498 = vmatprep.subr.mxu0 0.0
      %499 = vmatpush1.msra.mxu0 0.0
      %500 = vmatprep.subr.mxu0 0.0
      %501 = vmatpush1.msra.mxu0 0.0
      %502 = vmatprep.subr.mxu0 0.0
      %503 = vmatpush1.msra.mxu0 0.0
      %504 = vmatprep.subr.mxu0 0.0
      %505 = vmatpush1.msra.mxu0 0.0
      %506 = vmatprep.subr.mxu0 0.0
      %507 = vmatpush1.msra.mxu0 0.0
      %508 = vmatprep.subr.mxu0 0.0
      %509 = vmatpush1.msra.mxu0 0.0
      %510 = vmatprep.subr.mxu0 0.0
      %511 = vmatpush1.msra.mxu0 0.0
      %512 = vmatprep.subr.mxu0 0.0
      %513 = vmatpush1.msra.mxu0 0.0
      %514 = vmatprep.subr.mxu0 0.0
      %515 = vmatpush1.msra.mxu0 0.0
      %516 = vmatprep.subr.mxu0 0.0
      %517 = vmatpush1.msra.mxu0 0.0
      %518 = vmatprep.subr.mxu0 0.0
      %519 = vmatpush1.msra.mxu0 0.0
      %520 = vmatprep.subr.mxu0 0.0
      %521 = vmatpush1.msra.mxu0 0.0
      %522 = vmatprep.subr.mxu0 0.0
      %523 = vmatpush1.msra.mxu0 0.0
      %524 = vmatprep.subr.mxu0 0.0
      %525 = vmatpush1.msra.mxu0 0.0
      %526 = vmatprep.subr.mxu0 0.0
      %527 = vmatpush1.msra.mxu0 0.0
      %528 = vmatprep.subr.mxu0 0.0
      %529 = vmatpush1.msra.mxu0 0.0
      %530 = vmatprep.subr.mxu0 0.0
      %531 = vmatpush1.msra.mxu0 0.0
      %532 = vmatprep.subr.mxu0 0.0
      %533 = vmatpush1.msra.mxu0 0.0
      %534 = vmatprep.subr.mxu0 0.0
      %535 = vmatpush1.msra.mxu0 0.0
      %536 = vmatprep.subr.mxu0 0.0
      %537 = vmatpush1.msra.mxu0 0.0
      %538 = vmatprep.subr.mxu0 0.0
      %539 = vmatpush1.msra.mxu0 0.0
      %540 = vmatprep.subr.mxu0 0.0
      %541 = vmatpush1.msra.mxu0 0.0
      %542 = vmatprep.subr.mxu0 0.0
      %543 = vmatpush1.msra.mxu0 0.0
      %544 = vmatprep.subr.mxu0 0.0
      %545 = vmatpush1.msra.mxu0 0.0
      %546 = vmatprep.mubr.f32.mxu0 0.0
      %547 = vmatmul.mubr.f32.gmra.mrb[0].mxu0 %v480
      %v548 = vpop.f32.mrb[0].mxu0
      %v549 = vadd.f32 0.0, %v548
      %v550 = vpop.f32.mrb[0].mxu0
      %551 = vdwg.mxu0
      %v553 = vrot.slane %v549, 7
      %v555 = vadd.f32 %v43, %v553
      %v556 = vxor.u32 %v555, 2147483648
      %v557 = vmul.f32 %v556, 1.442695
      %v558 = vpow.pop %v557
      %v559 = vadd.f32 %v558, 1.0
      %v560 = vrcp.pop %v559
      %v561 = vmul.f32 1.0, %v560
      %v562 = vtanh.pop %v555
      %v564 = vlaneseq
      %v565 = vshrl.u32 %v564, 7
      %v566 = vsub.s32 0, %v565
      %v567 = vrot.slane %v477, %v566
      %568 = vrot.lane.b32.xlu0 %v567, 32
      %v569 = vpop.permute.xlu0 %568
      %v571 = vmul.f32 %v561, %v569
      %573 = vrot.lane.b32.xlu0 %v562, 64
      %v574 = vpop.permute.xlu0 %573
      %v576 = vmul.f32 %v561, %v574
      %578 = vrot.lane.b32.xlu0 %v576, 32
      %v579 = vpop.permute.xlu0 %578
      %v581 = vadd.f32 %v571, %v579
      %v582 = vtanh.pop %v581
      %584 = vrot.lane.b32.xlu0 %v582, 64
      %v585 = vpop.permute.xlu0 %584
      %v587 = vmul.f32 %v561, %v585
      %v589 = vrot.slane %v587, 1
      %590 = vrot.lane.b32.xlu0 %v589, 32
      %v591 = vpop.permute.xlu0 %590
      %v592 = vsel %vm478, %v591, 0
      %594 = vmatprep.subr.mxu0 0.0
      %595 = vmatpush1.msra.mxu0 %v38
      %596 = vmatprep.subr.mxu0 0.0
      %597 = vmatpush1.msra.mxu0 %v39
      %598 = vmatprep.subr.mxu0 0.0
      %599 = vmatpush1.msra.mxu0 %v40
      %600 = vmatprep.subr.mxu0 0.0
      %601 = vmatpush1.msra.mxu0 %v41
      %602 = vmatprep.subr.mxu0 0.0
      %603 = vmatpush1.msra.mxu0 0.0
      %604 = vmatprep.subr.mxu0 0.0
      %605 = vmatpush1.msra.mxu0 0.0
      %606 = vmatprep.subr.mxu0 0.0
      %607 = vmatpush1.msra.mxu0 0.0
      %608 = vmatprep.subr.mxu0 0.0
      %609 = vmatpush1.msra.mxu0 0.0
      %610 = vmatprep.subr.mxu0 0.0
      %611 = vmatpush1.msra.mxu0 0.0
      %612 = vmatprep.subr.mxu0 0.0
      %613 = vmatpush1.msra.mxu0 0.0
      %614 = vmatprep.subr.mxu0 0.0
      %615 = vmatpush1.msra.mxu0 0.0
      %616 = vmatprep.subr.mxu0 0.0
      %617 = vmatpush1.msra.mxu0 0.0
      %618 = vmatprep.subr.mxu0 0.0
      %619 = vmatpush1.msra.mxu0 0.0
      %620 = vmatprep.subr.mxu0 0.0
      %621 = vmatpush1.msra.mxu0 0.0
      %622 = vmatprep.subr.mxu0 0.0
      %623 = vmatpush1.msra.mxu0 0.0
      %624 = vmatprep.subr.mxu0 0.0
      %625 = vmatpush1.msra.mxu0 0.0
      %626 = vmatprep.subr.mxu0 0.0
      %627 = vmatpush1.msra.mxu0 0.0
      %628 = vmatprep.subr.mxu0 0.0
      %629 = vmatpush1.msra.mxu0 0.0
      %630 = vmatprep.subr.mxu0 0.0
      %631 = vmatpush1.msra.mxu0 0.0
      %632 = vmatprep.subr.mxu0 0.0
      %633 = vmatpush1.msra.mxu0 0.0
      %634 = vmatprep.subr.mxu0 0.0
      %635 = vmatpush1.msra.mxu0 0.0
      %636 = vmatprep.subr.mxu0 0.0
      %637 = vmatpush1.msra.mxu0 0.0
      %638 = vmatprep.subr.mxu0 0.0
      %639 = vmatpush1.msra.mxu0 0.0
      %640 = vmatprep.subr.mxu0 0.0
      %641 = vmatpush1.msra.mxu0 0.0
      %642 = vmatprep.subr.mxu0 0.0
      %643 = vmatpush1.msra.mxu0 0.0
      %644 = vmatprep.subr.mxu0 0.0
      %645 = vmatpush1.msra.mxu0 0.0
      %646 = vmatprep.subr.mxu0 0.0
      %647 = vmatpush1.msra.mxu0 0.0
      %648 = vmatprep.subr.mxu0 0.0
      %649 = vmatpush1.msra.mxu0 0.0
      %650 = vmatprep.subr.mxu0 0.0
      %651 = vmatpush1.msra.mxu0 0.0
      %652 = vmatprep.subr.mxu0 0.0
      %653 = vmatpush1.msra.mxu0 0.0
      %654 = vmatprep.subr.mxu0 0.0
      %655 = vmatpush1.msra.mxu0 0.0
      %656 = vmatprep.subr.mxu0 0.0
      %657 = vmatpush1.msra.mxu0 0.0
      %658 = vmatprep.mubr.f32.mxu0 0.0
      %659 = vmatmul.mubr.f32.gmra.mrb[0].mxu0 %v592
      %v660 = vpop.f32.mrb[0].mxu0
      %v661 = vadd.f32 %v42, %v660
      %v662 = vpop.f32.mrb[0].mxu0
      %663 = vdwg.mxu0
      %664 = vst [vmem:[%s4 + $0x2] sm:$0x1] %v661
      %665 = vrot.lane.b32.xlu0 %v587, 32
      %v666 = vpop.permute.xlu0 %665
      %vm668 = vcmask 254977
      %669 = vst.msk [vmem:[#allocation2 - $0x1] sm:$0x2] %vm668, %v666
      %671 = vrot.lane.b32.xlu0 %v581, 96
      %v672 = vpop.permute.xlu0 %671
      %674 = vst.msk [vmem:[#allocation3 - $0x1] sm:$0x2] %vm668, %v672
      %675 = vrot.lane.b32.xlu0 %v661, 127
      %v676 = vpop.permute.xlu0 %675
      %s677 = vtos %v676
      %s678 = vtos %v661
      %p679 = scmp.gt.f32.partialorder %s677, %s678
      %s680 = scalar_select %p679, 1, 0
      %681 = sst [smem:[%s50]] %s680
      %682 = sst [smem:[%s52]] 3
    $region33: #{lstm_reinforce_forward.1} parent=1 // pred_fallthru
      _
    %s683 = sld [smem:[#allocation4]]
    %p684 = scmp.eq.s32.totalorder %s683, 0
    // Predicated region
    $region34: #{lstm_reinforce_forward.1} parent=1 // pred_check
      %p685 = pneg %p684
    $region35: #{lstm_reinforce_forward.1} parent=1 // pred_check_branch
      %687 = sbr.rel (%p685) target = $region37
    $region36: #{lstm_reinforce_forward.1} parent=1 // pred_region
      %v688 = vld [vmem:[#allocation2] sm:$0x1]
      %v689 = vld [vmem:[#allocation3] sm:$0x1]
      %vm690 = vcmask 261120
      %v692 = vsel %vm690, %v688, 0
      %694 = vmatprep.subr.mxu0 0.0
      %695 = vmatpush1.msra.mxu0 %v34
      %696 = vmatprep.subr.mxu0 0.0
      %697 = vmatpush1.msra.mxu0 %v35
      %698 = vmatprep.subr.mxu0 0.0
      %699 = vmatpush1.msra.mxu0 %v36
      %700 = vmatprep.subr.mxu0 0.0
      %701 = vmatpush1.msra.mxu0 %v37
      %702 = vmatprep.subr.mxu0 0.0
      %703 = vmatpush1.msra.mxu0 0.0
      %704 = vmatprep.subr.mxu0 0.0
      %705 = vmatpush1.msra.mxu0 0.0
      %706 = vmatprep.subr.mxu0 0.0
      %707 = vmatpush1.msra.mxu0 0.0
      %708 = vmatprep.subr.mxu0 0.0
      %709 = vmatpush1.msra.mxu0 0.0
      %710 = vmatprep.subr.mxu0 0.0
      %711 = vmatpush1.msra.mxu0 0.0
      %712 = vmatprep.subr.mxu0 0.0
      %713 = vmatpush1.msra.mxu0 0.0
      %714 = vmatprep.subr.mxu0 0.0
      %715 = vmatpush1.msra.mxu0 0.0
      %716 = vmatprep.subr.mxu0 0.0
      %717 = vmatpush1.msra.mxu0 0.0
      %718 = vmatprep.subr.mxu0 0.0
      %719 = vmatpush1.msra.mxu0 0.0
      %720 = vmatprep.subr.mxu0 0.0
      %721 = vmatpush1.msra.mxu0 0.0
      %722 = vmatprep.subr.mxu0 0.0
      %723 = vmatpush1.msra.mxu0 0.0
      %724 = vmatprep.subr.mxu0 0.0
      %725 = vmatpush1.msra.mxu0 0.0
      %726 = vmatprep.subr.mxu0 0.0
      %727 = vmatpush1.msra.mxu0 0.0
      %728 = vmatprep.subr.mxu0 0.0
      %729 = vmatpush1.msra.mxu0 0.0
      %730 = vmatprep.subr.mxu0 0.0
      %731 = vmatpush1.msra.mxu0 0.0
      %732 = vmatprep.subr.mxu0 0.0
      %733 = vmatpush1.msra.mxu0 0.0
      %734 = vmatprep.subr.mxu0 0.0
      %735 = vmatpush1.msra.mxu0 0.0
      %736 = vmatprep.subr.mxu0 0.0
      %737 = vmatpush1.msra.mxu0 0.0
      %738 = vmatprep.subr.mxu0 0.0
      %739 = vmatpush1.msra.mxu0 0.0
      %740 = vmatprep.subr.mxu0 0.0
      %741 = vmatpush1.msra.mxu0 0.0
      %742 = vmatprep.subr.mxu0 0.0
      %743 = vmatpush1.msra.mxu0 0.0
      %744 = vmatprep.subr.mxu0 0.0
      %745 = vmatpush1.msra.mxu0 0.0
      %746 = vmatprep.subr.mxu0 0.0
      %747 = vmatpush1.msra.mxu0 0.0
      %748 = vmatprep.subr.mxu0 0.0
      %749 = vmatpush1.msra.mxu0 0.0
      %750 = vmatprep.subr.mxu0 0.0
      %751 = vmatpush1.msra.mxu0 0.0
      %752 = vmatprep.subr.mxu0 0.0
      %753 = vmatpush1.msra.mxu0 0.0
      %754 = vmatprep.subr.mxu0 0.0
      %755 = vmatpush1.msra.mxu0 0.0
      %756 = vmatprep.subr.mxu0 0.0
      %757 = vmatpush1.msra.mxu0 0.0
      %758 = vmatprep.mubr.f32.mxu0 0.0
      %759 = vmatmul.mubr.f32.gmra.mrb[0].mxu0 %v692
      %v760 = vpop.f32.mrb[0].mxu0
      %v761 = vadd.f32 0.0, %v760
      %v762 = vpop.f32.mrb[0].mxu0
      %763 = vdwg.mxu0
      %v765 = vrot.slane %v761, 7
      %v767 = vadd.f32 %v43, %v765
      %v768 = vxor.u32 %v767, 2147483648
      %v769 = vmul.f32 %v768, 1.442695
      %v770 = vpow.pop %v769
      %v771 = vadd.f32 %v770, 1.0
      %v772 = vrcp.pop %v771
      %v773 = vmul.f32 1.0, %v772
      %v774 = vtanh.pop %v767
      %v776 = vlaneseq
      %v777 = vshrl.u32 %v776, 7
      %v778 = vsub.s32 0, %v777
      %v779 = vrot.slane %v689, %v778
      %780 = vrot.lane.b32.xlu0 %v779, 32
      %v781 = vpop.permute.xlu0 %780
      %v783 = vmul.f32 %v773, %v781
      %785 = vrot.lane.b32.xlu0 %v774, 64
      %v786 = vpop.permute.xlu0 %785
      %v788 = vmul.f32 %v773, %v786
      %790 = vrot.lane.b32.xlu0 %v788, 32
      %v791 = vpop.permute.xlu0 %790
      %v793 = vadd.f32 %v783, %v791
      %v794 = vtanh.pop %v793
      %796 = vrot.lane.b32.xlu0 %v794, 64
      %v797 = vpop.permute.xlu0 %796
      %v799 = vmul.f32 %v773, %v797
      %v801 = vrot.slane %v799, 1
      %802 = vrot.lane.b32.xlu0 %v801, 32
      %v803 = vpop.permute.xlu0 %802
      %v804 = vsel %vm690, %v803, 0
      %806 = vmatprep.subr.mxu0 0.0
      %807 = vmatpush1.msra.mxu0 %v38
      %808 = vmatprep.subr.mxu0 0.0
      %809 = vmatpush1.msra.mxu0 %v39
      %810 = vmatprep.subr.mxu0 0.0
      %811 = vmatpush1.msra.mxu0 %v40
      %812 = vmatprep.subr.mxu0 0.0
      %813 = vmatpush1.msra.mxu0 %v41
      %814 = vmatprep.subr.mxu0 0.0
      %815 = vmatpush1.msra.mxu0 0.0
      %816 = vmatprep.subr.mxu0 0.0
      %817 = vmatpush1.msra.mxu0 0.0
      %818 = vmatprep.subr.mxu0 0.0
      %819 = vmatpush1.msra.mxu0 0.0
      %820 = vmatprep.subr.mxu0 0.0
      %821 = vmatpush1.msra.mxu0 0.0
      %822 = vmatprep.subr.mxu0 0.0
      %823 = vmatpush1.msra.mxu0 0.0
      %824 = vmatprep.subr.mxu0 0.0
      %825 = vmatpush1.msra.mxu0 0.0
      %826 = vmatprep.subr.mxu0 0.0
      %827 = vmatpush1.msra.mxu0 0.0
      %828 = vmatprep.subr.mxu0 0.0
      %829 = vmatpush1.msra.mxu0 0.0
      %830 = vmatprep.subr.mxu0 0.0
      %831 = vmatpush1.msra.mxu0 0.0
      %832 = vmatprep.subr.mxu0 0.0
      %833 = vmatpush1.msra.mxu0 0.0
      %834 = vmatprep.subr.mxu0 0.0
      %835 = vmatpush1.msra.mxu0 0.0
      %836 = vmatprep.subr.mxu0 0.0
      %837 = vmatpush1.msra.mxu0 0.0
      %838 = vmatprep.subr.mxu0 0.0
      %839 = vmatpush1.msra.mxu0 0.0
      %840 = vmatprep.subr.mxu0 0.0
      %841 = vmatpush1.msra.mxu0 0.0
      %842 = vmatprep.subr.mxu0 0.0
      %843 = vmatpush1.msra.mxu0 0.0
      %844 = vmatprep.subr.mxu0 0.0
      %845 = vmatpush1.msra.mxu0 0.0
      %846 = vmatprep.subr.mxu0 0.0
      %847 = vmatpush1.msra.mxu0 0.0
      %848 = vmatprep.subr.mxu0 0.0
      %849 = vmatpush1.msra.mxu0 0.0
      %850 = vmatprep.subr.mxu0 0.0
      %851 = vmatpush1.msra.mxu0 0.0
      %852 = vmatprep.subr.mxu0 0.0
      %853 = vmatpush1.msra.mxu0 0.0
      %854 = vmatprep.subr.mxu0 0.0
      %855 = vmatpush1.msra.mxu0 0.0
      %856 = vmatprep.subr.mxu0 0.0
      %857 = vmatpush1.msra.mxu0 0.0
      %858 = vmatprep.subr.mxu0 0.0
      %859 = vmatpush1.msra.mxu0 0.0
      %860 = vmatprep.subr.mxu0 0.0
      %861 = vmatpush1.msra.mxu0 0.0
      %862 = vmatprep.subr.mxu0 0.0
      %863 = vmatpush1.msra.mxu0 0.0
      %864 = vmatprep.subr.mxu0 0.0
      %865 = vmatpush1.msra.mxu0 0.0
      %866 = vmatprep.subr.mxu0 0.0
      %867 = vmatpush1.msra.mxu0 0.0
      %868 = vmatprep.subr.mxu0 0.0
      %869 = vmatpush1.msra.mxu0 0.0
      %870 = vmatprep.mubr.f32.mxu0 0.0
      %871 = vmatmul.mubr.f32.gmra.mrb[0].mxu0 %v804
      %v872 = vpop.f32.mrb[0].mxu0
      %v873 = vadd.f32 %v42, %v872
      %v874 = vpop.f32.mrb[0].mxu0
      %875 = vdwg.mxu0
      %876 = vst [vmem:[%s4 + $0x3] sm:$0x1] %v873
      %877 = vrot.lane.b32.xlu0 %v799, 32
      %v878 = vpop.permute.xlu0 %877
      %vm880 = vcmask 254977
      %881 = vst.msk [vmem:[#allocation2 - $0x1] sm:$0x2] %vm880, %v878
      %883 = vrot.lane.b32.xlu0 %v793, 96
      %v884 = vpop.permute.xlu0 %883
      %886 = vst.msk [vmem:[#allocation3 - $0x1] sm:$0x2] %vm880, %v884
      %887 = vrot.lane.b32.xlu0 %v873, 127
      %v888 = vpop.permute.xlu0 %887
      %s889 = vtos %v888
      %s890 = vtos %v873
      %p891 = scmp.gt.f32.partialorder %s889, %s890
      %s892 = scalar_select %p891, 1, 0
      %893 = sst [smem:[%s50]] %s892
      %894 = sst [smem:[%s52]] 4
    $region37: #{lstm_reinforce_forward.1} parent=1 // pred_fallthru
      _
    %s895 = sld [smem:[#allocation4]]
    %p896 = scmp.eq.s32.totalorder %s895, 0
    // Predicated region
    $region38: #{lstm_reinforce_forward.1} parent=1 // pred_check
      %p897 = pneg %p896
    $region39: #{lstm_reinforce_forward.1} parent=1 // pred_check_branch
      %899 = sbr.rel (%p897) target = $region41
    $region40: #{lstm_reinforce_forward.1} parent=1 // pred_region
      %v900 = vld [vmem:[#allocation2] sm:$0x1]
      %v901 = vld [vmem:[#allocation3] sm:$0x1]
      %vm902 = vcmask 261120
      %v904 = vsel %vm902, %v900, 0
      %906 = vmatprep.subr.mxu0 0.0
      %907 = vmatpush1.msra.mxu0 %v34
      %908 = vmatprep.subr.mxu0 0.0
      %909 = vmatpush1.msra.mxu0 %v35
      %910 = vmatprep.subr.mxu0 0.0
      %911 = vmatpush1.msra.mxu0 %v36
      %912 = vmatprep.subr.mxu0 0.0
      %913 = vmatpush1.msra.mxu0 %v37
      %914 = vmatprep.subr.mxu0 0.0
      %915 = vmatpush1.msra.mxu0 0.0
      %916 = vmatprep.subr.mxu0 0.0
      %917 = vmatpush1.msra.mxu0 0.0
      %918 = vmatprep.subr.mxu0 0.0
      %919 = vmatpush1.msra.mxu0 0.0
      %920 = vmatprep.subr.mxu0 0.0
      %921 = vmatpush1.msra.mxu0 0.0
      %922 = vmatprep.subr.mxu0 0.0
      %923 = vmatpush1.msra.mxu0 0.0
      %924 = vmatprep.subr.mxu0 0.0
      %925 = vmatpush1.msra.mxu0 0.0
      %926 = vmatprep.subr.mxu0 0.0
      %927 = vmatpush1.msra.mxu0 0.0
      %928 = vmatprep.subr.mxu0 0.0
      %929 = vmatpush1.msra.mxu0 0.0
      %930 = vmatprep.subr.mxu0 0.0
      %931 = vmatpush1.msra.mxu0 0.0
      %932 = vmatprep.subr.mxu0 0.0
      %933 = vmatpush1.msra.mxu0 0.0
      %934 = vmatprep.subr.mxu0 0.0
      %935 = vmatpush1.msra.mxu0 0.0
      %936 = vmatprep.subr.mxu0 0.0
      %937 = vmatpush1.msra.mxu0 0.0
      %938 = vmatprep.subr.mxu0 0.0
      %939 = vmatpush1.msra.mxu0 0.0
      %940 = vmatprep.subr.mxu0 0.0
      %941 = vmatpush1.msra.mxu0 0.0
      %942 = vmatprep.subr.mxu0 0.0
      %943 = vmatpush1.msra.mxu0 0.0
      %944 = vmatprep.subr.mxu0 0.0
      %945 = vmatpush1.msra.mxu0 0.0
      %946 = vmatprep.subr.mxu0 0.0
      %947 = vmatpush1.msra.mxu0 0.0
      %948 = vmatprep.subr.mxu0 0.0
      %949 = vmatpush1.msra.mxu0 0.0
      %950 = vmatprep.subr.mxu0 0.0
      %951 = vmatpush1.msra.mxu0 0.0
      %952 = vmatprep.subr.mxu0 0.0
      %953 = vmatpush1.msra.mxu0 0.0
      %954 = vmatprep.subr.mxu0 0.0
      %955 = vmatpush1.msra.mxu0 0.0
      %956 = vmatprep.subr.mxu0 0.0
      %957 = vmatpush1.msra.mxu0 0.0
      %958 = vmatprep.subr.mxu0 0.0
      %959 = vmatpush1.msra.mxu0 0.0
      %960 = vmatprep.subr.mxu0 0.0
      %961 = vmatpush1.msra.mxu0 0.0
      %962 = vmatprep.subr.mxu0 0.0
      %963 = vmatpush1.msra.mxu0 0.0
      %964 = vmatprep.subr.mxu0 0.0
      %965 = vmatpush1.msra.mxu0 0.0
      %966 = vmatprep.subr.mxu0 0.0
      %967 = vmatpush1.msra.mxu0 0.0
      %968 = vmatprep.subr.mxu0 0.0
      %969 = vmatpush1.msra.mxu0 0.0
      %970 = vmatprep.mubr.f32.mxu0 0.0
      %971 = vmatmul.mubr.f32.gmra.mrb[0].mxu0 %v904
      %v972 = vpop.f32.mrb[0].mxu0
      %v973 = vadd.f32 0.0, %v972
      %v974 = vpop.f32.mrb[0].mxu0
      %975 = vdwg.mxu0
      %v977 = vrot.slane %v973, 7
      %v979 = vadd.f32 %v43, %v977
      %v980 = vxor.u32 %v979, 2147483648
      %v981 = vmul.f32 %v980, 1.442695
      %v982 = vpow.pop %v981
      %v983 = vadd.f32 %v982, 1.0
      %v984 = vrcp.pop %v983
      %v985 = vmul.f32 1.0, %v984
      %v986 = vtanh.pop %v979
      %v988 = vlaneseq
      %v989 = vshrl.u32 %v988, 7
      %v990 = vsub.s32 0, %v989
      %v991 = vrot.slane %v901, %v990
      %992 = vrot.lane.b32.xlu0 %v991, 32
      %v993 = vpop.permute.xlu0 %992
      %v995 = vmul.f32 %v985, %v993
      %997 = vrot.lane.b32.xlu0 %v986, 64
      %v998 = vpop.permute.xlu0 %997
      %v1000 = vmul.f32 %v985, %v998
      %1002 = vrot.lane.b32.xlu0 %v1000, 32
      %v1003 = vpop.permute.xlu0 %1002
      %v1005 = vadd.f32 %v995, %v1003
      %v1006 = vtanh.pop %v1005
      %1008 = vrot.lane.b32.xlu0 %v1006, 64
      %v1009 = vpop.permute.xlu0 %1008
      %v1011 = vmul.f32 %v985, %v1009
      %v1013 = vrot.slane %v1011, 1
      %1014 = vrot.lane.b32.xlu0 %v1013, 32
      %v1015 = vpop.permute.xlu0 %1014
      %v1016 = vsel %vm902, %v1015, 0
      %1018 = vmatprep.subr.mxu0 0.0
      %1019 = vmatpush1.msra.mxu0 %v38
      %1020 = vmatprep.subr.mxu0 0.0
      %1021 = vmatpush1.msra.mxu0 %v39
      %1022 = vmatprep.subr.mxu0 0.0
      %1023 = vmatpush1.msra.mxu0 %v40
      %1024 = vmatprep.subr.mxu0 0.0
      %1025 = vmatpush1.msra.mxu0 %v41
      %1026 = vmatprep.subr.mxu0 0.0
      %1027 = vmatpush1.msra.mxu0 0.0
      %1028 = vmatprep.subr.mxu0 0.0
      %1029 = vmatpush1.msra.mxu0 0.0
      %1030 = vmatprep.subr.mxu0 0.0
      %1031 = vmatpush1.msra.mxu0 0.0
      %1032 = vmatprep.subr.mxu0 0.0
      %1033 = vmatpush1.msra.mxu0 0.0
      %1034 = vmatprep.subr.mxu0 0.0
      %1035 = vmatpush1.msra.mxu0 0.0
      %1036 = vmatprep.subr.mxu0 0.0
      %1037 = vmatpush1.msra.mxu0 0.0
      %1038 = vmatprep.subr.mxu0 0.0
      %1039 = vmatpush1.msra.mxu0 0.0
      %1040 = vmatprep.subr.mxu0 0.0
      %1041 = vmatpush1.msra.mxu0 0.0
      %1042 = vmatprep.subr.mxu0 0.0
      %1043 = vmatpush1.msra.mxu0 0.0
      %1044 = vmatprep.subr.mxu0 0.0
      %1045 = vmatpush1.msra.mxu0 0.0
      %1046 = vmatprep.subr.mxu0 0.0
      %1047 = vmatpush1.msra.mxu0 0.0
      %1048 = vmatprep.subr.mxu0 0.0
      %1049 = vmatpush1.msra.mxu0 0.0
      %1050 = vmatprep.subr.mxu0 0.0
      %1051 = vmatpush1.msra.mxu0 0.0
      %1052 = vmatprep.subr.mxu0 0.0
      %1053 = vmatpush1.msra.mxu0 0.0
      %1054 = vmatprep.subr.mxu0 0.0
      %1055 = vmatpush1.msra.mxu0 0.0
      %1056 = vmatprep.subr.mxu0 0.0
      %1057 = vmatpush1.msra.mxu0 0.0
      %1058 = vmatprep.subr.mxu0 0.0
      %1059 = vmatpush1.msra.mxu0 0.0
      %1060 = vmatprep.subr.mxu0 0.0
      %1061 = vmatpush1.msra.mxu0 0.0
      %1062 = vmatprep.subr.mxu0 0.0
      %1063 = vmatpush1.msra.mxu0 0.0
      %1064 = vmatprep.subr.mxu0 0.0
      %1065 = vmatpush1.msra.mxu0 0.0
      %1066 = vmatprep.subr.mxu0 0.0
      %1067 = vmatpush1.msra.mxu0 0.0
      %1068 = vmatprep.subr.mxu0 0.0
      %1069 = vmatpush1.msra.mxu0 0.0
      %1070 = vmatprep.subr.mxu0 0.0
      %1071 = vmatpush1.msra.mxu0 0.0
      %1072 = vmatprep.subr.mxu0 0.0
      %1073 = vmatpush1.msra.mxu0 0.0
      %1074 = vmatprep.subr.mxu0 0.0
      %1075 = vmatpush1.msra.mxu0 0.0
      %1076 = vmatprep.subr.mxu0 0.0
      %1077 = vmatpush1.msra.mxu0 0.0
      %1078 = vmatprep.subr.mxu0 0.0
      %1079 = vmatpush1.msra.mxu0 0.0
      %1080 = vmatprep.subr.mxu0 0.0
      %1081 = vmatpush1.msra.mxu0 0.0
      %1082 = vmatprep.mubr.f32.mxu0 0.0
      %1083 = vmatmul.mubr.f32.gmra.mrb[0].mxu0 %v1016
      %v1084 = vpop.f32.mrb[0].mxu0
      %v1085 = vadd.f32 %v42, %v1084
      %v1086 = vpop.f32.mrb[0].mxu0
      %1087 = vdwg.mxu0
      %1088 = vst [vmem:[%s4 + $0x4] sm:$0x1] %v1085
      %1089 = vrot.lane.b32.xlu0 %v1011, 32
      %v1090 = vpop.permute.xlu0 %1089
      %vm1092 = vcmask 254977
      %1093 = vst.msk [vmem:[#allocation2 - $0x1] sm:$0x2] %vm1092, %v1090
      %1095 = vrot.lane.b32.xlu0 %v1005, 96
      %v1096 = vpop.permute.xlu0 %1095
      %1098 = vst.msk [vmem:[#allocation3 - $0x1] sm:$0x2] %vm1092, %v1096
      %1099 = vrot.lane.b32.xlu0 %v1085, 127
      %v1100 = vpop.permute.xlu0 %1099
      %s1101 = vtos %v1100
      %s1102 = vtos %v1085
      %p1103 = scmp.gt.f32.partialorder %s1101, %s1102
      %s1104 = scalar_select %p1103, 1, 0
      %1105 = sst [smem:[%s50]] %s1104
      %1106 = sst [smem:[%s52]] 5
    $region41: #{lstm_reinforce_forward.1} parent=1 // pred_fallthru
      _
    %s1107 = sld [smem:[#allocation4]]
    %p1108 = scmp.eq.s32.totalorder %s1107, 0
    // Predicated region
    $region42: #{lstm_reinforce_forward.1} parent=1 // pred_check
      %p1109 = pneg %p1108
    $region43: #{lstm_reinforce_forward.1} parent=1 // pred_check_branch
      %1111 = sbr.rel (%p1109) target = $region45
    $region44: #{lstm_reinforce_forward.1} parent=1 // pred_region
      %v1112 = vld [vmem:[#allocation2] sm:$0x1]
      %v1113 = vld [vmem:[#allocation3] sm:$0x1]
      %vm1114 = vcmask 261120
      %v1116 = vsel %vm1114, %v1112, 0
      %1118 = vmatprep.subr.mxu0 0.0
      %1119 = vmatpush1.msra.mxu0 %v34
      %1120 = vmatprep.subr.mxu0 0.0
      %1121 = vmatpush1.msra.mxu0 %v35
      %1122 = vmatprep.subr.mxu0 0.0
      %1123 = vmatpush1.msra.mxu0 %v36
      %1124 = vmatprep.subr.mxu0 0.0
      %1125 = vmatpush1.msra.mxu0 %v37
      %1126 = vmatprep.subr.mxu0 0.0
      %1127 = vmatpush1.msra.mxu0 0.0
      %1128 = vmatprep.subr.mxu0 0.0
      %1129 = vmatpush1.msra.mxu0 0.0
      %1130 = vmatprep.subr.mxu0 0.0
      %1131 = vmatpush1.msra.mxu0 0.0
      %1132 = vmatprep.subr.mxu0 0.0
      %1133 = vmatpush1.msra.mxu0 0.0
      %1134 = vmatprep.subr.mxu0 0.0
      %1135 = vmatpush1.msra.mxu0 0.0
      %1136 = vmatprep.subr.mxu0 0.0
      %1137 = vmatpush1.msra.mxu0 0.0
      %1138 = vmatprep.subr.mxu0 0.0
      %1139 = vmatpush1.msra.mxu0 0.0
      %1140 = vmatprep.subr.mxu0 0.0
      %1141 = vmatpush1.msra.mxu0 0.0
      %1142 = vmatprep.subr.mxu0 0.0
      %1143 = vmatpush1.msra.mxu0 0.0
      %1144 = vmatprep.subr.mxu0 0.0
      %1145 = vmatpush1.msra.mxu0 0.0
      %1146 = vmatprep.subr.mxu0 0.0
      %1147 = vmatpush1.msra.mxu0 0.0
      %1148 = vmatprep.subr.mxu0 0.0
      %1149 = vmatpush1.msra.mxu0 0.0
      %1150 = vmatprep.subr.mxu0 0.0
      %1151 = vmatpush1.msra.mxu0 0.0
      %1152 = vmatprep.subr.mxu0 0.0
      %1153 = vmatpush1.msra.mxu0 0.0
      %1154 = vmatprep.subr.mxu0 0.0
      %1155 = vmatpush1.msra.mxu0 0.0
      %1156 = vmatprep.subr.mxu0 0.0
      %1157 = vmatpush1.msra.mxu0 0.0
      %1158 = vmatprep.subr.mxu0 0.0
      %1159 = vmatpush1.msra.mxu0 0.0
      %1160 = vmatprep.subr.mxu0 0.0
      %1161 = vmatpush1.msra.mxu0 0.0
      %1162 = vmatprep.subr.mxu0 0.0
      %1163 = vmatpush1.msra.mxu0 0.0
      %1164 = vmatprep.subr.mxu0 0.0
      %1165 = vmatpush1.msra.mxu0 0.0
      %1166 = vmatprep.subr.mxu0 0.0
      %1167 = vmatpush1.msra.mxu0 0.0
      %1168 = vmatprep.subr.mxu0 0.0
      %1169 = vmatpush1.msra.mxu0 0.0
      %1170 = vmatprep.subr.mxu0 0.0
      %1171 = vmatpush1.msra.mxu0 0.0
      %1172 = vmatprep.subr.mxu0 0.0
      %1173 = vmatpush1.msra.mxu0 0.0
      %1174 = vmatprep.subr.mxu0 0.0
      %1175 = vmatpush1.msra.mxu0 0.0
      %1176 = vmatprep.subr.mxu0 0.0
      %1177 = vmatpush1.msra.mxu0 0.0
      %1178 = vmatprep.subr.mxu0 0.0
      %1179 = vmatpush1.msra.mxu0 0.0
      %1180 = vmatprep.subr.mxu0 0.0
      %1181 = vmatpush1.msra.mxu0 0.0
      %1182 = vmatprep.mubr.f32.mxu0 0.0
      %1183 = vmatmul.mubr.f32.gmra.mrb[0].mxu0 %v1116
      %v1184 = vpop.f32.mrb[0].mxu0
      %v1185 = vadd.f32 0.0, %v1184
      %v1186 = vpop.f32.mrb[0].mxu0
      %1187 = vdwg.mxu0
      %v1189 = vrot.slane %v1185, 7
      %v1191 = vadd.f32 %v43, %v1189
      %v1192 = vxor.u32 %v1191, 2147483648
      %v1193 = vmul.f32 %v1192, 1.442695
      %v1194 = vpow.pop %v1193
      %v1195 = vadd.f32 %v1194, 1.0
      %v1196 = vrcp.pop %v1195
      %v1197 = vmul.f32 1.0, %v1196
      %v1198 = vtanh.pop %v1191
      %v1200 = vlaneseq
      %v1201 = vshrl.u32 %v1200, 7
      %v1202 = vsub.s32 0, %v1201
      %v1203 = vrot.slane %v1113, %v1202
      %1204 = vrot.lane.b32.xlu0 %v1203, 32
      %v1205 = vpop.permute.xlu0 %1204
      %v1207 = vmul.f32 %v1197, %v1205
      %1209 = vrot.lane.b32.xlu0 %v1198, 64
      %v1210 = vpop.permute.xlu0 %1209
      %v1212 = vmul.f32 %v1197, %v1210
      %1214 = vrot.lane.b32.xlu0 %v1212, 32
      %v1215 = vpop.permute.xlu0 %1214
      %v1217 = vadd.f32 %v1207, %v1215
      %v1218 = vtanh.pop %v1217
      %1220 = vrot.lane.b32.xlu0 %v1218, 64
      %v1221 = vpop.permute.xlu0 %1220
      %v1223 = vmul.f32 %v1197, %v1221
      %v1225 = vrot.slane %v1223, 1
      %1226 = vrot.lane.b32.xlu0 %v1225, 32
      %v1227 = vpop.permute.xlu0 %1226
      %v1228 = vsel %vm1114, %v1227, 0
      %1230 = vmatprep.subr.mxu0 0.0
      %1231 = vmatpush1.msra.mxu0 %v38
      %1232 = vmatprep.subr.mxu0 0.0
      %1233 = vmatpush1.msra.mxu0 %v39
      %1234 = vmatprep.subr.mxu0 0.0
      %1235 = vmatpush1.msra.mxu0 %v40
      %1236 = vmatprep.subr.mxu0 0.0
      %1237 = vmatpush1.msra.mxu0 %v41
      %1238 = vmatprep.subr.mxu0 0.0
      %1239 = vmatpush1.msra.mxu0 0.0
      %1240 = vmatprep.subr.mxu0 0.0
      %1241 = vmatpush1.msra.mxu0 0.0
      %1242 = vmatprep.subr.mxu0 0.0
      %1243 = vmatpush1.msra.mxu0 0.0
      %1244 = vmatprep.subr.mxu0 0.0
      %1245 = vmatpush1.msra.mxu0 0.0
      %1246 = vmatprep.subr.mxu0 0.0
      %1247 = vmatpush1.msra.mxu0 0.0
      %1248 = vmatprep.subr.mxu0 0.0
      %1249 = vmatpush1.msra.mxu0 0.0
      %1250 = vmatprep.subr.mxu0 0.0
      %1251 = vmatpush1.msra.mxu0 0.0
      %1252 = vmatprep.subr.mxu0 0.0
      %1253 = vmatpush1.msra.mxu0 0.0
      %1254 = vmatprep.subr.mxu0 0.0
      %1255 = vmatpush1.msra.mxu0 0.0
      %1256 = vmatprep.subr.mxu0 0.0
      %1257 = vmatpush1.msra.mxu0 0.0
      %1258 = vmatprep.subr.mxu0 0.0
      %1259 = vmatpush1.msra.mxu0 0.0
      %1260 = vmatprep.subr.mxu0 0.0
      %1261 = vmatpush1.msra.mxu0 0.0
      %1262 = vmatprep.subr.mxu0 0.0
      %1263 = vmatpush1.msra.mxu0 0.0
      %1264 = vmatprep.subr.mxu0 0.0
      %1265 = vmatpush1.msra.mxu0 0.0
      %1266 = vmatprep.subr.mxu0 0.0
      %1267 = vmatpush1.msra.mxu0 0.0
      %1268 = vmatprep.subr.mxu0 0.0
      %1269 = vmatpush1.msra.mxu0 0.0
      %1270 = vmatprep.subr.mxu0 0.0
      %1271 = vmatpush1.msra.mxu0 0.0
      %1272 = vmatprep.subr.mxu0 0.0
      %1273 = vmatpush1.msra.mxu0 0.0
      %1274 = vmatprep.subr.mxu0 0.0
      %1275 = vmatpush1.msra.mxu0 0.0
      %1276 = vmatprep.subr.mxu0 0.0
      %1277 = vmatpush1.msra.mxu0 0.0
      %1278 = vmatprep.subr.mxu0 0.0
      %1279 = vmatpush1.msra.mxu0 0.0
      %1280 = vmatprep.subr.mxu0 0.0
      %1281 = vmatpush1.msra.mxu0 0.0
      %1282 = vmatprep.subr.mxu0 0.0
      %1283 = vmatpush1.msra.mxu0 0.0
      %1284 = vmatprep.subr.mxu0 0.0
      %1285 = vmatpush1.msra.mxu0 0.0
      %1286 = vmatprep.subr.mxu0 0.0
      %1287 = vmatpush1.msra.mxu0 0.0
      %1288 = vmatprep.subr.mxu0 0.0
      %1289 = vmatpush1.msra.mxu0 0.0
      %1290 = vmatprep.subr.mxu0 0.0
      %1291 = vmatpush1.msra.mxu0 0.0
      %1292 = vmatprep.subr.mxu0 0.0
      %1293 = vmatpush1.msra.mxu0 0.0
      %1294 = vmatprep.mubr.f32.mxu0 0.0
      %1295 = vmatmul.mubr.f32.gmra.mrb[0].mxu0 %v1228
      %v1296 = vpop.f32.mrb[0].mxu0
      %v1297 = vadd.f32 %v42, %v1296
      %v1298 = vpop.f32.mrb[0].mxu0
      %1299 = vdwg.mxu0
      %1300 = vst [vmem:[%s4 + $0x5] sm:$0x1] %v1297
      %1301 = vrot.lane.b32.xlu0 %v1223, 32
      %v1302 = vpop.permute.xlu0 %1301
      %vm1304 = vcmask 254977
      %1305 = vst.msk [vmem:[#allocation2 - $0x1] sm:$0x2] %vm1304, %v1302
      %1307 = vrot.lane.b32.xlu0 %v1217, 96
      %v1308 = vpop.permute.xlu0 %1307
      %1310 = vst.msk [vmem:[#allocation3 - $0x1] sm:$0x2] %vm1304, %v1308
      %1311 = vrot.lane.b32.xlu0 %v1297, 127
      %v1312 = vpop.permute.xlu0 %1311
      %s1313 = vtos %v1312
      %s1314 = vtos %v1297
      %p1315 = scmp.gt.f32.partialorder %s1313, %s1314
      %s1316 = scalar_select %p1315, 1, 0
      %1317 = sst [smem:[%s50]] %s1316
      %1318 = sst [smem:[%s52]] 6
    $region45: #{lstm_reinforce_forward.1} parent=1 // pred_fallthru
      _
    %s1319 = sld [smem:[#allocation4]]
    %p1320 = scmp.eq.s32.totalorder %s1319, 0
    // Predicated region
    $region46: #{lstm_reinforce_forward.1} parent=1 // pred_check
      %p1321 = pneg %p1320
    $region47: #{lstm_reinforce_forward.1} parent=1 // pred_check_branch
      %1323 = sbr.rel (%p1321) target = $region49
    $region48: #{lstm_reinforce_forward.1} parent=1 // pred_region
      %v1324 = vld [vmem:[#allocation2] sm:$0x1]
      %v1325 = vld [vmem:[#allocation3] sm:$0x1]
      %vm1326 = vcmask 261120
      %v1328 = vsel %vm1326, %v1324, 0
      %1330 = vmatprep.subr.mxu0 0.0
      %1331 = vmatpush1.msra.mxu0 %v34
      %1332 = vmatprep.subr.mxu0 0.0
      %1333 = vmatpush1.msra.mxu0 %v35
      %1334 = vmatprep.subr.mxu0 0.0
      %1335 = vmatpush1.msra.mxu0 %v36
      %1336 = vmatprep.subr.mxu0 0.0
      %1337 = vmatpush1.msra.mxu0 %v37
      %1338 = vmatprep.subr.mxu0 0.0
      %1339 = vmatpush1.msra.mxu0 0.0
      %1340 = vmatprep.subr.mxu0 0.0
      %1341 = vmatpush1.msra.mxu0 0.0
      %1342 = vmatprep.subr.mxu0 0.0
      %1343 = vmatpush1.msra.mxu0 0.0
      %1344 = vmatprep.subr.mxu0 0.0
      %1345 = vmatpush1.msra.mxu0 0.0
      %1346 = vmatprep.subr.mxu0 0.0
      %1347 = vmatpush1.msra.mxu0 0.0
      %1348 = vmatprep.subr.mxu0 0.0
      %1349 = vmatpush1.msra.mxu0 0.0
      %1350 = vmatprep.subr.mxu0 0.0
      %1351 = vmatpush1.msra.mxu0 0.0
      %1352 = vmatprep.subr.mxu0 0.0
      %1353 = vmatpush1.msra.mxu0 0.0
      %1354 = vmatprep.subr.mxu0 0.0
      %1355 = vmatpush1.msra.mxu0 0.0
      %1356 = vmatprep.subr.mxu0 0.0
      %1357 = vmatpush1.msra.mxu0 0.0
      %1358 = vmatprep.subr.mxu0 0.0
      %1359 = vmatpush1.msra.mxu0 0.0
      %1360 = vmatprep.subr.mxu0 0.0
      %1361 = vmatpush1.msra.mxu0 0.0
      %1362 = vmatprep.subr.mxu0 0.0
      %1363 = vmatpush1.msra.mxu0 0.0
      %1364 = vmatprep.subr.mxu0 0.0
      %1365 = vmatpush1.msra.mxu0 0.0
      %1366 = vmatprep.subr.mxu0 0.0
      %1367 = vmatpush1.msra.mxu0 0.0
      %1368 = vmatprep.subr.mxu0 0.0
      %1369 = vmatpush1.msra.mxu0 0.0
      %1370 = vmatprep.subr.mxu0 0.0
      %1371 = vmatpush1.msra.mxu0 0.0
      %1372 = vmatprep.subr.mxu0 0.0
      %1373 = vmatpush1.msra.mxu0 0.0
      %1374 = vmatprep.subr.mxu0 0.0
      %1375 = vmatpush1.msra.mxu0 0.0
      %1376 = vmatprep.subr.mxu0 0.0
      %1377 = vmatpush1.msra.mxu0 0.0
      %1378 = vmatprep.subr.mxu0 0.0
      %1379 = vmatpush1.msra.mxu0 0.0
      %1380 = vmatprep.subr.mxu0 0.0
      %1381 = vmatpush1.msra.mxu0 0.0
      %1382 = vmatprep.subr.mxu0 0.0
      %1383 = vmatpush1.msra.mxu0 0.0
      %1384 = vmatprep.subr.mxu0 0.0
      %1385 = vmatpush1.msra.mxu0 0.0
      %1386 = vmatprep.subr.mxu0 0.0
      %1387 = vmatpush1.msra.mxu0 0.0
      %1388 = vmatprep.subr.mxu0 0.0
      %1389 = vmatpush1.msra.mxu0 0.0
      %1390 = vmatprep.subr.mxu0 0.0
      %1391 = vmatpush1.msra.mxu0 0.0
      %1392 = vmatprep.subr.mxu0 0.0
      %1393 = vmatpush1.msra.mxu0 0.0
      %1394 = vmatprep.mubr.f32.mxu0 0.0
      %1395 = vmatmul.mubr.f32.gmra.mrb[0].mxu0 %v1328
      %v1396 = vpop.f32.mrb[0].mxu0
      %v1397 = vadd.f32 0.0, %v1396
      %v1398 = vpop.f32.mrb[0].mxu0
      %1399 = vdwg.mxu0
      %v1401 = vrot.slane %v1397, 7
      %v1403 = vadd.f32 %v43, %v1401
      %v1404 = vxor.u32 %v1403, 2147483648
      %v1405 = vmul.f32 %v1404, 1.442695
      %v1406 = vpow.pop %v1405
      %v1407 = vadd.f32 %v1406, 1.0
      %v1408 = vrcp.pop %v1407
      %v1409 = vmul.f32 1.0, %v1408
      %v1410 = vtanh.pop %v1403
      %v1412 = vlaneseq
      %v1413 = vshrl.u32 %v1412, 7
      %v1414 = vsub.s32 0, %v1413
      %v1415 = vrot.slane %v1325, %v1414
      %1416 = vrot.lane.b32.xlu0 %v1415, 32
      %v1417 = vpop.permute.xlu0 %1416
      %v1419 = vmul.f32 %v1409, %v1417
      %1421 = vrot.lane.b32.xlu0 %v1410, 64
      %v1422 = vpop.permute.xlu0 %1421
      %v1424 = vmul.f32 %v1409, %v1422
      %1426 = vrot.lane.b32.xlu0 %v1424, 32
      %v1427 = vpop.permute.xlu0 %1426
      %v1429 = vadd.f32 %v1419, %v1427
      %v1430 = vtanh.pop %v1429
      %1432 = vrot.lane.b32.xlu0 %v1430, 64
      %v1433 = vpop.permute.xlu0 %1432
      %v1435 = vmul.f32 %v1409, %v1433
      %v1437 = vrot.slane %v1435, 1
      %1438 = vrot.lane.b32.xlu0 %v1437, 32
      %v1439 = vpop.permute.xlu0 %1438
      %v1440 = vsel %vm1326, %v1439, 0
      %1442 = vmatprep.subr.mxu0 0.0
      %1443 = vmatpush1.msra.mxu0 %v38
      %1444 = vmatprep.subr.mxu0 0.0
      %1445 = vmatpush1.msra.mxu0 %v39
      %1446 = vmatprep.subr.mxu0 0.0
      %1447 = vmatpush1.msra.mxu0 %v40
      %1448 = vmatprep.subr.mxu0 0.0
      %1449 = vmatpush1.msra.mxu0 %v41
      %1450 = vmatprep.subr.mxu0 0.0
      %1451 = vmatpush1.msra.mxu0 0.0
      %1452 = vmatprep.subr.mxu0 0.0
      %1453 = vmatpush1.msra.mxu0 0.0
      %1454 = vmatprep.subr.mxu0 0.0
      %1455 = vmatpush1.msra.mxu0 0.0
      %1456 = vmatprep.subr.mxu0 0.0
      %1457 = vmatpush1.msra.mxu0 0.0
      %1458 = vmatprep.subr.mxu0 0.0
      %1459 = vmatpush1.msra.mxu0 0.0
      %1460 = vmatprep.subr.mxu0 0.0
      %1461 = vmatpush1.msra.mxu0 0.0
      %1462 = vmatprep.subr.mxu0 0.0
      %1463 = vmatpush1.msra.mxu0 0.0
      %1464 = vmatprep.subr.mxu0 0.0
      %1465 = vmatpush1.msra.mxu0 0.0
      %1466 = vmatprep.subr.mxu0 0.0
      %1467 = vmatpush1.msra.mxu0 0.0
      %1468 = vmatprep.subr.mxu0 0.0
      %1469 = vmatpush1.msra.mxu0 0.0
      %1470 = vmatprep.subr.mxu0 0.0
      %1471 = vmatpush1.msra.mxu0 0.0
      %1472 = vmatprep.subr.mxu0 0.0
      %1473 = vmatpush1.msra.mxu0 0.0
      %1474 = vmatprep.subr.mxu0 0.0
      %1475 = vmatpush1.msra.mxu0 0.0
      %1476 = vmatprep.subr.mxu0 0.0
      %1477 = vmatpush1.msra.mxu0 0.0
      %1478 = vmatprep.subr.mxu0 0.0
      %1479 = vmatpush1.msra.mxu0 0.0
      %1480 = vmatprep.subr.mxu0 0.0
      %1481 = vmatpush1.msra.mxu0 0.0
      %1482 = vmatprep.subr.mxu0 0.0
      %1483 = vmatpush1.msra.mxu0 0.0
      %1484 = vmatprep.subr.mxu0 0.0
      %1485 = vmatpush1.msra.mxu0 0.0
      %1486 = vmatprep.subr.mxu0 0.0
      %1487 = vmatpush1.msra.mxu0 0.0
      %1488 = vmatprep.subr.mxu0 0.0
      %1489 = vmatpush1.msra.mxu0 0.0
      %1490 = vmatprep.subr.mxu0 0.0
      %1491 = vmatpush1.msra.mxu0 0.0
      %1492 = vmatprep.subr.mxu0 0.0
      %1493 = vmatpush1.msra.mxu0 0.0
      %1494 = vmatprep.subr.mxu0 0.0
      %1495 = vmatpush1.msra.mxu0 0.0
      %1496 = vmatprep.subr.mxu0 0.0
      %1497 = vmatpush1.msra.mxu0 0.0
      %1498 = vmatprep.subr.mxu0 0.0
      %1499 = vmatpush1.msra.mxu0 0.0
      %1500 = vmatprep.subr.mxu0 0.0
      %1501 = vmatpush1.msra.mxu0 0.0
      %1502 = vmatprep.subr.mxu0 0.0
      %1503 = vmatpush1.msra.mxu0 0.0
      %1504 = vmatprep.subr.mxu0 0.0
      %1505 = vmatpush1.msra.mxu0 0.0
      %1506 = vmatprep.mubr.f32.mxu0 0.0
      %1507 = vmatmul.mubr.f32.gmra.mrb[0].mxu0 %v1440
      %v1508 = vpop.f32.mrb[0].mxu0
      %v1509 = vadd.f32 %v42, %v1508
      %v1510 = vpop.f32.mrb[0].mxu0
      %1511 = vdwg.mxu0
      %1512 = vst [vmem:[%s4 + $0x6] sm:$0x1] %v1509
      %1513 = vrot.lane.b32.xlu0 %v1435, 32
      %v1514 = vpop.permute.xlu0 %1513
      %vm1516 = vcmask 254977
      %1517 = vst.msk [vmem:[#allocation2 - $0x1] sm:$0x2] %vm1516, %v1514
      %1519 = vrot.lane.b32.xlu0 %v1429, 96
      %v1520 = vpop.permute.xlu0 %1519
      %1522 = vst.msk [vmem:[#allocation3 - $0x1] sm:$0x2] %vm1516, %v1520
      %1523 = vrot.lane.b32.xlu0 %v1509, 127
      %v1524 = vpop.permute.xlu0 %1523
      %s1525 = vtos %v1524
      %s1526 = vtos %v1509
      %p1527 = scmp.gt.f32.partialorder %s1525, %s1526
      %s1528 = scalar_select %p1527, 1, 0
      %1529 = sst [smem:[%s50]] %s1528
      %1530 = sst [smem:[%s52]] 7
    $region49: #{lstm_reinforce_forward.1} parent=1 // pred_fallthru
      _
    %s1531 = sld [smem:[#allocation4]]
    %p1532 = scmp.eq.s32.totalorder %s1531, 0
    // Predicated region
    $region50: #{lstm_reinforce_forward.1} parent=1 // pred_check
      %p1533 = pneg %p1532
    $region51: #{lstm_reinforce_forward.1} parent=1 // pred_check_branch
      %1535 = sbr.rel (%p1533) target = $region53
    $region52: #{lstm_reinforce_forward.1} parent=1 // pred_region
      %v1536 = vld [vmem:[#allocation2] sm:$0x1]
      %v1537 = vld [vmem:[#allocation3] sm:$0x1]
      %vm1538 = vcmask 261120
      %v1540 = vsel %vm1538, %v1536, 0
      %1542 = vmatprep.subr.mxu0 0.0
      %1543 = vmatpush1.msra.mxu0 %v34
      %1544 = vmatprep.subr.mxu0 0.0
      %1545 = vmatpush1.msra.mxu0 %v35
      %1546 = vmatprep.subr.mxu0 0.0
      %1547 = vmatpush1.msra.mxu0 %v36
      %1548 = vmatprep.subr.mxu0 0.0
      %1549 = vmatpush1.msra.mxu0 %v37
      %1550 = vmatprep.subr.mxu0 0.0
      %1551 = vmatpush1.msra.mxu0 0.0
      %1552 = vmatprep.subr.mxu0 0.0
      %1553 = vmatpush1.msra.mxu0 0.0
      %1554 = vmatprep.subr.mxu0 0.0
      %1555 = vmatpush1.msra.mxu0 0.0
      %1556 = vmatprep.subr.mxu0 0.0
      %1557 = vmatpush1.msra.mxu0 0.0
      %1558 = vmatprep.subr.mxu0 0.0
      %1559 = vmatpush1.msra.mxu0 0.0
      %1560 = vmatprep.subr.mxu0 0.0
      %1561 = vmatpush1.msra.mxu0 0.0
      %1562 = vmatprep.subr.mxu0 0.0
      %1563 = vmatpush1.msra.mxu0 0.0
      %1564 = vmatprep.subr.mxu0 0.0
      %1565 = vmatpush1.msra.mxu0 0.0
      %1566 = vmatprep.subr.mxu0 0.0
      %1567 = vmatpush1.msra.mxu0 0.0
      %1568 = vmatprep.subr.mxu0 0.0
      %1569 = vmatpush1.msra.mxu0 0.0
      %1570 = vmatprep.subr.mxu0 0.0
      %1571 = vmatpush1.msra.mxu0 0.0
      %1572 = vmatprep.subr.mxu0 0.0
      %1573 = vmatpush1.msra.mxu0 0.0
      %1574 = vmatprep.subr.mxu0 0.0
      %1575 = vmatpush1.msra.mxu0 0.0
      %1576 = vmatprep.subr.mxu0 0.0
      %1577 = vmatpush1.msra.mxu0 0.0
      %1578 = vmatprep.subr.mxu0 0.0
      %1579 = vmatpush1.msra.mxu0 0.0
      %1580 = vmatprep.subr.mxu0 0.0
      %1581 = vmatpush1.msra.mxu0 0.0
      %1582 = vmatprep.subr.mxu0 0.0
      %1583 = vmatpush1.msra.mxu0 0.0
      %1584 = vmatprep.subr.mxu0 0.0
      %1585 = vmatpush1.msra.mxu0 0.0
      %1586 = vmatprep.subr.mxu0 0.0
      %1587 = vmatpush1.msra.mxu0 0.0
      %1588 = vmatprep.subr.mxu0 0.0
      %1589 = vmatpush1.msra.mxu0 0.0
      %1590 = vmatprep.subr.mxu0 0.0
      %1591 = vmatpush1.msra.mxu0 0.0
      %1592 = vmatprep.subr.mxu0 0.0
      %1593 = vmatpush1.msra.mxu0 0.0
      %1594 = vmatprep.subr.mxu0 0.0
      %1595 = vmatpush1.msra.mxu0 0.0
      %1596 = vmatprep.subr.mxu0 0.0
      %1597 = vmatpush1.msra.mxu0 0.0
      %1598 = vmatprep.subr.mxu0 0.0
      %1599 = vmatpush1.msra.mxu0 0.0
      %1600 = vmatprep.subr.mxu0 0.0
      %1601 = vmatpush1.msra.mxu0 0.0
      %1602 = vmatprep.subr.mxu0 0.0
      %1603 = vmatpush1.msra.mxu0 0.0
      %1604 = vmatprep.subr.mxu0 0.0
      %1605 = vmatpush1.msra.mxu0 0.0
      %1606 = vmatprep.mubr.f32.mxu0 0.0
      %1607 = vmatmul.mubr.f32.gmra.mrb[0].mxu0 %v1540
      %v1608 = vpop.f32.mrb[0].mxu0
      %v1609 = vadd.f32 0.0, %v1608
      %v1610 = vpop.f32.mrb[0].mxu0
      %1611 = vdwg.mxu0
      %v1613 = vrot.slane %v1609, 7
      %v1615 = vadd.f32 %v43, %v1613
      %v1616 = vxor.u32 %v1615, 2147483648
      %v1617 = vmul.f32 %v1616, 1.442695
      %v1618 = vpow.pop %v1617
      %v1619 = vadd.f32 %v1618, 1.0
      %v1620 = vrcp.pop %v1619
      %v1621 = vmul.f32 1.0, %v1620
      %v1622 = vtanh.pop %v1615
      %v1624 = vlaneseq
      %v1625 = vshrl.u32 %v1624, 7
      %v1626 = vsub.s32 0, %v1625
      %v1627 = vrot.slane %v1537, %v1626
      %1628 = vrot.lane.b32.xlu0 %v1627, 32
      %v1629 = vpop.permute.xlu0 %1628
      %v1631 = vmul.f32 %v1621, %v1629
      %1633 = vrot.lane.b32.xlu0 %v1622, 64
      %v1634 = vpop.permute.xlu0 %1633
      %v1636 = vmul.f32 %v1621, %v1634
      %1638 = vrot.lane.b32.xlu0 %v1636, 32
      %v1639 = vpop.permute.xlu0 %1638
      %v1641 = vadd.f32 %v1631, %v1639
      %v1642 = vtanh.pop %v1641
      %1644 = vrot.lane.b32.xlu0 %v1642, 64
      %v1645 = vpop.permute.xlu0 %1644
      %v1647 = vmul.f32 %v1621, %v1645
      %v1649 = vrot.slane %v1647, 1
      %1650 = vrot.lane.b32.xlu0 %v1649, 32
      %v1651 = vpop.permute.xlu0 %1650
      %v1652 = vsel %vm1538, %v1651, 0
      %1654 = vmatprep.subr.mxu0 0.0
      %1655 = vmatpush1.msra.mxu0 %v38
      %1656 = vmatprep.subr.mxu0 0.0
      %1657 = vmatpush1.msra.mxu0 %v39
      %1658 = vmatprep.subr.mxu0 0.0
      %1659 = vmatpush1.msra.mxu0 %v40
      %1660 = vmatprep.subr.mxu0 0.0
      %1661 = vmatpush1.msra.mxu0 %v41
      %1662 = vmatprep.subr.mxu0 0.0
      %1663 = vmatpush1.msra.mxu0 0.0
      %1664 = vmatprep.subr.mxu0 0.0
      %1665 = vmatpush1.msra.mxu0 0.0
      %1666 = vmatprep.subr.mxu0 0.0
      %1667 = vmatpush1.msra.mxu0 0.0
      %1668 = vmatprep.subr.mxu0 0.0
      %1669 = vmatpush1.msra.mxu0 0.0
      %1670 = vmatprep.subr.mxu0 0.0
      %1671 = vmatpush1.msra.mxu0 0.0
      %1672 = vmatprep.subr.mxu0 0.0
      %1673 = vmatpush1.msra.mxu0 0.0
      %1674 = vmatprep.subr.mxu0 0.0
      %1675 = vmatpush1.msra.mxu0 0.0
      %1676 = vmatprep.subr.mxu0 0.0
      %1677 = vmatpush1.msra.mxu0 0.0
      %1678 = vmatprep.subr.mxu0 0.0
      %1679 = vmatpush1.msra.mxu0 0.0
      %1680 = vmatprep.subr.mxu0 0.0
      %1681 = vmatpush1.msra.mxu0 0.0
      %1682 = vmatprep.subr.mxu0 0.0
      %1683 = vmatpush1.msra.mxu0 0.0
      %1684 = vmatprep.subr.mxu0 0.0
      %1685 = vmatpush1.msra.mxu0 0.0
      %1686 = vmatprep.subr.mxu0 0.0
      %1687 = vmatpush1.msra.mxu0 0.0
      %1688 = vmatprep.subr.mxu0 0.0
      %1689 = vmatpush1.msra.mxu0 0.0
      %1690 = vmatprep.subr.mxu0 0.0
      %1691 = vmatpush1.msra.mxu0 0.0
      %1692 = vmatprep.subr.mxu0 0.0
      %1693 = vmatpush1.msra.mxu0 0.0
      %1694 = vmatprep.subr.mxu0 0.0
      %1695 = vmatpush1.msra.mxu0 0.0
      %1696 = vmatprep.subr.mxu0 0.0
      %1697 = vmatpush1.msra.mxu0 0.0
      %1698 = vmatprep.subr.mxu0 0.0
      %1699 = vmatpush1.msra.mxu0 0.0
      %1700 = vmatprep.subr.mxu0 0.0
      %1701 = vmatpush1.msra.mxu0 0.0
      %1702 = vmatprep.subr.mxu0 0.0
      %1703 = vmatpush1.msra.mxu0 0.0
      %1704 = vmatprep.subr.mxu0 0.0
      %1705 = vmatpush1.msra.mxu0 0.0
      %1706 = vmatprep.subr.mxu0 0.0
      %1707 = vmatpush1.msra.mxu0 0.0
      %1708 = vmatprep.subr.mxu0 0.0
      %1709 = vmatpush1.msra.mxu0 0.0
      %1710 = vmatprep.subr.mxu0 0.0
      %1711 = vmatpush1.msra.mxu0 0.0
      %1712 = vmatprep.subr.mxu0 0.0
      %1713 = vmatpush1.msra.mxu0 0.0
      %1714 = vmatprep.subr.mxu0 0.0
      %1715 = vmatpush1.msra.mxu0 0.0
      %1716 = vmatprep.subr.mxu0 0.0
      %1717 = vmatpush1.msra.mxu0 0.0
      %1718 = vmatprep.mubr.f32.mxu0 0.0
      %1719 = vmatmul.mubr.f32.gmra.mrb[0].mxu0 %v1652
      %v1720 = vpop.f32.mrb[0].mxu0
      %v1721 = vadd.f32 %v42, %v1720
      %v1722 = vpop.f32.mrb[0].mxu0
      %1723 = vdwg.mxu0
      %1724 = vst [vmem:[%s4 + $0x7] sm:$0x1] %v1721
      %1725 = vrot.lane.b32.xlu0 %v1647, 32
      %v1726 = vpop.permute.xlu0 %1725
      %vm1728 = vcmask 254977
      %1729 = vst.msk [vmem:[#allocation2 - $0x1] sm:$0x2] %vm1728, %v1726
      %1731 = vrot.lane.b32.xlu0 %v1641, 96
      %v1732 = vpop.permute.xlu0 %1731
      %1734 = vst.msk [vmem:[#allocation3 - $0x1] sm:$0x2] %vm1728, %v1732
      %1735 = vrot.lane.b32.xlu0 %v1721, 127
      %v1736 = vpop.permute.xlu0 %1735
      %s1737 = vtos %v1736
      %s1738 = vtos %v1721
      %p1739 = scmp.gt.f32.partialorder %s1737, %s1738
      %s1740 = scalar_select %p1739, 1, 0
      %1741 = sst [smem:[%s50]] %s1740
      %1742 = sst [smem:[%s52]] 8
    $region53: #{lstm_reinforce_forward.1} parent=1 // pred_fallthru
      _
    %s1743 = sld [smem:[#allocation4]]
    %p1744 = scmp.eq.s32.totalorder %s1743, 0
    // Predicated region
    $region54: #{lstm_reinforce_forward.1} parent=1 // pred_check
      %p1745 = pneg %p1744
    $region55: #{lstm_reinforce_forward.1} parent=1 // pred_check_branch
      %1747 = sbr.rel (%p1745) target = $region57
    $region56: #{lstm_reinforce_forward.1} parent=1 // pred_region
      %v1748 = vld [vmem:[#allocation2] sm:$0x1]
      %v1749 = vld [vmem:[#allocation3] sm:$0x1]
      %vm1750 = vcmask 261120
      %v1752 = vsel %vm1750, %v1748, 0
      %1754 = vmatprep.subr.mxu0 0.0
      %1755 = vmatpush1.msra.mxu0 %v34
      %1756 = vmatprep.subr.mxu0 0.0
      %1757 = vmatpush1.msra.mxu0 %v35
      %1758 = vmatprep.subr.mxu0 0.0
      %1759 = vmatpush1.msra.mxu0 %v36
      %1760 = vmatprep.subr.mxu0 0.0
      %1761 = vmatpush1.msra.mxu0 %v37
      %1762 = vmatprep.subr.mxu0 0.0
      %1763 = vmatpush1.msra.mxu0 0.0
      %1764 = vmatprep.subr.mxu0 0.0
      %1765 = vmatpush1.msra.mxu0 0.0
      %1766 = vmatprep.subr.mxu0 0.0
      %1767 = vmatpush1.msra.mxu0 0.0
      %1768 = vmatprep.subr.mxu0 0.0
      %1769 = vmatpush1.msra.mxu0 0.0
      %1770 = vmatprep.subr.mxu0 0.0
      %1771 = vmatpush1.msra.mxu0 0.0
      %1772 = vmatprep.subr.mxu0 0.0
      %1773 = vmatpush1.msra.mxu0 0.0
      %1774 = vmatprep.subr.mxu0 0.0
      %1775 = vmatpush1.msra.mxu0 0.0
      %1776 = vmatprep.subr.mxu0 0.0
      %1777 = vmatpush1.msra.mxu0 0.0
      %1778 = vmatprep.subr.mxu0 0.0
      %1779 = vmatpush1.msra.mxu0 0.0
      %1780 = vmatprep.subr.mxu0 0.0
      %1781 = vmatpush1.msra.mxu0 0.0
      %1782 = vmatprep.subr.mxu0 0.0
      %1783 = vmatpush1.msra.mxu0 0.0
      %1784 = vmatprep.subr.mxu0 0.0
      %1785 = vmatpush1.msra.mxu0 0.0
      %1786 = vmatprep.subr.mxu0 0.0
      %1787 = vmatpush1.msra.mxu0 0.0
      %1788 = vmatprep.subr.mxu0 0.0
      %1789 = vmatpush1.msra.mxu0 0.0
      %1790 = vmatprep.subr.mxu0 0.0
      %1791 = vmatpush1.msra.mxu0 0.0
      %1792 = vmatprep.subr.mxu0 0.0
      %1793 = vmatpush1.msra.mxu0 0.0
      %1794 = vmatprep.subr.mxu0 0.0
      %1795 = vmatpush1.msra.mxu0 0.0
      %1796 = vmatprep.subr.mxu0 0.0
      %1797 = vmatpush1.msra.mxu0 0.0
      %1798 = vmatprep.subr.mxu0 0.0
      %1799 = vmatpush1.msra.mxu0 0.0
      %1800 = vmatprep.subr.mxu0 0.0
      %1801 = vmatpush1.msra.mxu0 0.0
      %1802 = vmatprep.subr.mxu0 0.0
      %1803 = vmatpush1.msra.mxu0 0.0
      %1804 = vmatprep.subr.mxu0 0.0
      %1805 = vmatpush1.msra.mxu0 0.0
      %1806 = vmatprep.subr.mxu0 0.0
      %1807 = vmatpush1.msra.mxu0 0.0
      %1808 = vmatprep.subr.mxu0 0.0
      %1809 = vmatpush1.msra.mxu0 0.0
      %1810 = vmatprep.subr.mxu0 0.0
      %1811 = vmatpush1.msra.mxu0 0.0
      %1812 = vmatprep.subr.mxu0 0.0
      %1813 = vmatpush1.msra.mxu0 0.0
      %1814 = vmatprep.subr.mxu0 0.0
      %1815 = vmatpush1.msra.mxu0 0.0
      %1816 = vmatprep.subr.mxu0 0.0
      %1817 = vmatpush1.msra.mxu0 0.0
      %1818 = vmatprep.mubr.f32.mxu0 0.0
      %1819 = vmatmul.mubr.f32.gmra.mrb[0].mxu0 %v1752
      %v1820 = vpop.f32.mrb[0].mxu0
      %v1821 = vadd.f32 0.0, %v1820
      %v1822 = vpop.f32.mrb[0].mxu0
      %1823 = vdwg.mxu0
      %v1825 = vrot.slane %v1821, 7
      %v1827 = vadd.f32 %v43, %v1825
      %v1828 = vxor.u32 %v1827, 2147483648
      %v1829 = vmul.f32 %v1828, 1.442695
      %v1830 = vpow.pop %v1829
      %v1831 = vadd.f32 %v1830, 1.0
      %v1832 = vrcp.pop %v1831
      %v1833 = vmul.f32 1.0, %v1832
      %v1834 = vtanh.pop %v1827
      %v1836 = vlaneseq
      %v1837 = vshrl.u32 %v1836, 7
      %v1838 = vsub.s32 0, %v1837
      %v1839 = vrot.slane %v1749, %v1838
      %1840 = vrot.lane.b32.xlu0 %v1839, 32
      %v1841 = vpop.permute.xlu0 %1840
      %v1843 = vmul.f32 %v1833, %v1841
      %1845 = vrot.lane.b32.xlu0 %v1834, 64
      %v1846 = vpop.permute.xlu0 %1845
      %v1848 = vmul.f32 %v1833, %v1846
      %1850 = vrot.lane.b32.xlu0 %v1848, 32
      %v1851 = vpop.permute.xlu0 %1850
      %v1853 = vadd.f32 %v1843, %v1851
      %v1854 = vtanh.pop %v1853
      %1856 = vrot.lane.b32.xlu0 %v1854, 64
      %v1857 = vpop.permute.xlu0 %1856
      %v1859 = vmul.f32 %v1833, %v1857
      %v1861 = vrot.slane %v1859, 1
      %1862 = vrot.lane.b32.xlu0 %v1861, 32
      %v1863 = vpop.permute.xlu0 %1862
      %v1864 = vsel %vm1750, %v1863, 0
      %1866 = vmatprep.subr.mxu0 0.0
      %1867 = vmatpush1.msra.mxu0 %v38
      %1868 = vmatprep.subr.mxu0 0.0
      %1869 = vmatpush1.msra.mxu0 %v39
      %1870 = vmatprep.subr.mxu0 0.0
      %1871 = vmatpush1.msra.mxu0 %v40
      %1872 = vmatprep.subr.mxu0 0.0
      %1873 = vmatpush1.msra.mxu0 %v41
      %1874 = vmatprep.subr.mxu0 0.0
      %1875 = vmatpush1.msra.mxu0 0.0
      %1876 = vmatprep.subr.mxu0 0.0
      %1877 = vmatpush1.msra.mxu0 0.0
      %1878 = vmatprep.subr.mxu0 0.0
      %1879 = vmatpush1.msra.mxu0 0.0
      %1880 = vmatprep.subr.mxu0 0.0
      %1881 = vmatpush1.msra.mxu0 0.0
      %1882 = vmatprep.subr.mxu0 0.0
      %1883 = vmatpush1.msra.mxu0 0.0
      %1884 = vmatprep.subr.mxu0 0.0
      %1885 = vmatpush1.msra.mxu0 0.0
      %1886 = vmatprep.subr.mxu0 0.0
      %1887 = vmatpush1.msra.mxu0 0.0
      %1888 = vmatprep.subr.mxu0 0.0
      %1889 = vmatpush1.msra.mxu0 0.0
      %1890 = vmatprep.subr.mxu0 0.0
      %1891 = vmatpush1.msra.mxu0 0.0
      %1892 = vmatprep.subr.mxu0 0.0
      %1893 = vmatpush1.msra.mxu0 0.0
      %1894 = vmatprep.subr.mxu0 0.0
      %1895 = vmatpush1.msra.mxu0 0.0
      %1896 = vmatprep.subr.mxu0 0.0
      %1897 = vmatpush1.msra.mxu0 0.0
      %1898 = vmatprep.subr.mxu0 0.0
      %1899 = vmatpush1.msra.mxu0 0.0
      %1900 = vmatprep.subr.mxu0 0.0
      %1901 = vmatpush1.msra.mxu0 0.0
      %1902 = vmatprep.subr.mxu0 0.0
      %1903 = vmatpush1.msra.mxu0 0.0
      %1904 = vmatprep.subr.mxu0 0.0
      %1905 = vmatpush1.msra.mxu0 0.0
      %1906 = vmatprep.subr.mxu0 0.0
      %1907 = vmatpush1.msra.mxu0 0.0
      %1908 = vmatprep.subr.mxu0 0.0
      %1909 = vmatpush1.msra.mxu0 0.0
      %1910 = vmatprep.subr.mxu0 0.0
      %1911 = vmatpush1.msra.mxu0 0.0
      %1912 = vmatprep.subr.mxu0 0.0
      %1913 = vmatpush1.msra.mxu0 0.0
      %1914 = vmatprep.subr.mxu0 0.0
      %1915 = vmatpush1.msra.mxu0 0.0
      %1916 = vmatprep.subr.mxu0 0.0
      %1917 = vmatpush1.msra.mxu0 0.0
      %1918 = vmatprep.subr.mxu0 0.0
      %1919 = vmatpush1.msra.mxu0 0.0
      %1920 = vmatprep.subr.mxu0 0.0
      %1921 = vmatpush1.msra.mxu0 0.0
      %1922 = vmatprep.subr.mxu0 0.0
      %1923 = vmatpush1.msra.mxu0 0.0
      %1924 = vmatprep.subr.mxu0 0.0
      %1925 = vmatpush1.msra.mxu0 0.0
      %1926 = vmatprep.subr.mxu0 0.0
      %1927 = vmatpush1.msra.mxu0 0.0
      %1928 = vmatprep.subr.mxu0 0.0
      %1929 = vmatpush1.msra.mxu0 0.0
      %1930 = vmatprep.mubr.f32.mxu0 0.0
      %1931 = vmatmul.mubr.f32.gmra.mrb[0].mxu0 %v1864
      %v1932 = vpop.f32.mrb[0].mxu0
      %v1933 = vadd.f32 %v42, %v1932
      %v1934 = vpop.f32.mrb[0].mxu0
      %1935 = vdwg.mxu0
      %1936 = vst [vmem:[%s4 + $0x8] sm:$0x1] %v1933
      %1937 = vrot.lane.b32.xlu0 %v1859, 32
      %v1938 = vpop.permute.xlu0 %1937
      %vm1940 = vcmask 254977
      %1941 = vst.msk [vmem:[#allocation2 - $0x1] sm:$0x2] %vm1940, %v1938
      %1943 = vrot.lane.b32.xlu0 %v1853, 96
      %v1944 = vpop.permute.xlu0 %1943
      %1946 = vst.msk [vmem:[#allocation3 - $0x1] sm:$0x2] %vm1940, %v1944
      %1947 = vrot.lane.b32.xlu0 %v1933, 127
      %v1948 = vpop.permute.xlu0 %1947
      %s1949 = vtos %v1948
      %s1950 = vtos %v1933
      %p1951 = scmp.gt.f32.partialorder %s1949, %s1950
      %s1952 = scalar_select %p1951, 1, 0
      %1953 = sst [smem:[%s50]] %s1952
      %1954 = sst [smem:[%s52]] 9
    $region57: #{lstm_reinforce_forward.1} parent=1 // pred_fallthru
      _
    %s1955 = sld [smem:[#allocation4]]
    %p1956 = scmp.eq.s32.totalorder %s1955, 0
    // Predicated region
    $region58: #{lstm_reinforce_forward.1} parent=1 // pred_check
      %p1957 = pneg %p1956
    $region59: #{lstm_reinforce_forward.1} parent=1 // pred_check_branch
      %1959 = sbr.rel (%p1957) target = $region61
    $region60: #{lstm_reinforce_forward.1} parent=1 // pred_region
      %v1960 = vld [vmem:[#allocation2] sm:$0x1]
      %v1961 = vld [vmem:[#allocation3] sm:$0x1]
      %vm1962 = vcmask 261120
      %v1964 = vsel %vm1962, %v1960, 0
      %1966 = vmatprep.subr.mxu0 0.0
      %1967 = vmatpush1.msra.mxu0 %v34
      %1968 = vmatprep.subr.mxu0 0.0
      %1969 = vmatpush1.msra.mxu0 %v35
      %1970 = vmatprep.subr.mxu0 0.0
      %1971 = vmatpush1.msra.mxu0 %v36
      %1972 = vmatprep.subr.mxu0 0.0
      %1973 = vmatpush1.msra.mxu0 %v37
      %1974 = vmatprep.subr.mxu0 0.0
      %1975 = vmatpush1.msra.mxu0 0.0
      %1976 = vmatprep.subr.mxu0 0.0
      %1977 = vmatpush1.msra.mxu0 0.0
      %1978 = vmatprep.subr.mxu0 0.0
      %1979 = vmatpush1.msra.mxu0 0.0
      %1980 = vmatprep.subr.mxu0 0.0
      %1981 = vmatpush1.msra.mxu0 0.0
      %1982 = vmatprep.subr.mxu0 0.0
      %1983 = vmatpush1.msra.mxu0 0.0
      %1984 = vmatprep.subr.mxu0 0.0
      %1985 = vmatpush1.msra.mxu0 0.0
      %1986 = vmatprep.subr.mxu0 0.0
      %1987 = vmatpush1.msra.mxu0 0.0
      %1988 = vmatprep.subr.mxu0 0.0
      %1989 = vmatpush1.msra.mxu0 0.0
      %1990 = vmatprep.subr.mxu0 0.0
      %1991 = vmatpush1.msra.mxu0 0.0
      %1992 = vmatprep.subr.mxu0 0.0
      %1993 = vmatpush1.msra.mxu0 0.0
      %1994 = vmatprep.subr.mxu0 0.0
      %1995 = vmatpush1.msra.mxu0 0.0
      %1996 = vmatprep.subr.mxu0 0.0
      %1997 = vmatpush1.msra.mxu0 0.0
      %1998 = vmatprep.subr.mxu0 0.0
      %1999 = vmatpush1.msra.mxu0 0.0
      %2000 = vmatprep.subr.mxu0 0.0
      %2001 = vmatpush1.msra.mxu0 0.0
      %2002 = vmatprep.subr.mxu0 0.0
      %2003 = vmatpush1.msra.mxu0 0.0
      %2004 = vmatprep.subr.mxu0 0.0
      %2005 = vmatpush1.msra.mxu0 0.0
      %2006 = vmatprep.subr.mxu0 0.0
      %2007 = vmatpush1.msra.mxu0 0.0
      %2008 = vmatprep.subr.mxu0 0.0
      %2009 = vmatpush1.msra.mxu0 0.0
      %2010 = vmatprep.subr.mxu0 0.0
      %2011 = vmatpush1.msra.mxu0 0.0
      %2012 = vmatprep.subr.mxu0 0.0
      %2013 = vmatpush1.msra.mxu0 0.0
      %2014 = vmatprep.subr.mxu0 0.0
      %2015 = vmatpush1.msra.mxu0 0.0
      %2016 = vmatprep.subr.mxu0 0.0
      %2017 = vmatpush1.msra.mxu0 0.0
      %2018 = vmatprep.subr.mxu0 0.0
      %2019 = vmatpush1.msra.mxu0 0.0
      %2020 = vmatprep.subr.mxu0 0.0
      %2021 = vmatpush1.msra.mxu0 0.0
      %2022 = vmatprep.subr.mxu0 0.0
      %2023 = vmatpush1.msra.mxu0 0.0
      %2024 = vmatprep.subr.mxu0 0.0
      %2025 = vmatpush1.msra.mxu0 0.0
      %2026 = vmatprep.subr.mxu0 0.0
      %2027 = vmatpush1.msra.mxu0 0.0
      %2028 = vmatprep.subr.mxu0 0.0
      %2029 = vmatpush1.msra.mxu0 0.0
      %2030 = vmatprep.mubr.f32.mxu0 0.0
      %2031 = vmatmul.mubr.f32.gmra.mrb[0].mxu0 %v1964
      %v2032 = vpop.f32.mrb[0].mxu0
      %v2033 = vadd.f32 0.0, %v2032
      %v2034 = vpop.f32.mrb[0].mxu0
      %2035 = vdwg.mxu0
      %v2037 = vrot.slane %v2033, 7
      %v2039 = vadd.f32 %v43, %v2037
      %v2040 = vxor.u32 %v2039, 2147483648
      %v2041 = vmul.f32 %v2040, 1.442695
      %v2042 = vpow.pop %v2041
      %v2043 = vadd.f32 %v2042, 1.0
      %v2044 = vrcp.pop %v2043
      %v2045 = vmul.f32 1.0, %v2044
      %v2046 = vtanh.pop %v2039
      %v2048 = vlaneseq
      %v2049 = vshrl.u32 %v2048, 7
      %v2050 = vsub.s32 0, %v2049
      %v2051 = vrot.slane %v1961, %v2050
      %2052 = vrot.lane.b32.xlu0 %v2051, 32
      %v2053 = vpop.permute.xlu0 %2052
      %v2055 = vmul.f32 %v2045, %v2053
      %2057 = vrot.lane.b32.xlu0 %v2046, 64
      %v2058 = vpop.permute.xlu0 %2057
      %v2060 = vmul.f32 %v2045, %v2058
      %2062 = vrot.lane.b32.xlu0 %v2060, 32
      %v2063 = vpop.permute.xlu0 %2062
      %v2065 = vadd.f32 %v2055, %v2063
      %v2066 = vtanh.pop %v2065
      %2068 = vrot.lane.b32.xlu0 %v2066, 64
      %v2069 = vpop.permute.xlu0 %2068
      %v2071 = vmul.f32 %v2045, %v2069
      %v2073 = vrot.slane %v2071, 1
      %2074 = vrot.lane.b32.xlu0 %v2073, 32
      %v2075 = vpop.permute.xlu0 %2074
      %v2076 = vsel %vm1962, %v2075, 0
      %2078 = vmatprep.subr.mxu0 0.0
      %2079 = vmatpush1.msra.mxu0 %v38
      %2080 = vmatprep.subr.mxu0 0.0
      %2081 = vmatpush1.msra.mxu0 %v39
      %2082 = vmatprep.subr.mxu0 0.0
      %2083 = vmatpush1.msra.mxu0 %v40
      %2084 = vmatprep.subr.mxu0 0.0
      %2085 = vmatpush1.msra.mxu0 %v41
      %2086 = vmatprep.subr.mxu0 0.0
      %2087 = vmatpush1.msra.mxu0 0.0
      %2088 = vmatprep.subr.mxu0 0.0
      %2089 = vmatpush1.msra.mxu0 0.0
      %2090 = vmatprep.subr.mxu0 0.0
      %2091 = vmatpush1.msra.mxu0 0.0
      %2092 = vmatprep.subr.mxu0 0.0
      %2093 = vmatpush1.msra.mxu0 0.0
      %2094 = vmatprep.subr.mxu0 0.0
      %2095 = vmatpush1.msra.mxu0 0.0
      %2096 = vmatprep.subr.mxu0 0.0
      %2097 = vmatpush1.msra.mxu0 0.0
      %2098 = vmatprep.subr.mxu0 0.0
      %2099 = vmatpush1.msra.mxu0 0.0
      %2100 = vmatprep.subr.mxu0 0.0
      %2101 = vmatpush1.msra.mxu0 0.0
      %2102 = vmatprep.subr.mxu0 0.0
      %2103 = vmatpush1.msra.mxu0 0.0
      %2104 = vmatprep.subr.mxu0 0.0
      %2105 = vmatpush1.msra.mxu0 0.0
      %2106 = vmatprep.subr.mxu0 0.0
      %2107 = vmatpush1.msra.mxu0 0.0
      %2108 = vmatprep.subr.mxu0 0.0
      %2109 = vmatpush1.msra.mxu0 0.0
      %2110 = vmatprep.subr.mxu0 0.0
      %2111 = vmatpush1.msra.mxu0 0.0
      %2112 = vmatprep.subr.mxu0 0.0
      %2113 = vmatpush1.msra.mxu0 0.0
      %2114 = vmatprep.subr.mxu0 0.0
      %2115 = vmatpush1.msra.mxu0 0.0
      %2116 = vmatprep.subr.mxu0 0.0
      %2117 = vmatpush1.msra.mxu0 0.0
      %2118 = vmatprep.subr.mxu0 0.0
      %2119 = vmatpush1.msra.mxu0 0.0
      %2120 = vmatprep.subr.mxu0 0.0
      %2121 = vmatpush1.msra.mxu0 0.0
      %2122 = vmatprep.subr.mxu0 0.0
      %2123 = vmatpush1.msra.mxu0 0.0
      %2124 = vmatprep.subr.mxu0 0.0
      %2125 = vmatpush1.msra.mxu0 0.0
      %2126 = vmatprep.subr.mxu0 0.0
      %2127 = vmatpush1.msra.mxu0 0.0
      %2128 = vmatprep.subr.mxu0 0.0
      %2129 = vmatpush1.msra.mxu0 0.0
      %2130 = vmatprep.subr.mxu0 0.0
      %2131 = vmatpush1.msra.mxu0 0.0
      %2132 = vmatprep.subr.mxu0 0.0
      %2133 = vmatpush1.msra.mxu0 0.0
      %2134 = vmatprep.subr.mxu0 0.0
      %2135 = vmatpush1.msra.mxu0 0.0
      %2136 = vmatprep.subr.mxu0 0.0
      %2137 = vmatpush1.msra.mxu0 0.0
      %2138 = vmatprep.subr.mxu0 0.0
      %2139 = vmatpush1.msra.mxu0 0.0
      %2140 = vmatprep.subr.mxu0 0.0
      %2141 = vmatpush1.msra.mxu0 0.0
      %2142 = vmatprep.mubr.f32.mxu0 0.0
      %2143 = vmatmul.mubr.f32.gmra.mrb[0].mxu0 %v2076
      %v2144 = vpop.f32.mrb[0].mxu0
      %v2145 = vadd.f32 %v42, %v2144
      %v2146 = vpop.f32.mrb[0].mxu0
      %2147 = vdwg.mxu0
      %2148 = vst [vmem:[%s4 + $0x9] sm:$0x1] %v2145
      %2149 = vrot.lane.b32.xlu0 %v2071, 32
      %v2150 = vpop.permute.xlu0 %2149
      %vm2152 = vcmask 254977
      %2153 = vst.msk [vmem:[#allocation2 - $0x1] sm:$0x2] %vm2152, %v2150
      %2155 = vrot.lane.b32.xlu0 %v2065, 96
      %v2156 = vpop.permute.xlu0 %2155
      %2158 = vst.msk [vmem:[#allocation3 - $0x1] sm:$0x2] %vm2152, %v2156
      %2159 = vrot.lane.b32.xlu0 %v2145, 127
      %v2160 = vpop.permute.xlu0 %2159
      %s2161 = vtos %v2160
      %s2162 = vtos %v2145
      %p2163 = scmp.gt.f32.partialorder %s2161, %s2162
      %s2164 = scalar_select %p2163, 1, 0
      %2165 = sst [smem:[%s50]] %s2164
      %2166 = sst [smem:[%s52]] 10
    $region61: #{lstm_reinforce_forward.1} parent=1 // pred_fallthru
      _
    %s2167 = sld [smem:[#allocation4]]
    %p2168 = scmp.eq.s32.totalorder %s2167, 0
    // Predicated region
    $region62: #{lstm_reinforce_forward.1} parent=1 // pred_check
      %p2169 = pneg %p2168
    $region63: #{lstm_reinforce_forward.1} parent=1 // pred_check_branch
      %2171 = sbr.rel (%p2169) target = $region65
    $region64: #{lstm_reinforce_forward.1} parent=1 // pred_region
      %v2172 = vld [vmem:[#allocation2] sm:$0x1]
      %v2173 = vld [vmem:[#allocation3] sm:$0x1]
      %vm2174 = vcmask 261120
      %v2176 = vsel %vm2174, %v2172, 0
      %2178 = vmatprep.subr.mxu0 0.0
      %2179 = vmatpush1.msra.mxu0 %v34
      %2180 = vmatprep.subr.mxu0 0.0
      %2181 = vmatpush1.msra.mxu0 %v35
      %2182 = vmatprep.subr.mxu0 0.0
      %2183 = vmatpush1.msra.mxu0 %v36
      %2184 = vmatprep.subr.mxu0 0.0
      %2185 = vmatpush1.msra.mxu0 %v37
      %2186 = vmatprep.subr.mxu0 0.0
      %2187 = vmatpush1.msra.mxu0 0.0
      %2188 = vmatprep.subr.mxu0 0.0
      %2189 = vmatpush1.msra.mxu0 0.0
      %2190 = vmatprep.subr.mxu0 0.0
      %2191 = vmatpush1.msra.mxu0 0.0
      %2192 = vmatprep.subr.mxu0 0.0
      %2193 = vmatpush1.msra.mxu0 0.0
      %2194 = vmatprep.subr.mxu0 0.0
      %2195 = vmatpush1.msra.mxu0 0.0
      %2196 = vmatprep.subr.mxu0 0.0
      %2197 = vmatpush1.msra.mxu0 0.0
      %2198 = vmatprep.subr.mxu0 0.0
      %2199 = vmatpush1.msra.mxu0 0.0
      %2200 = vmatprep.subr.mxu0 0.0
      %2201 = vmatpush1.msra.mxu0 0.0
      %2202 = vmatprep.subr.mxu0 0.0
      %2203 = vmatpush1.msra.mxu0 0.0
      %2204 = vmatprep.subr.mxu0 0.0
      %2205 = vmatpush1.msra.mxu0 0.0
      %2206 = vmatprep.subr.mxu0 0.0
      %2207 = vmatpush1.msra.mxu0 0.0
      %2208 = vmatprep.subr.mxu0 0.0
      %2209 = vmatpush1.msra.mxu0 0.0
      %2210 = vmatprep.subr.mxu0 0.0
      %2211 = vmatpush1.msra.mxu0 0.0
      %2212 = vmatprep.subr.mxu0 0.0
      %2213 = vmatpush1.msra.mxu0 0.0
      %2214 = vmatprep.subr.mxu0 0.0
      %2215 = vmatpush1.msra.mxu0 0.0
      %2216 = vmatprep.subr.mxu0 0.0
      %2217 = vmatpush1.msra.mxu0 0.0
      %2218 = vmatprep.subr.mxu0 0.0
      %2219 = vmatpush1.msra.mxu0 0.0
      %2220 = vmatprep.subr.mxu0 0.0
      %2221 = vmatpush1.msra.mxu0 0.0
      %2222 = vmatprep.subr.mxu0 0.0
      %2223 = vmatpush1.msra.mxu0 0.0
      %2224 = vmatprep.subr.mxu0 0.0
      %2225 = vmatpush1.msra.mxu0 0.0
      %2226 = vmatprep.subr.mxu0 0.0
      %2227 = vmatpush1.msra.mxu0 0.0
      %2228 = vmatprep.subr.mxu0 0.0
      %2229 = vmatpush1.msra.mxu0 0.0
      %2230 = vmatprep.subr.mxu0 0.0
      %2231 = vmatpush1.msra.mxu0 0.0
      %2232 = vmatprep.subr.mxu0 0.0
      %2233 = vmatpush1.msra.mxu0 0.0
      %2234 = vmatprep.subr.mxu0 0.0
      %2235 = vmatpush1.msra.mxu0 0.0
      %2236 = vmatprep.subr.mxu0 0.0
      %2237 = vmatpush1.msra.mxu0 0.0
      %2238 = vmatprep.subr.mxu0 0.0
      %2239 = vmatpush1.msra.mxu0 0.0
      %2240 = vmatprep.subr.mxu0 0.0
      %2241 = vmatpush1.msra.mxu0 0.0
      %2242 = vmatprep.mubr.f32.mxu0 0.0
      %2243 = vmatmul.mubr.f32.gmra.mrb[0].mxu0 %v2176
      %v2244 = vpop.f32.mrb[0].mxu0
      %v2245 = vadd.f32 0.0, %v2244
      %v2246 = vpop.f32.mrb[0].mxu0
      %2247 = vdwg.mxu0
      %v2249 = vrot.slane %v2245, 7
      %v2251 = vadd.f32 %v43, %v2249
      %v2252 = vxor.u32 %v2251, 2147483648
      %v2253 = vmul.f32 %v2252, 1.442695
      %v2254 = vpow.pop %v2253
      %v2255 = vadd.f32 %v2254, 1.0
      %v2256 = vrcp.pop %v2255
      %v2257 = vmul.f32 1.0, %v2256
      %v2258 = vtanh.pop %v2251
      %v2260 = vlaneseq
      %v2261 = vshrl.u32 %v2260, 7
      %v2262 = vsub.s32 0, %v2261
      %v2263 = vrot.slane %v2173, %v2262
      %2264 = vrot.lane.b32.xlu0 %v2263, 32
      %v2265 = vpop.permute.xlu0 %2264
      %v2267 = vmul.f32 %v2257, %v2265
      %2269 = vrot.lane.b32.xlu0 %v2258, 64
      %v2270 = vpop.permute.xlu0 %2269
      %v2272 = vmul.f32 %v2257, %v2270
      %2274 = vrot.lane.b32.xlu0 %v2272, 32
      %v2275 = vpop.permute.xlu0 %2274
      %v2277 = vadd.f32 %v2267, %v2275
      %v2278 = vtanh.pop %v2277
      %2280 = vrot.lane.b32.xlu0 %v2278, 64
      %v2281 = vpop.permute.xlu0 %2280
      %v2283 = vmul.f32 %v2257, %v2281
      %v2285 = vrot.slane %v2283, 1
      %2286 = vrot.lane.b32.xlu0 %v2285, 32
      %v2287 = vpop.permute.xlu0 %2286
      %v2288 = vsel %vm2174, %v2287, 0
      %2290 = vmatprep.subr.mxu0 0.0
      %2291 = vmatpush1.msra.mxu0 %v38
      %2292 = vmatprep.subr.mxu0 0.0
      %2293 = vmatpush1.msra.mxu0 %v39
      %2294 = vmatprep.subr.mxu0 0.0
      %2295 = vmatpush1.msra.mxu0 %v40
      %2296 = vmatprep.subr.mxu0 0.0
      %2297 = vmatpush1.msra.mxu0 %v41
      %2298 = vmatprep.subr.mxu0 0.0
      %2299 = vmatpush1.msra.mxu0 0.0
      %2300 = vmatprep.subr.mxu0 0.0
      %2301 = vmatpush1.msra.mxu0 0.0
      %2302 = vmatprep.subr.mxu0 0.0
      %2303 = vmatpush1.msra.mxu0 0.0
      %2304 = vmatprep.subr.mxu0 0.0
      %2305 = vmatpush1.msra.mxu0 0.0
      %2306 = vmatprep.subr.mxu0 0.0
      %2307 = vmatpush1.msra.mxu0 0.0
      %2308 = vmatprep.subr.mxu0 0.0
      %2309 = vmatpush1.msra.mxu0 0.0
      %2310 = vmatprep.subr.mxu0 0.0
      %2311 = vmatpush1.msra.mxu0 0.0
      %2312 = vmatprep.subr.mxu0 0.0
      %2313 = vmatpush1.msra.mxu0 0.0
      %2314 = vmatprep.subr.mxu0 0.0
      %2315 = vmatpush1.msra.mxu0 0.0
      %2316 = vmatprep.subr.mxu0 0.0
      %2317 = vmatpush1.msra.mxu0 0.0
      %2318 = vmatprep.subr.mxu0 0.0
      %2319 = vmatpush1.msra.mxu0 0.0
      %2320 = vmatprep.subr.mxu0 0.0
      %2321 = vmatpush1.msra.mxu0 0.0
      %2322 = vmatprep.subr.mxu0 0.0
      %2323 = vmatpush1.msra.mxu0 0.0
      %2324 = vmatprep.subr.mxu0 0.0
      %2325 = vmatpush1.msra.mxu0 0.0
      %2326 = vmatprep.subr.mxu0 0.0
      %2327 = vmatpush1.msra.mxu0 0.0
      %2328 = vmatprep.subr.mxu0 0.0
      %2329 = vmatpush1.msra.mxu0 0.0
      %2330 = vmatprep.subr.mxu0 0.0
      %2331 = vmatpush1.msra.mxu0 0.0
      %2332 = vmatprep.subr.mxu0 0.0
      %2333 = vmatpush1.msra.mxu0 0.0
      %2334 = vmatprep.subr.mxu0 0.0
      %2335 = vmatpush1.msra.mxu0 0.0
      %2336 = vmatprep.subr.mxu0 0.0
      %2337 = vmatpush1.msra.mxu0 0.0
      %2338 = vmatprep.subr.mxu0 0.0
      %2339 = vmatpush1.msra.mxu0 0.0
      %2340 = vmatprep.subr.mxu0 0.0
      %2341 = vmatpush1.msra.mxu0 0.0
      %2342 = vmatprep.subr.mxu0 0.0
      %2343 = vmatpush1.msra.mxu0 0.0
      %2344 = vmatprep.subr.mxu0 0.0
      %2345 = vmatpush1.msra.mxu0 0.0
      %2346 = vmatprep.subr.mxu0 0.0
      %2347 = vmatpush1.msra.mxu0 0.0
      %2348 = vmatprep.subr.mxu0 0.0
      %2349 = vmatpush1.msra.mxu0 0.0
      %2350 = vmatprep.subr.mxu0 0.0
      %2351 = vmatpush1.msra.mxu0 0.0
      %2352 = vmatprep.subr.mxu0 0.0
      %2353 = vmatpush1.msra.mxu0 0.0
      %2354 = vmatprep.mubr.f32.mxu0 0.0
      %2355 = vmatmul.mubr.f32.gmra.mrb[0].mxu0 %v2288
      %v2356 = vpop.f32.mrb[0].mxu0
      %v2357 = vadd.f32 %v42, %v2356
      %v2358 = vpop.f32.mrb[0].mxu0
      %2359 = vdwg.mxu0
      %2360 = vst [vmem:[%s4 + $0xa] sm:$0x1] %v2357
      %2361 = vrot.lane.b32.xlu0 %v2283, 32
      %v2362 = vpop.permute.xlu0 %2361
      %vm2364 = vcmask 254977
      %2365 = vst.msk [vmem:[#allocation2 - $0x1] sm:$0x2] %vm2364, %v2362
      %2367 = vrot.lane.b32.xlu0 %v2277, 96
      %v2368 = vpop.permute.xlu0 %2367
      %2370 = vst.msk [vmem:[#allocation3 - $0x1] sm:$0x2] %vm2364, %v2368
      %2371 = vrot.lane.b32.xlu0 %v2357, 127
      %v2372 = vpop.permute.xlu0 %2371
      %s2373 = vtos %v2372
      %s2374 = vtos %v2357
      %p2375 = scmp.gt.f32.partialorder %s2373, %s2374
      %s2376 = scalar_select %p2375, 1, 0
      %2377 = sst [smem:[%s50]] %s2376
      %2378 = sst [smem:[%s52]] 11
    $region65: #{lstm_reinforce_forward.1} parent=1 // pred_fallthru
      _
    %s2379 = sld [smem:[#allocation4]]
    %p2380 = scmp.eq.s32.totalorder %s2379, 0
    // Predicated region
    $region66: #{lstm_reinforce_forward.1} parent=1 // pred_check
      %p2381 = pneg %p2380
    $region67: #{lstm_reinforce_forward.1} parent=1 // pred_check_branch
      %2383 = sbr.rel (%p2381) target = $region69
    $region68: #{lstm_reinforce_forward.1} parent=1 // pred_region
      %v2384 = vld [vmem:[#allocation2] sm:$0x1]
      %v2385 = vld [vmem:[#allocation3] sm:$0x1]
      %vm2386 = vcmask 261120
      %v2388 = vsel %vm2386, %v2384, 0
      %2390 = vmatprep.subr.mxu0 0.0
      %2391 = vmatpush1.msra.mxu0 %v34
      %2392 = vmatprep.subr.mxu0 0.0
      %2393 = vmatpush1.msra.mxu0 %v35
      %2394 = vmatprep.subr.mxu0 0.0
      %2395 = vmatpush1.msra.mxu0 %v36
      %2396 = vmatprep.subr.mxu0 0.0
      %2397 = vmatpush1.msra.mxu0 %v37
      %2398 = vmatprep.subr.mxu0 0.0
      %2399 = vmatpush1.msra.mxu0 0.0
      %2400 = vmatprep.subr.mxu0 0.0
      %2401 = vmatpush1.msra.mxu0 0.0
      %2402 = vmatprep.subr.mxu0 0.0
      %2403 = vmatpush1.msra.mxu0 0.0
      %2404 = vmatprep.subr.mxu0 0.0
      %2405 = vmatpush1.msra.mxu0 0.0
      %2406 = vmatprep.subr.mxu0 0.0
      %2407 = vmatpush1.msra.mxu0 0.0
      %2408 = vmatprep.subr.mxu0 0.0
      %2409 = vmatpush1.msra.mxu0 0.0
      %2410 = vmatprep.subr.mxu0 0.0
      %2411 = vmatpush1.msra.mxu0 0.0
      %2412 = vmatprep.subr.mxu0 0.0
      %2413 = vmatpush1.msra.mxu0 0.0
      %2414 = vmatprep.subr.mxu0 0.0
      %2415 = vmatpush1.msra.mxu0 0.0
      %2416 = vmatprep.subr.mxu0 0.0
      %2417 = vmatpush1.msra.mxu0 0.0
      %2418 = vmatprep.subr.mxu0 0.0
      %2419 = vmatpush1.msra.mxu0 0.0
      %2420 = vmatprep.subr.mxu0 0.0
      %2421 = vmatpush1.msra.mxu0 0.0
      %2422 = vmatprep.subr.mxu0 0.0
      %2423 = vmatpush1.msra.mxu0 0.0
      %2424 = vmatprep.subr.mxu0 0.0
      %2425 = vmatpush1.msra.mxu0 0.0
      %2426 = vmatprep.subr.mxu0 0.0
      %2427 = vmatpush1.msra.mxu0 0.0
      %2428 = vmatprep.subr.mxu0 0.0
      %2429 = vmatpush1.msra.mxu0 0.0
      %2430 = vmatprep.subr.mxu0 0.0
      %2431 = vmatpush1.msra.mxu0 0.0
      %2432 = vmatprep.subr.mxu0 0.0
      %2433 = vmatpush1.msra.mxu0 0.0
      %2434 = vmatprep.subr.mxu0 0.0
      %2435 = vmatpush1.msra.mxu0 0.0
      %2436 = vmatprep.subr.mxu0 0.0
      %2437 = vmatpush1.msra.mxu0 0.0
      %2438 = vmatprep.subr.mxu0 0.0
      %2439 = vmatpush1.msra.mxu0 0.0
      %2440 = vmatprep.subr.mxu0 0.0
      %2441 = vmatpush1.msra.mxu0 0.0
      %2442 = vmatprep.subr.mxu0 0.0
      %2443 = vmatpush1.msra.mxu0 0.0
      %2444 = vmatprep.subr.mxu0 0.0
      %2445 = vmatpush1.msra.mxu0 0.0
      %2446 = vmatprep.subr.mxu0 0.0
      %2447 = vmatpush1.msra.mxu0 0.0
      %2448 = vmatprep.subr.mxu0 0.0
      %2449 = vmatpush1.msra.mxu0 0.0
      %2450 = vmatprep.subr.mxu0 0.0
      %2451 = vmatpush1.msra.mxu0 0.0
      %2452 = vmatprep.subr.mxu0 0.0
      %2453 = vmatpush1.msra.mxu0 0.0
      %2454 = vmatprep.mubr.f32.mxu0 0.0
      %2455 = vmatmul.mubr.f32.gmra.mrb[0].mxu0 %v2388
      %v2456 = vpop.f32.mrb[0].mxu0
      %v2457 = vadd.f32 0.0, %v2456
      %v2458 = vpop.f32.mrb[0].mxu0
      %2459 = vdwg.mxu0
      %v2461 = vrot.slane %v2457, 7
      %v2463 = vadd.f32 %v43, %v2461
      %v2464 = vxor.u32 %v2463, 2147483648
      %v2465 = vmul.f32 %v2464, 1.442695
      %v2466 = vpow.pop %v2465
      %v2467 = vadd.f32 %v2466, 1.0
      %v2468 = vrcp.pop %v2467
      %v2469 = vmul.f32 1.0, %v2468
      %v2470 = vtanh.pop %v2463
      %v2472 = vlaneseq
      %v2473 = vshrl.u32 %v2472, 7
      %v2474 = vsub.s32 0, %v2473
      %v2475 = vrot.slane %v2385, %v2474
      %2476 = vrot.lane.b32.xlu0 %v2475, 32
      %v2477 = vpop.permute.xlu0 %2476
      %v2479 = vmul.f32 %v2469, %v2477
      %2481 = vrot.lane.b32.xlu0 %v2470, 64
      %v2482 = vpop.permute.xlu0 %2481
      %v2484 = vmul.f32 %v2469, %v2482
      %2486 = vrot.lane.b32.xlu0 %v2484, 32
      %v2487 = vpop.permute.xlu0 %2486
      %v2489 = vadd.f32 %v2479, %v2487
      %v2490 = vtanh.pop %v2489
      %2492 = vrot.lane.b32.xlu0 %v2490, 64
      %v2493 = vpop.permute.xlu0 %2492
      %v2495 = vmul.f32 %v2469, %v2493
      %v2497 = vrot.slane %v2495, 1
      %2498 = vrot.lane.b32.xlu0 %v2497, 32
      %v2499 = vpop.permute.xlu0 %2498
      %v2500 = vsel %vm2386, %v2499, 0
      %2502 = vmatprep.subr.mxu0 0.0
      %2503 = vmatpush1.msra.mxu0 %v38
      %2504 = vmatprep.subr.mxu0 0.0
      %2505 = vmatpush1.msra.mxu0 %v39
      %2506 = vmatprep.subr.mxu0 0.0
      %2507 = vmatpush1.msra.mxu0 %v40
      %2508 = vmatprep.subr.mxu0 0.0
      %2509 = vmatpush1.msra.mxu0 %v41
      %2510 = vmatprep.subr.mxu0 0.0
      %2511 = vmatpush1.msra.mxu0 0.0
      %2512 = vmatprep.subr.mxu0 0.0
      %2513 = vmatpush1.msra.mxu0 0.0
      %2514 = vmatprep.subr.mxu0 0.0
      %2515 = vmatpush1.msra.mxu0 0.0
      %2516 = vmatprep.subr.mxu0 0.0
      %2517 = vmatpush1.msra.mxu0 0.0
      %2518 = vmatprep.subr.mxu0 0.0
      %2519 = vmatpush1.msra.mxu0 0.0
      %2520 = vmatprep.subr.mxu0 0.0
      %2521 = vmatpush1.msra.mxu0 0.0
      %2522 = vmatprep.subr.mxu0 0.0
      %2523 = vmatpush1.msra.mxu0 0.0
      %2524 = vmatprep.subr.mxu0 0.0
      %2525 = vmatpush1.msra.mxu0 0.0
      %2526 = vmatprep.subr.mxu0 0.0
      %2527 = vmatpush1.msra.mxu0 0.0
      %2528 = vmatprep.subr.mxu0 0.0
      %2529 = vmatpush1.msra.mxu0 0.0
      %2530 = vmatprep.subr.mxu0 0.0
      %2531 = vmatpush1.msra.mxu0 0.0
      %2532 = vmatprep.subr.mxu0 0.0
      %2533 = vmatpush1.msra.mxu0 0.0
      %2534 = vmatprep.subr.mxu0 0.0
      %2535 = vmatpush1.msra.mxu0 0.0
      %2536 = vmatprep.subr.mxu0 0.0
      %2537 = vmatpush1.msra.mxu0 0.0
      %2538 = vmatprep.subr.mxu0 0.0
      %2539 = vmatpush1.msra.mxu0 0.0
      %2540 = vmatprep.subr.mxu0 0.0
      %2541 = vmatpush1.msra.mxu0 0.0
      %2542 = vmatprep.subr.mxu0 0.0
      %2543 = vmatpush1.msra.mxu0 0.0
      %2544 = vmatprep.subr.mxu0 0.0
      %2545 = vmatpush1.msra.mxu0 0.0
      %2546 = vmatprep.subr.mxu0 0.0
      %2547 = vmatpush1.msra.mxu0 0.0
      %2548 = vmatprep.subr.mxu0 0.0
      %2549 = vmatpush1.msra.mxu0 0.0
      %2550 = vmatprep.subr.mxu0 0.0
      %2551 = vmatpush1.msra.mxu0 0.0
      %2552 = vmatprep.subr.mxu0 0.0
      %2553 = vmatpush1.msra.mxu0 0.0
      %2554 = vmatprep.subr.mxu0 0.0
      %2555 = vmatpush1.msra.mxu0 0.0
      %2556 = vmatprep.subr.mxu0 0.0
      %2557 = vmatpush1.msra.mxu0 0.0
      %2558 = vmatprep.subr.mxu0 0.0
      %2559 = vmatpush1.msra.mxu0 0.0
      %2560 = vmatprep.subr.mxu0 0.0
      %2561 = vmatpush1.msra.mxu0 0.0
      %2562 = vmatprep.subr.mxu0 0.0
      %2563 = vmatpush1.msra.mxu0 0.0
      %2564 = vmatprep.subr.mxu0 0.0
      %2565 = vmatpush1.msra.mxu0 0.0
      %2566 = vmatprep.mubr.f32.mxu0 0.0
      %2567 = vmatmul.mubr.f32.gmra.mrb[0].mxu0 %v2500
      %v2568 = vpop.f32.mrb[0].mxu0
      %v2569 = vadd.f32 %v42, %v2568
      %v2570 = vpop.f32.mrb[0].mxu0
      %2571 = vdwg.mxu0
      %2572 = vst [vmem:[%s4 + $0xb] sm:$0x1] %v2569
      %2573 = vrot.lane.b32.xlu0 %v2495, 32
      %v2574 = vpop.permute.xlu0 %2573
      %vm2576 = vcmask 254977
      %2577 = vst.msk [vmem:[#allocation2 - $0x1] sm:$0x2] %vm2576, %v2574
      %2579 = vrot.lane.b32.xlu0 %v2489, 96
      %v2580 = vpop.permute.xlu0 %2579
      %2582 = vst.msk [vmem:[#allocation3 - $0x1] sm:$0x2] %vm2576, %v2580
      %2583 = vrot.lane.b32.xlu0 %v2569, 127
      %v2584 = vpop.permute.xlu0 %2583
      %s2585 = vtos %v2584
      %s2586 = vtos %v2569
      %p2587 = scmp.gt.f32.partialorder %s2585, %s2586
      %s2588 = scalar_select %p2587, 1, 0
      %2589 = sst [smem:[%s50]] %s2588
      %2590 = sst [smem:[%s52]] 12
    $region69: #{lstm_reinforce_forward.1} parent=1 // pred_fallthru
      _
    %s2591 = sld [smem:[#allocation4]]
    %p2592 = scmp.eq.s32.totalorder %s2591, 0
    // Predicated region
    $region70: #{lstm_reinforce_forward.1} parent=1 // pred_check
      %p2593 = pneg %p2592
    $region71: #{lstm_reinforce_forward.1} parent=1 // pred_check_branch
      %2595 = sbr.rel (%p2593) target = $region73
    $region72: #{lstm_reinforce_forward.1} parent=1 // pred_region
      %v2596 = vld [vmem:[#allocation2] sm:$0x1]
      %v2597 = vld [vmem:[#allocation3] sm:$0x1]
      %vm2598 = vcmask 261120
      %v2600 = vsel %vm2598, %v2596, 0
      %2602 = vmatprep.subr.mxu0 0.0
      %2603 = vmatpush1.msra.mxu0 %v34
      %2604 = vmatprep.subr.mxu0 0.0
      %2605 = vmatpush1.msra.mxu0 %v35
      %2606 = vmatprep.subr.mxu0 0.0
      %2607 = vmatpush1.msra.mxu0 %v36
      %2608 = vmatprep.subr.mxu0 0.0
      %2609 = vmatpush1.msra.mxu0 %v37
      %2610 = vmatprep.subr.mxu0 0.0
      %2611 = vmatpush1.msra.mxu0 0.0
      %2612 = vmatprep.subr.mxu0 0.0
      %2613 = vmatpush1.msra.mxu0 0.0
      %2614 = vmatprep.subr.mxu0 0.0
      %2615 = vmatpush1.msra.mxu0 0.0
      %2616 = vmatprep.subr.mxu0 0.0
      %2617 = vmatpush1.msra.mxu0 0.0
      %2618 = vmatprep.subr.mxu0 0.0
      %2619 = vmatpush1.msra.mxu0 0.0
      %2620 = vmatprep.subr.mxu0 0.0
      %2621 = vmatpush1.msra.mxu0 0.0
      %2622 = vmatprep.subr.mxu0 0.0
      %2623 = vmatpush1.msra.mxu0 0.0
      %2624 = vmatprep.subr.mxu0 0.0
      %2625 = vmatpush1.msra.mxu0 0.0
      %2626 = vmatprep.subr.mxu0 0.0
      %2627 = vmatpush1.msra.mxu0 0.0
      %2628 = vmatprep.subr.mxu0 0.0
      %2629 = vmatpush1.msra.mxu0 0.0
      %2630 = vmatprep.subr.mxu0 0.0
      %2631 = vmatpush1.msra.mxu0 0.0
      %2632 = vmatprep.subr.mxu0 0.0
      %2633 = vmatpush1.msra.mxu0 0.0
      %2634 = vmatprep.subr.mxu0 0.0
      %2635 = vmatpush1.msra.mxu0 0.0
      %2636 = vmatprep.subr.mxu0 0.0
      %2637 = vmatpush1.msra.mxu0 0.0
      %2638 = vmatprep.subr.mxu0 0.0
      %2639 = vmatpush1.msra.mxu0 0.0
      %2640 = vmatprep.subr.mxu0 0.0
      %2641 = vmatpush1.msra.mxu0 0.0
      %2642 = vmatprep.subr.mxu0 0.0
      %2643 = vmatpush1.msra.mxu0 0.0
      %2644 = vmatprep.subr.mxu0 0.0
      %2645 = vmatpush1.msra.mxu0 0.0
      %2646 = vmatprep.subr.mxu0 0.0
      %2647 = vmatpush1.msra.mxu0 0.0
      %2648 = vmatprep.subr.mxu0 0.0
      %2649 = vmatpush1.msra.mxu0 0.0
      %2650 = vmatprep.subr.mxu0 0.0
      %2651 = vmatpush1.msra.mxu0 0.0
      %2652 = vmatprep.subr.mxu0 0.0
      %2653 = vmatpush1.msra.mxu0 0.0
      %2654 = vmatprep.subr.mxu0 0.0
      %2655 = vmatpush1.msra.mxu0 0.0
      %2656 = vmatprep.subr.mxu0 0.0
      %2657 = vmatpush1.msra.mxu0 0.0
      %2658 = vmatprep.subr.mxu0 0.0
      %2659 = vmatpush1.msra.mxu0 0.0
      %2660 = vmatprep.subr.mxu0 0.0
      %2661 = vmatpush1.msra.mxu0 0.0
      %2662 = vmatprep.subr.mxu0 0.0
      %2663 = vmatpush1.msra.mxu0 0.0
      %2664 = vmatprep.subr.mxu0 0.0
      %2665 = vmatpush1.msra.mxu0 0.0
      %2666 = vmatprep.mubr.f32.mxu0 0.0
      %2667 = vmatmul.mubr.f32.gmra.mrb[0].mxu0 %v2600
      %v2668 = vpop.f32.mrb[0].mxu0
      %v2669 = vadd.f32 0.0, %v2668
      %v2670 = vpop.f32.mrb[0].mxu0
      %2671 = vdwg.mxu0
      %v2673 = vrot.slane %v2669, 7
      %v2675 = vadd.f32 %v43, %v2673
      %v2676 = vxor.u32 %v2675, 2147483648
      %v2677 = vmul.f32 %v2676, 1.442695
      %v2678 = vpow.pop %v2677
      %v2679 = vadd.f32 %v2678, 1.0
      %v2680 = vrcp.pop %v2679
      %v2681 = vmul.f32 1.0, %v2680
      %v2682 = vtanh.pop %v2675
      %v2684 = vlaneseq
      %v2685 = vshrl.u32 %v2684, 7
      %v2686 = vsub.s32 0, %v2685
      %v2687 = vrot.slane %v2597, %v2686
      %2688 = vrot.lane.b32.xlu0 %v2687, 32
      %v2689 = vpop.permute.xlu0 %2688
      %v2691 = vmul.f32 %v2681, %v2689
      %2693 = vrot.lane.b32.xlu0 %v2682, 64
      %v2694 = vpop.permute.xlu0 %2693
      %v2696 = vmul.f32 %v2681, %v2694
      %2698 = vrot.lane.b32.xlu0 %v2696, 32
      %v2699 = vpop.permute.xlu0 %2698
      %v2701 = vadd.f32 %v2691, %v2699
      %v2702 = vtanh.pop %v2701
      %2704 = vrot.lane.b32.xlu0 %v2702, 64
      %v2705 = vpop.permute.xlu0 %2704
      %v2707 = vmul.f32 %v2681, %v2705
      %v2709 = vrot.slane %v2707, 1
      %2710 = vrot.lane.b32.xlu0 %v2709, 32
      %v2711 = vpop.permute.xlu0 %2710
      %v2712 = vsel %vm2598, %v2711, 0
      %2714 = vmatprep.subr.mxu0 0.0
      %2715 = vmatpush1.msra.mxu0 %v38
      %2716 = vmatprep.subr.mxu0 0.0
      %2717 = vmatpush1.msra.mxu0 %v39
      %2718 = vmatprep.subr.mxu0 0.0
      %2719 = vmatpush1.msra.mxu0 %v40
      %2720 = vmatprep.subr.mxu0 0.0
      %2721 = vmatpush1.msra.mxu0 %v41
      %2722 = vmatprep.subr.mxu0 0.0
      %2723 = vmatpush1.msra.mxu0 0.0
      %2724 = vmatprep.subr.mxu0 0.0
      %2725 = vmatpush1.msra.mxu0 0.0
      %2726 = vmatprep.subr.mxu0 0.0
      %2727 = vmatpush1.msra.mxu0 0.0
      %2728 = vmatprep.subr.mxu0 0.0
      %2729 = vmatpush1.msra.mxu0 0.0
      %2730 = vmatprep.subr.mxu0 0.0
      %2731 = vmatpush1.msra.mxu0 0.0
      %2732 = vmatprep.subr.mxu0 0.0
      %2733 = vmatpush1.msra.mxu0 0.0
      %2734 = vmatprep.subr.mxu0 0.0
      %2735 = vmatpush1.msra.mxu0 0.0
      %2736 = vmatprep.subr.mxu0 0.0
      %2737 = vmatpush1.msra.mxu0 0.0
      %2738 = vmatprep.subr.mxu0 0.0
      %2739 = vmatpush1.msra.mxu0 0.0
      %2740 = vmatprep.subr.mxu0 0.0
      %2741 = vmatpush1.msra.mxu0 0.0
      %2742 = vmatprep.subr.mxu0 0.0
      %2743 = vmatpush1.msra.mxu0 0.0
      %2744 = vmatprep.subr.mxu0 0.0
      %2745 = vmatpush1.msra.mxu0 0.0
      %2746 = vmatprep.subr.mxu0 0.0
      %2747 = vmatpush1.msra.mxu0 0.0
      %2748 = vmatprep.subr.mxu0 0.0
      %2749 = vmatpush1.msra.mxu0 0.0
      %2750 = vmatprep.subr.mxu0 0.0
      %2751 = vmatpush1.msra.mxu0 0.0
      %2752 = vmatprep.subr.mxu0 0.0
      %2753 = vmatpush1.msra.mxu0 0.0
      %2754 = vmatprep.subr.mxu0 0.0
      %2755 = vmatpush1.msra.mxu0 0.0
      %2756 = vmatprep.subr.mxu0 0.0
      %2757 = vmatpush1.msra.mxu0 0.0
      %2758 = vmatprep.subr.mxu0 0.0
      %2759 = vmatpush1.msra.mxu0 0.0
      %2760 = vmatprep.subr.mxu0 0.0
      %2761 = vmatpush1.msra.mxu0 0.0
      %2762 = vmatprep.subr.mxu0 0.0
      %2763 = vmatpush1.msra.mxu0 0.0
      %2764 = vmatprep.subr.mxu0 0.0
      %2765 = vmatpush1.msra.mxu0 0.0
      %2766 = vmatprep.subr.mxu0 0.0
      %2767 = vmatpush1.msra.mxu0 0.0
      %2768 = vmatprep.subr.mxu0 0.0
      %2769 = vmatpush1.msra.mxu0 0.0
      %2770 = vmatprep.subr.mxu0 0.0
      %2771 = vmatpush1.msra.mxu0 0.0
      %2772 = vmatprep.subr.mxu0 0.0
      %2773 = vmatpush1.msra.mxu0 0.0
      %2774 = vmatprep.subr.mxu0 0.0
      %2775 = vmatpush1.msra.mxu0 0.0
      %2776 = vmatprep.subr.mxu0 0.0
      %2777 = vmatpush1.msra.mxu0 0.0
      %2778 = vmatprep.mubr.f32.mxu0 0.0
      %2779 = vmatmul.mubr.f32.gmra.mrb[0].mxu0 %v2712
      %v2780 = vpop.f32.mrb[0].mxu0
      %v2781 = vadd.f32 %v42, %v2780
      %v2782 = vpop.f32.mrb[0].mxu0
      %2783 = vdwg.mxu0
      %2784 = vst [vmem:[%s4 + $0xc] sm:$0x1] %v2781
      %2785 = vrot.lane.b32.xlu0 %v2707, 32
      %v2786 = vpop.permute.xlu0 %2785
      %vm2788 = vcmask 254977
      %2789 = vst.msk [vmem:[#allocation2 - $0x1] sm:$0x2] %vm2788, %v2786
      %2791 = vrot.lane.b32.xlu0 %v2701, 96
      %v2792 = vpop.permute.xlu0 %2791
      %2794 = vst.msk [vmem:[#allocation3 - $0x1] sm:$0x2] %vm2788, %v2792
      %2795 = vrot.lane.b32.xlu0 %v2781, 127
      %v2796 = vpop.permute.xlu0 %2795
      %s2797 = vtos %v2796
      %s2798 = vtos %v2781
      %p2799 = scmp.gt.f32.partialorder %s2797, %s2798
      %s2800 = scalar_select %p2799, 1, 0
      %2801 = sst [smem:[%s50]] %s2800
      %2802 = sst [smem:[%s52]] 13
    $region73: #{lstm_reinforce_forward.1} parent=1 // pred_fallthru
      _
    %s2803 = sld [smem:[#allocation4]]
    %p2804 = scmp.eq.s32.totalorder %s2803, 0
    // Predicated region
    $region74: #{lstm_reinforce_forward.1} parent=1 // pred_check
      %p2805 = pneg %p2804
    $region75: #{lstm_reinforce_forward.1} parent=1 // pred_check_branch
      %2807 = sbr.rel (%p2805) target = $region77
    $region76: #{lstm_reinforce_forward.1} parent=1 // pred_region
      %v2808 = vld [vmem:[#allocation2] sm:$0x1]
      %v2809 = vld [vmem:[#allocation3] sm:$0x1]
      %vm2810 = vcmask 261120
      %v2812 = vsel %vm2810, %v2808, 0
      %2814 = vmatprep.subr.mxu0 0.0
      %2815 = vmatpush1.msra.mxu0 %v34
      %2816 = vmatprep.subr.mxu0 0.0
      %2817 = vmatpush1.msra.mxu0 %v35
      %2818 = vmatprep.subr.mxu0 0.0
      %2819 = vmatpush1.msra.mxu0 %v36
      %2820 = vmatprep.subr.mxu0 0.0
      %2821 = vmatpush1.msra.mxu0 %v37
      %2822 = vmatprep.subr.mxu0 0.0
      %2823 = vmatpush1.msra.mxu0 0.0
      %2824 = vmatprep.subr.mxu0 0.0
      %2825 = vmatpush1.msra.mxu0 0.0
      %2826 = vmatprep.subr.mxu0 0.0
      %2827 = vmatpush1.msra.mxu0 0.0
      %2828 = vmatprep.subr.mxu0 0.0
      %2829 = vmatpush1.msra.mxu0 0.0
      %2830 = vmatprep.subr.mxu0 0.0
      %2831 = vmatpush1.msra.mxu0 0.0
      %2832 = vmatprep.subr.mxu0 0.0
      %2833 = vmatpush1.msra.mxu0 0.0
      %2834 = vmatprep.subr.mxu0 0.0
      %2835 = vmatpush1.msra.mxu0 0.0
      %2836 = vmatprep.subr.mxu0 0.0
      %2837 = vmatpush1.msra.mxu0 0.0
      %2838 = vmatprep.subr.mxu0 0.0
      %2839 = vmatpush1.msra.mxu0 0.0
      %2840 = vmatprep.subr.mxu0 0.0
      %2841 = vmatpush1.msra.mxu0 0.0
      %2842 = vmatprep.subr.mxu0 0.0
      %2843 = vmatpush1.msra.mxu0 0.0
      %2844 = vmatprep.subr.mxu0 0.0
      %2845 = vmatpush1.msra.mxu0 0.0
      %2846 = vmatprep.subr.mxu0 0.0
      %2847 = vmatpush1.msra.mxu0 0.0
      %2848 = vmatprep.subr.mxu0 0.0
      %2849 = vmatpush1.msra.mxu0 0.0
      %2850 = vmatprep.subr.mxu0 0.0
      %2851 = vmatpush1.msra.mxu0 0.0
      %2852 = vmatprep.subr.mxu0 0.0
      %2853 = vmatpush1.msra.mxu0 0.0
      %2854 = vmatprep.subr.mxu0 0.0
      %2855 = vmatpush1.msra.mxu0 0.0
      %2856 = vmatprep.subr.mxu0 0.0
      %2857 = vmatpush1.msra.mxu0 0.0
      %2858 = vmatprep.subr.mxu0 0.0
      %2859 = vmatpush1.msra.mxu0 0.0
      %2860 = vmatprep.subr.mxu0 0.0
      %2861 = vmatpush1.msra.mxu0 0.0
      %2862 = vmatprep.subr.mxu0 0.0
      %2863 = vmatpush1.msra.mxu0 0.0
      %2864 = vmatprep.subr.mxu0 0.0
      %2865 = vmatpush1.msra.mxu0 0.0
      %2866 = vmatprep.subr.mxu0 0.0
      %2867 = vmatpush1.msra.mxu0 0.0
      %2868 = vmatprep.subr.mxu0 0.0
      %2869 = vmatpush1.msra.mxu0 0.0
      %2870 = vmatprep.subr.mxu0 0.0
      %2871 = vmatpush1.msra.mxu0 0.0
      %2872 = vmatprep.subr.mxu0 0.0
      %2873 = vmatpush1.msra.mxu0 0.0
      %2874 = vmatprep.subr.mxu0 0.0
      %2875 = vmatpush1.msra.mxu0 0.0
      %2876 = vmatprep.subr.mxu0 0.0
      %2877 = vmatpush1.msra.mxu0 0.0
      %2878 = vmatprep.mubr.f32.mxu0 0.0
      %2879 = vmatmul.mubr.f32.gmra.mrb[0].mxu0 %v2812
      %v2880 = vpop.f32.mrb[0].mxu0
      %v2881 = vadd.f32 0.0, %v2880
      %v2882 = vpop.f32.mrb[0].mxu0
      %2883 = vdwg.mxu0
      %v2885 = vrot.slane %v2881, 7
      %v2887 = vadd.f32 %v43, %v2885
      %v2888 = vxor.u32 %v2887, 2147483648
      %v2889 = vmul.f32 %v2888, 1.442695
      %v2890 = vpow.pop %v2889
      %v2891 = vadd.f32 %v2890, 1.0
      %v2892 = vrcp.pop %v2891
      %v2893 = vmul.f32 1.0, %v2892
      %v2894 = vtanh.pop %v2887
      %v2896 = vlaneseq
      %v2897 = vshrl.u32 %v2896, 7
      %v2898 = vsub.s32 0, %v2897
      %v2899 = vrot.slane %v2809, %v2898
      %2900 = vrot.lane.b32.xlu0 %v2899, 32
      %v2901 = vpop.permute.xlu0 %2900
      %v2903 = vmul.f32 %v2893, %v2901
      %2905 = vrot.lane.b32.xlu0 %v2894, 64
      %v2906 = vpop.permute.xlu0 %2905
      %v2908 = vmul.f32 %v2893, %v2906
      %2910 = vrot.lane.b32.xlu0 %v2908, 32
      %v2911 = vpop.permute.xlu0 %2910
      %v2913 = vadd.f32 %v2903, %v2911
      %v2914 = vtanh.pop %v2913
      %2916 = vrot.lane.b32.xlu0 %v2914, 64
      %v2917 = vpop.permute.xlu0 %2916
      %v2919 = vmul.f32 %v2893, %v2917
      %v2921 = vrot.slane %v2919, 1
      %2922 = vrot.lane.b32.xlu0 %v2921, 32
      %v2923 = vpop.permute.xlu0 %2922
      %v2924 = vsel %vm2810, %v2923, 0
      %2926 = vmatprep.subr.mxu0 0.0
      %2927 = vmatpush1.msra.mxu0 %v38
      %2928 = vmatprep.subr.mxu0 0.0
      %2929 = vmatpush1.msra.mxu0 %v39
      %2930 = vmatprep.subr.mxu0 0.0
      %2931 = vmatpush1.msra.mxu0 %v40
      %2932 = vmatprep.subr.mxu0 0.0
      %2933 = vmatpush1.msra.mxu0 %v41
      %2934 = vmatprep.subr.mxu0 0.0
      %2935 = vmatpush1.msra.mxu0 0.0
      %2936 = vmatprep.subr.mxu0 0.0
      %2937 = vmatpush1.msra.mxu0 0.0
      %2938 = vmatprep.subr.mxu0 0.0
      %2939 = vmatpush1.msra.mxu0 0.0
      %2940 = vmatprep.subr.mxu0 0.0
      %2941 = vmatpush1.msra.mxu0 0.0
      %2942 = vmatprep.subr.mxu0 0.0
      %2943 = vmatpush1.msra.mxu0 0.0
      %2944 = vmatprep.subr.mxu0 0.0
      %2945 = vmatpush1.msra.mxu0 0.0
      %2946 = vmatprep.subr.mxu0 0.0
      %2947 = vmatpush1.msra.mxu0 0.0
      %2948 = vmatprep.subr.mxu0 0.0
      %2949 = vmatpush1.msra.mxu0 0.0
      %2950 = vmatprep.subr.mxu0 0.0
      %2951 = vmatpush1.msra.mxu0 0.0
      %2952 = vmatprep.subr.mxu0 0.0
      %2953 = vmatpush1.msra.mxu0 0.0
      %2954 = vmatprep.subr.mxu0 0.0
      %2955 = vmatpush1.msra.mxu0 0.0
      %2956 = vmatprep.subr.mxu0 0.0
      %2957 = vmatpush1.msra.mxu0 0.0
      %2958 = vmatprep.subr.mxu0 0.0
      %2959 = vmatpush1.msra.mxu0 0.0
      %2960 = vmatprep.subr.mxu0 0.0
      %2961 = vmatpush1.msra.mxu0 0.0
      %2962 = vmatprep.subr.mxu0 0.0
      %2963 = vmatpush1.msra.mxu0 0.0
      %2964 = vmatprep.subr.mxu0 0.0
      %2965 = vmatpush1.msra.mxu0 0.0
      %2966 = vmatprep.subr.mxu0 0.0
      %2967 = vmatpush1.msra.mxu0 0.0
      %2968 = vmatprep.subr.mxu0 0.0
      %2969 = vmatpush1.msra.mxu0 0.0
      %2970 = vmatprep.subr.mxu0 0.0
      %2971 = vmatpush1.msra.mxu0 0.0
      %2972 = vmatprep.subr.mxu0 0.0
      %2973 = vmatpush1.msra.mxu0 0.0
      %2974 = vmatprep.subr.mxu0 0.0
      %2975 = vmatpush1.msra.mxu0 0.0
      %2976 = vmatprep.subr.mxu0 0.0
      %2977 = vmatpush1.msra.mxu0 0.0
      %2978 = vmatprep.subr.mxu0 0.0
      %2979 = vmatpush1.msra.mxu0 0.0
      %2980 = vmatprep.subr.mxu0 0.0
      %2981 = vmatpush1.msra.mxu0 0.0
      %2982 = vmatprep.subr.mxu0 0.0
      %2983 = vmatpush1.msra.mxu0 0.0
      %2984 = vmatprep.subr.mxu0 0.0
      %2985 = vmatpush1.msra.mxu0 0.0
      %2986 = vmatprep.subr.mxu0 0.0
      %2987 = vmatpush1.msra.mxu0 0.0
      %2988 = vmatprep.subr.mxu0 0.0
      %2989 = vmatpush1.msra.mxu0 0.0
      %2990 = vmatprep.mubr.f32.mxu0 0.0
      %2991 = vmatmul.mubr.f32.gmra.mrb[0].mxu0 %v2924
      %v2992 = vpop.f32.mrb[0].mxu0
      %v2993 = vadd.f32 %v42, %v2992
      %v2994 = vpop.f32.mrb[0].mxu0
      %2995 = vdwg.mxu0
      %2996 = vst [vmem:[%s4 + $0xd] sm:$0x1] %v2993
      %2997 = vrot.lane.b32.xlu0 %v2919, 32
      %v2998 = vpop.permute.xlu0 %2997
      %vm3000 = vcmask 254977
      %3001 = vst.msk [vmem:[#allocation2 - $0x1] sm:$0x2] %vm3000, %v2998
      %3003 = vrot.lane.b32.xlu0 %v2913, 96
      %v3004 = vpop.permute.xlu0 %3003
      %3006 = vst.msk [vmem:[#allocation3 - $0x1] sm:$0x2] %vm3000, %v3004
      %3007 = vrot.lane.b32.xlu0 %v2993, 127
      %v3008 = vpop.permute.xlu0 %3007
      %s3009 = vtos %v3008
      %s3010 = vtos %v2993
      %p3011 = scmp.gt.f32.partialorder %s3009, %s3010
      %s3012 = scalar_select %p3011, 1, 0
      %3013 = sst [smem:[%s50]] %s3012
      %3014 = sst [smem:[%s52]] 14
    $region77: #{lstm_reinforce_forward.1} parent=1 // pred_fallthru
      _
    %s3015 = sld [smem:[#allocation4]]
    %p3016 = scmp.eq.s32.totalorder %s3015, 0
    // Predicated region
    $region78: #{lstm_reinforce_forward.1} parent=1 // pred_check
      %p3017 = pneg %p3016
    $region79: #{lstm_reinforce_forward.1} parent=1 // pred_check_branch
      %3019 = sbr.rel (%p3017) target = $region81
    $region80: #{lstm_reinforce_forward.1} parent=1 // pred_region
      %v3020 = vld [vmem:[#allocation2] sm:$0x1]
      %v3021 = vld [vmem:[#allocation3] sm:$0x1]
      %vm3022 = vcmask 261120
      %v3024 = vsel %vm3022, %v3020, 0
      %3026 = vmatprep.subr.mxu0 0.0
      %3027 = vmatpush1.msra.mxu0 %v34
      %3028 = vmatprep.subr.mxu0 0.0
      %3029 = vmatpush1.msra.mxu0 %v35
      %3030 = vmatprep.subr.mxu0 0.0
      %3031 = vmatpush1.msra.mxu0 %v36
      %3032 = vmatprep.subr.mxu0 0.0
      %3033 = vmatpush1.msra.mxu0 %v37
      %3034 = vmatprep.subr.mxu0 0.0
      %3035 = vmatpush1.msra.mxu0 0.0
      %3036 = vmatprep.subr.mxu0 0.0
      %3037 = vmatpush1.msra.mxu0 0.0
      %3038 = vmatprep.subr.mxu0 0.0
      %3039 = vmatpush1.msra.mxu0 0.0
      %3040 = vmatprep.subr.mxu0 0.0
      %3041 = vmatpush1.msra.mxu0 0.0
      %3042 = vmatprep.subr.mxu0 0.0
      %3043 = vmatpush1.msra.mxu0 0.0
      %3044 = vmatprep.subr.mxu0 0.0
      %3045 = vmatpush1.msra.mxu0 0.0
      %3046 = vmatprep.subr.mxu0 0.0
      %3047 = vmatpush1.msra.mxu0 0.0
      %3048 = vmatprep.subr.mxu0 0.0
      %3049 = vmatpush1.msra.mxu0 0.0
      %3050 = vmatprep.subr.mxu0 0.0
      %3051 = vmatpush1.msra.mxu0 0.0
      %3052 = vmatprep.subr.mxu0 0.0
      %3053 = vmatpush1.msra.mxu0 0.0
      %3054 = vmatprep.subr.mxu0 0.0
      %3055 = vmatpush1.msra.mxu0 0.0
      %3056 = vmatprep.subr.mxu0 0.0
      %3057 = vmatpush1.msra.mxu0 0.0
      %3058 = vmatprep.subr.mxu0 0.0
      %3059 = vmatpush1.msra.mxu0 0.0
      %3060 = vmatprep.subr.mxu0 0.0
      %3061 = vmatpush1.msra.mxu0 0.0
      %3062 = vmatprep.subr.mxu0 0.0
      %3063 = vmatpush1.msra.mxu0 0.0
      %3064 = vmatprep.subr.mxu0 0.0
      %3065 = vmatpush1.msra.mxu0 0.0
      %3066 = vmatprep.subr.mxu0 0.0
      %3067 = vmatpush1.msra.mxu0 0.0
      %3068 = vmatprep.subr.mxu0 0.0
      %3069 = vmatpush1.msra.mxu0 0.0
      %3070 = vmatprep.subr.mxu0 0.0
      %3071 = vmatpush1.msra.mxu0 0.0
      %3072 = vmatprep.subr.mxu0 0.0
      %3073 = vmatpush1.msra.mxu0 0.0
      %3074 = vmatprep.subr.mxu0 0.0
      %3075 = vmatpush1.msra.mxu0 0.0
      %3076 = vmatprep.subr.mxu0 0.0
      %3077 = vmatpush1.msra.mxu0 0.0
      %3078 = vmatprep.subr.mxu0 0.0
      %3079 = vmatpush1.msra.mxu0 0.0
      %3080 = vmatprep.subr.mxu0 0.0
      %3081 = vmatpush1.msra.mxu0 0.0
      %3082 = vmatprep.subr.mxu0 0.0
      %3083 = vmatpush1.msra.mxu0 0.0
      %3084 = vmatprep.subr.mxu0 0.0
      %3085 = vmatpush1.msra.mxu0 0.0
      %3086 = vmatprep.subr.mxu0 0.0
      %3087 = vmatpush1.msra.mxu0 0.0
      %3088 = vmatprep.subr.mxu0 0.0
      %3089 = vmatpush1.msra.mxu0 0.0
      %3090 = vmatprep.mubr.f32.mxu0 0.0
      %3091 = vmatmul.mubr.f32.gmra.mrb[0].mxu0 %v3024
      %v3092 = vpop.f32.mrb[0].mxu0
      %v3093 = vadd.f32 0.0, %v3092
      %v3094 = vpop.f32.mrb[0].mxu0
      %3095 = vdwg.mxu0
      %v3097 = vrot.slane %v3093, 7
      %v3099 = vadd.f32 %v43, %v3097
      %v3100 = vxor.u32 %v3099, 2147483648
      %v3101 = vmul.f32 %v3100, 1.442695
      %v3102 = vpow.pop %v3101
      %v3103 = vadd.f32 %v3102, 1.0
      %v3104 = vrcp.pop %v3103
      %v3105 = vmul.f32 1.0, %v3104
      %v3106 = vtanh.pop %v3099
      %v3108 = vlaneseq
      %v3109 = vshrl.u32 %v3108, 7
      %v3110 = vsub.s32 0, %v3109
      %v3111 = vrot.slane %v3021, %v3110
      %3112 = vrot.lane.b32.xlu0 %v3111, 32
      %v3113 = vpop.permute.xlu0 %3112
      %v3115 = vmul.f32 %v3105, %v3113
      %3117 = vrot.lane.b32.xlu0 %v3106, 64
      %v3118 = vpop.permute.xlu0 %3117
      %v3120 = vmul.f32 %v3105, %v3118
      %3122 = vrot.lane.b32.xlu0 %v3120, 32
      %v3123 = vpop.permute.xlu0 %3122
      %v3125 = vadd.f32 %v3115, %v3123
      %v3126 = vtanh.pop %v3125
      %3128 = vrot.lane.b32.xlu0 %v3126, 64
      %v3129 = vpop.permute.xlu0 %3128
      %v3131 = vmul.f32 %v3105, %v3129
      %v3133 = vrot.slane %v3131, 1
      %3134 = vrot.lane.b32.xlu0 %v3133, 32
      %v3135 = vpop.permute.xlu0 %3134
      %v3136 = vsel %vm3022, %v3135, 0
      %3138 = vmatprep.subr.mxu0 0.0
      %3139 = vmatpush1.msra.mxu0 %v38
      %3140 = vmatprep.subr.mxu0 0.0
      %3141 = vmatpush1.msra.mxu0 %v39
      %3142 = vmatprep.subr.mxu0 0.0
      %3143 = vmatpush1.msra.mxu0 %v40
      %3144 = vmatprep.subr.mxu0 0.0
      %3145 = vmatpush1.msra.mxu0 %v41
      %3146 = vmatprep.subr.mxu0 0.0
      %3147 = vmatpush1.msra.mxu0 0.0
      %3148 = vmatprep.subr.mxu0 0.0
      %3149 = vmatpush1.msra.mxu0 0.0
      %3150 = vmatprep.subr.mxu0 0.0
      %3151 = vmatpush1.msra.mxu0 0.0
      %3152 = vmatprep.subr.mxu0 0.0
      %3153 = vmatpush1.msra.mxu0 0.0
      %3154 = vmatprep.subr.mxu0 0.0
      %3155 = vmatpush1.msra.mxu0 0.0
      %3156 = vmatprep.subr.mxu0 0.0
      %3157 = vmatpush1.msra.mxu0 0.0
      %3158 = vmatprep.subr.mxu0 0.0
      %3159 = vmatpush1.msra.mxu0 0.0
      %3160 = vmatprep.subr.mxu0 0.0
      %3161 = vmatpush1.msra.mxu0 0.0
      %3162 = vmatprep.subr.mxu0 0.0
      %3163 = vmatpush1.msra.mxu0 0.0
      %3164 = vmatprep.subr.mxu0 0.0
      %3165 = vmatpush1.msra.mxu0 0.0
      %3166 = vmatprep.subr.mxu0 0.0
      %3167 = vmatpush1.msra.mxu0 0.0
      %3168 = vmatprep.subr.mxu0 0.0
      %3169 = vmatpush1.msra.mxu0 0.0
      %3170 = vmatprep.subr.mxu0 0.0
      %3171 = vmatpush1.msra.mxu0 0.0
      %3172 = vmatprep.subr.mxu0 0.0
      %3173 = vmatpush1.msra.mxu0 0.0
      %3174 = vmatprep.subr.mxu0 0.0
      %3175 = vmatpush1.msra.mxu0 0.0
      %3176 = vmatprep.subr.mxu0 0.0
      %3177 = vmatpush1.msra.mxu0 0.0
      %3178 = vmatprep.subr.mxu0 0.0
      %3179 = vmatpush1.msra.mxu0 0.0
      %3180 = vmatprep.subr.mxu0 0.0
      %3181 = vmatpush1.msra.mxu0 0.0
      %3182 = vmatprep.subr.mxu0 0.0
      %3183 = vmatpush1.msra.mxu0 0.0
      %3184 = vmatprep.subr.mxu0 0.0
      %3185 = vmatpush1.msra.mxu0 0.0
      %3186 = vmatprep.subr.mxu0 0.0
      %3187 = vmatpush1.msra.mxu0 0.0
      %3188 = vmatprep.subr.mxu0 0.0
      %3189 = vmatpush1.msra.mxu0 0.0
      %3190 = vmatprep.subr.mxu0 0.0
      %3191 = vmatpush1.msra.mxu0 0.0
      %3192 = vmatprep.subr.mxu0 0.0
      %3193 = vmatpush1.msra.mxu0 0.0
      %3194 = vmatprep.subr.mxu0 0.0
      %3195 = vmatpush1.msra.mxu0 0.0
      %3196 = vmatprep.subr.mxu0 0.0
      %3197 = vmatpush1.msra.mxu0 0.0
      %3198 = vmatprep.subr.mxu0 0.0
      %3199 = vmatpush1.msra.mxu0 0.0
      %3200 = vmatprep.subr.mxu0 0.0
      %3201 = vmatpush1.msra.mxu0 0.0
      %3202 = vmatprep.mubr.f32.mxu0 0.0
      %3203 = vmatmul.mubr.f32.gmra.mrb[0].mxu0 %v3136
      %v3204 = vpop.f32.mrb[0].mxu0
      %v3205 = vadd.f32 %v42, %v3204
      %v3206 = vpop.f32.mrb[0].mxu0
      %3207 = vdwg.mxu0
      %3208 = vst [vmem:[%s4 + $0xe] sm:$0x1] %v3205
      %3209 = vrot.lane.b32.xlu0 %v3131, 32
      %v3210 = vpop.permute.xlu0 %3209
      %vm3212 = vcmask 254977
      %3213 = vst.msk [vmem:[#allocation2 - $0x1] sm:$0x2] %vm3212, %v3210
      %3215 = vrot.lane.b32.xlu0 %v3125, 96
      %v3216 = vpop.permute.xlu0 %3215
      %3218 = vst.msk [vmem:[#allocation3 - $0x1] sm:$0x2] %vm3212, %v3216
      %3219 = vrot.lane.b32.xlu0 %v3205, 127
      %v3220 = vpop.permute.xlu0 %3219
      %s3221 = vtos %v3220
      %s3222 = vtos %v3205
      %p3223 = scmp.gt.f32.partialorder %s3221, %s3222
      %s3224 = scalar_select %p3223, 1, 0
      %3225 = sst [smem:[%s50]] %s3224
      %3226 = sst [smem:[%s52]] 15
    $region81: #{lstm_reinforce_forward.1} parent=1 // pred_fallthru
      _
    %s3227 = sld [smem:[#allocation4]]
    %p3228 = scmp.eq.s32.totalorder %s3227, 0
    // Predicated region
    $region82: #{lstm_reinforce_forward.1} parent=1 // pred_check
      %p3229 = pneg %p3228
    $region83: #{lstm_reinforce_forward.1} parent=1 // pred_check_branch
      %3231 = sbr.rel (%p3229) target = $region85
    $region84: #{lstm_reinforce_forward.1} parent=1 // pred_region
      %v3232 = vld [vmem:[#allocation2] sm:$0x1]
      %v3233 = vld [vmem:[#allocation3] sm:$0x1]
      %vm3234 = vcmask 261120
      %v3236 = vsel %vm3234, %v3232, 0
      %3238 = vmatprep.subr.mxu0 0.0
      %3239 = vmatpush1.msra.mxu0 %v34
      %3240 = vmatprep.subr.mxu0 0.0
      %3241 = vmatpush1.msra.mxu0 %v35
      %3242 = vmatprep.subr.mxu0 0.0
      %3243 = vmatpush1.msra.mxu0 %v36
      %3244 = vmatprep.subr.mxu0 0.0
      %3245 = vmatpush1.msra.mxu0 %v37
      %3246 = vmatprep.subr.mxu0 0.0
      %3247 = vmatpush1.msra.mxu0 0.0
      %3248 = vmatprep.subr.mxu0 0.0
      %3249 = vmatpush1.msra.mxu0 0.0
      %3250 = vmatprep.subr.mxu0 0.0
      %3251 = vmatpush1.msra.mxu0 0.0
      %3252 = vmatprep.subr.mxu0 0.0
      %3253 = vmatpush1.msra.mxu0 0.0
      %3254 = vmatprep.subr.mxu0 0.0
      %3255 = vmatpush1.msra.mxu0 0.0
      %3256 = vmatprep.subr.mxu0 0.0
      %3257 = vmatpush1.msra.mxu0 0.0
      %3258 = vmatprep.subr.mxu0 0.0
      %3259 = vmatpush1.msra.mxu0 0.0
      %3260 = vmatprep.subr.mxu0 0.0
      %3261 = vmatpush1.msra.mxu0 0.0
      %3262 = vmatprep.subr.mxu0 0.0
      %3263 = vmatpush1.msra.mxu0 0.0
      %3264 = vmatprep.subr.mxu0 0.0
      %3265 = vmatpush1.msra.mxu0 0.0
      %3266 = vmatprep.subr.mxu0 0.0
      %3267 = vmatpush1.msra.mxu0 0.0
      %3268 = vmatprep.subr.mxu0 0.0
      %3269 = vmatpush1.msra.mxu0 0.0
      %3270 = vmatprep.subr.mxu0 0.0
      %3271 = vmatpush1.msra.mxu0 0.0
      %3272 = vmatprep.subr.mxu0 0.0
      %3273 = vmatpush1.msra.mxu0 0.0
      %3274 = vmatprep.subr.mxu0 0.0
      %3275 = vmatpush1.msra.mxu0 0.0
      %3276 = vmatprep.subr.mxu0 0.0
      %3277 = vmatpush1.msra.mxu0 0.0
      %3278 = vmatprep.subr.mxu0 0.0
      %3279 = vmatpush1.msra.mxu0 0.0
      %3280 = vmatprep.subr.mxu0 0.0
      %3281 = vmatpush1.msra.mxu0 0.0
      %3282 = vmatprep.subr.mxu0 0.0
      %3283 = vmatpush1.msra.mxu0 0.0
      %3284 = vmatprep.subr.mxu0 0.0
      %3285 = vmatpush1.msra.mxu0 0.0
      %3286 = vmatprep.subr.mxu0 0.0
      %3287 = vmatpush1.msra.mxu0 0.0
      %3288 = vmatprep.subr.mxu0 0.0
      %3289 = vmatpush1.msra.mxu0 0.0
      %3290 = vmatprep.subr.mxu0 0.0
      %3291 = vmatpush1.msra.mxu0 0.0
      %3292 = vmatprep.subr.mxu0 0.0
      %3293 = vmatpush1.msra.mxu0 0.0
      %3294 = vmatprep.subr.mxu0 0.0
      %3295 = vmatpush1.msra.mxu0 0.0
      %3296 = vmatprep.subr.mxu0 0.0
      %3297 = vmatpush1.msra.mxu0 0.0
      %3298 = vmatprep.subr.mxu0 0.0
      %3299 = vmatpush1.msra.mxu0 0.0
      %3300 = vmatprep.subr.mxu0 0.0
      %3301 = vmatpush1.msra.mxu0 0.0
      %3302 = vmatprep.mubr.f32.mxu0 0.0
      %3303 = vmatmul.mubr.f32.gmra.mrb[0].mxu0 %v3236
      %v3304 = vpop.f32.mrb[0].mxu0
      %v3305 = vadd.f32 0.0, %v3304
      %v3306 = vpop.f32.mrb[0].mxu0
      %3307 = vdwg.mxu0
      %v3309 = vrot.slane %v3305, 7
      %v3311 = vadd.f32 %v43, %v3309
      %v3312 = vxor.u32 %v3311, 2147483648
      %v3313 = vmul.f32 %v3312, 1.442695
      %v3314 = vpow.pop %v3313
      %v3315 = vadd.f32 %v3314, 1.0
      %v3316 = vrcp.pop %v3315
      %v3317 = vmul.f32 1.0, %v3316
      %v3318 = vtanh.pop %v3311
      %v3320 = vlaneseq
      %v3321 = vshrl.u32 %v3320, 7
      %v3322 = vsub.s32 0, %v3321
      %v3323 = vrot.slane %v3233, %v3322
      %3324 = vrot.lane.b32.xlu0 %v3323, 32
      %v3325 = vpop.permute.xlu0 %3324
      %v3327 = vmul.f32 %v3317, %v3325
      %3329 = vrot.lane.b32.xlu0 %v3318, 64
      %v3330 = vpop.permute.xlu0 %3329
      %v3332 = vmul.f32 %v3317, %v3330
      %3334 = vrot.lane.b32.xlu0 %v3332, 32
      %v3335 = vpop.permute.xlu0 %3334
      %v3337 = vadd.f32 %v3327, %v3335
      %v3338 = vtanh.pop %v3337
      %3340 = vrot.lane.b32.xlu0 %v3338, 64
      %v3341 = vpop.permute.xlu0 %3340
      %v3343 = vmul.f32 %v3317, %v3341
      %v3345 = vrot.slane %v3343, 1
      %3346 = vrot.lane.b32.xlu0 %v3345, 32
      %v3347 = vpop.permute.xlu0 %3346
      %v3348 = vsel %vm3234, %v3347, 0
      %3350 = vmatprep.subr.mxu0 0.0
      %3351 = vmatpush1.msra.mxu0 %v38
      %3352 = vmatprep.subr.mxu0 0.0
      %3353 = vmatpush1.msra.mxu0 %v39
      %3354 = vmatprep.subr.mxu0 0.0
      %3355 = vmatpush1.msra.mxu0 %v40
      %3356 = vmatprep.subr.mxu0 0.0
      %3357 = vmatpush1.msra.mxu0 %v41
      %3358 = vmatprep.subr.mxu0 0.0
      %3359 = vmatpush1.msra.mxu0 0.0
      %3360 = vmatprep.subr.mxu0 0.0
      %3361 = vmatpush1.msra.mxu0 0.0
      %3362 = vmatprep.subr.mxu0 0.0
      %3363 = vmatpush1.msra.mxu0 0.0
      %3364 = vmatprep.subr.mxu0 0.0
      %3365 = vmatpush1.msra.mxu0 0.0
      %3366 = vmatprep.subr.mxu0 0.0
      %3367 = vmatpush1.msra.mxu0 0.0
      %3368 = vmatprep.subr.mxu0 0.0
      %3369 = vmatpush1.msra.mxu0 0.0
      %3370 = vmatprep.subr.mxu0 0.0
      %3371 = vmatpush1.msra.mxu0 0.0
      %3372 = vmatprep.subr.mxu0 0.0
      %3373 = vmatpush1.msra.mxu0 0.0
      %3374 = vmatprep.subr.mxu0 0.0
      %3375 = vmatpush1.msra.mxu0 0.0
      %3376 = vmatprep.subr.mxu0 0.0
      %3377 = vmatpush1.msra.mxu0 0.0
      %3378 = vmatprep.subr.mxu0 0.0
      %3379 = vmatpush1.msra.mxu0 0.0
      %3380 = vmatprep.subr.mxu0 0.0
      %3381 = vmatpush1.msra.mxu0 0.0
      %3382 = vmatprep.subr.mxu0 0.0
      %3383 = vmatpush1.msra.mxu0 0.0
      %3384 = vmatprep.subr.mxu0 0.0
      %3385 = vmatpush1.msra.mxu0 0.0
      %3386 = vmatprep.subr.mxu0 0.0
      %3387 = vmatpush1.msra.mxu0 0.0
      %3388 = vmatprep.subr.mxu0 0.0
      %3389 = vmatpush1.msra.mxu0 0.0
      %3390 = vmatprep.subr.mxu0 0.0
      %3391 = vmatpush1.msra.mxu0 0.0
      %3392 = vmatprep.subr.mxu0 0.0
      %3393 = vmatpush1.msra.mxu0 0.0
      %3394 = vmatprep.subr.mxu0 0.0
      %3395 = vmatpush1.msra.mxu0 0.0
      %3396 = vmatprep.subr.mxu0 0.0
      %3397 = vmatpush1.msra.mxu0 0.0
      %3398 = vmatprep.subr.mxu0 0.0
      %3399 = vmatpush1.msra.mxu0 0.0
      %3400 = vmatprep.subr.mxu0 0.0
      %3401 = vmatpush1.msra.mxu0 0.0
      %3402 = vmatprep.subr.mxu0 0.0
      %3403 = vmatpush1.msra.mxu0 0.0
      %3404 = vmatprep.subr.mxu0 0.0
      %3405 = vmatpush1.msra.mxu0 0.0
      %3406 = vmatprep.subr.mxu0 0.0
      %3407 = vmatpush1.msra.mxu0 0.0
      %3408 = vmatprep.subr.mxu0 0.0
      %3409 = vmatpush1.msra.mxu0 0.0
      %3410 = vmatprep.subr.mxu0 0.0
      %3411 = vmatpush1.msra.mxu0 0.0
      %3412 = vmatprep.subr.mxu0 0.0
      %3413 = vmatpush1.msra.mxu0 0.0
      %3414 = vmatprep.mubr.f32.mxu0 0.0
      %3415 = vmatmul.mubr.f32.gmra.mrb[0].mxu0 %v3348
      %v3416 = vpop.f32.mrb[0].mxu0
      %v3417 = vadd.f32 %v42, %v3416
      %v3418 = vpop.f32.mrb[0].mxu0
      %3419 = vdwg.mxu0
      %3420 = vst [vmem:[%s4 + $0xf] sm:$0x1] %v3417
      %3421 = vrot.lane.b32.xlu0 %v3343, 32
      %v3422 = vpop.permute.xlu0 %3421
      %vm3424 = vcmask 254977
      %3425 = vst.msk [vmem:[#allocation2 - $0x1] sm:$0x2] %vm3424, %v3422
      %3427 = vrot.lane.b32.xlu0 %v3337, 96
      %v3428 = vpop.permute.xlu0 %3427
      %3430 = vst.msk [vmem:[#allocation3 - $0x1] sm:$0x2] %vm3424, %v3428
      %3431 = vrot.lane.b32.xlu0 %v3417, 127
      %v3432 = vpop.permute.xlu0 %3431
      %s3433 = vtos %v3432
      %s3434 = vtos %v3417
      %p3435 = scmp.gt.f32.partialorder %s3433, %s3434
      %s3436 = scalar_select %p3435, 1, 0
      %3437 = sst [smem:[%s50]] %s3436
      %3438 = sst [smem:[%s52]] 16
    $region85: #{lstm_reinforce_forward.1} parent=1 // pred_fallthru
      _
    %s3439 = sld [smem:[#allocation4]]
    %p3440 = scmp.eq.s32.totalorder %s3439, 0
    // Predicated region
    $region86: #{lstm_reinforce_forward.1} parent=1 // pred_check
      %p3441 = pneg %p3440
    $region87: #{lstm_reinforce_forward.1} parent=1 // pred_check_branch
      %3443 = sbr.rel (%p3441) target = $region89
    $region88: #{lstm_reinforce_forward.1} parent=1 // pred_region
      %v3444 = vld [vmem:[#allocation2] sm:$0x1]
      %v3445 = vld [vmem:[#allocation3] sm:$0x1]
      %vm3446 = vcmask 261120
      %v3448 = vsel %vm3446, %v3444, 0
      %3450 = vmatprep.subr.mxu0 0.0
      %3451 = vmatpush1.msra.mxu0 %v34
      %3452 = vmatprep.subr.mxu0 0.0
      %3453 = vmatpush1.msra.mxu0 %v35
      %3454 = vmatprep.subr.mxu0 0.0
      %3455 = vmatpush1.msra.mxu0 %v36
      %3456 = vmatprep.subr.mxu0 0.0
      %3457 = vmatpush1.msra.mxu0 %v37
      %3458 = vmatprep.subr.mxu0 0.0
      %3459 = vmatpush1.msra.mxu0 0.0
      %3460 = vmatprep.subr.mxu0 0.0
      %3461 = vmatpush1.msra.mxu0 0.0
      %3462 = vmatprep.subr.mxu0 0.0
      %3463 = vmatpush1.msra.mxu0 0.0
      %3464 = vmatprep.subr.mxu0 0.0
      %3465 = vmatpush1.msra.mxu0 0.0
      %3466 = vmatprep.subr.mxu0 0.0
      %3467 = vmatpush1.msra.mxu0 0.0
      %3468 = vmatprep.subr.mxu0 0.0
      %3469 = vmatpush1.msra.mxu0 0.0
      %3470 = vmatprep.subr.mxu0 0.0
      %3471 = vmatpush1.msra.mxu0 0.0
      %3472 = vmatprep.subr.mxu0 0.0
      %3473 = vmatpush1.msra.mxu0 0.0
      %3474 = vmatprep.subr.mxu0 0.0
      %3475 = vmatpush1.msra.mxu0 0.0
      %3476 = vmatprep.subr.mxu0 0.0
      %3477 = vmatpush1.msra.mxu0 0.0
      %3478 = vmatprep.subr.mxu0 0.0
      %3479 = vmatpush1.msra.mxu0 0.0
      %3480 = vmatprep.subr.mxu0 0.0
      %3481 = vmatpush1.msra.mxu0 0.0
      %3482 = vmatprep.subr.mxu0 0.0
      %3483 = vmatpush1.msra.mxu0 0.0
      %3484 = vmatprep.subr.mxu0 0.0
      %3485 = vmatpush1.msra.mxu0 0.0
      %3486 = vmatprep.subr.mxu0 0.0
      %3487 = vmatpush1.msra.mxu0 0.0
      %3488 = vmatprep.subr.mxu0 0.0
      %3489 = vmatpush1.msra.mxu0 0.0
      %3490 = vmatprep.subr.mxu0 0.0
      %3491 = vmatpush1.msra.mxu0 0.0
      %3492 = vmatprep.subr.mxu0 0.0
      %3493 = vmatpush1.msra.mxu0 0.0
      %3494 = vmatprep.subr.mxu0 0.0
      %3495 = vmatpush1.msra.mxu0 0.0
      %3496 = vmatprep.subr.mxu0 0.0
      %3497 = vmatpush1.msra.mxu0 0.0
      %3498 = vmatprep.subr.mxu0 0.0
      %3499 = vmatpush1.msra.mxu0 0.0
      %3500 = vmatprep.subr.mxu0 0.0
      %3501 = vmatpush1.msra.mxu0 0.0
      %3502 = vmatprep.subr.mxu0 0.0
      %3503 = vmatpush1.msra.mxu0 0.0
      %3504 = vmatprep.subr.mxu0 0.0
      %3505 = vmatpush1.msra.mxu0 0.0
      %3506 = vmatprep.subr.mxu0 0.0
      %3507 = vmatpush1.msra.mxu0 0.0
      %3508 = vmatprep.subr.mxu0 0.0
      %3509 = vmatpush1.msra.mxu0 0.0
      %3510 = vmatprep.subr.mxu0 0.0
      %3511 = vmatpush1.msra.mxu0 0.0
      %3512 = vmatprep.subr.mxu0 0.0
      %3513 = vmatpush1.msra.mxu0 0.0
      %3514 = vmatprep.mubr.f32.mxu0 0.0
      %3515 = vmatmul.mubr.f32.gmra.mrb[0].mxu0 %v3448
      %v3516 = vpop.f32.mrb[0].mxu0
      %v3517 = vadd.f32 0.0, %v3516
      %v3518 = vpop.f32.mrb[0].mxu0
      %3519 = vdwg.mxu0
      %v3521 = vrot.slane %v3517, 7
      %v3523 = vadd.f32 %v43, %v3521
      %v3524 = vxor.u32 %v3523, 2147483648
      %v3525 = vmul.f32 %v3524, 1.442695
      %v3526 = vpow.pop %v3525
      %v3527 = vadd.f32 %v3526, 1.0
      %v3528 = vrcp.pop %v3527
      %v3529 = vmul.f32 1.0, %v3528
      %v3530 = vtanh.pop %v3523
      %v3532 = vlaneseq
      %v3533 = vshrl.u32 %v3532, 7
      %v3534 = vsub.s32 0, %v3533
      %v3535 = vrot.slane %v3445, %v3534
      %3536 = vrot.lane.b32.xlu0 %v3535, 32
      %v3537 = vpop.permute.xlu0 %3536
      %v3539 = vmul.f32 %v3529, %v3537
      %3541 = vrot.lane.b32.xlu0 %v3530, 64
      %v3542 = vpop.permute.xlu0 %3541
      %v3544 = vmul.f32 %v3529, %v3542
      %3546 = vrot.lane.b32.xlu0 %v3544, 32
      %v3547 = vpop.permute.xlu0 %3546
      %v3549 = vadd.f32 %v3539, %v3547
      %v3550 = vtanh.pop %v3549
      %3552 = vrot.lane.b32.xlu0 %v3550, 64
      %v3553 = vpop.permute.xlu0 %3552
      %v3555 = vmul.f32 %v3529, %v3553
      %v3557 = vrot.slane %v3555, 1
      %3558 = vrot.lane.b32.xlu0 %v3557, 32
      %v3559 = vpop.permute.xlu0 %3558
      %v3560 = vsel %vm3446, %v3559, 0
      %3562 = vmatprep.subr.mxu0 0.0
      %3563 = vmatpush1.msra.mxu0 %v38
      %3564 = vmatprep.subr.mxu0 0.0
      %3565 = vmatpush1.msra.mxu0 %v39
      %3566 = vmatprep.subr.mxu0 0.0
      %3567 = vmatpush1.msra.mxu0 %v40
      %3568 = vmatprep.subr.mxu0 0.0
      %3569 = vmatpush1.msra.mxu0 %v41
      %3570 = vmatprep.subr.mxu0 0.0
      %3571 = vmatpush1.msra.mxu0 0.0
      %3572 = vmatprep.subr.mxu0 0.0
      %3573 = vmatpush1.msra.mxu0 0.0
      %3574 = vmatprep.subr.mxu0 0.0
      %3575 = vmatpush1.msra.mxu0 0.0
      %3576 = vmatprep.subr.mxu0 0.0
      %3577 = vmatpush1.msra.mxu0 0.0
      %3578 = vmatprep.subr.mxu0 0.0
      %3579 = vmatpush1.msra.mxu0 0.0
      %3580 = vmatprep.subr.mxu0 0.0
      %3581 = vmatpush1.msra.mxu0 0.0
      %3582 = vmatprep.subr.mxu0 0.0
      %3583 = vmatpush1.msra.mxu0 0.0
      %3584 = vmatprep.subr.mxu0 0.0
      %3585 = vmatpush1.msra.mxu0 0.0
      %3586 = vmatprep.subr.mxu0 0.0
      %3587 = vmatpush1.msra.mxu0 0.0
      %3588 = vmatprep.subr.mxu0 0.0
      %3589 = vmatpush1.msra.mxu0 0.0
      %3590 = vmatprep.subr.mxu0 0.0
      %3591 = vmatpush1.msra.mxu0 0.0
      %3592 = vmatprep.subr.mxu0 0.0
      %3593 = vmatpush1.msra.mxu0 0.0
      %3594 = vmatprep.subr.mxu0 0.0
      %3595 = vmatpush1.msra.mxu0 0.0
      %3596 = vmatprep.subr.mxu0 0.0
      %3597 = vmatpush1.msra.mxu0 0.0
      %3598 = vmatprep.subr.mxu0 0.0
      %3599 = vmatpush1.msra.mxu0 0.0
      %3600 = vmatprep.subr.mxu0 0.0
      %3601 = vmatpush1.msra.mxu0 0.0
      %3602 = vmatprep.subr.mxu0 0.0
      %3603 = vmatpush1.msra.mxu0 0.0
      %3604 = vmatprep.subr.mxu0 0.0
      %3605 = vmatpush1.msra.mxu0 0.0
      %3606 = vmatprep.subr.mxu0 0.0
      %3607 = vmatpush1.msra.mxu0 0.0
      %3608 = vmatprep.subr.mxu0 0.0
      %3609 = vmatpush1.msra.mxu0 0.0
      %3610 = vmatprep.subr.mxu0 0.0
      %3611 = vmatpush1.msra.mxu0 0.0
      %3612 = vmatprep.subr.mxu0 0.0
      %3613 = vmatpush1.msra.mxu0 0.0
      %3614 = vmatprep.subr.mxu0 0.0
      %3615 = vmatpush1.msra.mxu0 0.0
      %3616 = vmatprep.subr.mxu0 0.0
      %3617 = vmatpush1.msra.mxu0 0.0
      %3618 = vmatprep.subr.mxu0 0.0
      %3619 = vmatpush1.msra.mxu0 0.0
      %3620 = vmatprep.subr.mxu0 0.0
      %3621 = vmatpush1.msra.mxu0 0.0
      %3622 = vmatprep.subr.mxu0 0.0
      %3623 = vmatpush1.msra.mxu0 0.0
      %3624 = vmatprep.subr.mxu0 0.0
      %3625 = vmatpush1.msra.mxu0 0.0
      %3626 = vmatprep.mubr.f32.mxu0 0.0
      %3627 = vmatmul.mubr.f32.gmra.mrb[0].mxu0 %v3560
      %v3628 = vpop.f32.mrb[0].mxu0
      %v3629 = vadd.f32 %v42, %v3628
      %v3630 = vpop.f32.mrb[0].mxu0
      %3631 = vdwg.mxu0
      %3632 = vst [vmem:[%s4 + $0x10] sm:$0x1] %v3629
      %3633 = vrot.lane.b32.xlu0 %v3555, 32
      %v3634 = vpop.permute.xlu0 %3633
      %vm3636 = vcmask 254977
      %3637 = vst.msk [vmem:[#allocation2 - $0x1] sm:$0x2] %vm3636, %v3634
      %3639 = vrot.lane.b32.xlu0 %v3549, 96
      %v3640 = vpop.permute.xlu0 %3639
      %3642 = vst.msk [vmem:[#allocation3 - $0x1] sm:$0x2] %vm3636, %v3640
      %3643 = vrot.lane.b32.xlu0 %v3629, 127
      %v3644 = vpop.permute.xlu0 %3643
      %s3645 = vtos %v3644
      %s3646 = vtos %v3629
      %p3647 = scmp.gt.f32.partialorder %s3645, %s3646
      %s3648 = scalar_select %p3647, 1, 0
      %3649 = sst [smem:[%s50]] %s3648
      %3650 = sst [smem:[%s52]] 17
    $region89: #{lstm_reinforce_forward.1} parent=1 // pred_fallthru
      _
    %s3651 = sld [smem:[#allocation4]]
    %p3652 = scmp.eq.s32.totalorder %s3651, 0
    // Predicated region
    $region90: #{lstm_reinforce_forward.1} parent=1 // pred_check
      %p3653 = pneg %p3652
    $region91: #{lstm_reinforce_forward.1} parent=1 // pred_check_branch
      %3655 = sbr.rel (%p3653) target = $region93
    $region92: #{lstm_reinforce_forward.1} parent=1 // pred_region
      %v3656 = vld [vmem:[#allocation2] sm:$0x1]
      %v3657 = vld [vmem:[#allocation3] sm:$0x1]
      %vm3658 = vcmask 261120
      %v3660 = vsel %vm3658, %v3656, 0
      %3662 = vmatprep.subr.mxu0 0.0
      %3663 = vmatpush1.msra.mxu0 %v34
      %3664 = vmatprep.subr.mxu0 0.0
      %3665 = vmatpush1.msra.mxu0 %v35
      %3666 = vmatprep.subr.mxu0 0.0
      %3667 = vmatpush1.msra.mxu0 %v36
      %3668 = vmatprep.subr.mxu0 0.0
      %3669 = vmatpush1.msra.mxu0 %v37
      %3670 = vmatprep.subr.mxu0 0.0
      %3671 = vmatpush1.msra.mxu0 0.0
      %3672 = vmatprep.subr.mxu0 0.0
      %3673 = vmatpush1.msra.mxu0 0.0
      %3674 = vmatprep.subr.mxu0 0.0
      %3675 = vmatpush1.msra.mxu0 0.0
      %3676 = vmatprep.subr.mxu0 0.0
      %3677 = vmatpush1.msra.mxu0 0.0
      %3678 = vmatprep.subr.mxu0 0.0
      %3679 = vmatpush1.msra.mxu0 0.0
      %3680 = vmatprep.subr.mxu0 0.0
      %3681 = vmatpush1.msra.mxu0 0.0
      %3682 = vmatprep.subr.mxu0 0.0
      %3683 = vmatpush1.msra.mxu0 0.0
      %3684 = vmatprep.subr.mxu0 0.0
      %3685 = vmatpush1.msra.mxu0 0.0
      %3686 = vmatprep.subr.mxu0 0.0
      %3687 = vmatpush1.msra.mxu0 0.0
      %3688 = vmatprep.subr.mxu0 0.0
      %3689 = vmatpush1.msra.mxu0 0.0
      %3690 = vmatprep.subr.mxu0 0.0
      %3691 = vmatpush1.msra.mxu0 0.0
      %3692 = vmatprep.subr.mxu0 0.0
      %3693 = vmatpush1.msra.mxu0 0.0
      %3694 = vmatprep.subr.mxu0 0.0
      %3695 = vmatpush1.msra.mxu0 0.0
      %3696 = vmatprep.subr.mxu0 0.0
      %3697 = vmatpush1.msra.mxu0 0.0
      %3698 = vmatprep.subr.mxu0 0.0
      %3699 = vmatpush1.msra.mxu0 0.0
      %3700 = vmatprep.subr.mxu0 0.0
      %3701 = vmatpush1.msra.mxu0 0.0
      %3702 = vmatprep.subr.mxu0 0.0
      %3703 = vmatpush1.msra.mxu0 0.0
      %3704 = vmatprep.subr.mxu0 0.0
      %3705 = vmatpush1.msra.mxu0 0.0
      %3706 = vmatprep.subr.mxu0 0.0
      %3707 = vmatpush1.msra.mxu0 0.0
      %3708 = vmatprep.subr.mxu0 0.0
      %3709 = vmatpush1.msra.mxu0 0.0
      %3710 = vmatprep.subr.mxu0 0.0
      %3711 = vmatpush1.msra.mxu0 0.0
      %3712 = vmatprep.subr.mxu0 0.0
      %3713 = vmatpush1.msra.mxu0 0.0
      %3714 = vmatprep.subr.mxu0 0.0
      %3715 = vmatpush1.msra.mxu0 0.0
      %3716 = vmatprep.subr.mxu0 0.0
      %3717 = vmatpush1.msra.mxu0 0.0
      %3718 = vmatprep.subr.mxu0 0.0
      %3719 = vmatpush1.msra.mxu0 0.0
      %3720 = vmatprep.subr.mxu0 0.0
      %3721 = vmatpush1.msra.mxu0 0.0
      %3722 = vmatprep.subr.mxu0 0.0
      %3723 = vmatpush1.msra.mxu0 0.0
      %3724 = vmatprep.subr.mxu0 0.0
      %3725 = vmatpush1.msra.mxu0 0.0
      %3726 = vmatprep.mubr.f32.mxu0 0.0
      %3727 = vmatmul.mubr.f32.gmra.mrb[0].mxu0 %v3660
      %v3728 = vpop.f32.mrb[0].mxu0
      %v3729 = vadd.f32 0.0, %v3728
      %v3730 = vpop.f32.mrb[0].mxu0
      %3731 = vdwg.mxu0
      %v3733 = vrot.slane %v3729, 7
      %v3735 = vadd.f32 %v43, %v3733
      %v3736 = vxor.u32 %v3735, 2147483648
      %v3737 = vmul.f32 %v3736, 1.442695
      %v3738 = vpow.pop %v3737
      %v3739 = vadd.f32 %v3738, 1.0
      %v3740 = vrcp.pop %v3739
      %v3741 = vmul.f32 1.0, %v3740
      %v3742 = vtanh.pop %v3735
      %v3744 = vlaneseq
      %v3745 = vshrl.u32 %v3744, 7
      %v3746 = vsub.s32 0, %v3745
      %v3747 = vrot.slane %v3657, %v3746
      %3748 = vrot.lane.b32.xlu0 %v3747, 32
      %v3749 = vpop.permute.xlu0 %3748
      %v3751 = vmul.f32 %v3741, %v3749
      %3753 = vrot.lane.b32.xlu0 %v3742, 64
      %v3754 = vpop.permute.xlu0 %3753
      %v3756 = vmul.f32 %v3741, %v3754
      %3758 = vrot.lane.b32.xlu0 %v3756, 32
      %v3759 = vpop.permute.xlu0 %3758
      %v3761 = vadd.f32 %v3751, %v3759
      %v3762 = vtanh.pop %v3761
      %3764 = vrot.lane.b32.xlu0 %v3762, 64
      %v3765 = vpop.permute.xlu0 %3764
      %v3767 = vmul.f32 %v3741, %v3765
      %v3769 = vrot.slane %v3767, 1
      %3770 = vrot.lane.b32.xlu0 %v3769, 32
      %v3771 = vpop.permute.xlu0 %3770
      %v3772 = vsel %vm3658, %v3771, 0
      %3774 = vmatprep.subr.mxu0 0.0
      %3775 = vmatpush1.msra.mxu0 %v38
      %3776 = vmatprep.subr.mxu0 0.0
      %3777 = vmatpush1.msra.mxu0 %v39
      %3778 = vmatprep.subr.mxu0 0.0
      %3779 = vmatpush1.msra.mxu0 %v40
      %3780 = vmatprep.subr.mxu0 0.0
      %3781 = vmatpush1.msra.mxu0 %v41
      %3782 = vmatprep.subr.mxu0 0.0
      %3783 = vmatpush1.msra.mxu0 0.0
      %3784 = vmatprep.subr.mxu0 0.0
      %3785 = vmatpush1.msra.mxu0 0.0
      %3786 = vmatprep.subr.mxu0 0.0
      %3787 = vmatpush1.msra.mxu0 0.0
      %3788 = vmatprep.subr.mxu0 0.0
      %3789 = vmatpush1.msra.mxu0 0.0
      %3790 = vmatprep.subr.mxu0 0.0
      %3791 = vmatpush1.msra.mxu0 0.0
      %3792 = vmatprep.subr.mxu0 0.0
      %3793 = vmatpush1.msra.mxu0 0.0
      %3794 = vmatprep.subr.mxu0 0.0
      %3795 = vmatpush1.msra.mxu0 0.0
      %3796 = vmatprep.subr.mxu0 0.0
      %3797 = vmatpush1.msra.mxu0 0.0
      %3798 = vmatprep.subr.mxu0 0.0
      %3799 = vmatpush1.msra.mxu0 0.0
      %3800 = vmatprep.subr.mxu0 0.0
      %3801 = vmatpush1.msra.mxu0 0.0
      %3802 = vmatprep.subr.mxu0 0.0
      %3803 = vmatpush1.msra.mxu0 0.0
      %3804 = vmatprep.subr.mxu0 0.0
      %3805 = vmatpush1.msra.mxu0 0.0
      %3806 = vmatprep.subr.mxu0 0.0
      %3807 = vmatpush1.msra.mxu0 0.0
      %3808 = vmatprep.subr.mxu0 0.0
      %3809 = vmatpush1.msra.mxu0 0.0
      %3810 = vmatprep.subr.mxu0 0.0
      %3811 = vmatpush1.msra.mxu0 0.0
      %3812 = vmatprep.subr.mxu0 0.0
      %3813 = vmatpush1.msra.mxu0 0.0
      %3814 = vmatprep.subr.mxu0 0.0
      %3815 = vmatpush1.msra.mxu0 0.0
      %3816 = vmatprep.subr.mxu0 0.0
      %3817 = vmatpush1.msra.mxu0 0.0
      %3818 = vmatprep.subr.mxu0 0.0
      %3819 = vmatpush1.msra.mxu0 0.0
      %3820 = vmatprep.subr.mxu0 0.0
      %3821 = vmatpush1.msra.mxu0 0.0
      %3822 = vmatprep.subr.mxu0 0.0
      %3823 = vmatpush1.msra.mxu0 0.0
      %3824 = vmatprep.subr.mxu0 0.0
      %3825 = vmatpush1.msra.mxu0 0.0
      %3826 = vmatprep.subr.mxu0 0.0
      %3827 = vmatpush1.msra.mxu0 0.0
      %3828 = vmatprep.subr.mxu0 0.0
      %3829 = vmatpush1.msra.mxu0 0.0
      %3830 = vmatprep.subr.mxu0 0.0
      %3831 = vmatpush1.msra.mxu0 0.0
      %3832 = vmatprep.subr.mxu0 0.0
      %3833 = vmatpush1.msra.mxu0 0.0
      %3834 = vmatprep.subr.mxu0 0.0
      %3835 = vmatpush1.msra.mxu0 0.0
      %3836 = vmatprep.subr.mxu0 0.0
      %3837 = vmatpush1.msra.mxu0 0.0
      %3838 = vmatprep.mubr.f32.mxu0 0.0
      %3839 = vmatmul.mubr.f32.gmra.mrb[0].mxu0 %v3772
      %v3840 = vpop.f32.mrb[0].mxu0
      %v3841 = vadd.f32 %v42, %v3840
      %v3842 = vpop.f32.mrb[0].mxu0
      %3843 = vdwg.mxu0
      %3844 = vst [vmem:[%s4 + $0x11] sm:$0x1] %v3841
      %3845 = vrot.lane.b32.xlu0 %v3767, 32
      %v3846 = vpop.permute.xlu0 %3845
      %vm3848 = vcmask 254977
      %3849 = vst.msk [vmem:[#allocation2 - $0x1] sm:$0x2] %vm3848, %v3846
      %3851 = vrot.lane.b32.xlu0 %v3761, 96
      %v3852 = vpop.permute.xlu0 %3851
      %3854 = vst.msk [vmem:[#allocation3 - $0x1] sm:$0x2] %vm3848, %v3852
      %3855 = vrot.lane.b32.xlu0 %v3841, 127
      %v3856 = vpop.permute.xlu0 %3855
      %s3857 = vtos %v3856
      %s3858 = vtos %v3841
      %p3859 = scmp.gt.f32.partialorder %s3857, %s3858
      %s3860 = scalar_select %p3859, 1, 0
      %3861 = sst [smem:[%s50]] %s3860
      %3862 = sst [smem:[%s52]] 18
    $region93: #{lstm_reinforce_forward.1} parent=1 // pred_fallthru
      _
    %s3863 = sld [smem:[#allocation4]]
    %p3864 = scmp.eq.s32.totalorder %s3863, 0
    // Predicated region
    $region94: #{lstm_reinforce_forward.1} parent=1 // pred_check
      %p3865 = pneg %p3864
    $region95: #{lstm_reinforce_forward.1} parent=1 // pred_check_branch
      %3867 = sbr.rel (%p3865) target = $region97
    $region96: #{lstm_reinforce_forward.1} parent=1 // pred_region
      %v3868 = vld [vmem:[#allocation2] sm:$0x1]
      %v3869 = vld [vmem:[#allocation3] sm:$0x1]
      %vm3870 = vcmask 261120
      %v3872 = vsel %vm3870, %v3868, 0
      %3874 = vmatprep.subr.mxu0 0.0
      %3875 = vmatpush1.msra.mxu0 %v34
      %3876 = vmatprep.subr.mxu0 0.0
      %3877 = vmatpush1.msra.mxu0 %v35
      %3878 = vmatprep.subr.mxu0 0.0
      %3879 = vmatpush1.msra.mxu0 %v36
      %3880 = vmatprep.subr.mxu0 0.0
      %3881 = vmatpush1.msra.mxu0 %v37
      %3882 = vmatprep.subr.mxu0 0.0
      %3883 = vmatpush1.msra.mxu0 0.0
      %3884 = vmatprep.subr.mxu0 0.0
      %3885 = vmatpush1.msra.mxu0 0.0
      %3886 = vmatprep.subr.mxu0 0.0
      %3887 = vmatpush1.msra.mxu0 0.0
      %3888 = vmatprep.subr.mxu0 0.0
      %3889 = vmatpush1.msra.mxu0 0.0
      %3890 = vmatprep.subr.mxu0 0.0
      %3891 = vmatpush1.msra.mxu0 0.0
      %3892 = vmatprep.subr.mxu0 0.0
      %3893 = vmatpush1.msra.mxu0 0.0
      %3894 = vmatprep.subr.mxu0 0.0
      %3895 = vmatpush1.msra.mxu0 0.0
      %3896 = vmatprep.subr.mxu0 0.0
      %3897 = vmatpush1.msra.mxu0 0.0
      %3898 = vmatprep.subr.mxu0 0.0
      %3899 = vmatpush1.msra.mxu0 0.0
      %3900 = vmatprep.subr.mxu0 0.0
      %3901 = vmatpush1.msra.mxu0 0.0
      %3902 = vmatprep.subr.mxu0 0.0
      %3903 = vmatpush1.msra.mxu0 0.0
      %3904 = vmatprep.subr.mxu0 0.0
      %3905 = vmatpush1.msra.mxu0 0.0
      %3906 = vmatprep.subr.mxu0 0.0
      %3907 = vmatpush1.msra.mxu0 0.0
      %3908 = vmatprep.subr.mxu0 0.0
      %3909 = vmatpush1.msra.mxu0 0.0
      %3910 = vmatprep.subr.mxu0 0.0
      %3911 = vmatpush1.msra.mxu0 0.0
      %3912 = vmatprep.subr.mxu0 0.0
      %3913 = vmatpush1.msra.mxu0 0.0
      %3914 = vmatprep.subr.mxu0 0.0
      %3915 = vmatpush1.msra.mxu0 0.0
      %3916 = vmatprep.subr.mxu0 0.0
      %3917 = vmatpush1.msra.mxu0 0.0
      %3918 = vmatprep.subr.mxu0 0.0
      %3919 = vmatpush1.msra.mxu0 0.0
      %3920 = vmatprep.subr.mxu0 0.0
      %3921 = vmatpush1.msra.mxu0 0.0
      %3922 = vmatprep.subr.mxu0 0.0
      %3923 = vmatpush1.msra.mxu0 0.0
      %3924 = vmatprep.subr.mxu0 0.0
      %3925 = vmatpush1.msra.mxu0 0.0
      %3926 = vmatprep.subr.mxu0 0.0
      %3927 = vmatpush1.msra.mxu0 0.0
      %3928 = vmatprep.subr.mxu0 0.0
      %3929 = vmatpush1.msra.mxu0 0.0
      %3930 = vmatprep.subr.mxu0 0.0
      %3931 = vmatpush1.msra.mxu0 0.0
      %3932 = vmatprep.subr.mxu0 0.0
      %3933 = vmatpush1.msra.mxu0 0.0
      %3934 = vmatprep.subr.mxu0 0.0
      %3935 = vmatpush1.msra.mxu0 0.0
      %3936 = vmatprep.subr.mxu0 0.0
      %3937 = vmatpush1.msra.mxu0 0.0
      %3938 = vmatprep.mubr.f32.mxu0 0.0
      %3939 = vmatmul.mubr.f32.gmra.mrb[0].mxu0 %v3872
      %v3940 = vpop.f32.mrb[0].mxu0
      %v3941 = vadd.f32 0.0, %v3940
      %v3942 = vpop.f32.mrb[0].mxu0
      %3943 = vdwg.mxu0
      %v3945 = vrot.slane %v3941, 7
      %v3947 = vadd.f32 %v43, %v3945
      %v3948 = vxor.u32 %v3947, 2147483648
      %v3949 = vmul.f32 %v3948, 1.442695
      %v3950 = vpow.pop %v3949
      %v3951 = vadd.f32 %v3950, 1.0
      %v3952 = vrcp.pop %v3951
      %v3953 = vmul.f32 1.0, %v3952
      %v3954 = vtanh.pop %v3947
      %v3956 = vlaneseq
      %v3957 = vshrl.u32 %v3956, 7
      %v3958 = vsub.s32 0, %v3957
      %v3959 = vrot.slane %v3869, %v3958
      %3960 = vrot.lane.b32.xlu0 %v3959, 32
      %v3961 = vpop.permute.xlu0 %3960
      %v3963 = vmul.f32 %v3953, %v3961
      %3965 = vrot.lane.b32.xlu0 %v3954, 64
      %v3966 = vpop.permute.xlu0 %3965
      %v3968 = vmul.f32 %v3953, %v3966
      %3970 = vrot.lane.b32.xlu0 %v3968, 32
      %v3971 = vpop.permute.xlu0 %3970
      %v3973 = vadd.f32 %v3963, %v3971
      %v3974 = vtanh.pop %v3973
      %3976 = vrot.lane.b32.xlu0 %v3974, 64
      %v3977 = vpop.permute.xlu0 %3976
      %v3979 = vmul.f32 %v3953, %v3977
      %v3981 = vrot.slane %v3979, 1
      %3982 = vrot.lane.b32.xlu0 %v3981, 32
      %v3983 = vpop.permute.xlu0 %3982
      %v3984 = vsel %vm3870, %v3983, 0
      %3986 = vmatprep.subr.mxu0 0.0
      %3987 = vmatpush1.msra.mxu0 %v38
      %3988 = vmatprep.subr.mxu0 0.0
      %3989 = vmatpush1.msra.mxu0 %v39
      %3990 = vmatprep.subr.mxu0 0.0
      %3991 = vmatpush1.msra.mxu0 %v40
      %3992 = vmatprep.subr.mxu0 0.0
      %3993 = vmatpush1.msra.mxu0 %v41
      %3994 = vmatprep.subr.mxu0 0.0
      %3995 = vmatpush1.msra.mxu0 0.0
      %3996 = vmatprep.subr.mxu0 0.0
      %3997 = vmatpush1.msra.mxu0 0.0
      %3998 = vmatprep.subr.mxu0 0.0
      %3999 = vmatpush1.msra.mxu0 0.0
      %4000 = vmatprep.subr.mxu0 0.0
      %4001 = vmatpush1.msra.mxu0 0.0
      %4002 = vmatprep.subr.mxu0 0.0
      %4003 = vmatpush1.msra.mxu0 0.0
      %4004 = vmatprep.subr.mxu0 0.0
      %4005 = vmatpush1.msra.mxu0 0.0
      %4006 = vmatprep.subr.mxu0 0.0
      %4007 = vmatpush1.msra.mxu0 0.0
      %4008 = vmatprep.subr.mxu0 0.0
      %4009 = vmatpush1.msra.mxu0 0.0
      %4010 = vmatprep.subr.mxu0 0.0
      %4011 = vmatpush1.msra.mxu0 0.0
      %4012 = vmatprep.subr.mxu0 0.0
      %4013 = vmatpush1.msra.mxu0 0.0
      %4014 = vmatprep.subr.mxu0 0.0
      %4015 = vmatpush1.msra.mxu0 0.0
      %4016 = vmatprep.subr.mxu0 0.0
      %4017 = vmatpush1.msra.mxu0 0.0
      %4018 = vmatprep.subr.mxu0 0.0
      %4019 = vmatpush1.msra.mxu0 0.0
      %4020 = vmatprep.subr.mxu0 0.0
      %4021 = vmatpush1.msra.mxu0 0.0
      %4022 = vmatprep.subr.mxu0 0.0
      %4023 = vmatpush1.msra.mxu0 0.0
      %4024 = vmatprep.subr.mxu0 0.0
      %4025 = vmatpush1.msra.mxu0 0.0
      %4026 = vmatprep.subr.mxu0 0.0
      %4027 = vmatpush1.msra.mxu0 0.0
      %4028 = vmatprep.subr.mxu0 0.0
      %4029 = vmatpush1.msra.mxu0 0.0
      %4030 = vmatprep.subr.mxu0 0.0
      %4031 = vmatpush1.msra.mxu0 0.0
      %4032 = vmatprep.subr.mxu0 0.0
      %4033 = vmatpush1.msra.mxu0 0.0
      %4034 = vmatprep.subr.mxu0 0.0
      %4035 = vmatpush1.msra.mxu0 0.0
      %4036 = vmatprep.subr.mxu0 0.0
      %4037 = vmatpush1.msra.mxu0 0.0
      %4038 = vmatprep.subr.mxu0 0.0
      %4039 = vmatpush1.msra.mxu0 0.0
      %4040 = vmatprep.subr.mxu0 0.0
      %4041 = vmatpush1.msra.mxu0 0.0
      %4042 = vmatprep.subr.mxu0 0.0
      %4043 = vmatpush1.msra.mxu0 0.0
      %4044 = vmatprep.subr.mxu0 0.0
      %4045 = vmatpush1.msra.mxu0 0.0
      %4046 = vmatprep.subr.mxu0 0.0
      %4047 = vmatpush1.msra.mxu0 0.0
      %4048 = vmatprep.subr.mxu0 0.0
      %4049 = vmatpush1.msra.mxu0 0.0
      %4050 = vmatprep.mubr.f32.mxu0 0.0
      %4051 = vmatmul.mubr.f32.gmra.mrb[0].mxu0 %v3984
      %v4052 = vpop.f32.mrb[0].mxu0
      %v4053 = vadd.f32 %v42, %v4052
      %v4054 = vpop.f32.mrb[0].mxu0
      %4055 = vdwg.mxu0
      %4056 = vst [vmem:[%s4 + $0x12] sm:$0x1] %v4053
      %4057 = vrot.lane.b32.xlu0 %v3979, 32
      %v4058 = vpop.permute.xlu0 %4057
      %vm4060 = vcmask 254977
      %4061 = vst.msk [vmem:[#allocation2 - $0x1] sm:$0x2] %vm4060, %v4058
      %4063 = vrot.lane.b32.xlu0 %v3973, 96
      %v4064 = vpop.permute.xlu0 %4063
      %4066 = vst.msk [vmem:[#allocation3 - $0x1] sm:$0x2] %vm4060, %v4064
      %4067 = vrot.lane.b32.xlu0 %v4053, 127
      %v4068 = vpop.permute.xlu0 %4067
      %s4069 = vtos %v4068
      %s4070 = vtos %v4053
      %p4071 = scmp.gt.f32.partialorder %s4069, %s4070
      %s4072 = scalar_select %p4071, 1, 0
      %4073 = sst [smem:[%s50]] %s4072
      %4074 = sst [smem:[%s52]] 19
    $region97: #{lstm_reinforce_forward.1} parent=1 // pred_fallthru
      _
    %s4075 = sld [smem:[#allocation4]]
    %p4076 = scmp.eq.s32.totalorder %s4075, 0
    // Predicated region
    $region98: #{lstm_reinforce_forward.1} parent=1 // pred_check
      %p4077 = pneg %p4076
    $region99: #{lstm_reinforce_forward.1} parent=1 // pred_check_branch
      %4079 = sbr.rel (%p4077) target = $region101
    $region100: #{lstm_reinforce_forward.1} parent=1 // pred_region
      %v4080 = vld [vmem:[#allocation2] sm:$0x1]
      %v4081 = vld [vmem:[#allocation3] sm:$0x1]
      %vm4082 = vcmask 261120
      %v4084 = vsel %vm4082, %v4080, 0
      %4086 = vmatprep.subr.mxu0 0.0
      %4087 = vmatpush1.msra.mxu0 %v34
      %4088 = vmatprep.subr.mxu0 0.0
      %4089 = vmatpush1.msra.mxu0 %v35
      %4090 = vmatprep.subr.mxu0 0.0
      %4091 = vmatpush1.msra.mxu0 %v36
      %4092 = vmatprep.subr.mxu0 0.0
      %4093 = vmatpush1.msra.mxu0 %v37
      %4094 = vmatprep.subr.mxu0 0.0
      %4095 = vmatpush1.msra.mxu0 0.0
      %4096 = vmatprep.subr.mxu0 0.0
      %4097 = vmatpush1.msra.mxu0 0.0
      %4098 = vmatprep.subr.mxu0 0.0
      %4099 = vmatpush1.msra.mxu0 0.0
      %4100 = vmatprep.subr.mxu0 0.0
      %4101 = vmatpush1.msra.mxu0 0.0
      %4102 = vmatprep.subr.mxu0 0.0
      %4103 = vmatpush1.msra.mxu0 0.0
      %4104 = vmatprep.subr.mxu0 0.0
      %4105 = vmatpush1.msra.mxu0 0.0
      %4106 = vmatprep.subr.mxu0 0.0
      %4107 = vmatpush1.msra.mxu0 0.0
      %4108 = vmatprep.subr.mxu0 0.0
      %4109 = vmatpush1.msra.mxu0 0.0
      %4110 = vmatprep.subr.mxu0 0.0
      %4111 = vmatpush1.msra.mxu0 0.0
      %4112 = vmatprep.subr.mxu0 0.0
      %4113 = vmatpush1.msra.mxu0 0.0
      %4114 = vmatprep.subr.mxu0 0.0
      %4115 = vmatpush1.msra.mxu0 0.0
      %4116 = vmatprep.subr.mxu0 0.0
      %4117 = vmatpush1.msra.mxu0 0.0
      %4118 = vmatprep.subr.mxu0 0.0
      %4119 = vmatpush1.msra.mxu0 0.0
      %4120 = vmatprep.subr.mxu0 0.0
      %4121 = vmatpush1.msra.mxu0 0.0
      %4122 = vmatprep.subr.mxu0 0.0
      %4123 = vmatpush1.msra.mxu0 0.0
      %4124 = vmatprep.subr.mxu0 0.0
      %4125 = vmatpush1.msra.mxu0 0.0
      %4126 = vmatprep.subr.mxu0 0.0
      %4127 = vmatpush1.msra.mxu0 0.0
      %4128 = vmatprep.subr.mxu0 0.0
      %4129 = vmatpush1.msra.mxu0 0.0
      %4130 = vmatprep.subr.mxu0 0.0
      %4131 = vmatpush1.msra.mxu0 0.0
      %4132 = vmatprep.subr.mxu0 0.0
      %4133 = vmatpush1.msra.mxu0 0.0
      %4134 = vmatprep.subr.mxu0 0.0
      %4135 = vmatpush1.msra.mxu0 0.0
      %4136 = vmatprep.subr.mxu0 0.0
      %4137 = vmatpush1.msra.mxu0 0.0
      %4138 = vmatprep.subr.mxu0 0.0
      %4139 = vmatpush1.msra.mxu0 0.0
      %4140 = vmatprep.subr.mxu0 0.0
      %4141 = vmatpush1.msra.mxu0 0.0
      %4142 = vmatprep.subr.mxu0 0.0
      %4143 = vmatpush1.msra.mxu0 0.0
      %4144 = vmatprep.subr.mxu0 0.0
      %4145 = vmatpush1.msra.mxu0 0.0
      %4146 = vmatprep.subr.mxu0 0.0
      %4147 = vmatpush1.msra.mxu0 0.0
      %4148 = vmatprep.subr.mxu0 0.0
      %4149 = vmatpush1.msra.mxu0 0.0
      %4150 = vmatprep.mubr.f32.mxu0 0.0
      %4151 = vmatmul.mubr.f32.gmra.mrb[0].mxu0 %v4084
      %v4152 = vpop.f32.mrb[0].mxu0
      %v4153 = vadd.f32 0.0, %v4152
      %v4154 = vpop.f32.mrb[0].mxu0
      %4155 = vdwg.mxu0
      %v4157 = vrot.slane %v4153, 7
      %v4159 = vadd.f32 %v43, %v4157
      %v4160 = vxor.u32 %v4159, 2147483648
      %v4161 = vmul.f32 %v4160, 1.442695
      %v4162 = vpow.pop %v4161
      %v4163 = vadd.f32 %v4162, 1.0
      %v4164 = vrcp.pop %v4163
      %v4165 = vmul.f32 1.0, %v4164
      %v4166 = vtanh.pop %v4159
      %v4168 = vlaneseq
      %v4169 = vshrl.u32 %v4168, 7
      %v4170 = vsub.s32 0, %v4169
      %v4171 = vrot.slane %v4081, %v4170
      %4172 = vrot.lane.b32.xlu0 %v4171, 32
      %v4173 = vpop.permute.xlu0 %4172
      %v4175 = vmul.f32 %v4165, %v4173
      %4177 = vrot.lane.b32.xlu0 %v4166, 64
      %v4178 = vpop.permute.xlu0 %4177
      %v4180 = vmul.f32 %v4165, %v4178
      %4182 = vrot.lane.b32.xlu0 %v4180, 32
      %v4183 = vpop.permute.xlu0 %4182
      %v4185 = vadd.f32 %v4175, %v4183
      %v4186 = vtanh.pop %v4185
      %4188 = vrot.lane.b32.xlu0 %v4186, 64
      %v4189 = vpop.permute.xlu0 %4188
      %v4191 = vmul.f32 %v4165, %v4189
      %v4193 = vrot.slane %v4191, 1
      %4194 = vrot.lane.b32.xlu0 %v4193, 32
      %v4195 = vpop.permute.xlu0 %4194
      %v4196 = vsel %vm4082, %v4195, 0
      %4198 = vmatprep.subr.mxu0 0.0
      %4199 = vmatpush1.msra.mxu0 %v38
      %4200 = vmatprep.subr.mxu0 0.0
      %4201 = vmatpush1.msra.mxu0 %v39
      %4202 = vmatprep.subr.mxu0 0.0
      %4203 = vmatpush1.msra.mxu0 %v40
      %4204 = vmatprep.subr.mxu0 0.0
      %4205 = vmatpush1.msra.mxu0 %v41
      %4206 = vmatprep.subr.mxu0 0.0
      %4207 = vmatpush1.msra.mxu0 0.0
      %4208 = vmatprep.subr.mxu0 0.0
      %4209 = vmatpush1.msra.mxu0 0.0
      %4210 = vmatprep.subr.mxu0 0.0
      %4211 = vmatpush1.msra.mxu0 0.0
      %4212 = vmatprep.subr.mxu0 0.0
      %4213 = vmatpush1.msra.mxu0 0.0
      %4214 = vmatprep.subr.mxu0 0.0
      %4215 = vmatpush1.msra.mxu0 0.0
      %4216 = vmatprep.subr.mxu0 0.0
      %4217 = vmatpush1.msra.mxu0 0.0
      %4218 = vmatprep.subr.mxu0 0.0
      %4219 = vmatpush1.msra.mxu0 0.0
      %4220 = vmatprep.subr.mxu0 0.0
      %4221 = vmatpush1.msra.mxu0 0.0
      %4222 = vmatprep.subr.mxu0 0.0
      %4223 = vmatpush1.msra.mxu0 0.0
      %4224 = vmatprep.subr.mxu0 0.0
      %4225 = vmatpush1.msra.mxu0 0.0
      %4226 = vmatprep.subr.mxu0 0.0
      %4227 = vmatpush1.msra.mxu0 0.0
      %4228 = vmatprep.subr.mxu0 0.0
      %4229 = vmatpush1.msra.mxu0 0.0
      %4230 = vmatprep.subr.mxu0 0.0
      %4231 = vmatpush1.msra.mxu0 0.0
      %4232 = vmatprep.subr.mxu0 0.0
      %4233 = vmatpush1.msra.mxu0 0.0
      %4234 = vmatprep.subr.mxu0 0.0
      %4235 = vmatpush1.msra.mxu0 0.0
      %4236 = vmatprep.subr.mxu0 0.0
      %4237 = vmatpush1.msra.mxu0 0.0
      %4238 = vmatprep.subr.mxu0 0.0
      %4239 = vmatpush1.msra.mxu0 0.0
      %4240 = vmatprep.subr.mxu0 0.0
      %4241 = vmatpush1.msra.mxu0 0.0
      %4242 = vmatprep.subr.mxu0 0.0
      %4243 = vmatpush1.msra.mxu0 0.0
      %4244 = vmatprep.subr.mxu0 0.0
      %4245 = vmatpush1.msra.mxu0 0.0
      %4246 = vmatprep.subr.mxu0 0.0
      %4247 = vmatpush1.msra.mxu0 0.0
      %4248 = vmatprep.subr.mxu0 0.0
      %4249 = vmatpush1.msra.mxu0 0.0
      %4250 = vmatprep.subr.mxu0 0.0
      %4251 = vmatpush1.msra.mxu0 0.0
      %4252 = vmatprep.subr.mxu0 0.0
      %4253 = vmatpush1.msra.mxu0 0.0
      %4254 = vmatprep.subr.mxu0 0.0
      %4255 = vmatpush1.msra.mxu0 0.0
      %4256 = vmatprep.subr.mxu0 0.0
      %4257 = vmatpush1.msra.mxu0 0.0
      %4258 = vmatprep.subr.mxu0 0.0
      %4259 = vmatpush1.msra.mxu0 0.0
      %4260 = vmatprep.subr.mxu0 0.0
      %4261 = vmatpush1.msra.mxu0 0.0
      %4262 = vmatprep.mubr.f32.mxu0 0.0
      %4263 = vmatmul.mubr.f32.gmra.mrb[0].mxu0 %v4196
      %v4264 = vpop.f32.mrb[0].mxu0
      %v4265 = vadd.f32 %v42, %v4264
      %v4266 = vpop.f32.mrb[0].mxu0
      %4267 = vdwg.mxu0
      %4268 = vst [vmem:[%s4 + $0x13] sm:$0x1] %v4265
      %4269 = vrot.lane.b32.xlu0 %v4191, 32
      %v4270 = vpop.permute.xlu0 %4269
      %vm4272 = vcmask 254977
      %4273 = vst.msk [vmem:[#allocation2 - $0x1] sm:$0x2] %vm4272, %v4270
      %4275 = vrot.lane.b32.xlu0 %v4185, 96
      %v4276 = vpop.permute.xlu0 %4275
      %4278 = vst.msk [vmem:[#allocation3 - $0x1] sm:$0x2] %vm4272, %v4276
      %4279 = vrot.lane.b32.xlu0 %v4265, 127
      %v4280 = vpop.permute.xlu0 %4279
      %s4281 = vtos %v4280
      %s4282 = vtos %v4265
      %p4283 = scmp.gt.f32.partialorder %s4281, %s4282
      %s4284 = scalar_select %p4283, 1, 0
      %4285 = sst [smem:[%s50]] %s4284
      %4286 = sst [smem:[%s52]] 20
    $region101: #{lstm_reinforce_forward.1} parent=1 // pred_fallthru
      _
    %s4287 = sld [smem:[#allocation4]]
    %p4288 = scmp.eq.s32.totalorder %s4287, 0
    // Predicated region
    $region102: #{lstm_reinforce_forward.1} parent=1 // pred_check
      %p4289 = pneg %p4288
    $region103: #{lstm_reinforce_forward.1} parent=1 // pred_check_branch
      %4291 = sbr.rel (%p4289) target = $region105
    $region104: #{lstm_reinforce_forward.1} parent=1 // pred_region
      %v4292 = vld [vmem:[#allocation2] sm:$0x1]
      %v4293 = vld [vmem:[#allocation3] sm:$0x1]
      %vm4294 = vcmask 261120
      %v4296 = vsel %vm4294, %v4292, 0
      %4298 = vmatprep.subr.mxu0 0.0
      %4299 = vmatpush1.msra.mxu0 %v34
      %4300 = vmatprep.subr.mxu0 0.0
      %4301 = vmatpush1.msra.mxu0 %v35
      %4302 = vmatprep.subr.mxu0 0.0
      %4303 = vmatpush1.msra.mxu0 %v36
      %4304 = vmatprep.subr.mxu0 0.0
      %4305 = vmatpush1.msra.mxu0 %v37
      %4306 = vmatprep.subr.mxu0 0.0
      %4307 = vmatpush1.msra.mxu0 0.0
      %4308 = vmatprep.subr.mxu0 0.0
      %4309 = vmatpush1.msra.mxu0 0.0
      %4310 = vmatprep.subr.mxu0 0.0
      %4311 = vmatpush1.msra.mxu0 0.0
      %4312 = vmatprep.subr.mxu0 0.0
      %4313 = vmatpush1.msra.mxu0 0.0
      %4314 = vmatprep.subr.mxu0 0.0
      %4315 = vmatpush1.msra.mxu0 0.0
      %4316 = vmatprep.subr.mxu0 0.0
      %4317 = vmatpush1.msra.mxu0 0.0
      %4318 = vmatprep.subr.mxu0 0.0
      %4319 = vmatpush1.msra.mxu0 0.0
      %4320 = vmatprep.subr.mxu0 0.0
      %4321 = vmatpush1.msra.mxu0 0.0
      %4322 = vmatprep.subr.mxu0 0.0
      %4323 = vmatpush1.msra.mxu0 0.0
      %4324 = vmatprep.subr.mxu0 0.0
      %4325 = vmatpush1.msra.mxu0 0.0
      %4326 = vmatprep.subr.mxu0 0.0
      %4327 = vmatpush1.msra.mxu0 0.0
      %4328 = vmatprep.subr.mxu0 0.0
      %4329 = vmatpush1.msra.mxu0 0.0
      %4330 = vmatprep.subr.mxu0 0.0
      %4331 = vmatpush1.msra.mxu0 0.0
      %4332 = vmatprep.subr.mxu0 0.0
      %4333 = vmatpush1.msra.mxu0 0.0
      %4334 = vmatprep.subr.mxu0 0.0
      %4335 = vmatpush1.msra.mxu0 0.0
      %4336 = vmatprep.subr.mxu0 0.0
      %4337 = vmatpush1.msra.mxu0 0.0
      %4338 = vmatprep.subr.mxu0 0.0
      %4339 = vmatpush1.msra.mxu0 0.0
      %4340 = vmatprep.subr.mxu0 0.0
      %4341 = vmatpush1.msra.mxu0 0.0
      %4342 = vmatprep.subr.mxu0 0.0
      %4343 = vmatpush1.msra.mxu0 0.0
      %4344 = vmatprep.subr.mxu0 0.0
      %4345 = vmatpush1.msra.mxu0 0.0
      %4346 = vmatprep.subr.mxu0 0.0
      %4347 = vmatpush1.msra.mxu0 0.0
      %4348 = vmatprep.subr.mxu0 0.0
      %4349 = vmatpush1.msra.mxu0 0.0
      %4350 = vmatprep.subr.mxu0 0.0
      %4351 = vmatpush1.msra.mxu0 0.0
      %4352 = vmatprep.subr.mxu0 0.0
      %4353 = vmatpush1.msra.mxu0 0.0
      %4354 = vmatprep.subr.mxu0 0.0
      %4355 = vmatpush1.msra.mxu0 0.0
      %4356 = vmatprep.subr.mxu0 0.0
      %4357 = vmatpush1.msra.mxu0 0.0
      %4358 = vmatprep.subr.mxu0 0.0
      %4359 = vmatpush1.msra.mxu0 0.0
      %4360 = vmatprep.subr.mxu0 0.0
      %4361 = vmatpush1.msra.mxu0 0.0
      %4362 = vmatprep.mubr.f32.mxu0 0.0
      %4363 = vmatmul.mubr.f32.gmra.mrb[0].mxu0 %v4296
      %v4364 = vpop.f32.mrb[0].mxu0
      %v4365 = vadd.f32 0.0, %v4364
      %v4366 = vpop.f32.mrb[0].mxu0
      %4367 = vdwg.mxu0
      %v4369 = vrot.slane %v4365, 7
      %v4371 = vadd.f32 %v43, %v4369
      %v4372 = vxor.u32 %v4371, 2147483648
      %v4373 = vmul.f32 %v4372, 1.442695
      %v4374 = vpow.pop %v4373
      %v4375 = vadd.f32 %v4374, 1.0
      %v4376 = vrcp.pop %v4375
      %v4377 = vmul.f32 1.0, %v4376
      %v4378 = vtanh.pop %v4371
      %v4380 = vlaneseq
      %v4381 = vshrl.u32 %v4380, 7
      %v4382 = vsub.s32 0, %v4381
      %v4383 = vrot.slane %v4293, %v4382
      %4384 = vrot.lane.b32.xlu0 %v4383, 32
      %v4385 = vpop.permute.xlu0 %4384
      %v4387 = vmul.f32 %v4377, %v4385
      %4389 = vrot.lane.b32.xlu0 %v4378, 64
      %v4390 = vpop.permute.xlu0 %4389
      %v4392 = vmul.f32 %v4377, %v4390
      %4394 = vrot.lane.b32.xlu0 %v4392, 32
      %v4395 = vpop.permute.xlu0 %4394
      %v4397 = vadd.f32 %v4387, %v4395
      %v4398 = vtanh.pop %v4397
      %4400 = vrot.lane.b32.xlu0 %v4398, 64
      %v4401 = vpop.permute.xlu0 %4400
      %v4403 = vmul.f32 %v4377, %v4401
      %v4405 = vrot.slane %v4403, 1
      %4406 = vrot.lane.b32.xlu0 %v4405, 32
      %v4407 = vpop.permute.xlu0 %4406
      %v4408 = vsel %vm4294, %v4407, 0
      %4410 = vmatprep.subr.mxu0 0.0
      %4411 = vmatpush1.msra.mxu0 %v38
      %4412 = vmatprep.subr.mxu0 0.0
      %4413 = vmatpush1.msra.mxu0 %v39
      %4414 = vmatprep.subr.mxu0 0.0
      %4415 = vmatpush1.msra.mxu0 %v40
      %4416 = vmatprep.subr.mxu0 0.0
      %4417 = vmatpush1.msra.mxu0 %v41
      %4418 = vmatprep.subr.mxu0 0.0
      %4419 = vmatpush1.msra.mxu0 0.0
      %4420 = vmatprep.subr.mxu0 0.0
      %4421 = vmatpush1.msra.mxu0 0.0
      %4422 = vmatprep.subr.mxu0 0.0
      %4423 = vmatpush1.msra.mxu0 0.0
      %4424 = vmatprep.subr.mxu0 0.0
      %4425 = vmatpush1.msra.mxu0 0.0
      %4426 = vmatprep.subr.mxu0 0.0
      %4427 = vmatpush1.msra.mxu0 0.0
      %4428 = vmatprep.subr.mxu0 0.0
      %4429 = vmatpush1.msra.mxu0 0.0
      %4430 = vmatprep.subr.mxu0 0.0
      %4431 = vmatpush1.msra.mxu0 0.0
      %4432 = vmatprep.subr.mxu0 0.0
      %4433 = vmatpush1.msra.mxu0 0.0
      %4434 = vmatprep.subr.mxu0 0.0
      %4435 = vmatpush1.msra.mxu0 0.0
      %4436 = vmatprep.subr.mxu0 0.0
      %4437 = vmatpush1.msra.mxu0 0.0
      %4438 = vmatprep.subr.mxu0 0.0
      %4439 = vmatpush1.msra.mxu0 0.0
      %4440 = vmatprep.subr.mxu0 0.0
      %4441 = vmatpush1.msra.mxu0 0.0
      %4442 = vmatprep.subr.mxu0 0.0
      %4443 = vmatpush1.msra.mxu0 0.0
      %4444 = vmatprep.subr.mxu0 0.0
      %4445 = vmatpush1.msra.mxu0 0.0
      %4446 = vmatprep.subr.mxu0 0.0
      %4447 = vmatpush1.msra.mxu0 0.0
      %4448 = vmatprep.subr.mxu0 0.0
      %4449 = vmatpush1.msra.mxu0 0.0
      %4450 = vmatprep.subr.mxu0 0.0
      %4451 = vmatpush1.msra.mxu0 0.0
      %4452 = vmatprep.subr.mxu0 0.0
      %4453 = vmatpush1.msra.mxu0 0.0
      %4454 = vmatprep.subr.mxu0 0.0
      %4455 = vmatpush1.msra.mxu0 0.0
      %4456 = vmatprep.subr.mxu0 0.0
      %4457 = vmatpush1.msra.mxu0 0.0
      %4458 = vmatprep.subr.mxu0 0.0
      %4459 = vmatpush1.msra.mxu0 0.0
      %4460 = vmatprep.subr.mxu0 0.0
      %4461 = vmatpush1.msra.mxu0 0.0
      %4462 = vmatprep.subr.mxu0 0.0
      %4463 = vmatpush1.msra.mxu0 0.0
      %4464 = vmatprep.subr.mxu0 0.0
      %4465 = vmatpush1.msra.mxu0 0.0
      %4466 = vmatprep.subr.mxu0 0.0
      %4467 = vmatpush1.msra.mxu0 0.0
      %4468 = vmatprep.subr.mxu0 0.0
      %4469 = vmatpush1.msra.mxu0 0.0
      %4470 = vmatprep.subr.mxu0 0.0
      %4471 = vmatpush1.msra.mxu0 0.0
      %4472 = vmatprep.subr.mxu0 0.0
      %4473 = vmatpush1.msra.mxu0 0.0
      %4474 = vmatprep.mubr.f32.mxu0 0.0
      %4475 = vmatmul.mubr.f32.gmra.mrb[0].mxu0 %v4408
      %v4476 = vpop.f32.mrb[0].mxu0
      %v4477 = vadd.f32 %v42, %v4476
      %v4478 = vpop.f32.mrb[0].mxu0
      %4479 = vdwg.mxu0
      %4480 = vst [vmem:[%s4 + $0x14] sm:$0x1] %v4477
      %4481 = vrot.lane.b32.xlu0 %v4403, 32
      %v4482 = vpop.permute.xlu0 %4481
      %vm4484 = vcmask 254977
      %4485 = vst.msk [vmem:[#allocation2 - $0x1] sm:$0x2] %vm4484, %v4482
      %4487 = vrot.lane.b32.xlu0 %v4397, 96
      %v4488 = vpop.permute.xlu0 %4487
      %4490 = vst.msk [vmem:[#allocation3 - $0x1] sm:$0x2] %vm4484, %v4488
      %4491 = vrot.lane.b32.xlu0 %v4477, 127
      %v4492 = vpop.permute.xlu0 %4491
      %s4493 = vtos %v4492
      %s4494 = vtos %v4477
      %p4495 = scmp.gt.f32.partialorder %s4493, %s4494
      %s4496 = scalar_select %p4495, 1, 0
      %4497 = sst [smem:[%s50]] %s4496
      %4498 = sst [smem:[%s52]] 21
    $region105: #{lstm_reinforce_forward.1} parent=1 // pred_fallthru
      _
    // Predicated region
    $region106: #{lstm_reinforce_forward.1} parent=1 // pred_check
      _
    $region107: #{lstm_reinforce_forward.1} parent=1 // pred_check_branch
      %4500 = sbr.rel (0) target = $region109
    $region108: #{lstm_reinforce_forward.1} parent=1 // pred_region
      _
    $region109: #{lstm_reinforce_forward.1} parent=1 // pred_fallthru
      _
    // Predicated region
    $region110: #{lstm_reinforce_forward.1} parent=1 // pred_check
      _
    $region111: #{lstm_reinforce_forward.1} parent=1 // pred_check_branch
      %4502 = sbr.rel (0) target = $region113
    $region112: #{lstm_reinforce_forward.1} parent=1 // pred_region
      %s4504 = ssub.s32 16, 16
      %4505 = vsyncadd [#allocation7], %s4504
      %4508 = dma.smem_to_hbm [#allocation8], 16, %s5, [#allocation7]
    $region113: #{lstm_reinforce_forward.1} parent=1 // pred_fallthru
      _
    // Predicated region
    $region114: #{lstm_reinforce_forward.1} parent=1 // pred_check
      _
    $region115: #{lstm_reinforce_forward.1} parent=1 // pred_check_branch
      %4510 = sbr.rel (0) target = $region117
    $region116: #{lstm_reinforce_forward.1} parent=1 // pred_region
      _
    $region117: #{lstm_reinforce_forward.1} parent=1 // pred_fallthru
      _
    // Predicated region
    $region118: #{lstm_reinforce_forward.1} parent=1 // pred_check
      _
    $region119: #{lstm_reinforce_forward.1} parent=1 // pred_check_branch
      %4512 = sbr.rel (0) target = $region121
    $region120: #{lstm_reinforce_forward.1} parent=1 // pred_region
      %4513 = dma.done [#allocation7], 16
    $region121: #{lstm_reinforce_forward.1} parent=1 // pred_fallthru
      _
    %4514 = sfence
    %4515 = vsyncpa [#allocation6], 1
    %4516 = vsyncpa [#allocation7], 1

</llo_original>
